<compile_context>
chip_gen: v7x
topology: tpu7x:2x2x1
jax: 0.10.0
libtpu: 0.0.40
codegen_flags: <defaults>
</compile_context>

<pallas_src>
import functools

import jax
import jax.numpy as jnp
from jax.experimental import pallas as pl
from jax.experimental.pallas import tpu as pltpu

IN_FEATURES = 1280   # EfficientNet-B0 classifier in_features
EMBED_DIM = 512      # nn.Linear(in_features, 512)

C_STEM = 32
C_B1 = 32
C_B1P = 16
C_B2 = 96
C_B2P = 24
SE1 = 8
SE2 = 4
K_STEM_PAD = 32      # stem im2col K padded 27 -> 32

BN_EPS_BACKBONE = 1e-3
BN_EPS_HEAD = 1e-5


# ----------------------------------------------------------------------------
# Fused Pallas kernel (whole forward pass, B_TILE samples per grid step)
# ----------------------------------------------------------------------------
def _fused_effnet_kernel(
    # per-step inputs
    cols_ref, sel_ref,
    # stem (BN folded into weight/bias)
    stem_w_ref, stem_b_ref,
    # block 1
    b1dw_w_ref, b1dw_b_ref,
    b1se_w1_ref, b1se_b1_ref, b1se_w2_ref, b1se_b2_ref,
    w1c_ref, b1c_ref,          # composed (project1+BN -> expand2+BN)
    # block 2
    b2dw_w_ref, b2dw_b_ref,
    b2se_w1_ref, b2se_b1_ref, b2se_w2_ref, b2se_b2_ref,
    w2c_ref, b2c_ref,          # composed (project2+BN -> conv_head+BN)
    # composed EffNetBx_v2 head (bn1 -> Linear -> bn2)
    wec_ref, bec_ref,
    # output
    out_ref,
    # VMEM scratch
    pad1_ref, pad2_ref, d2s_ref,
    *, B, Ho, Wo, act_dtype):
  P = Ho * Wo
  Hs, Ws = Ho // 2, Wo // 2
  Psub = Hs * Ws
  f32 = jnp.float32
  bf16 = jnp.bfloat16

  def mm(a, w_ref):
    # MXU matmul: bf16 operands, f32 accumulation.
    return jnp.dot(a.astype(bf16), w_ref[...], preferred_element_type=f32)

  def act(y):
    # SiLU in act_dtype (bf16 on v6e/v7x, f32 on v5e and older).
    z = y.astype(act_dtype)
    return z * jax.nn.sigmoid(z)

  def dwconv3x3(x_bpc, pad_ref, w_ref, b_ref, c):
    # Depthwise 3x3, stride 1, pad 1; BN scale folded into w, shift in b.
    Wp = pad_ref.shape[2]
    # Zero only the 1-px halo actually read by the taps; interior is fully
    # overwritten below and alignment-pad columns (>= Wo+2) are never read.
    zrow = jnp.zeros((B, 1, Wp, c), f32)
    zcol = jnp.zeros((B, Ho, 1, c), f32)
    pad_ref[:, 0:1, :, :] = zrow
    pad_ref[:, Ho + 1:Ho + 2, :, :] = zrow
    pad_ref[:, 1:Ho + 1, 0:1, :] = zcol
    pad_ref[:, 1:Ho + 1, Wo + 1:Wo + 2, :] = zcol
    pad_ref[:, 1:Ho + 1, 1:Wo + 1, :] = x_bpc.reshape(B, Ho, Wo, c).astype(f32)
    w = w_ref[...]                                        # [9, c]
    acc = jnp.zeros((B, Ho, Wo, c), f32)
    for ky in range(3):
      for kx in range(3):
        k = ky * 3 + kx
        tap = pad_ref[:, ky:ky + Ho, kx:kx + Wo, :]       # [B, Ho, Wo, c]
        acc = acc + tap * w[k:k + 1, :].reshape(1, 1, 1, c)
    acc = acc + b_ref[...].reshape(1, 1, 1, c)            # folded BN shift
    return acc.reshape(B, P, c)

  # ---- stem: conv3x3 stride 2 (im2col patches from wrapper) + folded BN + SiLU
  cols = cols_ref[...].reshape(B * P, K_STEM_PAD)                 # bf16
  x0 = act(jnp.dot(cols, stem_w_ref[...], preferred_element_type=f32)
           + stem_b_ref[...])                                     # [B*P, 32]

  # ---- block 1: MBConv expand=1 (dw3x3 + BN + SiLU, SE, 1x1 project)
  d1 = act(dwconv3x3(x0.reshape(B, P, C_B1), pad1_ref,
                     b1dw_w_ref, b1dw_b_ref, C_B1))               # [B, P, 32]
  s1 = jnp.sum(d1.astype(f32), axis=1) * (1.0 / P)                # squeeze [B, 32]
  s1 = act(mm(s1, b1se_w1_ref) + b1se_b1_ref[...])                # [B, 8]
  g1 = jax.nn.sigmoid(mm(s1, b1se_w2_ref) + b1se_b2_ref[...])     # excite [B, 32]
  d1 = d1 * g1.reshape(B, 1, C_B1).astype(d1.dtype)               # channel gate
  # composed (project1+BN -> expand2+BN) 1x1 conv, then SiLU
  e = act(mm(d1.reshape(B * P, C_B1), w1c_ref) + b1c_ref[...])    # [B*P, 96]

  # ---- block 2: MBConv expand=6, stride 2
  d2 = dwconv3x3(e.reshape(B, P, C_B2), pad2_ref,
                 b2dw_w_ref, b2dw_b_ref, C_B2)                    # [B, P, 96] f32
  # Stride-2 subsample BEFORE everything downstream (SE, project, head, SiLU,
  # pool): exact one-hot row-selection matmul on the (idle) MXU.
  # TODO(synk): a strided-tap dwconv (pl.ds stride=2 reads) would also cut the
  # dwconv accumulation itself 4x; kept full-P + selection for lowering safety.
  sel = sel_ref[...]                                              # [Psub, P] bf16
  for b in range(B):                                              # static, small
    d2s_ref[b * Psub:(b + 1) * Psub, :] = jnp.dot(
        sel, d2[b].astype(bf16), preferred_element_type=f32)
  d2s = act(d2s_ref[...])                                         # [B*Psub, 96]
  s2 = jnp.sum(d2s.astype(f32).reshape(B, Psub, C_B2), axis=1) * (1.0 / Psub)
  s2 = act(mm(s2, b2se_w1_ref) + b2se_b1_ref[...])                # [B, 4]
  g2 = jax.nn.sigmoid(mm(s2, b2se_w2_ref) + b2se_b2_ref[...])     # [B, 96]
  d2g = (d2s.reshape(B, Psub, C_B2)
         * g2.reshape(B, 1, C_B2).astype(d2s.dtype)).reshape(B * Psub, C_B2)

  # ---- composed (project2+BN -> conv_head 1x1 + BN), SiLU, global avg pool
  h = act(mm(d2g, w2c_ref) + b2c_ref[...])                        # [B*Psub, 1280]
  feats = jnp.sum(h.astype(f32).reshape(B, Psub, IN_FEATURES),
                  axis=1) * (1.0 / Psub)                          # [B, 1280]

  # ---- composed head: bn1 -> Dropout(0.1)=identity (eval) -> Linear -> bn2
  z = mm(feats, wec_ref) + bec_ref[...]                           # [B, 512] f32
  out_ref[...] = z.astype(f32).reshape(1, B, EMBED_DIM)


# ----------------------------------------------------------------------------
# Parameter construction / BN folding / weight composition
# ----------------------------------------------------------------------------
def _bn_params(key, c):
  k1, k2, k3, k4 = jax.random.split(key, 4)
  gamma = 1.0 + 0.1 * jax.random.normal(k1, (c,))
  beta = 0.1 * jax.random.normal(k2, (c,))
  mean = 0.1 * jax.random.normal(k3, (c,))
  var = 1.0 + 0.1 * jax.random.uniform(k4, (c,))
  return gamma, beta, mean, var


def _bn_fold(bn, eps):
  gamma, beta, mean, var = bn
  scale = gamma / jnp.sqrt(var + eps)
  shift = beta - mean * scale
  return scale.astype(jnp.float32), shift.astype(jnp.float32)


def init_params(key):
  ks = iter(jax.random.split(key, 40))

  def nrm(shape, std=0.1):
    return (std * jax.random.normal(next(ks), shape)).astype(jnp.float32)

  p = {}
  # stem conv 3x3 s2: 3 -> 32
  p["stem_w"] = nrm((27, C_STEM))
  p["stem_bn"] = _bn_params(next(ks), C_STEM)
  # block 1 (MBConv, expand=1): dw3x3, SE(32->8), project 32->16
  p["b1_dw_w"] = nrm((3, 3, C_B1))
  p["b1_dw_bn"] = _bn_params(next(ks), C_B1)
  p["b1_se_w1"] = nrm((C_B1, SE1)); p["b1_se_b1"] = nrm((SE1,))
  p["b1_se_w2"] = nrm((SE1, C_B1)); p["b1_se_b2"] = nrm((C_B1,))
  p["b1_proj_w"] = nrm((C_B1, C_B1P))
  p["b1_proj_bn"] = _bn_params(next(ks), C_B1P)
  # block 2 (MBConv, expand=6, stride 2): 16 -> 96 -> 24, SE(96->4)
  p["b2_exp_w"] = nrm((C_B1P, C_B2))
  p["b2_exp_bn"] = _bn_params(next(ks), C_B2)
  p["b2_dw_w"] = nrm((3, 3, C_B2))
  p["b2_dw_bn"] = _bn_params(next(ks), C_B2)
  p["b2_se_w1"] = nrm((C_B2, SE2)); p["b2_se_b1"] = nrm((SE2,))
  p["b2_se_w2"] = nrm((SE2, C_B2)); p["b2_se_b2"] = nrm((C_B2,))
  p["b2_proj_w"] = nrm((C_B2, C_B2P))
  p["b2_proj_bn"] = _bn_params(next(ks), C_B2P)
  # conv_head 1x1: 24 -> 1280
  p["head_w"] = nrm((C_B2P, IN_FEATURES))
  p["head_bn"] = _bn_params(next(ks), IN_FEATURES)
  # EffNetBx_v2 head: bn1, embed Linear(1280 -> 512), bn2
  p["bn1"] = _bn_params(next(ks), IN_FEATURES)
  p["embed_w"] = nrm((IN_FEATURES, EMBED_DIM), std=0.02)
  p["embed_b"] = nrm((EMBED_DIM,))
  p["bn2"] = _bn_params(next(ks), EMBED_DIM)
  return p


# ----------------------------------------------------------------------------
# Wrapper: one pallas_call for the whole forward pass
# ----------------------------------------------------------------------------
def _const_spec(shape):
  nd = len(shape)
  return pl.BlockSpec(shape, lambda n, _nd=nd: (0,) * _nd)


def _pick_b_tile(n):
  # Amortize per-grid-step overhead, but keep >= 2 grid steps when possible so
  # both v7x TensorCores get work.
  for bt in (8, 4, 2):
    if n % bt == 0 and n // bt >= 2:
      return bt
  return 1


def _act_dtype():
  # bf16 VPU/EUP exists on v6e / v7x; v5e and older must stay f32.
  try:
    kind = jax.devices()[0].device_kind.lower()
  except Exception:
    return jnp.float32
  return jnp.bfloat16 if ("v6" in kind or "v7" in kind) else jnp.float32


@jax.jit
def effnetbx_v2_forward(p, x_nchw):
  x = jnp.transpose(x_nchw, (0, 2, 3, 1)).astype(jnp.float32)     # NCHW -> NHWC
  N, H, W, _ = x.shape
  assert H % 4 == 0 and W % 4 == 0, (H, W)
  Ho, Wo = H // 2, W // 2
  Hs, Ws = Ho // 2, Wo // 2
  P, Psub = Ho * Wo, Hs * Ws
  B = _pick_b_tile(N)
  G = N // B
  act_dtype = _act_dtype()
  f32, bf16 = jnp.float32, jnp.bfloat16

  # Stem im2col on the raw 3-channel input (tiny: P x 27 per sample).
  # TODO(synk): at large resolutions move this patch extraction in-kernel so the
  # stem HBM traffic stays at 1x input bytes.
  xp = jnp.pad(x, ((0, 0), (1, 1), (1, 1), (0, 0)))
  taps = []
  for ky in range(3):
    for kx in range(3):
      taps.append(xp[:, ky:ky + 2 * Ho:2, kx:kx + 2 * Wo:2, :])
  cols = jnp.concatenate(taps, axis=-1).reshape(N, P, 27)
  cols = jnp.pad(cols, ((0, 0), (0, 0), (0, K_STEM_PAD - 27))).astype(bf16)

  # One-hot stride-2 row-selection matrix over flat spatial positions (exact).
  ys, xs = jnp.meshgrid(jnp.arange(Hs), jnp.arange(Ws), indexing="ij")
  sel_pos = (2 * ys * Wo + 2 * xs).reshape(Psub)
  sel = jax.nn.one_hot(sel_pos, P, dtype=bf16)                    # [Psub, P]

  # ---- fold BNs and compose back-to-back affine 1x1 convs --------------------
  s_st, t_st = _bn_fold(p["stem_bn"], BN_EPS_BACKBONE)
  stem_w = jnp.pad(p["stem_w"] * s_st[None, :],
                   ((0, K_STEM_PAD - 27), (0, 0))).astype(bf16)   # [32, 32]
  stem_b = t_st.reshape(1, C_STEM)

  s_d1, t_d1 = _bn_fold(p["b1_dw_bn"], BN_EPS_BACKBONE)
  b1dw_w = (p["b1_dw_w"].reshape(9, C_B1) * s_d1[None, :]).astype(f32)
  b1dw_b = t_d1.reshape(1, C_B1)

  s_p1, t_p1 = _bn_fold(p["b1_proj_bn"], BN_EPS_BACKBONE)
  s_e2, t_e2 = _bn_fold(p["b2_exp_bn"], BN_EPS_BACKBONE)
  w1c = (((p["b1_proj_w"] * s_p1[None, :]) @ p["b2_exp_w"])
         * s_e2[None, :]).astype(bf16)                            # [32, 96]
  b1c = ((t_p1 @ p["b2_exp_w"]) * s_e2 + t_e2).reshape(1, C_B2).astype(f32)

  s_d2, t_d2 = _bn_fold(p["b2_dw_bn"], BN_EPS_BACKBONE)
  b2dw_w = (p["b2_dw_w"].reshape(9, C_B2) * s_d2[None, :]).astype(f32)
  b2dw_b = t_d2.reshape(1, C_B2)

  s_p2, t_p2 = _bn_fold(p["b2_proj_bn"], BN_EPS_BACKBONE)
  s_hd, t_hd = _bn_fold(p["head_bn"], BN_EPS_BACKBONE)
  w2c = (((p["b2_proj_w"] * s_p2[None, :]) @ p["head_w"])
         * s_hd[None, :]).astype(bf16)                            # [96, 1280]
  b2c = ((t_p2 @ p["head_w"]) * s_hd + t_hd).reshape(1, IN_FEATURES).astype(f32)

  s_b1, t_b1 = _bn_fold(p["bn1"], BN_EPS_HEAD)
  s_b2, t_b2 = _bn_fold(p["bn2"], BN_EPS_HEAD)
  wec = ((s_b1[:, None] * p["embed_w"]) * s_b2[None, :]).astype(bf16)
  bec = (((t_b1 @ p["embed_w"]) + p["embed_b"]) * s_b2
         + t_b2).reshape(1, EMBED_DIM).astype(f32)

  args = (
      cols, sel,
      stem_w, stem_b,
      b1dw_w, b1dw_b,
      p["b1_se_w1"].astype(bf16), p["b1_se_b1"].reshape(1, SE1).astype(f32),
      p["b1_se_w2"].astype(bf16), p["b1_se_b2"].reshape(1, C_B1).astype(f32),
      w1c, b1c,
      b2dw_w, b2dw_b,
      p["b2_se_w1"].astype(bf16), p["b2_se_b1"].reshape(1, SE2).astype(f32),
      p["b2_se_w2"].astype(bf16), p["b2_se_b2"].reshape(1, C_B2).astype(f32),
      w2c, b2c,
      wec, bec,
  )

  in_specs = [pl.BlockSpec((B, P, K_STEM_PAD), lambda n: (n, 0, 0))]
  in_specs += [_const_spec(a.shape) for a in args[1:]]
  # TODO(synk): on v7x (64 MiB VMEM) single-buffer the constant weight specs via
  # pipeline_mode=pl.Buffered(1) once confirmed in the Mosaic dump; total weight
  # bytes here (~1.6 MiB) make it a non-issue at these sizes.

  Wp = ((Wo + 2 + 7) // 8) * 8   # sublane-aligned padded width for dwconv scratch

  # Advisory cost estimate: MXU MACs, EUP sigmoids, HBM bytes.
  mm_macs = P * (K_STEM_PAD * C_STEM + C_B1 * C_B2)
  mm_macs += Psub * (P * C_B2 + C_B2 * IN_FEATURES)
  mm_macs += C_B1 * SE1 + SE1 * C_B1 + C_B2 * SE2 + SE2 * C_B2
  mm_macs += IN_FEATURES * EMBED_DIM
  dw_macs = 9 * P * (C_B1 + C_B2)
  transc = P * (C_STEM + C_B1 + C_B2) + Psub * (C_B2 + IN_FEATURES) + 256
  bytes_accessed = sum(int(a.size) * a.dtype.itemsize for a in args)
  bytes_accessed += N * EMBED_DIM * 4
  cost = pl.CostEstimate(flops=2 * N * (mm_macs + dw_macs),
                         transcendentals=N * transc,
                         bytes_accessed=int(bytes_accessed))

  out = pl.pallas_call(
      functools.partial(_fused_effnet_kernel, B=B, Ho=Ho, Wo=Wo,
                        act_dtype=act_dtype),
      out_shape=jax.ShapeDtypeStruct((G, B, EMBED_DIM), jnp.float32),
      grid=(G,),
      in_specs=in_specs,
      out_specs=pl.BlockSpec((1, B, EMBED_DIM), lambda n: (n, 0, 0)),
      scratch_shapes=[
          pltpu.VMEM((B, Ho + 2, Wp, C_B1), jnp.float32),
          pltpu.VMEM((B, Ho + 2, Wp, C_B2), jnp.float32),
          pltpu.VMEM((B * Psub, C_B2), jnp.float32),
      ],
      compiler_params=pltpu.CompilerParams(
          dimension_semantics=("parallel",),
          vmem_limit_bytes=32 * 1024 * 1024,
      ),
      cost_estimate=cost,
  )(*args)
  return out.reshape(N, EMBED_DIM)


if __name__ == "__main__":
  key = jax.random.PRNGKey(0)
  pkey, xkey = jax.random.split(key)
  params = init_params(pkey)
  x = jax.random.normal(xkey, (2, 3, 32, 32), dtype=jnp.float32)  # NCHW like PyTorch
  out = effnetbx_v2_forward(params, x)
  out = jax.block_until_ready(out)
  assert out.shape == (2, EMBED_DIM), out.shape
  assert bool(jnp.all(jnp.isfinite(out)))
  print("KERNEL_OK")
</pallas_src>

<mosaic_0001>
module attributes {stable_mosaic.version = 11 : i64} {
  func.func @_fused_effnet_kernel(%arg0: i32, %arg1: memref<1x256x32xbf16, #tpu.memory_space<vmem>>, %arg2: memref<64x256xbf16, #tpu.memory_space<vmem>>, %arg3: memref<32x32xbf16, #tpu.memory_space<vmem>>, %arg4: memref<1x32xf32, #tpu.memory_space<vmem>>, %arg5: memref<9x32xf32, #tpu.memory_space<vmem>>, %arg6: memref<1x32xf32, #tpu.memory_space<vmem>>, %arg7: memref<32x8xbf16, #tpu.memory_space<vmem>>, %arg8: memref<1x8xf32, #tpu.memory_space<vmem>>, %arg9: memref<8x32xbf16, #tpu.memory_space<vmem>>, %arg10: memref<1x32xf32, #tpu.memory_space<vmem>>, %arg11: memref<32x96xbf16, #tpu.memory_space<vmem>>, %arg12: memref<1x96xf32, #tpu.memory_space<vmem>>, %arg13: memref<9x96xf32, #tpu.memory_space<vmem>>, %arg14: memref<1x96xf32, #tpu.memory_space<vmem>>, %arg15: memref<96x4xbf16, #tpu.memory_space<vmem>>, %arg16: memref<1x4xf32, #tpu.memory_space<vmem>>, %arg17: memref<4x96xbf16, #tpu.memory_space<vmem>>, %arg18: memref<1x96xf32, #tpu.memory_space<vmem>>, %arg19: memref<96x1280xbf16, #tpu.memory_space<vmem>>, %arg20: memref<1x1280xf32, #tpu.memory_space<vmem>>, %arg21: memref<1280x512xbf16, #tpu.memory_space<vmem>>, %arg22: memref<1x512xf32, #tpu.memory_space<vmem>>, %arg23: memref<1x1x512xf32, #tpu.memory_space<vmem>>, %arg24: memref<1x18x24x32xf32, #tpu.memory_space<vmem>>, %arg25: memref<1x18x24x96xf32, #tpu.memory_space<vmem>>, %arg26: memref<64x96xf32, #tpu.memory_space<vmem>>) attributes {dimension_semantics = [#tpu.dimension_semantics<parallel>], iteration_bounds = array<i64: 2>, scalar_prefetch = 0 : i64, scratch_operands = 3 : i64, tpu.core_type = #tpu.core_type<tc>, window_params = [{transform_indices = @transform_0, window_bounds = array<i64: 1, 256, 32>}, {pipeline_mode = #tpu.pipeline_mode<synchronous>, transform_indices = @transform_1, window_bounds = array<i64: 64, 256>}, {pipeline_mode = #tpu.pipeline_mode<synchronous>, transform_indices = @transform_2, window_bounds = array<i64: 32, 32>}, {pipeline_mode = #tpu.pipeline_mode<synchronous>, transform_indices = @transform_3, window_bounds = array<i64: 1, 32>}, {pipeline_mode = #tpu.pipeline_mode<synchronous>, transform_indices = @transform_4, window_bounds = array<i64: 9, 32>}, {pipeline_mode = #tpu.pipeline_mode<synchronous>, transform_indices = @transform_5, window_bounds = array<i64: 1, 32>}, {pipeline_mode = #tpu.pipeline_mode<synchronous>, transform_indices = @transform_6, window_bounds = array<i64: 32, 8>}, {pipeline_mode = #tpu.pipeline_mode<synchronous>, transform_indices = @transform_7, window_bounds = array<i64: 1, 8>}, {pipeline_mode = #tpu.pipeline_mode<synchronous>, transform_indices = @transform_8, window_bounds = array<i64: 8, 32>}, {pipeline_mode = #tpu.pipeline_mode<synchronous>, transform_indices = @transform_9, window_bounds = array<i64: 1, 32>}, {pipeline_mode = #tpu.pipeline_mode<synchronous>, transform_indices = @transform_10, window_bounds = array<i64: 32, 96>}, {pipeline_mode = #tpu.pipeline_mode<synchronous>, transform_indices = @transform_11, window_bounds = array<i64: 1, 96>}, {pipeline_mode = #tpu.pipeline_mode<synchronous>, transform_indices = @transform_12, window_bounds = array<i64: 9, 96>}, {pipeline_mode = #tpu.pipeline_mode<synchronous>, transform_indices = @transform_13, window_bounds = array<i64: 1, 96>}, {pipeline_mode = #tpu.pipeline_mode<synchronous>, transform_indices = @transform_14, window_bounds = array<i64: 96, 4>}, {pipeline_mode = #tpu.pipeline_mode<synchronous>, transform_indices = @transform_15, window_bounds = array<i64: 1, 4>}, {pipeline_mode = #tpu.pipeline_mode<synchronous>, transform_indices = @transform_16, window_bounds = array<i64: 4, 96>}, {pipeline_mode = #tpu.pipeline_mode<synchronous>, transform_indices = @transform_17, window_bounds = array<i64: 1, 96>}, {pipeline_mode = #tpu.pipeline_mode<synchronous>, transform_indices = @transform_18, window_bounds = array<i64: 96, 1280>}, {pipeline_mode = #tpu.pipeline_mode<synchronous>, transform_indices = @transform_19, window_bounds = array<i64: 1, 1280>}, {pipeline_mode = #tpu.pipeline_mode<synchronous>, transform_indices = @transform_20, window_bounds = array<i64: 1280, 512>}, {pipeline_mode = #tpu.pipeline_mode<synchronous>, transform_indices = @transform_21, window_bounds = array<i64: 1, 512>}, {transform_indices = @transform_22, window_bounds = array<i64: 1, 1, 512>}]} {
    %c0 = arith.constant 0 : index
    %c0_0 = arith.constant 0 : index
    %c0_1 = arith.constant 0 : index
    %0 = vector.load %arg1[%c0, %c0_0, %c0_1] : memref<1x256x32xbf16, #tpu.memory_space<vmem>>, vector<1x256x32xbf16>
    %1 = vector.shape_cast %0 : vector<1x256x32xbf16> to vector<256x32xbf16>
    %c0_2 = arith.constant 0 : index
    %c0_3 = arith.constant 0 : index
    %2 = vector.load %arg3[%c0_2, %c0_3] : memref<32x32xbf16, #tpu.memory_space<vmem>>, vector<32x32xbf16>
    %cst = arith.constant dense<0.000000e+00> : vector<256x32xf32>
    %3 = tpu.matmul %1, %2, %cst {dimension_numbers = #tpu.dot_dimension_numbers<[1], [0], [0], [1], [0, 0, 1, 1], [], []>} : vector<256x32xbf16>, vector<32x32xbf16>, vector<256x32xf32> -> vector<256x32xf32>
    %c0_4 = arith.constant 0 : index
    %c0_5 = arith.constant 0 : index
    %4 = vector.load %arg4[%c0_4, %c0_5] : memref<1x32xf32, #tpu.memory_space<vmem>>, vector<1x32xf32>
    %5 = vector.broadcast %4 : vector<1x32xf32> to vector<256x32xf32>
    %6 = arith.addf %3, %5 : vector<256x32xf32>
    %7 = arith.negf %6 : vector<256x32xf32>
    %8 = math.exp %7 : vector<256x32xf32>
    %cst_6 = arith.constant 1.000000e+00 : f32
    %9 = vector.broadcast %cst_6 : f32 to vector<256x32xf32>
    %10 = arith.addf %9, %8 : vector<256x32xf32>
    %11 = arith.divf %9, %10 : vector<256x32xf32>
    %12 = arith.mulf %6, %11 : vector<256x32xf32>
    %13 = vector.shape_cast %12 : vector<256x32xf32> to vector<1x256x32xf32>
    %cst_7 = arith.constant 0.000000e+00 : f32
    %14 = vector.broadcast %cst_7 : f32 to vector<1x1x24x32xf32>
    %cst_8 = arith.constant 0.000000e+00 : f32
    %15 = vector.broadcast %cst_8 : f32 to vector<1x16x1x32xf32>
    %c0_9 = arith.constant 0 : index
    %c0_10 = arith.constant 0 : index
    %c0_11 = arith.constant 0 : index
    %c0_12 = arith.constant 0 : index
    %16 = vector.load %arg24[%c0_9, %c0_10, %c0_11, %c0_12] : memref<1x18x24x32xf32, #tpu.memory_space<vmem>>, vector<1x1x24x32xf32>
    tpu.vector_store %arg24[%c0_9, %c0_10, %c0_11, %c0_12], %14 {strides = array<i32>} : memref<1x18x24x32xf32, #tpu.memory_space<vmem>>, vector<1x1x24x32xf32>,
    %c0_13 = arith.constant 0 : index
    %c17 = arith.constant 17 : index
    %c0_14 = arith.constant 0 : index
    %c0_15 = arith.constant 0 : index
    %17 = vector.load %arg24[%c0_13, %c17, %c0_14, %c0_15] : memref<1x18x24x32xf32, #tpu.memory_space<vmem>>, vector<1x1x24x32xf32>
    tpu.vector_store %arg24[%c0_13, %c17, %c0_14, %c0_15], %14 {strides = array<i32>} : memref<1x18x24x32xf32, #tpu.memory_space<vmem>>, vector<1x1x24x32xf32>,
    %c0_16 = arith.constant 0 : index
    %c1 = arith.constant 1 : index
    %c0_17 = arith.constant 0 : index
    %c0_18 = arith.constant 0 : index
    %18 = vector.load %arg24[%c0_16, %c1, %c0_17, %c0_18] : memref<1x18x24x32xf32, #tpu.memory_space<vmem>>, vector<1x16x1x32xf32>
    tpu.vector_store %arg24[%c0_16, %c1, %c0_17, %c0_18], %15 {strides = array<i32>} : memref<1x18x24x32xf32, #tpu.memory_space<vmem>>, vector<1x16x1x32xf32>,
    %c0_19 = arith.constant 0 : index
    %c1_20 = arith.constant 1 : index
    %c17_21 = arith.constant 17 : index
    %c0_22 = arith.constant 0 : index
    %19 = vector.load %arg24[%c0_19, %c1_20, %c17_21, %c0_22] : memref<1x18x24x32xf32, #tpu.memory_space<vmem>>, vector<1x16x1x32xf32>
    tpu.vector_store %arg24[%c0_19, %c1_20, %c17_21, %c0_22], %15 {strides = array<i32>} : memref<1x18x24x32xf32, #tpu.memory_space<vmem>>, vector<1x16x1x32xf32>,
    %20 = vector.shape_cast %13 : vector<1x256x32xf32> to vector<1x16x16x32xf32>
    %c0_23 = arith.constant 0 : index
    %c1_24 = arith.constant 1 : index
    %c1_25 = arith.constant 1 : index
    %c0_26 = arith.constant 0 : index
    %21 = vector.load %arg24[%c0_23, %c1_24, %c1_25, %c0_26] : memref<1x18x24x32xf32, #tpu.memory_space<vmem>>, vector<1x16x16x32xf32>
    tpu.vector_store %arg24[%c0_23, %c1_24, %c1_25, %c0_26], %20 {strides = array<i32>} : memref<1x18x24x32xf32, #tpu.memory_space<vmem>>, vector<1x16x16x32xf32>,
    %c0_27 = arith.constant 0 : index
    %c0_28 = arith.constant 0 : index
    %22 = vector.load %arg5[%c0_27, %c0_28] : memref<9x32xf32, #tpu.memory_space<vmem>>, vector<9x32xf32>
    %cst_29 = arith.constant 0.000000e+00 : f32
    %23 = vector.broadcast %cst_29 : f32 to vector<1x16x16x32xf32>
    %c0_30 = arith.constant 0 : index
    %c0_31 = arith.constant 0 : index
    %c0_32 = arith.constant 0 : index
    %c0_33 = arith.constant 0 : index
    %24 = vector.load %arg24[%c0_30, %c0_31, %c0_32, %c0_33] : memref<1x18x24x32xf32, #tpu.memory_space<vmem>>, vector<1x16x16x32xf32>
    %25 = vector.extract_strided_slice %22 {offsets = [0, 0], sizes = [1, 32], strides = [1, 1]} : vector<9x32xf32> to vector<1x32xf32>
    %26 = vector.shape_cast %25 : vector<1x32xf32> to vector<1x1x1x32xf32>
    %27 = vector.broadcast %26 : vector<1x1x1x32xf32> to vector<1x16x16x32xf32>
    %28 = arith.mulf %24, %27 : vector<1x16x16x32xf32>
    %29 = arith.addf %23, %28 : vector<1x16x16x32xf32>
    %c0_34 = arith.constant 0 : index
    %c0_35 = arith.constant 0 : index
    %c1_36 = arith.constant 1 : index
    %c0_37 = arith.constant 0 : index
    %30 = vector.load %arg24[%c0_34, %c0_35, %c1_36, %c0_37] : memref<1x18x24x32xf32, #tpu.memory_space<vmem>>, vector<1x16x16x32xf32>
    %31 = vector.extract_strided_slice %22 {offsets = [1, 0], sizes = [1, 32], strides = [1, 1]} : vector<9x32xf32> to vector<1x32xf32>
    %32 = vector.shape_cast %31 : vector<1x32xf32> to vector<1x1x1x32xf32>
    %33 = vector.broadcast %32 : vector<1x1x1x32xf32> to vector<1x16x16x32xf32>
    %34 = arith.mulf %30, %33 : vector<1x16x16x32xf32>
    %35 = arith.addf %29, %34 : vector<1x16x16x32xf32>
    %c0_38 = arith.constant 0 : index
    %c0_39 = arith.constant 0 : index
    %c2 = arith.constant 2 : index
    %c0_40 = arith.constant 0 : index
    %36 = vector.load %arg24[%c0_38, %c0_39, %c2, %c0_40] : memref<1x18x24x32xf32, #tpu.memory_space<vmem>>, vector<1x16x16x32xf32>
    %37 = vector.extract_strided_slice %22 {offsets = [2, 0], sizes = [1, 32], strides = [1, 1]} : vector<9x32xf32> to vector<1x32xf32>
    %38 = vector.shape_cast %37 : vector<1x32xf32> to vector<1x1x1x32xf32>
    %39 = vector.broadcast %38 : vector<1x1x1x32xf32> to vector<1x16x16x32xf32>
    %40 = arith.mulf %36, %39 : vector<1x16x16x32xf32>
    %41 = arith.addf %35, %40 : vector<1x16x16x32xf32>
    %c0_41 = arith.constant 0 : index
    %c1_42 = arith.constant 1 : index
    %c0_43 = arith.constant 0 : index
    %c0_44 = arith.constant 0 : index
    %42 = vector.load %arg24[%c0_41, %c1_42, %c0_43, %c0_44] : memref<1x18x24x32xf32, #tpu.memory_space<vmem>>, vector<1x16x16x32xf32>
    %43 = vector.extract_strided_slice %22 {offsets = [3, 0], sizes = [1, 32], strides = [1, 1]} : vector<9x32xf32> to vector<1x32xf32>
    %44 = vector.shape_cast %43 : vector<1x32xf32> to vector<1x1x1x32xf32>
    %45 = vector.broadcast %44 : vector<1x1x1x32xf32> to vector<1x16x16x32xf32>
    %46 = arith.mulf %42, %45 : vector<1x16x16x32xf32>
    %47 = arith.addf %41, %46 : vector<1x16x16x32xf32>
    %c0_45 = arith.constant 0 : index
    %c1_46 = arith.constant 1 : index
    %c1_47 = arith.constant 1 : index
    %c0_48 = arith.constant 0 : index
    %48 = vector.load %arg24[%c0_45, %c1_46, %c1_47, %c0_48] : memref<1x18x24x32xf32, #tpu.memory_space<vmem>>, vector<1x16x16x32xf32>
    %49 = vector.extract_strided_slice %22 {offsets = [4, 0], sizes = [1, 32], strides = [1, 1]} : vector<9x32xf32> to vector<1x32xf32>
    %50 = vector.shape_cast %49 : vector<1x32xf32> to vector<1x1x1x32xf32>
    %51 = vector.broadcast %50 : vector<1x1x1x32xf32> to vector<1x16x16x32xf32>
    %52 = arith.mulf %48, %51 : vector<1x16x16x32xf32>
    %53 = arith.addf %47, %52 : vector<1x16x16x32xf32>
    %c0_49 = arith.constant 0 : index
    %c1_50 = arith.constant 1 : index
    %c2_51 = arith.constant 2 : index
    %c0_52 = arith.constant 0 : index
    %54 = vector.load %arg24[%c0_49, %c1_50, %c2_51, %c0_52] : memref<1x18x24x32xf32, #tpu.memory_space<vmem>>, vector<1x16x16x32xf32>
    %55 = vector.extract_strided_slice %22 {offsets = [5, 0], sizes = [1, 32], strides = [1, 1]} : vector<9x32xf32> to vector<1x32xf32>
    %56 = vector.shape_cast %55 : vector<1x32xf32> to vector<1x1x1x32xf32>
    %57 = vector.broadcast %56 : vector<1x1x1x32xf32> to vector<1x16x16x32xf32>
    %58 = arith.mulf %54, %57 : vector<1x16x16x32xf32>
    %59 = arith.addf %53, %58 : vector<1x16x16x32xf32>
    %c0_53 = arith.constant 0 : index
    %c2_54 = arith.constant 2 : index
    %c0_55 = arith.constant 0 : index
    %c0_56 = arith.constant 0 : index
    %60 = vector.load %arg24[%c0_53, %c2_54, %c0_55, %c0_56] : memref<1x18x24x32xf32, #tpu.memory_space<vmem>>, vector<1x16x16x32xf32>
    %61 = vector.extract_strided_slice %22 {offsets = [6, 0], sizes = [1, 32], strides = [1, 1]} : vector<9x32xf32> to vector<1x32xf32>
    %62 = vector.shape_cast %61 : vector<1x32xf32> to vector<1x1x1x32xf32>
    %63 = vector.broadcast %62 : vector<1x1x1x32xf32> to vector<1x16x16x32xf32>
    %64 = arith.mulf %60, %63 : vector<1x16x16x32xf32>
    %65 = arith.addf %59, %64 : vector<1x16x16x32xf32>
    %c0_57 = arith.constant 0 : index
    %c2_58 = arith.constant 2 : index
    %c1_59 = arith.constant 1 : index
    %c0_60 = arith.constant 0 : index
    %66 = vector.load %arg24[%c0_57, %c2_58, %c1_59, %c0_60] : memref<1x18x24x32xf32, #tpu.memory_space<vmem>>, vector<1x16x16x32xf32>
    %67 = vector.extract_strided_slice %22 {offsets = [7, 0], sizes = [1, 32], strides = [1, 1]} : vector<9x32xf32> to vector<1x32xf32>
    %68 = vector.shape_cast %67 : vector<1x32xf32> to vector<1x1x1x32xf32>
    %69 = vector.broadcast %68 : vector<1x1x1x32xf32> to vector<1x16x16x32xf32>
    %70 = arith.mulf %66, %69 : vector<1x16x16x32xf32>
    %71 = arith.addf %65, %70 : vector<1x16x16x32xf32>
    %c0_61 = arith.constant 0 : index
    %c2_62 = arith.constant 2 : index
    %c2_63 = arith.constant 2 : index
    %c0_64 = arith.constant 0 : index
    %72 = vector.load %arg24[%c0_61, %c2_62, %c2_63, %c0_64] : memref<1x18x24x32xf32, #tpu.memory_space<vmem>>, vector<1x16x16x32xf32>
    %73 = vector.extract_strided_slice %22 {offsets = [8, 0], sizes = [1, 32], strides = [1, 1]} : vector<9x32xf32> to vector<1x32xf32>
    %74 = vector.shape_cast %73 : vector<1x32xf32> to vector<1x1x1x32xf32>
    %75 = vector.broadcast %74 : vector<1x1x1x32xf32> to vector<1x16x16x32xf32>
    %76 = arith.mulf %72, %75 : vector<1x16x16x32xf32>
    %77 = arith.addf %71, %76 : vector<1x16x16x32xf32>
    %c0_65 = arith.constant 0 : index
    %c0_66 = arith.constant 0 : index
    %78 = vector.load %arg6[%c0_65, %c0_66] : memref<1x32xf32, #tpu.memory_space<vmem>>, vector<1x32xf32>
    %79 = vector.shape_cast %78 : vector<1x32xf32> to vector<1x1x1x32xf32>
    %80 = vector.broadcast %79 : vector<1x1x1x32xf32> to vector<1x16x16x32xf32>
    %81 = arith.addf %77, %80 : vector<1x16x16x32xf32>
    %82 = vector.shape_cast %81 : vector<1x16x16x32xf32> to vector<1x256x32xf32>
    %83 = arith.negf %82 : vector<1x256x32xf32>
    %84 = math.exp %83 : vector<1x256x32xf32>
    %cst_67 = arith.constant 1.000000e+00 : f32
    %85 = vector.broadcast %cst_67 : f32 to vector<1x256x32xf32>
    %86 = arith.addf %85, %84 : vector<1x256x32xf32>
    %87 = arith.divf %85, %86 : vector<1x256x32xf32>
    %88 = arith.mulf %82, %87 : vector<1x256x32xf32>
    %cst_68 = arith.constant dense<0.000000e+00> : vector<1x32xf32>
    %89 = vector.multi_reduction <add>, %88, %cst_68 [1] : vector<1x256x32xf32> to vector<1x32xf32>
    %cst_69 = arith.constant 3.906250e-03 : f32
    %90 = vector.broadcast %cst_69 : f32 to vector<1x32xf32>
    %91 = arith.mulf %89, %90 : vector<1x32xf32>
    %92 = arith.truncf %91 : vector<1x32xf32> to vector<1x32xbf16>
    %c0_70 = arith.constant 0 : index
    %c0_71 = arith.constant 0 : index
    %93 = vector.load %arg7[%c0_70, %c0_71] : memref<32x8xbf16, #tpu.memory_space<vmem>>, vector<32x8xbf16>
    %cst_72 = arith.constant dense<0.000000e+00> : vector<1x8xf32>
    %94 = tpu.matmul %92, %93, %cst_72 {dimension_numbers = #tpu.dot_dimension_numbers<[1], [0], [0], [1], [0, 0, 1, 1], [], []>} : vector<1x32xbf16>, vector<32x8xbf16>, vector<1x8xf32> -> vector<1x8xf32>
    %c0_73 = arith.constant 0 : index
    %c0_74 = arith.constant 0 : index
    %95 = vector.load %arg8[%c0_73, %c0_74] : memref<1x8xf32, #tpu.memory_space<vmem>>, vector<1x8xf32>
    %96 = arith.addf %94, %95 : vector<1x8xf32>
    %97 = arith.negf %96 : vector<1x8xf32>
    %98 = math.exp %97 : vector<1x8xf32>
    %cst_75 = arith.constant 1.000000e+00 : f32
    %99 = vector.broadcast %cst_75 : f32 to vector<1x8xf32>
    %100 = arith.addf %99, %98 : vector<1x8xf32>
    %101 = arith.divf %99, %100 : vector<1x8xf32>
    %102 = arith.mulf %96, %101 : vector<1x8xf32>
    %103 = arith.truncf %102 : vector<1x8xf32> to vector<1x8xbf16>
    %c0_76 = arith.constant 0 : index
    %c0_77 = arith.constant 0 : index
    %104 = vector.load %arg9[%c0_76, %c0_77] : memref<8x32xbf16, #tpu.memory_space<vmem>>, vector<8x32xbf16>
    %cst_78 = arith.constant dense<0.000000e+00> : vector<1x32xf32>
    %105 = tpu.matmul %103, %104, %cst_78 {dimension_numbers = #tpu.dot_dimension_numbers<[1], [0], [0], [1], [0, 0, 1, 1], [], []>} : vector<1x8xbf16>, vector<8x32xbf16>, vector<1x32xf32> -> vector<1x32xf32>
    %c0_79 = arith.constant 0 : index
    %c0_80 = arith.constant 0 : index
    %106 = vector.load %arg10[%c0_79, %c0_80] : memref<1x32xf32, #tpu.memory_space<vmem>>, vector<1x32xf32>
    %107 = arith.addf %105, %106 : vector<1x32xf32>
    %108 = arith.negf %107 : vector<1x32xf32>
    %109 = math.exp %108 : vector<1x32xf32>
    %cst_81 = arith.constant 1.000000e+00 : f32
    %110 = vector.broadcast %cst_81 : f32 to vector<1x32xf32>
    %111 = arith.addf %110, %109 : vector<1x32xf32>
    %112 = arith.divf %110, %111 : vector<1x32xf32>
    %113 = vector.shape_cast %112 : vector<1x32xf32> to vector<1x1x32xf32>
    %114 = vector.broadcast %113 : vector<1x1x32xf32> to vector<1x256x32xf32>
    %115 = arith.mulf %88, %114 : vector<1x256x32xf32>
    %116 = vector.shape_cast %115 : vector<1x256x32xf32> to vector<256x32xf32>
    %117 = arith.truncf %116 : vector<256x32xf32> to vector<256x32xbf16>
    %c0_82 = arith.constant 0 : index
    %c0_83 = arith.constant 0 : index
    %118 = vector.load %arg11[%c0_82, %c0_83] : memref<32x96xbf16, #tpu.memory_space<vmem>>, vector<32x96xbf16>
    %cst_84 = arith.constant dense<0.000000e+00> : vector<256x96xf32>
    %119 = tpu.matmul %117, %118, %cst_84 {dimension_numbers = #tpu.dot_dimension_numbers<[1], [0], [0], [1], [0, 0, 1, 1], [], []>} : vector<256x32xbf16>, vector<32x96xbf16>, vector<256x96xf32> -> vector<256x96xf32>
    %c0_85 = arith.constant 0 : index
    %c0_86 = arith.constant 0 : index
    %120 = vector.load %arg12[%c0_85, %c0_86] : memref<1x96xf32, #tpu.memory_space<vmem>>, vector<1x96xf32>
    %121 = vector.broadcast %120 : vector<1x96xf32> to vector<256x96xf32>
    %122 = arith.addf %119, %121 : vector<256x96xf32>
    %123 = arith.negf %122 : vector<256x96xf32>
    %124 = math.exp %123 : vector<256x96xf32>
    %cst_87 = arith.constant 1.000000e+00 : f32
    %125 = vector.broadcast %cst_87 : f32 to vector<256x96xf32>
    %126 = arith.addf %125, %124 : vector<256x96xf32>
    %127 = arith.divf %125, %126 : vector<256x96xf32>
    %128 = arith.mulf %122, %127 : vector<256x96xf32>
    %129 = vector.shape_cast %128 : vector<256x96xf32> to vector<1x256x96xf32>
    %cst_88 = arith.constant 0.000000e+00 : f32
    %130 = vector.broadcast %cst_88 : f32 to vector<1x1x24x96xf32>
    %cst_89 = arith.constant 0.000000e+00 : f32
    %131 = vector.broadcast %cst_89 : f32 to vector<1x16x1x96xf32>
    %c0_90 = arith.constant 0 : index
    %c0_91 = arith.constant 0 : index
    %c0_92 = arith.constant 0 : index
    %c0_93 = arith.constant 0 : index
    %132 = vector.load %arg25[%c0_90, %c0_91, %c0_92, %c0_93] : memref<1x18x24x96xf32, #tpu.memory_space<vmem>>, vector<1x1x24x96xf32>
    tpu.vector_store %arg25[%c0_90, %c0_91, %c0_92, %c0_93], %130 {strides = array<i32>} : memref<1x18x24x96xf32, #tpu.memory_space<vmem>>, vector<1x1x24x96xf32>,
    %c0_94 = arith.constant 0 : index
    %c17_95 = arith.constant 17 : index
    %c0_96 = arith.constant 0 : index
    %c0_97 = arith.constant 0 : index
    %133 = vector.load %arg25[%c0_94, %c17_95, %c0_96, %c0_97] : memref<1x18x24x96xf32, #tpu.memory_space<vmem>>, vector<1x1x24x96xf32>
    tpu.vector_store %arg25[%c0_94, %c17_95, %c0_96, %c0_97], %130 {strides = array<i32>} : memref<1x18x24x96xf32, #tpu.memory_space<vmem>>, vector<1x1x24x96xf32>,
    %c0_98 = arith.constant 0 : index
    %c1_99 = arith.constant 1 : index
    %c0_100 = arith.constant 0 : index
    %c0_101 = arith.constant 0 : index
    %134 = vector.load %arg25[%c0_98, %c1_99, %c0_100, %c0_101] : memref<1x18x24x96xf32, #tpu.memory_space<vmem>>, vector<1x16x1x96xf32>
    tpu.vector_store %arg25[%c0_98, %c1_99, %c0_100, %c0_101], %131 {strides = array<i32>} : memref<1x18x24x96xf32, #tpu.memory_space<vmem>>, vector<1x16x1x96xf32>,
    %c0_102 = arith.constant 0 : index
    %c1_103 = arith.constant 1 : index
    %c17_104 = arith.constant 17 : index
    %c0_105 = arith.constant 0 : index
    %135 = vector.load %arg25[%c0_102, %c1_103, %c17_104, %c0_105] : memref<1x18x24x96xf32, #tpu.memory_space<vmem>>, vector<1x16x1x96xf32>
    tpu.vector_store %arg25[%c0_102, %c1_103, %c17_104, %c0_105], %131 {strides = array<i32>} : memref<1x18x24x96xf32, #tpu.memory_space<vmem>>, vector<1x16x1x96xf32>,
    %136 = vector.shape_cast %129 : vector<1x256x96xf32> to vector<1x16x16x96xf32>
    %c0_106 = arith.constant 0 : index
    %c1_107 = arith.constant 1 : index
    %c1_108 = arith.constant 1 : index
    %c0_109 = arith.constant 0 : index
    %137 = vector.load %arg25[%c0_106, %c1_107, %c1_108, %c0_109] : memref<1x18x24x96xf32, #tpu.memory_space<vmem>>, vector<1x16x16x96xf32>
    tpu.vector_store %arg25[%c0_106, %c1_107, %c1_108, %c0_109], %136 {strides = array<i32>} : memref<1x18x24x96xf32, #tpu.memory_space<vmem>>, vector<1x16x16x96xf32>,
    %c0_110 = arith.constant 0 : index
    %c0_111 = arith.constant 0 : index
    %138 = vector.load %arg13[%c0_110, %c0_111] : memref<9x96xf32, #tpu.memory_space<vmem>>, vector<9x96xf32>
    %cst_112 = arith.constant 0.000000e+00 : f32
    %139 = vector.broadcast %cst_112 : f32 to vector<1x16x16x96xf32>
    %c0_113 = arith.constant 0 : index
    %c0_114 = arith.constant 0 : index
    %c0_115 = arith.constant 0 : index
    %c0_116 = arith.constant 0 : index
    %140 = vector.load %arg25[%c0_113, %c0_114, %c0_115, %c0_116] : memref<1x18x24x96xf32, #tpu.memory_space<vmem>>, vector<1x16x16x96xf32>
    %141 = vector.extract_strided_slice %138 {offsets = [0, 0], sizes = [1, 96], strides = [1, 1]} : vector<9x96xf32> to vector<1x96xf32>
    %142 = vector.shape_cast %141 : vector<1x96xf32> to vector<1x1x1x96xf32>
    %143 = vector.broadcast %142 : vector<1x1x1x96xf32> to vector<1x16x16x96xf32>
    %144 = arith.mulf %140, %143 : vector<1x16x16x96xf32>
    %145 = arith.addf %139, %144 : vector<1x16x16x96xf32>
    %c0_117 = arith.constant 0 : index
    %c0_118 = arith.constant 0 : index
    %c1_119 = arith.constant 1 : index
    %c0_120 = arith.constant 0 : index
    %146 = vector.load %arg25[%c0_117, %c0_118, %c1_119, %c0_120] : memref<1x18x24x96xf32, #tpu.memory_space<vmem>>, vector<1x16x16x96xf32>
    %147 = vector.extract_strided_slice %138 {offsets = [1, 0], sizes = [1, 96], strides = [1, 1]} : vector<9x96xf32> to vector<1x96xf32>
    %148 = vector.shape_cast %147 : vector<1x96xf32> to vector<1x1x1x96xf32>
    %149 = vector.broadcast %148 : vector<1x1x1x96xf32> to vector<1x16x16x96xf32>
    %150 = arith.mulf %146, %149 : vector<1x16x16x96xf32>
    %151 = arith.addf %145, %150 : vector<1x16x16x96xf32>
    %c0_121 = arith.constant 0 : index
    %c0_122 = arith.constant 0 : index
    %c2_123 = arith.constant 2 : index
    %c0_124 = arith.constant 0 : index
    %152 = vector.load %arg25[%c0_121, %c0_122, %c2_123, %c0_124] : memref<1x18x24x96xf32, #tpu.memory_space<vmem>>, vector<1x16x16x96xf32>
    %153 = vector.extract_strided_slice %138 {offsets = [2, 0], sizes = [1, 96], strides = [1, 1]} : vector<9x96xf32> to vector<1x96xf32>
    %154 = vector.shape_cast %153 : vector<1x96xf32> to vector<1x1x1x96xf32>
    %155 = vector.broadcast %154 : vector<1x1x1x96xf32> to vector<1x16x16x96xf32>
    %156 = arith.mulf %152, %155 : vector<1x16x16x96xf32>
    %157 = arith.addf %151, %156 : vector<1x16x16x96xf32>
    %c0_125 = arith.constant 0 : index
    %c1_126 = arith.constant 1 : index
    %c0_127 = arith.constant 0 : index
    %c0_128 = arith.constant 0 : index
    %158 = vector.load %arg25[%c0_125, %c1_126, %c0_127, %c0_128] : memref<1x18x24x96xf32, #tpu.memory_space<vmem>>, vector<1x16x16x96xf32>
    %159 = vector.extract_strided_slice %138 {offsets = [3, 0], sizes = [1, 96], strides = [1, 1]} : vector<9x96xf32> to vector<1x96xf32>
    %160 = vector.shape_cast %159 : vector<1x96xf32> to vector<1x1x1x96xf32>
    %161 = vector.broadcast %160 : vector<1x1x1x96xf32> to vector<1x16x16x96xf32>
    %162 = arith.mulf %158, %161 : vector<1x16x16x96xf32>
    %163 = arith.addf %157, %162 : vector<1x16x16x96xf32>
    %c0_129 = arith.constant 0 : index
    %c1_130 = arith.constant 1 : index
    %c1_131 = arith.constant 1 : index
    %c0_132 = arith.constant 0 : index
    %164 = vector.load %arg25[%c0_129, %c1_130, %c1_131, %c0_132] : memref<1x18x24x96xf32, #tpu.memory_space<vmem>>, vector<1x16x16x96xf32>
    %165 = vector.extract_strided_slice %138 {offsets = [4, 0], sizes = [1, 96], strides = [1, 1]} : vector<9x96xf32> to vector<1x96xf32>
    %166 = vector.shape_cast %165 : vector<1x96xf32> to vector<1x1x1x96xf32>
    %167 = vector.broadcast %166 : vector<1x1x1x96xf32> to vector<1x16x16x96xf32>
    %168 = arith.mulf %164, %167 : vector<1x16x16x96xf32>
    %169 = arith.addf %163, %168 : vector<1x16x16x96xf32>
    %c0_133 = arith.constant 0 : index
    %c1_134 = arith.constant 1 : index
    %c2_135 = arith.constant 2 : index
    %c0_136 = arith.constant 0 : index
    %170 = vector.load %arg25[%c0_133, %c1_134, %c2_135, %c0_136] : memref<1x18x24x96xf32, #tpu.memory_space<vmem>>, vector<1x16x16x96xf32>
    %171 = vector.extract_strided_slice %138 {offsets = [5, 0], sizes = [1, 96], strides = [1, 1]} : vector<9x96xf32> to vector<1x96xf32>
    %172 = vector.shape_cast %171 : vector<1x96xf32> to vector<1x1x1x96xf32>
    %173 = vector.broadcast %172 : vector<1x1x1x96xf32> to vector<1x16x16x96xf32>
    %174 = arith.mulf %170, %173 : vector<1x16x16x96xf32>
    %175 = arith.addf %169, %174 : vector<1x16x16x96xf32>
    %c0_137 = arith.constant 0 : index
    %c2_138 = arith.constant 2 : index
    %c0_139 = arith.constant 0 : index
    %c0_140 = arith.constant 0 : index
    %176 = vector.load %arg25[%c0_137, %c2_138, %c0_139, %c0_140] : memref<1x18x24x96xf32, #tpu.memory_space<vmem>>, vector<1x16x16x96xf32>
    %177 = vector.extract_strided_slice %138 {offsets = [6, 0], sizes = [1, 96], strides = [1, 1]} : vector<9x96xf32> to vector<1x96xf32>
    %178 = vector.shape_cast %177 : vector<1x96xf32> to vector<1x1x1x96xf32>
    %179 = vector.broadcast %178 : vector<1x1x1x96xf32> to vector<1x16x16x96xf32>
    %180 = arith.mulf %176, %179 : vector<1x16x16x96xf32>
    %181 = arith.addf %175, %180 : vector<1x16x16x96xf32>
    %c0_141 = arith.constant 0 : index
    %c2_142 = arith.constant 2 : index
    %c1_143 = arith.constant 1 : index
    %c0_144 = arith.constant 0 : index
    %182 = vector.load %arg25[%c0_141, %c2_142, %c1_143, %c0_144] : memref<1x18x24x96xf32, #tpu.memory_space<vmem>>, vector<1x16x16x96xf32>
    %183 = vector.extract_strided_slice %138 {offsets = [7, 0], sizes = [1, 96], strides = [1, 1]} : vector<9x96xf32> to vector<1x96xf32>
    %184 = vector.shape_cast %183 : vector<1x96xf32> to vector<1x1x1x96xf32>
    %185 = vector.broadcast %184 : vector<1x1x1x96xf32> to vector<1x16x16x96xf32>
    %186 = arith.mulf %182, %185 : vector<1x16x16x96xf32>
    %187 = arith.addf %181, %186 : vector<1x16x16x96xf32>
    %c0_145 = arith.constant 0 : index
    %c2_146 = arith.constant 2 : index
    %c2_147 = arith.constant 2 : index
    %c0_148 = arith.constant 0 : index
    %188 = vector.load %arg25[%c0_145, %c2_146, %c2_147, %c0_148] : memref<1x18x24x96xf32, #tpu.memory_space<vmem>>, vector<1x16x16x96xf32>
    %189 = vector.extract_strided_slice %138 {offsets = [8, 0], sizes = [1, 96], strides = [1, 1]} : vector<9x96xf32> to vector<1x96xf32>
    %190 = vector.shape_cast %189 : vector<1x96xf32> to vector<1x1x1x96xf32>
    %191 = vector.broadcast %190 : vector<1x1x1x96xf32> to vector<1x16x16x96xf32>
    %192 = arith.mulf %188, %191 : vector<1x16x16x96xf32>
    %193 = arith.addf %187, %192 : vector<1x16x16x96xf32>
    %c0_149 = arith.constant 0 : index
    %c0_150 = arith.constant 0 : index
    %194 = vector.load %arg14[%c0_149, %c0_150] : memref<1x96xf32, #tpu.memory_space<vmem>>, vector<1x96xf32>
    %195 = vector.shape_cast %194 : vector<1x96xf32> to vector<1x1x1x96xf32>
    %196 = vector.broadcast %195 : vector<1x1x1x96xf32> to vector<1x16x16x96xf32>
    %197 = arith.addf %193, %196 : vector<1x16x16x96xf32>
    %198 = vector.shape_cast %197 : vector<1x16x16x96xf32> to vector<1x256x96xf32>
    %c0_151 = arith.constant 0 : index
    %c0_152 = arith.constant 0 : index
    %199 = vector.load %arg2[%c0_151, %c0_152] : memref<64x256xbf16, #tpu.memory_space<vmem>>, vector<64x256xbf16>
    %200 = vector.shape_cast %198 : vector<1x256x96xf32> to vector<256x96xf32>
    %201 = arith.truncf %200 : vector<256x96xf32> to vector<256x96xbf16>
    %cst_153 = arith.constant dense<0.000000e+00> : vector<64x96xf32>
    %202 = tpu.matmul %199, %201, %cst_153 {dimension_numbers = #tpu.dot_dimension_numbers<[1], [0], [0], [1], [0, 0, 1, 1], [], []>} : vector<64x256xbf16>, vector<256x96xbf16>, vector<64x96xf32> -> vector<64x96xf32>
    %c0_154 = arith.constant 0 : index
    %c0_155 = arith.constant 0 : index
    %203 = vector.load %arg26[%c0_154, %c0_155] : memref<64x96xf32, #tpu.memory_space<vmem>>, vector<64x96xf32>
    tpu.vector_store %arg26[%c0_154, %c0_155], %202 {strides = array<i32>} : memref<64x96xf32, #tpu.memory_space<vmem>>, vector<64x96xf32>,
    %c0_156 = arith.constant 0 : index
    %c0_157 = arith.constant 0 : index
    %204 = vector.load %arg26[%c0_156, %c0_157] : memref<64x96xf32, #tpu.memory_space<vmem>>, vector<64x96xf32>
    %205 = arith.negf %204 : vector<64x96xf32>
    %206 = math.exp %205 : vector<64x96xf32>
    %cst_158 = arith.constant 1.000000e+00 : f32
    %207 = vector.broadcast %cst_158 : f32 to vector<64x96xf32>
    %208 = arith.addf %207, %206 : vector<64x96xf32>
    %209 = arith.divf %207, %208 : vector<64x96xf32>
    %210 = arith.mulf %204, %209 : vector<64x96xf32>
    %211 = vector.shape_cast %210 : vector<64x96xf32> to vector<1x64x96xf32>
    %cst_159 = arith.constant dense<0.000000e+00> : vector<1x96xf32>
    %212 = vector.multi_reduction <add>, %211, %cst_159 [1] : vector<1x64x96xf32> to vector<1x96xf32>
    %cst_160 = arith.constant 1.562500e-02 : f32
    %213 = vector.broadcast %cst_160 : f32 to vector<1x96xf32>
    %214 = arith.mulf %212, %213 : vector<1x96xf32>
    %215 = arith.truncf %214 : vector<1x96xf32> to vector<1x96xbf16>
    %c0_161 = arith.constant 0 : index
    %c0_162 = arith.constant 0 : index
    %216 = vector.load %arg15[%c0_161, %c0_162] : memref<96x4xbf16, #tpu.memory_space<vmem>>, vector<96x4xbf16>
    %cst_163 = arith.constant dense<0.000000e+00> : vector<1x4xf32>
    %217 = tpu.matmul %215, %216, %cst_163 {dimension_numbers = #tpu.dot_dimension_numbers<[1], [0], [0], [1], [0, 0, 1, 1], [], []>} : vector<1x96xbf16>, vector<96x4xbf16>, vector<1x4xf32> -> vector<1x4xf32>
    %c0_164 = arith.constant 0 : index
    %c0_165 = arith.constant 0 : index
    %218 = vector.load %arg16[%c0_164, %c0_165] : memref<1x4xf32, #tpu.memory_space<vmem>>, vector<1x4xf32>
    %219 = arith.addf %217, %218 : vector<1x4xf32>
    %220 = arith.negf %219 : vector<1x4xf32>
    %221 = math.exp %220 : vector<1x4xf32>
    %cst_166 = arith.constant 1.000000e+00 : f32
    %222 = vector.broadcast %cst_166 : f32 to vector<1x4xf32>
    %223 = arith.addf %222, %221 : vector<1x4xf32>
    %224 = arith.divf %222, %223 : vector<1x4xf32>
    %225 = arith.mulf %219, %224 : vector<1x4xf32>
    %226 = arith.truncf %225 : vector<1x4xf32> to vector<1x4xbf16>
    %c0_167 = arith.constant 0 : index
    %c0_168 = arith.constant 0 : index
    %227 = vector.load %arg17[%c0_167, %c0_168] : memref<4x96xbf16, #tpu.memory_space<vmem>>, vector<4x96xbf16>
    %cst_169 = arith.constant dense<0.000000e+00> : vector<1x96xf32>
    %228 = tpu.matmul %226, %227, %cst_169 {dimension_numbers = #tpu.dot_dimension_numbers<[1], [0], [0], [1], [0, 0, 1, 1], [], []>} : vector<1x4xbf16>, vector<4x96xbf16>, vector<1x96xf32> -> vector<1x96xf32>
    %c0_170 = arith.constant 0 : index
    %c0_171 = arith.constant 0 : index
    %229 = vector.load %arg18[%c0_170, %c0_171] : memref<1x96xf32, #tpu.memory_space<vmem>>, vector<1x96xf32>
    %230 = arith.addf %228, %229 : vector<1x96xf32>
    %231 = arith.negf %230 : vector<1x96xf32>
    %232 = math.exp %231 : vector<1x96xf32>
    %cst_172 = arith.constant 1.000000e+00 : f32
    %233 = vector.broadcast %cst_172 : f32 to vector<1x96xf32>
    %234 = arith.addf %233, %232 : vector<1x96xf32>
    %235 = arith.divf %233, %234 : vector<1x96xf32>
    %236 = vector.shape_cast %210 : vector<64x96xf32> to vector<1x64x96xf32>
    %237 = vector.shape_cast %235 : vector<1x96xf32> to vector<1x1x96xf32>
    %238 = vector.broadcast %237 : vector<1x1x96xf32> to vector<1x64x96xf32>
    %239 = arith.mulf %236, %238 : vector<1x64x96xf32>
    %240 = vector.shape_cast %239 : vector<1x64x96xf32> to vector<64x96xf32>
    %241 = arith.truncf %240 : vector<64x96xf32> to vector<64x96xbf16>
    %c0_173 = arith.constant 0 : index
    %c0_174 = arith.constant 0 : index
    %242 = vector.load %arg19[%c0_173, %c0_174] : memref<96x1280xbf16, #tpu.memory_space<vmem>>, vector<96x1280xbf16>
    %cst_175 = arith.constant dense<0.000000e+00> : vector<64x1280xf32>
    %243 = tpu.matmul %241, %242, %cst_175 {dimension_numbers = #tpu.dot_dimension_numbers<[1], [0], [0], [1], [0, 0, 1, 1], [], []>} : vector<64x96xbf16>, vector<96x1280xbf16>, vector<64x1280xf32> -> vector<64x1280xf32>
    %c0_176 = arith.constant 0 : index
    %c0_177 = arith.constant 0 : index
    %244 = vector.load %arg20[%c0_176, %c0_177] : memref<1x1280xf32, #tpu.memory_space<vmem>>, vector<1x1280xf32>
    %245 = vector.broadcast %244 : vector<1x1280xf32> to vector<64x1280xf32>
    %246 = arith.addf %243, %245 : vector<64x1280xf32>
    %247 = arith.negf %246 : vector<64x1280xf32>
    %248 = math.exp %247 : vector<64x1280xf32>
    %cst_178 = arith.constant 1.000000e+00 : f32
    %249 = vector.broadcast %cst_178 : f32 to vector<64x1280xf32>
    %250 = arith.addf %249, %248 : vector<64x1280xf32>
    %251 = arith.divf %249, %250 : vector<64x1280xf32>
    %252 = arith.mulf %246, %251 : vector<64x1280xf32>
    %253 = vector.shape_cast %252 : vector<64x1280xf32> to vector<1x64x1280xf32>
    %cst_179 = arith.constant dense<0.000000e+00> : vector<1x1280xf32>
    %254 = vector.multi_reduction <add>, %253, %cst_179 [1] : vector<1x64x1280xf32> to vector<1x1280xf32>
    %cst_180 = arith.constant 1.562500e-02 : f32
    %255 = vector.broadcast %cst_180 : f32 to vector<1x1280xf32>
    %256 = arith.mulf %254, %255 : vector<1x1280xf32>
    %257 = arith.truncf %256 : vector<1x1280xf32> to vector<1x1280xbf16>
    %c0_181 = arith.constant 0 : index
    %c0_182 = arith.constant 0 : index
    %258 = vector.load %arg21[%c0_181, %c0_182] : memref<1280x512xbf16, #tpu.memory_space<vmem>>, vector<1280x512xbf16>
    %cst_183 = arith.constant dense<0.000000e+00> : vector<1x512xf32>
    %259 = tpu.matmul %257, %258, %cst_183 {dimension_numbers = #tpu.dot_dimension_numbers<[1], [0], [0], [1], [0, 0, 1, 1], [], []>} : vector<1x1280xbf16>, vector<1280x512xbf16>, vector<1x512xf32> -> vector<1x512xf32>
    %c0_184 = arith.constant 0 : index
    %c0_185 = arith.constant 0 : index
    %260 = vector.load %arg22[%c0_184, %c0_185] : memref<1x512xf32, #tpu.memory_space<vmem>>, vector<1x512xf32>
    %261 = arith.addf %259, %260 : vector<1x512xf32>
    %262 = vector.shape_cast %261 : vector<1x512xf32> to vector<1x1x512xf32>
    %c0_186 = arith.constant 0 : index
    %c0_187 = arith.constant 0 : index
    %c0_188 = arith.constant 0 : index
    %263 = vector.load %arg23[%c0_186, %c0_187, %c0_188] : memref<1x1x512xf32, #tpu.memory_space<vmem>>, vector<1x1x512xf32>
    tpu.vector_store %arg23[%c0_186, %c0_187, %c0_188], %262 {strides = array<i32>} : memref<1x1x512xf32, #tpu.memory_space<vmem>>, vector<1x1x512xf32>,
    return
  }
  func.func @transform_0(%arg0: i32) -> (i32, i32, i32) {
    %c0_i32 = arith.constant 0 : i32
    %c0_i32_0 = arith.constant 0 : i32
    %c0_i32_1 = arith.constant 0 : i32
    return %arg0, %c0_i32, %c0_i32_0 : i32, i32, i32
  }
  func.func @transform_1(%arg0: i32) -> (i32, i32) {
    %c0_i32 = arith.constant 0 : i32
    %c0_i32_0 = arith.constant 0 : i32
    %c0_i32_1 = arith.constant 0 : i32
    return %c0_i32, %c0_i32_0 : i32, i32
  }
  func.func @transform_2(%arg0: i32) -> (i32, i32) {
    %c0_i32 = arith.constant 0 : i32
    %c0_i32_0 = arith.constant 0 : i32
    %c0_i32_1 = arith.constant 0 : i32
    return %c0_i32, %c0_i32_0 : i32, i32
  }
  func.func @transform_3(%arg0: i32) -> (i32, i32) {
    %c0_i32 = arith.constant 0 : i32
    %c0_i32_0 = arith.constant 0 : i32
    %c0_i32_1 = arith.constant 0 : i32
    return %c0_i32, %c0_i32_0 : i32, i32
  }
  func.func @transform_4(%arg0: i32) -> (i32, i32) {
    %c0_i32 = arith.constant 0 : i32
    %c0_i32_0 = arith.constant 0 : i32
    %c0_i32_1 = arith.constant 0 : i32
    return %c0_i32, %c0_i32_0 : i32, i32
  }
  func.func @transform_5(%arg0: i32) -> (i32, i32) {
    %c0_i32 = arith.constant 0 : i32
    %c0_i32_0 = arith.constant 0 : i32
    %c0_i32_1 = arith.constant 0 : i32
    return %c0_i32, %c0_i32_0 : i32, i32
  }
  func.func @transform_6(%arg0: i32) -> (i32, i32) {
    %c0_i32 = arith.constant 0 : i32
    %c0_i32_0 = arith.constant 0 : i32
    %c0_i32_1 = arith.constant 0 : i32
    return %c0_i32, %c0_i32_0 : i32, i32
  }
  func.func @transform_7(%arg0: i32) -> (i32, i32) {
    %c0_i32 = arith.constant 0 : i32
    %c0_i32_0 = arith.constant 0 : i32
    %c0_i32_1 = arith.constant 0 : i32
    return %c0_i32, %c0_i32_0 : i32, i32
  }
  func.func @transform_8(%arg0: i32) -> (i32, i32) {
    %c0_i32 = arith.constant 0 : i32
    %c0_i32_0 = arith.constant 0 : i32
    %c0_i32_1 = arith.constant 0 : i32
    return %c0_i32, %c0_i32_0 : i32, i32
  }
  func.func @transform_9(%arg0: i32) -> (i32, i32) {
    %c0_i32 = arith.constant 0 : i32
    %c0_i32_0 = arith.constant 0 : i32
    %c0_i32_1 = arith.constant 0 : i32
    return %c0_i32, %c0_i32_0 : i32, i32
  }
  func.func @transform_10(%arg0: i32) -> (i32, i32) {
    %c0_i32 = arith.constant 0 : i32
    %c0_i32_0 = arith.constant 0 : i32
    %c0_i32_1 = arith.constant 0 : i32
    return %c0_i32, %c0_i32_0 : i32, i32
  }
  func.func @transform_11(%arg0: i32) -> (i32, i32) {
    %c0_i32 = arith.constant 0 : i32
    %c0_i32_0 = arith.constant 0 : i32
    %c0_i32_1 = arith.constant 0 : i32
    return %c0_i32, %c0_i32_0 : i32, i32
  }
  func.func @transform_12(%arg0: i32) -> (i32, i32) {
    %c0_i32 = arith.constant 0 : i32
    %c0_i32_0 = arith.constant 0 : i32
    %c0_i32_1 = arith.constant 0 : i32
    return %c0_i32, %c0_i32_0 : i32, i32
  }
  func.func @transform_13(%arg0: i32) -> (i32, i32) {
    %c0_i32 = arith.constant 0 : i32
    %c0_i32_0 = arith.constant 0 : i32
    %c0_i32_1 = arith.constant 0 : i32
    return %c0_i32, %c0_i32_0 : i32, i32
  }
  func.func @transform_14(%arg0: i32) -> (i32, i32) {
    %c0_i32 = arith.constant 0 : i32
    %c0_i32_0 = arith.constant 0 : i32
    %c0_i32_1 = arith.constant 0 : i32
    return %c0_i32, %c0_i32_0 : i32, i32
  }
  func.func @transform_15(%arg0: i32) -> (i32, i32) {
    %c0_i32 = arith.constant 0 : i32
    %c0_i32_0 = arith.constant 0 : i32
    %c0_i32_1 = arith.constant 0 : i32
    return %c0_i32, %c0_i32_0 : i32, i32
  }
  func.func @transform_16(%arg0: i32) -> (i32, i32) {
    %c0_i32 = arith.constant 0 : i32
    %c0_i32_0 = arith.constant 0 : i32
    %c0_i32_1 = arith.constant 0 : i32
    return %c0_i32, %c0_i32_0 : i32, i32
  }
  func.func @transform_17(%arg0: i32) -> (i32, i32) {
    %c0_i32 = arith.constant 0 : i32
    %c0_i32_0 = arith.constant 0 : i32
    %c0_i32_1 = arith.constant 0 : i32
    return %c0_i32, %c0_i32_0 : i32, i32
  }
  func.func @transform_18(%arg0: i32) -> (i32, i32) {
    %c0_i32 = arith.constant 0 : i32
    %c0_i32_0 = arith.constant 0 : i32
    %c0_i32_1 = arith.constant 0 : i32
    return %c0_i32, %c0_i32_0 : i32, i32
  }
  func.func @transform_19(%arg0: i32) -> (i32, i32) {
    %c0_i32 = arith.constant 0 : i32
    %c0_i32_0 = arith.constant 0 : i32
    %c0_i32_1 = arith.constant 0 : i32
    return %c0_i32, %c0_i32_0 : i32, i32
  }
  func.func @transform_20(%arg0: i32) -> (i32, i32) {
    %c0_i32 = arith.constant 0 : i32
    %c0_i32_0 = arith.constant 0 : i32
    %c0_i32_1 = arith.constant 0 : i32
    return %c0_i32, %c0_i32_0 : i32, i32
  }
  func.func @transform_21(%arg0: i32) -> (i32, i32) {
    %c0_i32 = arith.constant 0 : i32
    %c0_i32_0 = arith.constant 0 : i32
    %c0_i32_1 = arith.constant 0 : i32
    return %c0_i32, %c0_i32_0 : i32, i32
  }
  func.func @transform_22(%arg0: i32) -> (i32, i32, i32) {
    %c0_i32 = arith.constant 0 : i32
    %c0_i32_0 = arith.constant 0 : i32
    %c0_i32_1 = arith.constant 0 : i32
    return %arg0, %c0_i32, %c0_i32_0 : i32, i32, i32
  }
}

</mosaic_0001>

<llo_original>
// kernel: effnetbx_v2_forward.1
$region0: #{effnetbx_v2_forward.1}
  #allocation0 [shape = 'u32[]', space=smem, size = 0x4, offset = 0x4, fixed_abs, tag = 'smem constant byte address 0x4 - core index']
  #allocation1 [shape = 'u32[144,128]{1,0:T(1,128)}', space=vmem, size = 0x12000, scoped, tag = 'internal scratch']
  #allocation2 [shape = 'f32[1,18,24,32]{3,2,1,0:T(8,128)}', space=vmem, size = 0x36000, scoped, tag = 'scratch operand']
  #allocation3 [shape = 'f32[1,18,24,96]{3,2,1,0:T(8,128)}', space=vmem, size = 0x36000, scoped, tag = 'scratch operand']
  #allocation4 [shape = 'f32[64,96]{1,0:T(8,128)}', space=vmem, size = 0x8000, scoped, tag = 'scratch operand']
  %s0 = inlined_call_operand.vmem [shape: bf16[2,256,32], index: 0, kind: input, shape index: {}]
  %s1 = inlined_call_operand.vmem [shape: bf16[64,256], index: 1, kind: input, shape index: {}]
  %s2 = inlined_call_operand.vmem [shape: bf16[32,32], index: 2, kind: input, shape index: {}]
  %s3 = inlined_call_operand.vmem [shape: f32[1,32], index: 3, kind: input, shape index: {}]
  %s4 = inlined_call_operand.vmem [shape: f32[9,32], index: 4, kind: input, shape index: {}]
  %s5 = inlined_call_operand.vmem [shape: f32[1,32], index: 5, kind: input, shape index: {}]
  %s6 = inlined_call_operand.vmem [shape: bf16[32,8], index: 6, kind: input, shape index: {}]
  %s7 = inlined_call_operand.vmem [shape: f32[1,8], index: 7, kind: input, shape index: {}]
  %s8 = inlined_call_operand.vmem [shape: bf16[8,32], index: 8, kind: input, shape index: {}]
  %s9 = inlined_call_operand.vmem [shape: f32[1,32], index: 9, kind: input, shape index: {}]
  %s10 = inlined_call_operand.vmem [shape: bf16[32,96], index: 10, kind: input, shape index: {}]
  %s11 = inlined_call_operand.vmem [shape: f32[1,96], index: 11, kind: input, shape index: {}]
  %s12 = inlined_call_operand.vmem [shape: f32[9,96], index: 12, kind: input, shape index: {}]
  %s13 = inlined_call_operand.vmem [shape: f32[1,96], index: 13, kind: input, shape index: {}]
  %s14 = inlined_call_operand.vmem [shape: bf16[96,4], index: 14, kind: input, shape index: {}]
  %s15 = inlined_call_operand.vmem [shape: f32[1,4], index: 15, kind: input, shape index: {}]
  %s16 = inlined_call_operand.vmem [shape: bf16[4,96], index: 16, kind: input, shape index: {}]
  %s17 = inlined_call_operand.vmem [shape: f32[1,96], index: 17, kind: input, shape index: {}]
  %s18 = inlined_call_operand.vmem [shape: bf16[96,1280], index: 18, kind: input, shape index: {}]
  %s19 = inlined_call_operand.vmem [shape: f32[1,1280], index: 19, kind: input, shape index: {}]
  %s20 = inlined_call_operand.vmem [shape: bf16[1280,512], index: 20, kind: input, shape index: {}]
  %s21 = inlined_call_operand.vmem [shape: f32[1,512], index: 21, kind: input, shape index: {}]
  %s22 = inlined_call_operand.vmem [shape: f32[2,1,512], index: 22, kind: output, shape index: {}]
  %s23 = sld [smem:[#allocation0]]
  $region121: #{effnetbx_v2_forward.1} parent=0
    _
  %s25 = ssub.s32 1, %s23
  %s26 = scalar_select 0, %s25, %s23
  loop: start=0, step=1, limit=4
  $region2: #{effnetbx_v2_forward.1} parent=0 // loop_pre_header
    _
  $region3: #{effnetbx_v2_forward.1} parent=0 // loop_header
    %s28 = sphi 0, %s32
    %p29 = scmp.ge.s32.totalorder %s28, 4
    %s38 = sphi 0, %s40
    %s41 = sphi 0, %s38
    %s42 = sphi 0, %s41
    %s58 = sphi 0, %s42
    %s62 = sphi 0, %s62
    %s64 = sphi 0, %s62
    %s65 = sphi 0, %s64
    %s79 = sphi 0, %s65
    %s83 = sphi 0, %s83
    %s85 = sphi 0, %s83
    %s86 = sphi 0, %s85
    %s100 = sphi 0, %s86
    %s104 = sphi 0, %s104
    %s106 = sphi 0, %s104
    %s107 = sphi 0, %s106
    %s121 = sphi 0, %s107
    %s125 = sphi 0, %s125
    %s127 = sphi 0, %s125
    %s128 = sphi 0, %s127
    %s142 = sphi 0, %s128
    %s146 = sphi 0, %s146
    %s148 = sphi 0, %s146
    %s149 = sphi 0, %s148
    %s163 = sphi 0, %s149
    %s167 = sphi 0, %s167
    %s169 = sphi 0, %s167
    %s170 = sphi 0, %s169
    %s184 = sphi 0, %s170
    %s188 = sphi 0, %s188
    %s190 = sphi 0, %s188
    %s191 = sphi 0, %s190
    %s205 = sphi 0, %s191
    %s209 = sphi 0, %s209
    %s211 = sphi 0, %s209
    %s212 = sphi 0, %s211
    %s226 = sphi 0, %s212
    %s230 = sphi 0, %s230
    %s232 = sphi 0, %s230
    %s233 = sphi 0, %s232
    %s247 = sphi 0, %s233
    %s251 = sphi 0, %s251
    %s253 = sphi 0, %s251
    %s254 = sphi 0, %s253
    %s268 = sphi 0, %s254
    %s272 = sphi 0, %s272
    %s274 = sphi 0, %s272
    %s275 = sphi 0, %s274
    %s289 = sphi 0, %s275
    %s293 = sphi 0, %s293
    %s295 = sphi 0, %s293
    %s296 = sphi 0, %s295
    %s310 = sphi 0, %s296
    %s314 = sphi 0, %s314
    %s316 = sphi 0, %s314
    %s317 = sphi 0, %s316
    %s331 = sphi 0, %s317
    %s335 = sphi 0, %s335
    %s337 = sphi 0, %s335
    %s338 = sphi 0, %s337
    %s352 = sphi 0, %s338
    %s356 = sphi 0, %s356
    %s358 = sphi 0, %s356
    %s359 = sphi 0, %s358
    %s373 = sphi 0, %s359
    %s377 = sphi 0, %s377
    %s379 = sphi 0, %s377
    %s380 = sphi 0, %s379
    %s394 = sphi 0, %s380
    %s398 = sphi 0, %s398
    %s400 = sphi 0, %s398
    %s401 = sphi 0, %s400
    %s415 = sphi 0, %s401
    %s419 = sphi 0, %s419
    %s421 = sphi 0, %s419
    %s422 = sphi 0, %s421
    %s436 = sphi 0, %s422
    %s440 = sphi 0, %s440
    %s442 = sphi 0, %s440
    %s443 = sphi 0, %s442
    %s457 = sphi 0, %s443
    %s461 = sphi 0, %s461
    %s463 = sphi 0, %s461
    %s464 = sphi 0, %s463
    %s478 = sphi 0, %s464
    %s482 = sphi 0, %s482
    %s484 = sphi 0, %s482
    %s485 = sphi 0, %s484
    %s499 = sphi 0, %s485
    %s505 = sphi 0, %s507
    %s508 = sphi 0, %s505
    %s509 = sphi 0, %s508
    %s525 = sphi 0, %s509
  $region4: #{effnetbx_v2_forward.1} parent=0 // loop_header_branch
    %31 = sbr.rel (%p29) target = $region8
  $region5: #{effnetbx_v2_forward.1} parent=0 // loop_body
    %s33 = ssub.s32 %s28, 1
    %s34 = ssub.s32 %s28, 2
    %s35 = sadd.s32 %s28, 1
    %s36 = ssub.s32 %s28, %s35
    %p37 = scmp.eq.s32.totalorder %s36, 0
    %s39 = sadd.s32 %s38, 1
    %s40 = scalar_select %p37, %s38, %s39
    %p43 = pneg %p37
    %p44 = scmp.eq.s32.totalorder %s28, 1
    %p45 = por %p43, %p44
    %p46 = scmp.ne.s32.totalorder %s38, %s41
    %p47 = scmp.eq.s32.totalorder %s28, 0
    %p48 = por %p46, %p47
    %p49 = scmp.ne.s32.totalorder %s38, %s41
    %p50 = scmp.eq.s32.totalorder %s33, 1
    %p51 = por %p49, %p50
    %p52 = scmp.ne.s32.totalorder %s41, %s42
    %p53 = scmp.eq.s32.totalorder %s33, 0
    %p54 = por %p52, %p53
    %p55 = scmp.ne.s32.totalorder %s41, %s42
    %p56 = scmp.eq.s32.totalorder %s34, 1
    %p57 = por %p55, %p56
    %p59 = scmp.ne.s32.totalorder %s42, %s58
    %p60 = scmp.eq.s32.totalorder %s34, 0
    %p61 = por %p59, %p60
    %s63 = sadd.s32 %s62, 1
    %p66 = scmp.eq.s32.totalorder %s28, 1
    %p67 = scmp.ne.s32.totalorder %s62, %s64
    %p68 = scmp.eq.s32.totalorder %s28, 0
    %p69 = por %p67, %p68
    %p70 = scmp.ne.s32.totalorder %s62, %s64
    %p71 = scmp.eq.s32.totalorder %s33, 1
    %p72 = por %p70, %p71
    %p73 = scmp.ne.s32.totalorder %s64, %s65
    %p74 = scmp.eq.s32.totalorder %s33, 0
    %p75 = por %p73, %p74
    %p76 = scmp.ne.s32.totalorder %s64, %s65
    %p77 = scmp.eq.s32.totalorder %s34, 1
    %p78 = por %p76, %p77
    %p80 = scmp.ne.s32.totalorder %s65, %s79
    %p81 = scmp.eq.s32.totalorder %s34, 0
    %p82 = por %p80, %p81
    %s84 = sadd.s32 %s83, 1
    %p87 = scmp.eq.s32.totalorder %s28, 1
    %p88 = scmp.ne.s32.totalorder %s83, %s85
    %p89 = scmp.eq.s32.totalorder %s28, 0
    %p90 = por %p88, %p89
    %p91 = scmp.ne.s32.totalorder %s83, %s85
    %p92 = scmp.eq.s32.totalorder %s33, 1
    %p93 = por %p91, %p92
    %p94 = scmp.ne.s32.totalorder %s85, %s86
    %p95 = scmp.eq.s32.totalorder %s33, 0
    %p96 = por %p94, %p95
    %p97 = scmp.ne.s32.totalorder %s85, %s86
    %p98 = scmp.eq.s32.totalorder %s34, 1
    %p99 = por %p97, %p98
    %p101 = scmp.ne.s32.totalorder %s86, %s100
    %p102 = scmp.eq.s32.totalorder %s34, 0
    %p103 = por %p101, %p102
    %s105 = sadd.s32 %s104, 1
    %p108 = scmp.eq.s32.totalorder %s28, 1
    %p109 = scmp.ne.s32.totalorder %s104, %s106
    %p110 = scmp.eq.s32.totalorder %s28, 0
    %p111 = por %p109, %p110
    %p112 = scmp.ne.s32.totalorder %s104, %s106
    %p113 = scmp.eq.s32.totalorder %s33, 1
    %p114 = por %p112, %p113
    %p115 = scmp.ne.s32.totalorder %s106, %s107
    %p116 = scmp.eq.s32.totalorder %s33, 0
    %p117 = por %p115, %p116
    %p118 = scmp.ne.s32.totalorder %s106, %s107
    %p119 = scmp.eq.s32.totalorder %s34, 1
    %p120 = por %p118, %p119
    %p122 = scmp.ne.s32.totalorder %s107, %s121
    %p123 = scmp.eq.s32.totalorder %s34, 0
    %p124 = por %p122, %p123
    %s126 = sadd.s32 %s125, 1
    %p129 = scmp.eq.s32.totalorder %s28, 1
    %p130 = scmp.ne.s32.totalorder %s125, %s127
    %p131 = scmp.eq.s32.totalorder %s28, 0
    %p132 = por %p130, %p131
    %p133 = scmp.ne.s32.totalorder %s125, %s127
    %p134 = scmp.eq.s32.totalorder %s33, 1
    %p135 = por %p133, %p134
    %p136 = scmp.ne.s32.totalorder %s127, %s128
    %p137 = scmp.eq.s32.totalorder %s33, 0
    %p138 = por %p136, %p137
    %p139 = scmp.ne.s32.totalorder %s127, %s128
    %p140 = scmp.eq.s32.totalorder %s34, 1
    %p141 = por %p139, %p140
    %p143 = scmp.ne.s32.totalorder %s128, %s142
    %p144 = scmp.eq.s32.totalorder %s34, 0
    %p145 = por %p143, %p144
    %s147 = sadd.s32 %s146, 1
    %p150 = scmp.eq.s32.totalorder %s28, 1
    %p151 = scmp.ne.s32.totalorder %s146, %s148
    %p152 = scmp.eq.s32.totalorder %s28, 0
    %p153 = por %p151, %p152
    %p154 = scmp.ne.s32.totalorder %s146, %s148
    %p155 = scmp.eq.s32.totalorder %s33, 1
    %p156 = por %p154, %p155
    %p157 = scmp.ne.s32.totalorder %s148, %s149
    %p158 = scmp.eq.s32.totalorder %s33, 0
    %p159 = por %p157, %p158
    %p160 = scmp.ne.s32.totalorder %s148, %s149
    %p161 = scmp.eq.s32.totalorder %s34, 1
    %p162 = por %p160, %p161
    %p164 = scmp.ne.s32.totalorder %s149, %s163
    %p165 = scmp.eq.s32.totalorder %s34, 0
    %p166 = por %p164, %p165
    %s168 = sadd.s32 %s167, 1
    %p171 = scmp.eq.s32.totalorder %s28, 1
    %p172 = scmp.ne.s32.totalorder %s167, %s169
    %p173 = scmp.eq.s32.totalorder %s28, 0
    %p174 = por %p172, %p173
    %p175 = scmp.ne.s32.totalorder %s167, %s169
    %p176 = scmp.eq.s32.totalorder %s33, 1
    %p177 = por %p175, %p176
    %p178 = scmp.ne.s32.totalorder %s169, %s170
    %p179 = scmp.eq.s32.totalorder %s33, 0
    %p180 = por %p178, %p179
    %p181 = scmp.ne.s32.totalorder %s169, %s170
    %p182 = scmp.eq.s32.totalorder %s34, 1
    %p183 = por %p181, %p182
    %p185 = scmp.ne.s32.totalorder %s170, %s184
    %p186 = scmp.eq.s32.totalorder %s34, 0
    %p187 = por %p185, %p186
    %s189 = sadd.s32 %s188, 1
    %p192 = scmp.eq.s32.totalorder %s28, 1
    %p193 = scmp.ne.s32.totalorder %s188, %s190
    %p194 = scmp.eq.s32.totalorder %s28, 0
    %p195 = por %p193, %p194
    %p196 = scmp.ne.s32.totalorder %s188, %s190
    %p197 = scmp.eq.s32.totalorder %s33, 1
    %p198 = por %p196, %p197
    %p199 = scmp.ne.s32.totalorder %s190, %s191
    %p200 = scmp.eq.s32.totalorder %s33, 0
    %p201 = por %p199, %p200
    %p202 = scmp.ne.s32.totalorder %s190, %s191
    %p203 = scmp.eq.s32.totalorder %s34, 1
    %p204 = por %p202, %p203
    %p206 = scmp.ne.s32.totalorder %s191, %s205
    %p207 = scmp.eq.s32.totalorder %s34, 0
    %p208 = por %p206, %p207
    %s210 = sadd.s32 %s209, 1
    %p213 = scmp.eq.s32.totalorder %s28, 1
    %p214 = scmp.ne.s32.totalorder %s209, %s211
    %p215 = scmp.eq.s32.totalorder %s28, 0
    %p216 = por %p214, %p215
    %p217 = scmp.ne.s32.totalorder %s209, %s211
    %p218 = scmp.eq.s32.totalorder %s33, 1
    %p219 = por %p217, %p218
    %p220 = scmp.ne.s32.totalorder %s211, %s212
    %p221 = scmp.eq.s32.totalorder %s33, 0
    %p222 = por %p220, %p221
    %p223 = scmp.ne.s32.totalorder %s211, %s212
    %p224 = scmp.eq.s32.totalorder %s34, 1
    %p225 = por %p223, %p224
    %p227 = scmp.ne.s32.totalorder %s212, %s226
    %p228 = scmp.eq.s32.totalorder %s34, 0
    %p229 = por %p227, %p228
    %s231 = sadd.s32 %s230, 1
    %p234 = scmp.eq.s32.totalorder %s28, 1
    %p235 = scmp.ne.s32.totalorder %s230, %s232
    %p236 = scmp.eq.s32.totalorder %s28, 0
    %p237 = por %p235, %p236
    %p238 = scmp.ne.s32.totalorder %s230, %s232
    %p239 = scmp.eq.s32.totalorder %s33, 1
    %p240 = por %p238, %p239
    %p241 = scmp.ne.s32.totalorder %s232, %s233
    %p242 = scmp.eq.s32.totalorder %s33, 0
    %p243 = por %p241, %p242
    %p244 = scmp.ne.s32.totalorder %s232, %s233
    %p245 = scmp.eq.s32.totalorder %s34, 1
    %p246 = por %p244, %p245
    %p248 = scmp.ne.s32.totalorder %s233, %s247
    %p249 = scmp.eq.s32.totalorder %s34, 0
    %p250 = por %p248, %p249
    %s252 = sadd.s32 %s251, 1
    %p255 = scmp.eq.s32.totalorder %s28, 1
    %p256 = scmp.ne.s32.totalorder %s251, %s253
    %p257 = scmp.eq.s32.totalorder %s28, 0
    %p258 = por %p256, %p257
    %p259 = scmp.ne.s32.totalorder %s251, %s253
    %p260 = scmp.eq.s32.totalorder %s33, 1
    %p261 = por %p259, %p260
    %p262 = scmp.ne.s32.totalorder %s253, %s254
    %p263 = scmp.eq.s32.totalorder %s33, 0
    %p264 = por %p262, %p263
    %p265 = scmp.ne.s32.totalorder %s253, %s254
    %p266 = scmp.eq.s32.totalorder %s34, 1
    %p267 = por %p265, %p266
    %p269 = scmp.ne.s32.totalorder %s254, %s268
    %p270 = scmp.eq.s32.totalorder %s34, 0
    %p271 = por %p269, %p270
    %s273 = sadd.s32 %s272, 1
    %p276 = scmp.eq.s32.totalorder %s28, 1
    %p277 = scmp.ne.s32.totalorder %s272, %s274
    %p278 = scmp.eq.s32.totalorder %s28, 0
    %p279 = por %p277, %p278
    %p280 = scmp.ne.s32.totalorder %s272, %s274
    %p281 = scmp.eq.s32.totalorder %s33, 1
    %p282 = por %p280, %p281
    %p283 = scmp.ne.s32.totalorder %s274, %s275
    %p284 = scmp.eq.s32.totalorder %s33, 0
    %p285 = por %p283, %p284
    %p286 = scmp.ne.s32.totalorder %s274, %s275
    %p287 = scmp.eq.s32.totalorder %s34, 1
    %p288 = por %p286, %p287
    %p290 = scmp.ne.s32.totalorder %s275, %s289
    %p291 = scmp.eq.s32.totalorder %s34, 0
    %p292 = por %p290, %p291
    %s294 = sadd.s32 %s293, 1
    %p297 = scmp.eq.s32.totalorder %s28, 1
    %p298 = scmp.ne.s32.totalorder %s293, %s295
    %p299 = scmp.eq.s32.totalorder %s28, 0
    %p300 = por %p298, %p299
    %p301 = scmp.ne.s32.totalorder %s293, %s295
    %p302 = scmp.eq.s32.totalorder %s33, 1
    %p303 = por %p301, %p302
    %p304 = scmp.ne.s32.totalorder %s295, %s296
    %p305 = scmp.eq.s32.totalorder %s33, 0
    %p306 = por %p304, %p305
    %p307 = scmp.ne.s32.totalorder %s295, %s296
    %p308 = scmp.eq.s32.totalorder %s34, 1
    %p309 = por %p307, %p308
    %p311 = scmp.ne.s32.totalorder %s296, %s310
    %p312 = scmp.eq.s32.totalorder %s34, 0
    %p313 = por %p311, %p312
    %s315 = sadd.s32 %s314, 1
    %p318 = scmp.eq.s32.totalorder %s28, 1
    %p319 = scmp.ne.s32.totalorder %s314, %s316
    %p320 = scmp.eq.s32.totalorder %s28, 0
    %p321 = por %p319, %p320
    %p322 = scmp.ne.s32.totalorder %s314, %s316
    %p323 = scmp.eq.s32.totalorder %s33, 1
    %p324 = por %p322, %p323
    %p325 = scmp.ne.s32.totalorder %s316, %s317
    %p326 = scmp.eq.s32.totalorder %s33, 0
    %p327 = por %p325, %p326
    %p328 = scmp.ne.s32.totalorder %s316, %s317
    %p329 = scmp.eq.s32.totalorder %s34, 1
    %p330 = por %p328, %p329
    %p332 = scmp.ne.s32.totalorder %s317, %s331
    %p333 = scmp.eq.s32.totalorder %s34, 0
    %p334 = por %p332, %p333
    %s336 = sadd.s32 %s335, 1
    %p339 = scmp.eq.s32.totalorder %s28, 1
    %p340 = scmp.ne.s32.totalorder %s335, %s337
    %p341 = scmp.eq.s32.totalorder %s28, 0
    %p342 = por %p340, %p341
    %p343 = scmp.ne.s32.totalorder %s335, %s337
    %p344 = scmp.eq.s32.totalorder %s33, 1
    %p345 = por %p343, %p344
    %p346 = scmp.ne.s32.totalorder %s337, %s338
    %p347 = scmp.eq.s32.totalorder %s33, 0
    %p348 = por %p346, %p347
    %p349 = scmp.ne.s32.totalorder %s337, %s338
    %p350 = scmp.eq.s32.totalorder %s34, 1
    %p351 = por %p349, %p350
    %p353 = scmp.ne.s32.totalorder %s338, %s352
    %p354 = scmp.eq.s32.totalorder %s34, 0
    %p355 = por %p353, %p354
    %s357 = sadd.s32 %s356, 1
    %p360 = scmp.eq.s32.totalorder %s28, 1
    %p361 = scmp.ne.s32.totalorder %s356, %s358
    %p362 = scmp.eq.s32.totalorder %s28, 0
    %p363 = por %p361, %p362
    %p364 = scmp.ne.s32.totalorder %s356, %s358
    %p365 = scmp.eq.s32.totalorder %s33, 1
    %p366 = por %p364, %p365
    %p367 = scmp.ne.s32.totalorder %s358, %s359
    %p368 = scmp.eq.s32.totalorder %s33, 0
    %p369 = por %p367, %p368
    %p370 = scmp.ne.s32.totalorder %s358, %s359
    %p371 = scmp.eq.s32.totalorder %s34, 1
    %p372 = por %p370, %p371
    %p374 = scmp.ne.s32.totalorder %s359, %s373
    %p375 = scmp.eq.s32.totalorder %s34, 0
    %p376 = por %p374, %p375
    %s378 = sadd.s32 %s377, 1
    %p381 = scmp.eq.s32.totalorder %s28, 1
    %p382 = scmp.ne.s32.totalorder %s377, %s379
    %p383 = scmp.eq.s32.totalorder %s28, 0
    %p384 = por %p382, %p383
    %p385 = scmp.ne.s32.totalorder %s377, %s379
    %p386 = scmp.eq.s32.totalorder %s33, 1
    %p387 = por %p385, %p386
    %p388 = scmp.ne.s32.totalorder %s379, %s380
    %p389 = scmp.eq.s32.totalorder %s33, 0
    %p390 = por %p388, %p389
    %p391 = scmp.ne.s32.totalorder %s379, %s380
    %p392 = scmp.eq.s32.totalorder %s34, 1
    %p393 = por %p391, %p392
    %p395 = scmp.ne.s32.totalorder %s380, %s394
    %p396 = scmp.eq.s32.totalorder %s34, 0
    %p397 = por %p395, %p396
    %s399 = sadd.s32 %s398, 1
    %p402 = scmp.eq.s32.totalorder %s28, 1
    %p403 = scmp.ne.s32.totalorder %s398, %s400
    %p404 = scmp.eq.s32.totalorder %s28, 0
    %p405 = por %p403, %p404
    %p406 = scmp.ne.s32.totalorder %s398, %s400
    %p407 = scmp.eq.s32.totalorder %s33, 1
    %p408 = por %p406, %p407
    %p409 = scmp.ne.s32.totalorder %s400, %s401
    %p410 = scmp.eq.s32.totalorder %s33, 0
    %p411 = por %p409, %p410
    %p412 = scmp.ne.s32.totalorder %s400, %s401
    %p413 = scmp.eq.s32.totalorder %s34, 1
    %p414 = por %p412, %p413
    %p416 = scmp.ne.s32.totalorder %s401, %s415
    %p417 = scmp.eq.s32.totalorder %s34, 0
    %p418 = por %p416, %p417
    %s420 = sadd.s32 %s419, 1
    %p423 = scmp.eq.s32.totalorder %s28, 1
    %p424 = scmp.ne.s32.totalorder %s419, %s421
    %p425 = scmp.eq.s32.totalorder %s28, 0
    %p426 = por %p424, %p425
    %p427 = scmp.ne.s32.totalorder %s419, %s421
    %p428 = scmp.eq.s32.totalorder %s33, 1
    %p429 = por %p427, %p428
    %p430 = scmp.ne.s32.totalorder %s421, %s422
    %p431 = scmp.eq.s32.totalorder %s33, 0
    %p432 = por %p430, %p431
    %p433 = scmp.ne.s32.totalorder %s421, %s422
    %p434 = scmp.eq.s32.totalorder %s34, 1
    %p435 = por %p433, %p434
    %p437 = scmp.ne.s32.totalorder %s422, %s436
    %p438 = scmp.eq.s32.totalorder %s34, 0
    %p439 = por %p437, %p438
    %s441 = sadd.s32 %s440, 1
    %p444 = scmp.eq.s32.totalorder %s28, 1
    %p445 = scmp.ne.s32.totalorder %s440, %s442
    %p446 = scmp.eq.s32.totalorder %s28, 0
    %p447 = por %p445, %p446
    %p448 = scmp.ne.s32.totalorder %s440, %s442
    %p449 = scmp.eq.s32.totalorder %s33, 1
    %p450 = por %p448, %p449
    %p451 = scmp.ne.s32.totalorder %s442, %s443
    %p452 = scmp.eq.s32.totalorder %s33, 0
    %p453 = por %p451, %p452
    %p454 = scmp.ne.s32.totalorder %s442, %s443
    %p455 = scmp.eq.s32.totalorder %s34, 1
    %p456 = por %p454, %p455
    %p458 = scmp.ne.s32.totalorder %s443, %s457
    %p459 = scmp.eq.s32.totalorder %s34, 0
    %p460 = por %p458, %p459
    %s462 = sadd.s32 %s461, 1
    %p465 = scmp.eq.s32.totalorder %s28, 1
    %p466 = scmp.ne.s32.totalorder %s461, %s463
    %p467 = scmp.eq.s32.totalorder %s28, 0
    %p468 = por %p466, %p467
    %p469 = scmp.ne.s32.totalorder %s461, %s463
    %p470 = scmp.eq.s32.totalorder %s33, 1
    %p471 = por %p469, %p470
    %p472 = scmp.ne.s32.totalorder %s463, %s464
    %p473 = scmp.eq.s32.totalorder %s33, 0
    %p474 = por %p472, %p473
    %p475 = scmp.ne.s32.totalorder %s463, %s464
    %p476 = scmp.eq.s32.totalorder %s34, 1
    %p477 = por %p475, %p476
    %p479 = scmp.ne.s32.totalorder %s464, %s478
    %p480 = scmp.eq.s32.totalorder %s34, 0
    %p481 = por %p479, %p480
    %s483 = sadd.s32 %s482, 1
    %p486 = scmp.eq.s32.totalorder %s28, 1
    %p487 = scmp.ne.s32.totalorder %s482, %s484
    %p488 = scmp.eq.s32.totalorder %s28, 0
    %p489 = por %p487, %p488
    %p490 = scmp.ne.s32.totalorder %s482, %s484
    %p491 = scmp.eq.s32.totalorder %s33, 1
    %p492 = por %p490, %p491
    %p493 = scmp.ne.s32.totalorder %s484, %s485
    %p494 = scmp.eq.s32.totalorder %s33, 0
    %p495 = por %p493, %p494
    %p496 = scmp.ne.s32.totalorder %s484, %s485
    %p497 = scmp.eq.s32.totalorder %s34, 1
    %p498 = por %p496, %p497
    %p500 = scmp.ne.s32.totalorder %s485, %s499
    %p501 = scmp.eq.s32.totalorder %s34, 0
    %p502 = por %p500, %p501
    %s503 = ssub.s32 %s28, %s35
    %p504 = scmp.eq.s32.totalorder %s503, 0
    %s506 = sadd.s32 %s505, 1
    %s507 = scalar_select %p504, %s505, %s506
    %p510 = pneg %p504
    %p511 = scmp.eq.s32.totalorder %s28, 1
    %p512 = por %p510, %p511
    %p513 = scmp.ne.s32.totalorder %s505, %s508
    %p514 = scmp.eq.s32.totalorder %s28, 0
    %p515 = por %p513, %p514
    %p516 = scmp.ne.s32.totalorder %s505, %s508
    %p517 = scmp.eq.s32.totalorder %s33, 1
    %p518 = por %p516, %p517
    %p519 = scmp.ne.s32.totalorder %s508, %s509
    %p520 = scmp.eq.s32.totalorder %s33, 0
    %p521 = por %p519, %p520
    %p522 = scmp.ne.s32.totalorder %s508, %s509
    %p523 = scmp.eq.s32.totalorder %s34, 1
    %p524 = por %p522, %p523
    %p526 = scmp.ne.s32.totalorder %s509, %s525
    %p527 = scmp.eq.s32.totalorder %s34, 0
    %p528 = por %p526, %p527
    %p529 = scmp.le.s32.totalorder 1, %s28
    %p530 = scmp.lt.s32.totalorder %s28, 3
    %p531 = pnand %p529, %p530
    %p532 = pneg %p531
    // Predicated region
    $region9: #{effnetbx_v2_forward.1} parent=5 // pred_check
      _
    $region10: #{effnetbx_v2_forward.1} parent=5 // pred_check_branch
      %534 = sbr.rel (%p531) target = $region12
    $region11: #{effnetbx_v2_forward.1} parent=5 // pred_region
      %s535 = ssub.s32 %s28, 1
      // Predicated region
      $region13: #{effnetbx_v2_forward.1} parent=11 // pred_check
        %p536 = pneg %p75
      $region14: #{effnetbx_v2_forward.1} parent=11 // pred_check_branch
        %538 = sbr.rel (%p536) target = $region16
      $region15: #{effnetbx_v2_forward.1} parent=11 // pred_region
        _
      $region16: #{effnetbx_v2_forward.1} parent=11 // pred_fallthru
        _
      // Predicated region
      $region17: #{effnetbx_v2_forward.1} parent=11 // pred_check
        %p539 = pneg %p96
      $region18: #{effnetbx_v2_forward.1} parent=11 // pred_check_branch
        %541 = sbr.rel (%p539) target = $region20
      $region19: #{effnetbx_v2_forward.1} parent=11 // pred_region
        _
      $region20: #{effnetbx_v2_forward.1} parent=11 // pred_fallthru
        _
      // Predicated region
      $region21: #{effnetbx_v2_forward.1} parent=11 // pred_check
        %p542 = pneg %p117
      $region22: #{effnetbx_v2_forward.1} parent=11 // pred_check_branch
        %544 = sbr.rel (%p542) target = $region24
      $region23: #{effnetbx_v2_forward.1} parent=11 // pred_region
        _
      $region24: #{effnetbx_v2_forward.1} parent=11 // pred_fallthru
        _
      // Predicated region
      $region25: #{effnetbx_v2_forward.1} parent=11 // pred_check
        %p545 = pneg %p138
      $region26: #{effnetbx_v2_forward.1} parent=11 // pred_check_branch
        %547 = sbr.rel (%p545) target = $region28
      $region27: #{effnetbx_v2_forward.1} parent=11 // pred_region
        _
      $region28: #{effnetbx_v2_forward.1} parent=11 // pred_fallthru
        _
      // Predicated region
      $region29: #{effnetbx_v2_forward.1} parent=11 // pred_check
        %p548 = pneg %p159
      $region30: #{effnetbx_v2_forward.1} parent=11 // pred_check_branch
        %550 = sbr.rel (%p548) target = $region32
      $region31: #{effnetbx_v2_forward.1} parent=11 // pred_region
        _
      $region32: #{effnetbx_v2_forward.1} parent=11 // pred_fallthru
        _
      // Predicated region
      $region33: #{effnetbx_v2_forward.1} parent=11 // pred_check
        %p551 = pneg %p180
      $region34: #{effnetbx_v2_forward.1} parent=11 // pred_check_branch
        %553 = sbr.rel (%p551) target = $region36
      $region35: #{effnetbx_v2_forward.1} parent=11 // pred_region
        _
      $region36: #{effnetbx_v2_forward.1} parent=11 // pred_fallthru
        _
      // Predicated region
      $region37: #{effnetbx_v2_forward.1} parent=11 // pred_check
        %p554 = pneg %p201
      $region38: #{effnetbx_v2_forward.1} parent=11 // pred_check_branch
        %556 = sbr.rel (%p554) target = $region40
      $region39: #{effnetbx_v2_forward.1} parent=11 // pred_region
        _
      $region40: #{effnetbx_v2_forward.1} parent=11 // pred_fallthru
        _
      // Predicated region
      $region41: #{effnetbx_v2_forward.1} parent=11 // pred_check
        %p557 = pneg %p222
      $region42: #{effnetbx_v2_forward.1} parent=11 // pred_check_branch
        %559 = sbr.rel (%p557) target = $region44
      $region43: #{effnetbx_v2_forward.1} parent=11 // pred_region
        _
      $region44: #{effnetbx_v2_forward.1} parent=11 // pred_fallthru
        _
      // Predicated region
      $region45: #{effnetbx_v2_forward.1} parent=11 // pred_check
        %p560 = pneg %p243
      $region46: #{effnetbx_v2_forward.1} parent=11 // pred_check_branch
        %562 = sbr.rel (%p560) target = $region48
      $region47: #{effnetbx_v2_forward.1} parent=11 // pred_region
        _
      $region48: #{effnetbx_v2_forward.1} parent=11 // pred_fallthru
        _
      // Predicated region
      $region49: #{effnetbx_v2_forward.1} parent=11 // pred_check
        %p563 = pneg %p264
      $region50: #{effnetbx_v2_forward.1} parent=11 // pred_check_branch
        %565 = sbr.rel (%p563) target = $region52
      $region51: #{effnetbx_v2_forward.1} parent=11 // pred_region
        _
      $region52: #{effnetbx_v2_forward.1} parent=11 // pred_fallthru
        _
      // Predicated region
      $region53: #{effnetbx_v2_forward.1} parent=11 // pred_check
        %p566 = pneg %p285
      $region54: #{effnetbx_v2_forward.1} parent=11 // pred_check_branch
        %568 = sbr.rel (%p566) target = $region56
      $region55: #{effnetbx_v2_forward.1} parent=11 // pred_region
        _
      $region56: #{effnetbx_v2_forward.1} parent=11 // pred_fallthru
        _
      // Predicated region
      $region57: #{effnetbx_v2_forward.1} parent=11 // pred_check
        %p569 = pneg %p306
      $region58: #{effnetbx_v2_forward.1} parent=11 // pred_check_branch
        %571 = sbr.rel (%p569) target = $region60
      $region59: #{effnetbx_v2_forward.1} parent=11 // pred_region
        _
      $region60: #{effnetbx_v2_forward.1} parent=11 // pred_fallthru
        _
      // Predicated region
      $region61: #{effnetbx_v2_forward.1} parent=11 // pred_check
        %p572 = pneg %p327
      $region62: #{effnetbx_v2_forward.1} parent=11 // pred_check_branch
        %574 = sbr.rel (%p572) target = $region64
      $region63: #{effnetbx_v2_forward.1} parent=11 // pred_region
        _
      $region64: #{effnetbx_v2_forward.1} parent=11 // pred_fallthru
        _
      // Predicated region
      $region65: #{effnetbx_v2_forward.1} parent=11 // pred_check
        %p575 = pneg %p348
      $region66: #{effnetbx_v2_forward.1} parent=11 // pred_check_branch
        %577 = sbr.rel (%p575) target = $region68
      $region67: #{effnetbx_v2_forward.1} parent=11 // pred_region
        _
      $region68: #{effnetbx_v2_forward.1} parent=11 // pred_fallthru
        _
      // Predicated region
      $region69: #{effnetbx_v2_forward.1} parent=11 // pred_check
        %p578 = pneg %p369
      $region70: #{effnetbx_v2_forward.1} parent=11 // pred_check_branch
        %580 = sbr.rel (%p578) target = $region72
      $region71: #{effnetbx_v2_forward.1} parent=11 // pred_region
        _
      $region72: #{effnetbx_v2_forward.1} parent=11 // pred_fallthru
        _
      // Predicated region
      $region73: #{effnetbx_v2_forward.1} parent=11 // pred_check
        %p581 = pneg %p390
      $region74: #{effnetbx_v2_forward.1} parent=11 // pred_check_branch
        %583 = sbr.rel (%p581) target = $region76
      $region75: #{effnetbx_v2_forward.1} parent=11 // pred_region
        _
      $region76: #{effnetbx_v2_forward.1} parent=11 // pred_fallthru
        _
      // Predicated region
      $region77: #{effnetbx_v2_forward.1} parent=11 // pred_check
        %p584 = pneg %p411
      $region78: #{effnetbx_v2_forward.1} parent=11 // pred_check_branch
        %586 = sbr.rel (%p584) target = $region80
      $region79: #{effnetbx_v2_forward.1} parent=11 // pred_region
        _
      $region80: #{effnetbx_v2_forward.1} parent=11 // pred_fallthru
        _
      // Predicated region
      $region81: #{effnetbx_v2_forward.1} parent=11 // pred_check
        %p587 = pneg %p432
      $region82: #{effnetbx_v2_forward.1} parent=11 // pred_check_branch
        %589 = sbr.rel (%p587) target = $region84
      $region83: #{effnetbx_v2_forward.1} parent=11 // pred_region
        _
      $region84: #{effnetbx_v2_forward.1} parent=11 // pred_fallthru
        _
      // Predicated region
      $region85: #{effnetbx_v2_forward.1} parent=11 // pred_check
        %p590 = pneg %p453
      $region86: #{effnetbx_v2_forward.1} parent=11 // pred_check_branch
        %592 = sbr.rel (%p590) target = $region88
      $region87: #{effnetbx_v2_forward.1} parent=11 // pred_region
        _
      $region88: #{effnetbx_v2_forward.1} parent=11 // pred_fallthru
        _
      // Predicated region
      $region89: #{effnetbx_v2_forward.1} parent=11 // pred_check
        %p593 = pneg %p474
      $region90: #{effnetbx_v2_forward.1} parent=11 // pred_check_branch
        %595 = sbr.rel (%p593) target = $region92
      $region91: #{effnetbx_v2_forward.1} parent=11 // pred_region
        _
      $region92: #{effnetbx_v2_forward.1} parent=11 // pred_fallthru
        _
      // Predicated region
      $region93: #{effnetbx_v2_forward.1} parent=11 // pred_check
        %p596 = pneg %p495
      $region94: #{effnetbx_v2_forward.1} parent=11 // pred_check_branch
        %598 = sbr.rel (%p596) target = $region96
      $region95: #{effnetbx_v2_forward.1} parent=11 // pred_region
        _
      $region96: #{effnetbx_v2_forward.1} parent=11 // pred_fallthru
        _
    $region12: #{effnetbx_v2_forward.1} parent=5 // pred_fallthru
      _
    %p599 = scmp.lt.s32.totalorder %s28, 2
    // Predicated region
    $region97: #{effnetbx_v2_forward.1} parent=5 // pred_check
      %p600 = pneg %p599
    $region98: #{effnetbx_v2_forward.1} parent=5 // pred_check_branch
      %602 = sbr.rel (%p600) target = $region100
    $region99: #{effnetbx_v2_forward.1} parent=5 // pred_region
      // Predicated region
      $region101: #{effnetbx_v2_forward.1} parent=99 // pred_check
        %p603 = pneg %p48
      $region102: #{effnetbx_v2_forward.1} parent=99 // pred_check_branch
        %605 = sbr.rel (%p603) target = $region104
      $region103: #{effnetbx_v2_forward.1} parent=99 // pred_region
        %p606 = scmp.lt.s32.totalorder %s28, 1
        %s607 = scalar_select %p606, %s28, 1
        %s608 = smul.addr %s607, 32
        %s609 = smul.addr %s608, 4
        %s610 = scalar_lea.vmem %s0, %s609
      $region104: #{effnetbx_v2_forward.1} parent=99 // pred_fallthru
        _
    $region100: #{effnetbx_v2_forward.1} parent=5 // pred_fallthru
      _
    %p611 = scmp.le.s32.totalorder 1, %s28
    %p612 = scmp.lt.s32.totalorder %s28, 3
    %p613 = pnand %p611, %p612
    %p614 = pneg %p613
    // Predicated region
    $region105: #{effnetbx_v2_forward.1} parent=5 // pred_check
      _
    $region106: #{effnetbx_v2_forward.1} parent=5 // pred_check_branch
      %616 = sbr.rel (%p613) target = $region108
    $region107: #{effnetbx_v2_forward.1} parent=5 // pred_region
      %s617 = ssub.s32 %s28, 1
      %p618 = scmp.lt.s32.totalorder %s33, 1
      %s619 = scalar_select %p618, %s33, 1
      %s620 = smul.addr %s619, 32
      %s621 = smul.addr %s620, 4
      %s622 = scalar_lea.vmem %s0, %s621
      %p623 = pneg %p54
      %p624 = pneg %p51
      %p625 = pneg %p75
      %p626 = pneg %p72
      %p627 = pneg %p96
      %p628 = pneg %p93
      %p629 = pneg %p117
      %p630 = pneg %p114
      %p631 = pneg %p138
      %p632 = pneg %p135
      %p633 = pneg %p159
      %p634 = pneg %p156
      %p635 = pneg %p180
      %p636 = pneg %p177
      %p637 = pneg %p201
      %p638 = pneg %p198
      %p639 = pneg %p222
      %p640 = pneg %p219
      %p641 = pneg %p243
      %p642 = pneg %p240
      %p643 = pneg %p264
      %p644 = pneg %p261
      %p645 = pneg %p285
      %p646 = pneg %p282
      %p647 = pneg %p306
      %p648 = pneg %p303
      %p649 = pneg %p327
      %p650 = pneg %p324
      %p651 = pneg %p348
      %p652 = pneg %p345
      %p653 = pneg %p369
      %p654 = pneg %p366
      %p655 = pneg %p390
      %p656 = pneg %p387
      %p657 = pneg %p411
      %p658 = pneg %p408
      %p659 = pneg %p432
      %p660 = pneg %p429
      %p661 = pneg %p453
      %p662 = pneg %p450
      %p663 = pneg %p474
      %p664 = pneg %p471
      %p665 = pneg %p495
      %p666 = pneg %p492
      %p667 = pneg %p521
      %p668 = pneg %p518
      %p669 = scmp.lt.s32.totalorder %s33, 1
      %s670 = scalar_select %p669, %s33, 1
      %s671 = smul.addr %s670, 4
      %s672 = scalar_lea.vmem %s22, %s671
      %p673 = scmp.lt.s32.totalorder %s33, 1
      %s674 = scalar_select %p673, %s33, 1
      %s675 = smul.addr %s674, 32
      %s676 = smul.addr %s675, 4
      %s677 = scalar_lea.vmem %s0, %s676
      %p678 = scmp.lt.s32.totalorder %s33, 1
      %s679 = scalar_select %p678, %s33, 1
      %s680 = smul.addr %s679, 4
      %s681 = scalar_lea.vmem %s22, %s680
      %v683 = vld [vmem:[%s677] sm:$0xf]
      %v684 = vld [vmem:[%s677 + $0x4] sm:$0xf]
      %v685 = vld [vmem:[%s677 + $0x8] sm:$0xf]
      %v686 = vld [vmem:[%s677 + $0xc] sm:$0xf]
      %v687 = vld [vmem:[%s677 + $0x10] sm:$0xf]
      %v688 = vld [vmem:[%s677 + $0x14] sm:$0xf]
      %v689 = vld [vmem:[%s677 + $0x18] sm:$0xf]
      %v690 = vld [vmem:[%s677 + $0x1c] sm:$0xf]
      %v691 = vld [vmem:[%s677 + $0x20] sm:$0xf]
      %v692 = vld [vmem:[%s677 + $0x24] sm:$0xf]
      %v693 = vld [vmem:[%s677 + $0x28] sm:$0xf]
      %v694 = vld [vmem:[%s677 + $0x2c] sm:$0xf]
      %v695 = vld [vmem:[%s677 + $0x30] sm:$0xf]
      %v696 = vld [vmem:[%s677 + $0x34] sm:$0xf]
      %v697 = vld [vmem:[%s677 + $0x38] sm:$0xf]
      %v698 = vld [vmem:[%s677 + $0x3c] sm:$0xf]
      %v699 = vld [vmem:[%s677 + $0x40] sm:$0xf]
      %v700 = vld [vmem:[%s677 + $0x44] sm:$0xf]
      %v701 = vld [vmem:[%s677 + $0x48] sm:$0xf]
      %v702 = vld [vmem:[%s677 + $0x4c] sm:$0xf]
      %v703 = vld [vmem:[%s677 + $0x50] sm:$0xf]
      %v704 = vld [vmem:[%s677 + $0x54] sm:$0xf]
      %v705 = vld [vmem:[%s677 + $0x58] sm:$0xf]
      %v706 = vld [vmem:[%s677 + $0x5c] sm:$0xf]
      %v707 = vld [vmem:[%s677 + $0x60] sm:$0xf]
      %v708 = vld [vmem:[%s677 + $0x64] sm:$0xf]
      %v709 = vld [vmem:[%s677 + $0x68] sm:$0xf]
      %v710 = vld [vmem:[%s677 + $0x6c] sm:$0xf]
      %v711 = vld [vmem:[%s677 + $0x70] sm:$0xf]
      %v712 = vld [vmem:[%s677 + $0x74] sm:$0xf]
      %v713 = vld [vmem:[%s677 + $0x78] sm:$0xf]
      %v714 = vld [vmem:[%s677 + $0x7c] sm:$0xf]
      %v715 = vld [vmem:[%s2] sm:$0xf]
      %v716 = vld [vmem:[%s2 + $0x4] sm:$0xf]
      %v717 = vld [vmem:[%s2 + $0x8] sm:$0xf]
      %v718 = vld [vmem:[%s2 + $0xc] sm:$0xf]
      %v719 = vld [vmem:[%s3] sm:$0x1]
      %v721 = vlaneseq
      %v722 = vshrl.u32 %v721, 7
      %v723 = vsub.s32 0, %v722
      %v724 = vrot.slane %v719, %v723
      %v758 = vunpack.c.l.b16 %v683
      %v759 = vunpack.c.l.b16 %v684
      %v760 = vunpack.c.l.b16 %v685
      %v761 = vunpack.c.l.b16 %v686
      %v762 = vunpack.c.l.b16 %v687
      %v763 = vunpack.c.l.b16 %v688
      %v764 = vunpack.c.l.b16 %v689
      %v765 = vunpack.c.l.b16 %v690
      %v766 = vunpack.c.l.b16 %v691
      %v767 = vunpack.c.l.b16 %v692
      %v768 = vunpack.c.l.b16 %v693
      %v769 = vunpack.c.l.b16 %v694
      %v770 = vunpack.c.l.b16 %v695
      %v771 = vunpack.c.l.b16 %v696
      %v772 = vunpack.c.l.b16 %v697
      %v773 = vunpack.c.l.b16 %v698
      %v774 = vunpack.c.l.b16 %v699
      %v775 = vunpack.c.l.b16 %v700
      %v776 = vunpack.c.l.b16 %v701
      %v777 = vunpack.c.l.b16 %v702
      %v778 = vunpack.c.l.b16 %v703
      %v779 = vunpack.c.l.b16 %v704
      %v780 = vunpack.c.l.b16 %v705
      %v781 = vunpack.c.l.b16 %v706
      %v782 = vunpack.c.l.b16 %v707
      %v783 = vunpack.c.l.b16 %v708
      %v784 = vunpack.c.l.b16 %v709
      %v785 = vunpack.c.l.b16 %v710
      %v786 = vunpack.c.l.b16 %v711
      %v787 = vunpack.c.l.b16 %v712
      %v788 = vunpack.c.l.b16 %v713
      %v789 = vunpack.c.l.b16 %v714
      %v790 = vpack.c.b16 %v759, %v758
      %v791 = vpack.c.b16 %v761, %v760
      %v792 = vpack.c.b16 %v763, %v762
      %v793 = vpack.c.b16 %v765, %v764
      %v794 = vpack.c.b16 %v767, %v766
      %v795 = vpack.c.b16 %v769, %v768
      %v796 = vpack.c.b16 %v771, %v770
      %v797 = vpack.c.b16 %v773, %v772
      %v798 = vpack.c.b16 %v775, %v774
      %v799 = vpack.c.b16 %v777, %v776
      %v800 = vpack.c.b16 %v779, %v778
      %v801 = vpack.c.b16 %v781, %v780
      %v802 = vpack.c.b16 %v783, %v782
      %v803 = vpack.c.b16 %v785, %v784
      %v804 = vpack.c.b16 %v787, %v786
      %v805 = vpack.c.b16 %v789, %v788
      %v810 = vunpack.c.l.b16 %v715
      %v811 = vunpack.c.l.b16 %v716
      %v812 = vunpack.c.l.b16 %v717
      %v813 = vunpack.c.l.b16 %v718
      %v814 = vpack.c.b16 %v811, %v810
      %v815 = vpack.c.b16 %v813, %v812
      %vm818 = vcmask 261120
      %v820 = vsel %vm818, %v790, 0
      %v823 = vsel %vm818, %v791, 0
      %v826 = vsel %vm818, %v792, 0
      %v829 = vsel %vm818, %v793, 0
      %v832 = vsel %vm818, %v794, 0
      %v835 = vsel %vm818, %v795, 0
      %v838 = vsel %vm818, %v796, 0
      %v841 = vsel %vm818, %v797, 0
      %v844 = vsel %vm818, %v798, 0
      %v847 = vsel %vm818, %v799, 0
      %v850 = vsel %vm818, %v800, 0
      %v853 = vsel %vm818, %v801, 0
      %v856 = vsel %vm818, %v802, 0
      %v859 = vsel %vm818, %v803, 0
      %v862 = vsel %vm818, %v804, 0
      %v865 = vsel %vm818, %v805, 0
      %867 = vmatprep.subr.bf16.mxu0 0
      %868 = vmatpush1.bf16.msra.mxu0 %v814
      %869 = vmatprep.subr.bf16.mxu0 0
      %870 = vmatpush1.bf16.msra.mxu0 %v815
      %871 = vmatprep.subr.bf16.mxu0 0
      %872 = vmatpush1.bf16.msra.mxu0 0
      %873 = vmatprep.subr.bf16.mxu0 0
      %874 = vmatpush1.bf16.msra.mxu0 0
      %875 = vmatprep.subr.bf16.mxu0 0
      %876 = vmatpush1.bf16.msra.mxu0 0
      %877 = vmatprep.subr.bf16.mxu0 0
      %878 = vmatpush1.bf16.msra.mxu0 0
      %879 = vmatprep.subr.bf16.mxu0 0
      %880 = vmatpush1.bf16.msra.mxu0 0
      %881 = vmatprep.subr.bf16.mxu0 0
      %882 = vmatpush1.bf16.msra.mxu0 0
      %883 = vmatprep.subr.bf16.mxu0 0
      %884 = vmatpush1.bf16.msra.mxu0 0
      %885 = vmatprep.subr.bf16.mxu0 0
      %886 = vmatpush1.bf16.msra.mxu0 0
      %887 = vmatprep.subr.bf16.mxu0 0
      %888 = vmatpush1.bf16.msra.mxu0 0
      %889 = vmatprep.subr.bf16.mxu0 0
      %890 = vmatpush1.bf16.msra.mxu0 0
      %891 = vmatprep.subr.bf16.mxu0 0
      %892 = vmatpush1.bf16.msra.mxu0 0
      %893 = vmatprep.subr.bf16.mxu0 0
      %894 = vmatpush1.bf16.msra.mxu0 0
      %895 = vmatprep.subr.bf16.mxu0 0
      %896 = vmatpush1.bf16.msra.mxu0 0
      %897 = vmatprep.subr.bf16.mxu0 0
      %898 = vmatpush1.bf16.msra.mxu0 0
      %899 = vmatprep.mubr.bf16.mxu0 0
      %900 = vmatmul.mubr.bf16.gmra.mrb[0].mxu0 %v820
      %v901 = vpop.f32.mrb[0].mxu0
      %v902 = vadd.f32 %v724, %v901
      %v903 = vpop.f32.mrb[0].mxu0
      %v904 = vpop.f32.mrb[0].mxu0
      %v905 = vadd.f32 %v724, %v904
      %v906 = vpop.f32.mrb[0].mxu0
      %907 = vmatprep.mubr.bf16.mxu0 0
      %908 = vmatmul.mubr.bf16.gmra.mrb[0].mxu0 %v823
      %v909 = vpop.f32.mrb[0].mxu0
      %v910 = vadd.f32 %v724, %v909
      %v911 = vpop.f32.mrb[0].mxu0
      %v912 = vpop.f32.mrb[0].mxu0
      %v913 = vadd.f32 %v724, %v912
      %v914 = vpop.f32.mrb[0].mxu0
      %915 = vmatprep.mubr.bf16.mxu0 0
      %916 = vmatmul.mubr.bf16.gmra.mrb[0].mxu0 %v826
      %v917 = vpop.f32.mrb[0].mxu0
      %v918 = vadd.f32 %v724, %v917
      %v919 = vpop.f32.mrb[0].mxu0
      %v920 = vpop.f32.mrb[0].mxu0
      %v921 = vadd.f32 %v724, %v920
      %v922 = vpop.f32.mrb[0].mxu0
      %923 = vmatprep.mubr.bf16.mxu0 0
      %924 = vmatmul.mubr.bf16.gmra.mrb[0].mxu0 %v829
      %v925 = vpop.f32.mrb[0].mxu0
      %v926 = vadd.f32 %v724, %v925
      %v927 = vpop.f32.mrb[0].mxu0
      %v928 = vpop.f32.mrb[0].mxu0
      %v929 = vadd.f32 %v724, %v928
      %v930 = vpop.f32.mrb[0].mxu0
      %931 = vmatprep.mubr.bf16.mxu0 0
      %932 = vmatmul.mubr.bf16.gmra.mrb[0].mxu0 %v832
      %v933 = vpop.f32.mrb[0].mxu0
      %v934 = vadd.f32 %v724, %v933
      %v935 = vpop.f32.mrb[0].mxu0
      %v936 = vpop.f32.mrb[0].mxu0
      %v937 = vadd.f32 %v724, %v936
      %v938 = vpop.f32.mrb[0].mxu0
      %939 = vmatprep.mubr.bf16.mxu0 0
      %940 = vmatmul.mubr.bf16.gmra.mrb[0].mxu0 %v835
      %v941 = vpop.f32.mrb[0].mxu0
      %v942 = vadd.f32 %v724, %v941
      %v943 = vpop.f32.mrb[0].mxu0
      %v944 = vpop.f32.mrb[0].mxu0
      %v945 = vadd.f32 %v724, %v944
      %v946 = vpop.f32.mrb[0].mxu0
      %947 = vmatprep.mubr.bf16.mxu0 0
      %948 = vmatmul.mubr.bf16.gmra.mrb[0].mxu0 %v838
      %v949 = vpop.f32.mrb[0].mxu0
      %v950 = vadd.f32 %v724, %v949
      %v951 = vpop.f32.mrb[0].mxu0
      %v952 = vpop.f32.mrb[0].mxu0
      %v953 = vadd.f32 %v724, %v952
      %v954 = vpop.f32.mrb[0].mxu0
      %955 = vmatprep.mubr.bf16.mxu0 0
      %956 = vmatmul.mubr.bf16.gmra.mrb[0].mxu0 %v841
      %v957 = vpop.f32.mrb[0].mxu0
      %v958 = vadd.f32 %v724, %v957
      %v959 = vpop.f32.mrb[0].mxu0
      %v960 = vpop.f32.mrb[0].mxu0
      %v961 = vadd.f32 %v724, %v960
      %v962 = vpop.f32.mrb[0].mxu0
      %963 = vmatprep.mubr.bf16.mxu0 0
      %964 = vmatmul.mubr.bf16.gmra.mrb[0].mxu0 %v844
      %v965 = vpop.f32.mrb[0].mxu0
      %v966 = vadd.f32 %v724, %v965
      %v967 = vpop.f32.mrb[0].mxu0
      %v968 = vpop.f32.mrb[0].mxu0
      %v969 = vadd.f32 %v724, %v968
      %v970 = vpop.f32.mrb[0].mxu0
      %971 = vmatprep.mubr.bf16.mxu0 0
      %972 = vmatmul.mubr.bf16.gmra.mrb[0].mxu0 %v847
      %v973 = vpop.f32.mrb[0].mxu0
      %v974 = vadd.f32 %v724, %v973
      %v975 = vpop.f32.mrb[0].mxu0
      %v976 = vpop.f32.mrb[0].mxu0
      %v977 = vadd.f32 %v724, %v976
      %v978 = vpop.f32.mrb[0].mxu0
      %979 = vmatprep.mubr.bf16.mxu0 0
      %980 = vmatmul.mubr.bf16.gmra.mrb[0].mxu0 %v850
      %v981 = vpop.f32.mrb[0].mxu0
      %v982 = vadd.f32 %v724, %v981
      %v983 = vpop.f32.mrb[0].mxu0
      %v984 = vpop.f32.mrb[0].mxu0
      %v985 = vadd.f32 %v724, %v984
      %v986 = vpop.f32.mrb[0].mxu0
      %987 = vmatprep.mubr.bf16.mxu0 0
      %988 = vmatmul.mubr.bf16.gmra.mrb[0].mxu0 %v853
      %v989 = vpop.f32.mrb[0].mxu0
      %v990 = vadd.f32 %v724, %v989
      %v991 = vpop.f32.mrb[0].mxu0
      %v992 = vpop.f32.mrb[0].mxu0
      %v993 = vadd.f32 %v724, %v992
      %v994 = vpop.f32.mrb[0].mxu0
      %995 = vmatprep.mubr.bf16.mxu0 0
      %996 = vmatmul.mubr.bf16.gmra.mrb[0].mxu0 %v856
      %v997 = vpop.f32.mrb[0].mxu0
      %v998 = vadd.f32 %v724, %v997
      %v999 = vpop.f32.mrb[0].mxu0
      %v1000 = vpop.f32.mrb[0].mxu0
      %v1001 = vadd.f32 %v724, %v1000
      %v1002 = vpop.f32.mrb[0].mxu0
      %1003 = vmatprep.mubr.bf16.mxu0 0
      %1004 = vmatmul.mubr.bf16.gmra.mrb[0].mxu0 %v859
      %v1005 = vpop.f32.mrb[0].mxu0
      %v1006 = vadd.f32 %v724, %v1005
      %v1007 = vpop.f32.mrb[0].mxu0
      %v1008 = vpop.f32.mrb[0].mxu0
      %v1009 = vadd.f32 %v724, %v1008
      %v1010 = vpop.f32.mrb[0].mxu0
      %1011 = vmatprep.mubr.bf16.mxu0 0
      %1012 = vmatmul.mubr.bf16.gmra.mrb[0].mxu0 %v862
      %v1013 = vpop.f32.mrb[0].mxu0
      %v1014 = vadd.f32 %v724, %v1013
      %v1015 = vpop.f32.mrb[0].mxu0
      %v1016 = vpop.f32.mrb[0].mxu0
      %v1017 = vadd.f32 %v724, %v1016
      %v1018 = vpop.f32.mrb[0].mxu0
      %1019 = vmatprep.mubr.bf16.mxu0 0
      %1020 = vmatmul.mubr.bf16.gmra.mrb[0].mxu0 %v865
      %v1021 = vpop.f32.mrb[0].mxu0
      %v1022 = vadd.f32 %v724, %v1021
      %v1023 = vpop.f32.mrb[0].mxu0
      %v1024 = vpop.f32.mrb[0].mxu0
      %v1025 = vadd.f32 %v724, %v1024
      %v1026 = vpop.f32.mrb[0].mxu0
      %1027 = vdwg.mxu0
      %v1028 = vxor.u32 %v902, 2147483648
      %v1029 = vxor.u32 %v905, 2147483648
      %v1030 = vxor.u32 %v910, 2147483648
      %v1031 = vxor.u32 %v913, 2147483648
      %v1032 = vxor.u32 %v918, 2147483648
      %v1033 = vxor.u32 %v921, 2147483648
      %v1034 = vxor.u32 %v926, 2147483648
      %v1035 = vxor.u32 %v929, 2147483648
      %v1036 = vxor.u32 %v934, 2147483648
      %v1037 = vxor.u32 %v937, 2147483648
      %v1038 = vxor.u32 %v942, 2147483648
      %v1039 = vxor.u32 %v945, 2147483648
      %v1040 = vxor.u32 %v950, 2147483648
      %v1041 = vxor.u32 %v953, 2147483648
      %v1042 = vxor.u32 %v958, 2147483648
      %v1043 = vxor.u32 %v961, 2147483648
      %v1044 = vxor.u32 %v966, 2147483648
      %v1045 = vxor.u32 %v969, 2147483648
      %v1046 = vxor.u32 %v974, 2147483648
      %v1047 = vxor.u32 %v977, 2147483648
      %v1048 = vxor.u32 %v982, 2147483648
      %v1049 = vxor.u32 %v985, 2147483648
      %v1050 = vxor.u32 %v990, 2147483648
      %v1051 = vxor.u32 %v993, 2147483648
      %v1052 = vxor.u32 %v998, 2147483648
      %v1053 = vxor.u32 %v1001, 2147483648
      %v1054 = vxor.u32 %v1006, 2147483648
      %v1055 = vxor.u32 %v1009, 2147483648
      %v1056 = vxor.u32 %v1014, 2147483648
      %v1057 = vxor.u32 %v1017, 2147483648
      %v1058 = vxor.u32 %v1022, 2147483648
      %v1059 = vxor.u32 %v1025, 2147483648
      %v1060 = vmul.f32 %v1028, 1.442695
      %v1061 = vpow.pop %v1060
      %v1062 = vmul.f32 %v1029, 1.442695
      %v1063 = vpow.pop %v1062
      %v1064 = vmul.f32 %v1030, 1.442695
      %v1065 = vpow.pop %v1064
      %v1066 = vmul.f32 %v1031, 1.442695
      %v1067 = vpow.pop %v1066
      %v1068 = vmul.f32 %v1032, 1.442695
      %v1069 = vpow.pop %v1068
      %v1070 = vmul.f32 %v1033, 1.442695
      %v1071 = vpow.pop %v1070
      %v1072 = vmul.f32 %v1034, 1.442695
      %v1073 = vpow.pop %v1072
      %v1074 = vmul.f32 %v1035, 1.442695
      %v1075 = vpow.pop %v1074
      %v1076 = vmul.f32 %v1036, 1.442695
      %v1077 = vpow.pop %v1076
      %v1078 = vmul.f32 %v1037, 1.442695
      %v1079 = vpow.pop %v1078
      %v1080 = vmul.f32 %v1038, 1.442695
      %v1081 = vpow.pop %v1080
      %v1082 = vmul.f32 %v1039, 1.442695
      %v1083 = vpow.pop %v1082
      %v1084 = vmul.f32 %v1040, 1.442695
      %v1085 = vpow.pop %v1084
      %v1086 = vmul.f32 %v1041, 1.442695
      %v1087 = vpow.pop %v1086
      %v1088 = vmul.f32 %v1042, 1.442695
      %v1089 = vpow.pop %v1088
      %v1090 = vmul.f32 %v1043, 1.442695
      %v1091 = vpow.pop %v1090
      %v1092 = vmul.f32 %v1044, 1.442695
      %v1093 = vpow.pop %v1092
      %v1094 = vmul.f32 %v1045, 1.442695
      %v1095 = vpow.pop %v1094
      %v1096 = vmul.f32 %v1046, 1.442695
      %v1097 = vpow.pop %v1096
      %v1098 = vmul.f32 %v1047, 1.442695
      %v1099 = vpow.pop %v1098
      %v1100 = vmul.f32 %v1048, 1.442695
      %v1101 = vpow.pop %v1100
      %v1102 = vmul.f32 %v1049, 1.442695
      %v1103 = vpow.pop %v1102
      %v1104 = vmul.f32 %v1050, 1.442695
      %v1105 = vpow.pop %v1104
      %v1106 = vmul.f32 %v1051, 1.442695
      %v1107 = vpow.pop %v1106
      %v1108 = vmul.f32 %v1052, 1.442695
      %v1109 = vpow.pop %v1108
      %v1110 = vmul.f32 %v1053, 1.442695
      %v1111 = vpow.pop %v1110
      %v1112 = vmul.f32 %v1054, 1.442695
      %v1113 = vpow.pop %v1112
      %v1114 = vmul.f32 %v1055, 1.442695
      %v1115 = vpow.pop %v1114
      %v1116 = vmul.f32 %v1056, 1.442695
      %v1117 = vpow.pop %v1116
      %v1118 = vmul.f32 %v1057, 1.442695
      %v1119 = vpow.pop %v1118
      %v1120 = vmul.f32 %v1058, 1.442695
      %v1121 = vpow.pop %v1120
      %v1122 = vmul.f32 %v1059, 1.442695
      %v1123 = vpow.pop %v1122
      %v1124 = vadd.f32 %v1061, 1.0
      %v1125 = vadd.f32 %v1063, 1.0
      %v1126 = vadd.f32 %v1065, 1.0
      %v1127 = vadd.f32 %v1067, 1.0
      %v1128 = vadd.f32 %v1069, 1.0
      %v1129 = vadd.f32 %v1071, 1.0
      %v1130 = vadd.f32 %v1073, 1.0
      %v1131 = vadd.f32 %v1075, 1.0
      %v1132 = vadd.f32 %v1077, 1.0
      %v1133 = vadd.f32 %v1079, 1.0
      %v1134 = vadd.f32 %v1081, 1.0
      %v1135 = vadd.f32 %v1083, 1.0
      %v1136 = vadd.f32 %v1085, 1.0
      %v1137 = vadd.f32 %v1087, 1.0
      %v1138 = vadd.f32 %v1089, 1.0
      %v1139 = vadd.f32 %v1091, 1.0
      %v1140 = vadd.f32 %v1093, 1.0
      %v1141 = vadd.f32 %v1095, 1.0
      %v1142 = vadd.f32 %v1097, 1.0
      %v1143 = vadd.f32 %v1099, 1.0
      %v1144 = vadd.f32 %v1101, 1.0
      %v1145 = vadd.f32 %v1103, 1.0
      %v1146 = vadd.f32 %v1105, 1.0
      %v1147 = vadd.f32 %v1107, 1.0
      %v1148 = vadd.f32 %v1109, 1.0
      %v1149 = vadd.f32 %v1111, 1.0
      %v1150 = vadd.f32 %v1113, 1.0
      %v1151 = vadd.f32 %v1115, 1.0
      %v1152 = vadd.f32 %v1117, 1.0
      %v1153 = vadd.f32 %v1119, 1.0
      %v1154 = vadd.f32 %v1121, 1.0
      %v1155 = vadd.f32 %v1123, 1.0
      %v1156 = vrcp.pop %v1124
      %v1157 = vmul.f32 1.0, %v1156
      %v1158 = vrcp.pop %v1125
      %v1159 = vmul.f32 1.0, %v1158
      %v1160 = vrcp.pop %v1126
      %v1161 = vmul.f32 1.0, %v1160
      %v1162 = vrcp.pop %v1127
      %v1163 = vmul.f32 1.0, %v1162
      %v1164 = vrcp.pop %v1128
      %v1165 = vmul.f32 1.0, %v1164
      %v1166 = vrcp.pop %v1129
      %v1167 = vmul.f32 1.0, %v1166
      %v1168 = vrcp.pop %v1130
      %v1169 = vmul.f32 1.0, %v1168
      %v1170 = vrcp.pop %v1131
      %v1171 = vmul.f32 1.0, %v1170
      %v1172 = vrcp.pop %v1132
      %v1173 = vmul.f32 1.0, %v1172
      %v1174 = vrcp.pop %v1133
      %v1175 = vmul.f32 1.0, %v1174
      %v1176 = vrcp.pop %v1134
      %v1177 = vmul.f32 1.0, %v1176
      %v1178 = vrcp.pop %v1135
      %v1179 = vmul.f32 1.0, %v1178
      %v1180 = vrcp.pop %v1136
      %v1181 = vmul.f32 1.0, %v1180
      %v1182 = vrcp.pop %v1137
      %v1183 = vmul.f32 1.0, %v1182
      %v1184 = vrcp.pop %v1138
      %v1185 = vmul.f32 1.0, %v1184
      %v1186 = vrcp.pop %v1139
      %v1187 = vmul.f32 1.0, %v1186
      %v1188 = vrcp.pop %v1140
      %v1189 = vmul.f32 1.0, %v1188
      %v1190 = vrcp.pop %v1141
      %v1191 = vmul.f32 1.0, %v1190
      %v1192 = vrcp.pop %v1142
      %v1193 = vmul.f32 1.0, %v1192
      %v1194 = vrcp.pop %v1143
      %v1195 = vmul.f32 1.0, %v1194
      %v1196 = vrcp.pop %v1144
      %v1197 = vmul.f32 1.0, %v1196
      %v1198 = vrcp.pop %v1145
      %v1199 = vmul.f32 1.0, %v1198
      %v1200 = vrcp.pop %v1146
      %v1201 = vmul.f32 1.0, %v1200
      %v1202 = vrcp.pop %v1147
      %v1203 = vmul.f32 1.0, %v1202
      %v1204 = vrcp.pop %v1148
      %v1205 = vmul.f32 1.0, %v1204
      %v1206 = vrcp.pop %v1149
      %v1207 = vmul.f32 1.0, %v1206
      %v1208 = vrcp.pop %v1150
      %v1209 = vmul.f32 1.0, %v1208
      %v1210 = vrcp.pop %v1151
      %v1211 = vmul.f32 1.0, %v1210
      %v1212 = vrcp.pop %v1152
      %v1213 = vmul.f32 1.0, %v1212
      %v1214 = vrcp.pop %v1153
      %v1215 = vmul.f32 1.0, %v1214
      %v1216 = vrcp.pop %v1154
      %v1217 = vmul.f32 1.0, %v1216
      %v1218 = vrcp.pop %v1155
      %v1219 = vmul.f32 1.0, %v1218
      %v1220 = vmul.f32 %v902, %v1157
      %v1221 = vmul.f32 %v905, %v1159
      %v1222 = vmul.f32 %v910, %v1161
      %v1223 = vmul.f32 %v913, %v1163
      %v1224 = vmul.f32 %v918, %v1165
      %v1225 = vmul.f32 %v921, %v1167
      %v1226 = vmul.f32 %v926, %v1169
      %v1227 = vmul.f32 %v929, %v1171
      %v1228 = vmul.f32 %v934, %v1173
      %v1229 = vmul.f32 %v937, %v1175
      %v1230 = vmul.f32 %v942, %v1177
      %v1231 = vmul.f32 %v945, %v1179
      %v1232 = vmul.f32 %v950, %v1181
      %v1233 = vmul.f32 %v953, %v1183
      %v1234 = vmul.f32 %v958, %v1185
      %v1235 = vmul.f32 %v961, %v1187
      %v1236 = vmul.f32 %v966, %v1189
      %v1237 = vmul.f32 %v969, %v1191
      %v1238 = vmul.f32 %v974, %v1193
      %v1239 = vmul.f32 %v977, %v1195
      %v1240 = vmul.f32 %v982, %v1197
      %v1241 = vmul.f32 %v985, %v1199
      %v1242 = vmul.f32 %v990, %v1201
      %v1243 = vmul.f32 %v993, %v1203
      %v1244 = vmul.f32 %v998, %v1205
      %v1245 = vmul.f32 %v1001, %v1207
      %v1246 = vmul.f32 %v1006, %v1209
      %v1247 = vmul.f32 %v1009, %v1211
      %v1248 = vmul.f32 %v1014, %v1213
      %v1249 = vmul.f32 %v1017, %v1215
      %v1250 = vmul.f32 %v1022, %v1217
      %v1251 = vmul.f32 %v1025, %v1219
      %1252 = vst.msk [vmem:[#allocation2] sm:$0xff] %vm818, 0.0
      %1253 = vst.msk [vmem:[#allocation2 + $0x8] sm:$0xff] %vm818, 0.0
      %1254 = vst.msk [vmem:[#allocation2 + $0x10] sm:$0xff] %vm818, 0.0
      %s1255 = scalar_lea.vmem [#allocation2], 408
      %1256 = vst.msk [vmem:[%s1255] sm:$0xff] %vm818, 0.0
      %1257 = vst.msk [vmem:[%s1255 + $0x8] sm:$0xff] %vm818, 0.0
      %1258 = vst.msk [vmem:[%s1255 + $0x10] sm:$0xff] %vm818, 0.0
      %s1259 = scalar_lea.vmem [#allocation2], 24
      %vm1260 = vcmask 253952
      %1261 = vst.msk [vmem:[%s1259] sm:$0x1] %vm1260, 0.0
      %1262 = vst.msk [vmem:[%s1259 + $0x18] sm:$0x1] %vm1260, 0.0
      %1263 = vst.msk [vmem:[%s1259 + $0x30] sm:$0x1] %vm1260, 0.0
      %1264 = vst.msk [vmem:[%s1259 + $0x48] sm:$0x1] %vm1260, 0.0
      %1265 = vst.msk [vmem:[%s1259 + $0x60] sm:$0x1] %vm1260, 0.0
      %1266 = vst.msk [vmem:[%s1259 + $0x78] sm:$0x1] %vm1260, 0.0
      %1267 = vst.msk [vmem:[%s1259 + $0x90] sm:$0x1] %vm1260, 0.0
      %1268 = vst.msk [vmem:[%s1259 + $0xa8] sm:$0x1] %vm1260, 0.0
      %1269 = vst.msk [vmem:[%s1259 + $0xc0] sm:$0x1] %vm1260, 0.0
      %1270 = vst.msk [vmem:[%s1259 + $0xd8] sm:$0x1] %vm1260, 0.0
      %1271 = vst.msk [vmem:[%s1259 + $0xf0] sm:$0x1] %vm1260, 0.0
      %1272 = vst.msk [vmem:[%s1259 + $0x108] sm:$0x1] %vm1260, 0.0
      %1273 = vst.msk [vmem:[%s1259 + $0x120] sm:$0x1] %vm1260, 0.0
      %1274 = vst.msk [vmem:[%s1259 + $0x138] sm:$0x1] %vm1260, 0.0
      %1275 = vst.msk [vmem:[%s1259 + $0x150] sm:$0x1] %vm1260, 0.0
      %1276 = vst.msk [vmem:[%s1259 + $0x168] sm:$0x1] %vm1260, 0.0
      %1277 = vst.msk [vmem:[%s1259 + $0x11] sm:$0x1] %vm1260, 0.0
      %1278 = vst.msk [vmem:[%s1259 + $0x29] sm:$0x1] %vm1260, 0.0
      %1279 = vst.msk [vmem:[%s1259 + $0x41] sm:$0x1] %vm1260, 0.0
      %1280 = vst.msk [vmem:[%s1259 + $0x59] sm:$0x1] %vm1260, 0.0
      %1281 = vst.msk [vmem:[%s1259 + $0x71] sm:$0x1] %vm1260, 0.0
      %1282 = vst.msk [vmem:[%s1259 + $0x89] sm:$0x1] %vm1260, 0.0
      %1283 = vst.msk [vmem:[%s1259 + $0xa1] sm:$0x1] %vm1260, 0.0
      %1284 = vst.msk [vmem:[%s1259 + $0xb9] sm:$0x1] %vm1260, 0.0
      %1285 = vst.msk [vmem:[%s1259 + $0xd1] sm:$0x1] %vm1260, 0.0
      %1286 = vst.msk [vmem:[%s1259 + $0xe9] sm:$0x1] %vm1260, 0.0
      %1287 = vst.msk [vmem:[%s1259 + $0x101] sm:$0x1] %vm1260, 0.0
      %1288 = vst.msk [vmem:[%s1259 + $0x119] sm:$0x1] %vm1260, 0.0
      %1289 = vst.msk [vmem:[%s1259 + $0x131] sm:$0x1] %vm1260, 0.0
      %1290 = vst.msk [vmem:[%s1259 + $0x149] sm:$0x1] %vm1260, 0.0
      %1291 = vst.msk [vmem:[%s1259 + $0x161] sm:$0x1] %vm1260, 0.0
      %1292 = vst.msk [vmem:[%s1259 + $0x179] sm:$0x1] %vm1260, 0.0
      %1293 = vst.msk [vmem:[%s1259 + $0x1] sm:$0xff] %vm818, %v1220
      %1294 = vst.msk [vmem:[%s1259 + $0x9] sm:$0xff] %vm818, %v1221
      %1295 = vst.msk [vmem:[%s1259 + $0x19] sm:$0xff] %vm818, %v1222
      %1296 = vst.msk [vmem:[%s1259 + $0x21] sm:$0xff] %vm818, %v1223
      %1297 = vst.msk [vmem:[%s1259 + $0x31] sm:$0xff] %vm818, %v1224
      %1298 = vst.msk [vmem:[%s1259 + $0x39] sm:$0xff] %vm818, %v1225
      %1299 = vst.msk [vmem:[%s1259 + $0x49] sm:$0xff] %vm818, %v1226
      %1300 = vst.msk [vmem:[%s1259 + $0x51] sm:$0xff] %vm818, %v1227
      %1301 = vst.msk [vmem:[%s1259 + $0x61] sm:$0xff] %vm818, %v1228
      %1302 = vst.msk [vmem:[%s1259 + $0x69] sm:$0xff] %vm818, %v1229
      %1303 = vst.msk [vmem:[%s1259 + $0x79] sm:$0xff] %vm818, %v1230
      %1304 = vst.msk [vmem:[%s1259 + $0x81] sm:$0xff] %vm818, %v1231
      %1305 = vst.msk [vmem:[%s1259 + $0x91] sm:$0xff] %vm818, %v1232
      %1306 = vst.msk [vmem:[%s1259 + $0x99] sm:$0xff] %vm818, %v1233
      %1307 = vst.msk [vmem:[%s1259 + $0xa9] sm:$0xff] %vm818, %v1234
      %1308 = vst.msk [vmem:[%s1259 + $0xb1] sm:$0xff] %vm818, %v1235
      %1309 = vst.msk [vmem:[%s1259 + $0xc1] sm:$0xff] %vm818, %v1236
      %1310 = vst.msk [vmem:[%s1259 + $0xc9] sm:$0xff] %vm818, %v1237
      %1311 = vst.msk [vmem:[%s1259 + $0xd9] sm:$0xff] %vm818, %v1238
      %1312 = vst.msk [vmem:[%s1259 + $0xe1] sm:$0xff] %vm818, %v1239
      %1313 = vst.msk [vmem:[%s1259 + $0xf1] sm:$0xff] %vm818, %v1240
      %1314 = vst.msk [vmem:[%s1259 + $0xf9] sm:$0xff] %vm818, %v1241
      %1315 = vst.msk [vmem:[%s1259 + $0x109] sm:$0xff] %vm818, %v1242
      %1316 = vst.msk [vmem:[%s1259 + $0x111] sm:$0xff] %vm818, %v1243
      %1317 = vst.msk [vmem:[%s1259 + $0x121] sm:$0xff] %vm818, %v1244
      %1318 = vst.msk [vmem:[%s1259 + $0x129] sm:$0xff] %vm818, %v1245
      %1319 = vst.msk [vmem:[%s1259 + $0x139] sm:$0xff] %vm818, %v1246
      %1320 = vst.msk [vmem:[%s1259 + $0x141] sm:$0xff] %vm818, %v1247
      %1321 = vst.msk [vmem:[%s1259 + $0x151] sm:$0xff] %vm818, %v1248
      %1322 = vst.msk [vmem:[%s1259 + $0x159] sm:$0xff] %vm818, %v1249
      %1323 = vst.msk [vmem:[%s1259 + $0x169] sm:$0xff] %vm818, %v1250
      %1324 = vst.msk [vmem:[%s1259 + $0x171] sm:$0xff] %vm818, %v1251
      %v1325 = vld [vmem:[%s4] sm:$0xff]
      %v1326 = vld [vmem:[%s4 + $0x8] sm:$0x1]
      %v1327 = vld [vmem:[#allocation2] sm:$0xff]
      %v1328 = vld [vmem:[#allocation2 + $0x8] sm:$0xff]
      %v1329 = vld [vmem:[#allocation2 + $0x18] sm:$0xff]
      %v1330 = vld [vmem:[#allocation2 + $0x20] sm:$0xff]
      %v1331 = vld [vmem:[#allocation2 + $0x30] sm:$0xff]
      %v1332 = vld [vmem:[#allocation2 + $0x38] sm:$0xff]
      %v1333 = vld [vmem:[#allocation2 + $0x48] sm:$0xff]
      %v1334 = vld [vmem:[#allocation2 + $0x50] sm:$0xff]
      %v1335 = vld [vmem:[#allocation2 + $0x60] sm:$0xff]
      %v1336 = vld [vmem:[#allocation2 + $0x68] sm:$0xff]
      %v1337 = vld [vmem:[#allocation2 + $0x78] sm:$0xff]
      %v1338 = vld [vmem:[#allocation2 + $0x80] sm:$0xff]
      %v1339 = vld [vmem:[#allocation2 + $0x90] sm:$0xff]
      %v1340 = vld [vmem:[#allocation2 + $0x98] sm:$0xff]
      %v1341 = vld [vmem:[#allocation2 + $0xa8] sm:$0xff]
      %v1342 = vld [vmem:[#allocation2 + $0xb0] sm:$0xff]
      %v1343 = vld [vmem:[#allocation2 + $0xc0] sm:$0xff]
      %v1344 = vld [vmem:[#allocation2 + $0xc8] sm:$0xff]
      %v1345 = vld [vmem:[#allocation2 + $0xd8] sm:$0xff]
      %v1346 = vld [vmem:[#allocation2 + $0xe0] sm:$0xff]
      %v1347 = vld [vmem:[#allocation2 + $0xf0] sm:$0xff]
      %v1348 = vld [vmem:[#allocation2 + $0xf8] sm:$0xff]
      %v1349 = vld [vmem:[#allocation2 + $0x108] sm:$0xff]
      %v1350 = vld [vmem:[#allocation2 + $0x110] sm:$0xff]
      %v1351 = vld [vmem:[#allocation2 + $0x120] sm:$0xff]
      %v1352 = vld [vmem:[#allocation2 + $0x128] sm:$0xff]
      %v1353 = vld [vmem:[#allocation2 + $0x138] sm:$0xff]
      %v1354 = vld [vmem:[#allocation2 + $0x140] sm:$0xff]
      %v1355 = vld [vmem:[#allocation2 + $0x150] sm:$0xff]
      %v1356 = vld [vmem:[#allocation2 + $0x158] sm:$0xff]
      %v1357 = vld [vmem:[#allocation2 + $0x168] sm:$0xff]
      %v1358 = vld [vmem:[#allocation2 + $0x170] sm:$0xff]
      %v1359 = vlaneseq
      %v1360 = vshrl.u32 %v1359, 7
      %v1361 = vsub.s32 0, %v1360
      %v1362 = vrot.slane %v1325, %v1361
      %v1363 = vmul.f32 %v1327, %v1362
      %v1364 = vmul.f32 %v1328, %v1362
      %v1365 = vmul.f32 %v1329, %v1362
      %v1366 = vmul.f32 %v1330, %v1362
      %v1367 = vmul.f32 %v1331, %v1362
      %v1368 = vmul.f32 %v1332, %v1362
      %v1369 = vmul.f32 %v1333, %v1362
      %v1370 = vmul.f32 %v1334, %v1362
      %v1371 = vmul.f32 %v1335, %v1362
      %v1372 = vmul.f32 %v1336, %v1362
      %v1373 = vmul.f32 %v1337, %v1362
      %v1374 = vmul.f32 %v1338, %v1362
      %v1375 = vmul.f32 %v1339, %v1362
      %v1376 = vmul.f32 %v1340, %v1362
      %v1377 = vmul.f32 %v1341, %v1362
      %v1378 = vmul.f32 %v1342, %v1362
      %v1379 = vmul.f32 %v1343, %v1362
      %v1380 = vmul.f32 %v1344, %v1362
      %v1381 = vmul.f32 %v1345, %v1362
      %v1382 = vmul.f32 %v1346, %v1362
      %v1383 = vmul.f32 %v1347, %v1362
      %v1384 = vmul.f32 %v1348, %v1362
      %v1385 = vmul.f32 %v1349, %v1362
      %v1386 = vmul.f32 %v1350, %v1362
      %v1387 = vmul.f32 %v1351, %v1362
      %v1388 = vmul.f32 %v1352, %v1362
      %v1389 = vmul.f32 %v1353, %v1362
      %v1390 = vmul.f32 %v1354, %v1362
      %v1391 = vmul.f32 %v1355, %v1362
      %v1392 = vmul.f32 %v1356, %v1362
      %v1393 = vmul.f32 %v1357, %v1362
      %v1394 = vmul.f32 %v1358, %v1362
      %v1395 = vadd.f32 %v1363, 0.0
      %v1396 = vadd.f32 %v1364, 0.0
      %v1397 = vadd.f32 %v1365, 0.0
      %v1398 = vadd.f32 %v1366, 0.0
      %v1399 = vadd.f32 %v1367, 0.0
      %v1400 = vadd.f32 %v1368, 0.0
      %v1401 = vadd.f32 %v1369, 0.0
      %v1402 = vadd.f32 %v1370, 0.0
      %v1403 = vadd.f32 %v1371, 0.0
      %v1404 = vadd.f32 %v1372, 0.0
      %v1405 = vadd.f32 %v1373, 0.0
      %v1406 = vadd.f32 %v1374, 0.0
      %v1407 = vadd.f32 %v1375, 0.0
      %v1408 = vadd.f32 %v1376, 0.0
      %v1409 = vadd.f32 %v1377, 0.0
      %v1410 = vadd.f32 %v1378, 0.0
      %v1411 = vadd.f32 %v1379, 0.0
      %v1412 = vadd.f32 %v1380, 0.0
      %v1413 = vadd.f32 %v1381, 0.0
      %v1414 = vadd.f32 %v1382, 0.0
      %v1415 = vadd.f32 %v1383, 0.0
      %v1416 = vadd.f32 %v1384, 0.0
      %v1417 = vadd.f32 %v1385, 0.0
      %v1418 = vadd.f32 %v1386, 0.0
      %v1419 = vadd.f32 %v1387, 0.0
      %v1420 = vadd.f32 %v1388, 0.0
      %v1421 = vadd.f32 %v1389, 0.0
      %v1422 = vadd.f32 %v1390, 0.0
      %v1423 = vadd.f32 %v1391, 0.0
      %v1424 = vadd.f32 %v1392, 0.0
      %v1425 = vadd.f32 %v1393, 0.0
      %v1426 = vadd.f32 %v1394, 0.0
      %v1427 = vld [vmem:[#allocation2 + $0x1] sm:$0xff]
      %v1428 = vld [vmem:[#allocation2 + $0x9] sm:$0xff]
      %v1429 = vld [vmem:[#allocation2 + $0x19] sm:$0xff]
      %v1430 = vld [vmem:[#allocation2 + $0x21] sm:$0xff]
      %v1431 = vld [vmem:[#allocation2 + $0x31] sm:$0xff]
      %v1432 = vld [vmem:[#allocation2 + $0x39] sm:$0xff]
      %v1433 = vld [vmem:[#allocation2 + $0x49] sm:$0xff]
      %v1434 = vld [vmem:[#allocation2 + $0x51] sm:$0xff]
      %v1435 = vld [vmem:[#allocation2 + $0x61] sm:$0xff]
      %v1436 = vld [vmem:[#allocation2 + $0x69] sm:$0xff]
      %v1437 = vld [vmem:[#allocation2 + $0x79] sm:$0xff]
      %v1438 = vld [vmem:[#allocation2 + $0x81] sm:$0xff]
      %v1439 = vld [vmem:[#allocation2 + $0x91] sm:$0xff]
      %v1440 = vld [vmem:[#allocation2 + $0x99] sm:$0xff]
      %v1441 = vld [vmem:[#allocation2 + $0xa9] sm:$0xff]
      %v1442 = vld [vmem:[#allocation2 + $0xb1] sm:$0xff]
      %v1443 = vld [vmem:[#allocation2 + $0xc1] sm:$0xff]
      %v1444 = vld [vmem:[#allocation2 + $0xc9] sm:$0xff]
      %v1445 = vld [vmem:[#allocation2 + $0xd9] sm:$0xff]
      %v1446 = vld [vmem:[#allocation2 + $0xe1] sm:$0xff]
      %v1447 = vld [vmem:[#allocation2 + $0xf1] sm:$0xff]
      %v1448 = vld [vmem:[#allocation2 + $0xf9] sm:$0xff]
      %v1449 = vld [vmem:[#allocation2 + $0x109] sm:$0xff]
      %v1450 = vld [vmem:[#allocation2 + $0x111] sm:$0xff]
      %v1451 = vld [vmem:[#allocation2 + $0x121] sm:$0xff]
      %v1452 = vld [vmem:[#allocation2 + $0x129] sm:$0xff]
      %v1453 = vld [vmem:[#allocation2 + $0x139] sm:$0xff]
      %v1454 = vld [vmem:[#allocation2 + $0x141] sm:$0xff]
      %v1455 = vld [vmem:[#allocation2 + $0x151] sm:$0xff]
      %v1456 = vld [vmem:[#allocation2 + $0x159] sm:$0xff]
      %v1457 = vld [vmem:[#allocation2 + $0x169] sm:$0xff]
      %v1458 = vld [vmem:[#allocation2 + $0x171] sm:$0xff]
      %v1459 = vlaneseq
      %v1460 = vshrl.u32 %v1459, 7
      %v1461 = vsub.s32 1, %v1460
      %v1462 = vrot.slane %v1325, %v1461
      %v1463 = vmul.f32 %v1427, %v1462
      %v1464 = vmul.f32 %v1428, %v1462
      %v1465 = vmul.f32 %v1429, %v1462
      %v1466 = vmul.f32 %v1430, %v1462
      %v1467 = vmul.f32 %v1431, %v1462
      %v1468 = vmul.f32 %v1432, %v1462
      %v1469 = vmul.f32 %v1433, %v1462
      %v1470 = vmul.f32 %v1434, %v1462
      %v1471 = vmul.f32 %v1435, %v1462
      %v1472 = vmul.f32 %v1436, %v1462
      %v1473 = vmul.f32 %v1437, %v1462
      %v1474 = vmul.f32 %v1438, %v1462
      %v1475 = vmul.f32 %v1439, %v1462
      %v1476 = vmul.f32 %v1440, %v1462
      %v1477 = vmul.f32 %v1441, %v1462
      %v1478 = vmul.f32 %v1442, %v1462
      %v1479 = vmul.f32 %v1443, %v1462
      %v1480 = vmul.f32 %v1444, %v1462
      %v1481 = vmul.f32 %v1445, %v1462
      %v1482 = vmul.f32 %v1446, %v1462
      %v1483 = vmul.f32 %v1447, %v1462
      %v1484 = vmul.f32 %v1448, %v1462
      %v1485 = vmul.f32 %v1449, %v1462
      %v1486 = vmul.f32 %v1450, %v1462
      %v1487 = vmul.f32 %v1451, %v1462
      %v1488 = vmul.f32 %v1452, %v1462
      %v1489 = vmul.f32 %v1453, %v1462
      %v1490 = vmul.f32 %v1454, %v1462
      %v1491 = vmul.f32 %v1455, %v1462
      %v1492 = vmul.f32 %v1456, %v1462
      %v1493 = vmul.f32 %v1457, %v1462
      %v1494 = vmul.f32 %v1458, %v1462
      %v1495 = vadd.f32 %v1395, %v1463
      %v1496 = vadd.f32 %v1396, %v1464
      %v1497 = vadd.f32 %v1397, %v1465
      %v1498 = vadd.f32 %v1398, %v1466
      %v1499 = vadd.f32 %v1399, %v1467
      %v1500 = vadd.f32 %v1400, %v1468
      %v1501 = vadd.f32 %v1401, %v1469
      %v1502 = vadd.f32 %v1402, %v1470
      %v1503 = vadd.f32 %v1403, %v1471
      %v1504 = vadd.f32 %v1404, %v1472
      %v1505 = vadd.f32 %v1405, %v1473
      %v1506 = vadd.f32 %v1406, %v1474
      %v1507 = vadd.f32 %v1407, %v1475
      %v1508 = vadd.f32 %v1408, %v1476
      %v1509 = vadd.f32 %v1409, %v1477
      %v1510 = vadd.f32 %v1410, %v1478
      %v1511 = vadd.f32 %v1411, %v1479
      %v1512 = vadd.f32 %v1412, %v1480
      %v1513 = vadd.f32 %v1413, %v1481
      %v1514 = vadd.f32 %v1414, %v1482
      %v1515 = vadd.f32 %v1415, %v1483
      %v1516 = vadd.f32 %v1416, %v1484
      %v1517 = vadd.f32 %v1417, %v1485
      %v1518 = vadd.f32 %v1418, %v1486
      %v1519 = vadd.f32 %v1419, %v1487
      %v1520 = vadd.f32 %v1420, %v1488
      %v1521 = vadd.f32 %v1421, %v1489
      %v1522 = vadd.f32 %v1422, %v1490
      %v1523 = vadd.f32 %v1423, %v1491
      %v1524 = vadd.f32 %v1424, %v1492
      %v1525 = vadd.f32 %v1425, %v1493
      %v1526 = vadd.f32 %v1426, %v1494
      %v1527 = vld [vmem:[#allocation2 + $0x2] sm:$0xff]
      %v1528 = vld [vmem:[#allocation2 + $0xa] sm:$0xff]
      %v1529 = vld [vmem:[#allocation2 + $0x1a] sm:$0xff]
      %v1530 = vld [vmem:[#allocation2 + $0x22] sm:$0xff]
      %v1531 = vld [vmem:[#allocation2 + $0x32] sm:$0xff]
      %v1532 = vld [vmem:[#allocation2 + $0x3a] sm:$0xff]
      %v1533 = vld [vmem:[#allocation2 + $0x4a] sm:$0xff]
      %v1534 = vld [vmem:[#allocation2 + $0x52] sm:$0xff]
      %v1535 = vld [vmem:[#allocation2 + $0x62] sm:$0xff]
      %v1536 = vld [vmem:[#allocation2 + $0x6a] sm:$0xff]
      %v1537 = vld [vmem:[#allocation2 + $0x7a] sm:$0xff]
      %v1538 = vld [vmem:[#allocation2 + $0x82] sm:$0xff]
      %v1539 = vld [vmem:[#allocation2 + $0x92] sm:$0xff]
      %v1540 = vld [vmem:[#allocation2 + $0x9a] sm:$0xff]
      %v1541 = vld [vmem:[#allocation2 + $0xaa] sm:$0xff]
      %v1542 = vld [vmem:[#allocation2 + $0xb2] sm:$0xff]
      %v1543 = vld [vmem:[#allocation2 + $0xc2] sm:$0xff]
      %v1544 = vld [vmem:[#allocation2 + $0xca] sm:$0xff]
      %v1545 = vld [vmem:[#allocation2 + $0xda] sm:$0xff]
      %v1546 = vld [vmem:[#allocation2 + $0xe2] sm:$0xff]
      %v1547 = vld [vmem:[#allocation2 + $0xf2] sm:$0xff]
      %v1548 = vld [vmem:[#allocation2 + $0xfa] sm:$0xff]
      %v1549 = vld [vmem:[#allocation2 + $0x10a] sm:$0xff]
      %v1550 = vld [vmem:[#allocation2 + $0x112] sm:$0xff]
      %v1551 = vld [vmem:[#allocation2 + $0x122] sm:$0xff]
      %v1552 = vld [vmem:[#allocation2 + $0x12a] sm:$0xff]
      %v1553 = vld [vmem:[#allocation2 + $0x13a] sm:$0xff]
      %v1554 = vld [vmem:[#allocation2 + $0x142] sm:$0xff]
      %v1555 = vld [vmem:[#allocation2 + $0x152] sm:$0xff]
      %v1556 = vld [vmem:[#allocation2 + $0x15a] sm:$0xff]
      %v1557 = vld [vmem:[#allocation2 + $0x16a] sm:$0xff]
      %v1558 = vld [vmem:[#allocation2 + $0x172] sm:$0xff]
      %v1559 = vlaneseq
      %v1560 = vshrl.u32 %v1559, 7
      %v1561 = vsub.s32 2, %v1560
      %v1562 = vrot.slane %v1325, %v1561
      %v1563 = vmul.f32 %v1527, %v1562
      %v1564 = vmul.f32 %v1528, %v1562
      %v1565 = vmul.f32 %v1529, %v1562
      %v1566 = vmul.f32 %v1530, %v1562
      %v1567 = vmul.f32 %v1531, %v1562
      %v1568 = vmul.f32 %v1532, %v1562
      %v1569 = vmul.f32 %v1533, %v1562
      %v1570 = vmul.f32 %v1534, %v1562
      %v1571 = vmul.f32 %v1535, %v1562
      %v1572 = vmul.f32 %v1536, %v1562
      %v1573 = vmul.f32 %v1537, %v1562
      %v1574 = vmul.f32 %v1538, %v1562
      %v1575 = vmul.f32 %v1539, %v1562
      %v1576 = vmul.f32 %v1540, %v1562
      %v1577 = vmul.f32 %v1541, %v1562
      %v1578 = vmul.f32 %v1542, %v1562
      %v1579 = vmul.f32 %v1543, %v1562
      %v1580 = vmul.f32 %v1544, %v1562
      %v1581 = vmul.f32 %v1545, %v1562
      %v1582 = vmul.f32 %v1546, %v1562
      %v1583 = vmul.f32 %v1547, %v1562
      %v1584 = vmul.f32 %v1548, %v1562
      %v1585 = vmul.f32 %v1549, %v1562
      %v1586 = vmul.f32 %v1550, %v1562
      %v1587 = vmul.f32 %v1551, %v1562
      %v1588 = vmul.f32 %v1552, %v1562
      %v1589 = vmul.f32 %v1553, %v1562
      %v1590 = vmul.f32 %v1554, %v1562
      %v1591 = vmul.f32 %v1555, %v1562
      %v1592 = vmul.f32 %v1556, %v1562
      %v1593 = vmul.f32 %v1557, %v1562
      %v1594 = vmul.f32 %v1558, %v1562
      %v1595 = vadd.f32 %v1495, %v1563
      %v1596 = vadd.f32 %v1496, %v1564
      %v1597 = vadd.f32 %v1497, %v1565
      %v1598 = vadd.f32 %v1498, %v1566
      %v1599 = vadd.f32 %v1499, %v1567
      %v1600 = vadd.f32 %v1500, %v1568
      %v1601 = vadd.f32 %v1501, %v1569
      %v1602 = vadd.f32 %v1502, %v1570
      %v1603 = vadd.f32 %v1503, %v1571
      %v1604 = vadd.f32 %v1504, %v1572
      %v1605 = vadd.f32 %v1505, %v1573
      %v1606 = vadd.f32 %v1506, %v1574
      %v1607 = vadd.f32 %v1507, %v1575
      %v1608 = vadd.f32 %v1508, %v1576
      %v1609 = vadd.f32 %v1509, %v1577
      %v1610 = vadd.f32 %v1510, %v1578
      %v1611 = vadd.f32 %v1511, %v1579
      %v1612 = vadd.f32 %v1512, %v1580
      %v1613 = vadd.f32 %v1513, %v1581
      %v1614 = vadd.f32 %v1514, %v1582
      %v1615 = vadd.f32 %v1515, %v1583
      %v1616 = vadd.f32 %v1516, %v1584
      %v1617 = vadd.f32 %v1517, %v1585
      %v1618 = vadd.f32 %v1518, %v1586
      %v1619 = vadd.f32 %v1519, %v1587
      %v1620 = vadd.f32 %v1520, %v1588
      %v1621 = vadd.f32 %v1521, %v1589
      %v1622 = vadd.f32 %v1522, %v1590
      %v1623 = vadd.f32 %v1523, %v1591
      %v1624 = vadd.f32 %v1524, %v1592
      %v1625 = vadd.f32 %v1525, %v1593
      %v1626 = vadd.f32 %v1526, %v1594
      %v1627 = vld [vmem:[%s1259] sm:$0xff]
      %v1628 = vld [vmem:[%s1259 + $0x8] sm:$0xff]
      %v1629 = vld [vmem:[%s1259 + $0x18] sm:$0xff]
      %v1630 = vld [vmem:[%s1259 + $0x20] sm:$0xff]
      %v1631 = vld [vmem:[%s1259 + $0x30] sm:$0xff]
      %v1632 = vld [vmem:[%s1259 + $0x38] sm:$0xff]
      %v1633 = vld [vmem:[%s1259 + $0x48] sm:$0xff]
      %v1634 = vld [vmem:[%s1259 + $0x50] sm:$0xff]
      %v1635 = vld [vmem:[%s1259 + $0x60] sm:$0xff]
      %v1636 = vld [vmem:[%s1259 + $0x68] sm:$0xff]
      %v1637 = vld [vmem:[%s1259 + $0x78] sm:$0xff]
      %v1638 = vld [vmem:[%s1259 + $0x80] sm:$0xff]
      %v1639 = vld [vmem:[%s1259 + $0x90] sm:$0xff]
      %v1640 = vld [vmem:[%s1259 + $0x98] sm:$0xff]
      %v1641 = vld [vmem:[%s1259 + $0xa8] sm:$0xff]
      %v1642 = vld [vmem:[%s1259 + $0xb0] sm:$0xff]
      %v1643 = vld [vmem:[%s1259 + $0xc0] sm:$0xff]
      %v1644 = vld [vmem:[%s1259 + $0xc8] sm:$0xff]
      %v1645 = vld [vmem:[%s1259 + $0xd8] sm:$0xff]
      %v1646 = vld [vmem:[%s1259 + $0xe0] sm:$0xff]
      %v1647 = vld [vmem:[%s1259 + $0xf0] sm:$0xff]
      %v1648 = vld [vmem:[%s1259 + $0xf8] sm:$0xff]
      %v1649 = vld [vmem:[%s1259 + $0x108] sm:$0xff]
      %v1650 = vld [vmem:[%s1259 + $0x110] sm:$0xff]
      %v1651 = vld [vmem:[%s1259 + $0x120] sm:$0xff]
      %v1652 = vld [vmem:[%s1259 + $0x128] sm:$0xff]
      %v1653 = vld [vmem:[%s1259 + $0x138] sm:$0xff]
      %v1654 = vld [vmem:[%s1259 + $0x140] sm:$0xff]
      %v1655 = vld [vmem:[%s1259 + $0x150] sm:$0xff]
      %v1656 = vld [vmem:[%s1259 + $0x158] sm:$0xff]
      %v1657 = vld [vmem:[%s1259 + $0x168] sm:$0xff]
      %v1658 = vld [vmem:[%s1259 + $0x170] sm:$0xff]
      %v1659 = vlaneseq
      %v1660 = vshrl.u32 %v1659, 7
      %v1661 = vsub.s32 3, %v1660
      %v1662 = vrot.slane %v1325, %v1661
      %v1663 = vmul.f32 %v1627, %v1662
      %v1664 = vmul.f32 %v1628, %v1662
      %v1665 = vmul.f32 %v1629, %v1662
      %v1666 = vmul.f32 %v1630, %v1662
      %v1667 = vmul.f32 %v1631, %v1662
      %v1668 = vmul.f32 %v1632, %v1662
      %v1669 = vmul.f32 %v1633, %v1662
      %v1670 = vmul.f32 %v1634, %v1662
      %v1671 = vmul.f32 %v1635, %v1662
      %v1672 = vmul.f32 %v1636, %v1662
      %v1673 = vmul.f32 %v1637, %v1662
      %v1674 = vmul.f32 %v1638, %v1662
      %v1675 = vmul.f32 %v1639, %v1662
      %v1676 = vmul.f32 %v1640, %v1662
      %v1677 = vmul.f32 %v1641, %v1662
      %v1678 = vmul.f32 %v1642, %v1662
      %v1679 = vmul.f32 %v1643, %v1662
      %v1680 = vmul.f32 %v1644, %v1662
      %v1681 = vmul.f32 %v1645, %v1662
      %v1682 = vmul.f32 %v1646, %v1662
      %v1683 = vmul.f32 %v1647, %v1662
      %v1684 = vmul.f32 %v1648, %v1662
      %v1685 = vmul.f32 %v1649, %v1662
      %v1686 = vmul.f32 %v1650, %v1662
      %v1687 = vmul.f32 %v1651, %v1662
      %v1688 = vmul.f32 %v1652, %v1662
      %v1689 = vmul.f32 %v1653, %v1662
      %v1690 = vmul.f32 %v1654, %v1662
      %v1691 = vmul.f32 %v1655, %v1662
      %v1692 = vmul.f32 %v1656, %v1662
      %v1693 = vmul.f32 %v1657, %v1662
      %v1694 = vmul.f32 %v1658, %v1662
      %v1695 = vadd.f32 %v1595, %v1663
      %v1696 = vadd.f32 %v1596, %v1664
      %v1697 = vadd.f32 %v1597, %v1665
      %v1698 = vadd.f32 %v1598, %v1666
      %v1699 = vadd.f32 %v1599, %v1667
      %v1700 = vadd.f32 %v1600, %v1668
      %v1701 = vadd.f32 %v1601, %v1669
      %v1702 = vadd.f32 %v1602, %v1670
      %v1703 = vadd.f32 %v1603, %v1671
      %v1704 = vadd.f32 %v1604, %v1672
      %v1705 = vadd.f32 %v1605, %v1673
      %v1706 = vadd.f32 %v1606, %v1674
      %v1707 = vadd.f32 %v1607, %v1675
      %v1708 = vadd.f32 %v1608, %v1676
      %v1709 = vadd.f32 %v1609, %v1677
      %v1710 = vadd.f32 %v1610, %v1678
      %v1711 = vadd.f32 %v1611, %v1679
      %v1712 = vadd.f32 %v1612, %v1680
      %v1713 = vadd.f32 %v1613, %v1681
      %v1714 = vadd.f32 %v1614, %v1682
      %v1715 = vadd.f32 %v1615, %v1683
      %v1716 = vadd.f32 %v1616, %v1684
      %v1717 = vadd.f32 %v1617, %v1685
      %v1718 = vadd.f32 %v1618, %v1686
      %v1719 = vadd.f32 %v1619, %v1687
      %v1720 = vadd.f32 %v1620, %v1688
      %v1721 = vadd.f32 %v1621, %v1689
      %v1722 = vadd.f32 %v1622, %v1690
      %v1723 = vadd.f32 %v1623, %v1691
      %v1724 = vadd.f32 %v1624, %v1692
      %v1725 = vadd.f32 %v1625, %v1693
      %v1726 = vadd.f32 %v1626, %v1694
      %v1727 = vld [vmem:[%s1259 + $0x1] sm:$0xff]
      %v1728 = vld [vmem:[%s1259 + $0x9] sm:$0xff]
      %v1729 = vld [vmem:[%s1259 + $0x19] sm:$0xff]
      %v1730 = vld [vmem:[%s1259 + $0x21] sm:$0xff]
      %v1731 = vld [vmem:[%s1259 + $0x31] sm:$0xff]
      %v1732 = vld [vmem:[%s1259 + $0x39] sm:$0xff]
      %v1733 = vld [vmem:[%s1259 + $0x49] sm:$0xff]
      %v1734 = vld [vmem:[%s1259 + $0x51] sm:$0xff]
      %v1735 = vld [vmem:[%s1259 + $0x61] sm:$0xff]
      %v1736 = vld [vmem:[%s1259 + $0x69] sm:$0xff]
      %v1737 = vld [vmem:[%s1259 + $0x79] sm:$0xff]
      %v1738 = vld [vmem:[%s1259 + $0x81] sm:$0xff]
      %v1739 = vld [vmem:[%s1259 + $0x91] sm:$0xff]
      %v1740 = vld [vmem:[%s1259 + $0x99] sm:$0xff]
      %v1741 = vld [vmem:[%s1259 + $0xa9] sm:$0xff]
      %v1742 = vld [vmem:[%s1259 + $0xb1] sm:$0xff]
      %v1743 = vld [vmem:[%s1259 + $0xc1] sm:$0xff]
      %v1744 = vld [vmem:[%s1259 + $0xc9] sm:$0xff]
      %v1745 = vld [vmem:[%s1259 + $0xd9] sm:$0xff]
      %v1746 = vld [vmem:[%s1259 + $0xe1] sm:$0xff]
      %v1747 = vld [vmem:[%s1259 + $0xf1] sm:$0xff]
      %v1748 = vld [vmem:[%s1259 + $0xf9] sm:$0xff]
      %v1749 = vld [vmem:[%s1259 + $0x109] sm:$0xff]
      %v1750 = vld [vmem:[%s1259 + $0x111] sm:$0xff]
      %v1751 = vld [vmem:[%s1259 + $0x121] sm:$0xff]
      %v1752 = vld [vmem:[%s1259 + $0x129] sm:$0xff]
      %v1753 = vld [vmem:[%s1259 + $0x139] sm:$0xff]
      %v1754 = vld [vmem:[%s1259 + $0x141] sm:$0xff]
      %v1755 = vld [vmem:[%s1259 + $0x151] sm:$0xff]
      %v1756 = vld [vmem:[%s1259 + $0x159] sm:$0xff]
      %v1757 = vld [vmem:[%s1259 + $0x169] sm:$0xff]
      %v1758 = vld [vmem:[%s1259 + $0x171] sm:$0xff]
      %v1759 = vlaneseq
      %v1760 = vshrl.u32 %v1759, 7
      %v1761 = vsub.s32 4, %v1760
      %v1762 = vrot.slane %v1325, %v1761
      %v1763 = vmul.f32 %v1727, %v1762
      %v1764 = vmul.f32 %v1728, %v1762
      %v1765 = vmul.f32 %v1729, %v1762
      %v1766 = vmul.f32 %v1730, %v1762
      %v1767 = vmul.f32 %v1731, %v1762
      %v1768 = vmul.f32 %v1732, %v1762
      %v1769 = vmul.f32 %v1733, %v1762
      %v1770 = vmul.f32 %v1734, %v1762
      %v1771 = vmul.f32 %v1735, %v1762
      %v1772 = vmul.f32 %v1736, %v1762
      %v1773 = vmul.f32 %v1737, %v1762
      %v1774 = vmul.f32 %v1738, %v1762
      %v1775 = vmul.f32 %v1739, %v1762
      %v1776 = vmul.f32 %v1740, %v1762
      %v1777 = vmul.f32 %v1741, %v1762
      %v1778 = vmul.f32 %v1742, %v1762
      %v1779 = vmul.f32 %v1743, %v1762
      %v1780 = vmul.f32 %v1744, %v1762
      %v1781 = vmul.f32 %v1745, %v1762
      %v1782 = vmul.f32 %v1746, %v1762
      %v1783 = vmul.f32 %v1747, %v1762
      %v1784 = vmul.f32 %v1748, %v1762
      %v1785 = vmul.f32 %v1749, %v1762
      %v1786 = vmul.f32 %v1750, %v1762
      %v1787 = vmul.f32 %v1751, %v1762
      %v1788 = vmul.f32 %v1752, %v1762
      %v1789 = vmul.f32 %v1753, %v1762
      %v1790 = vmul.f32 %v1754, %v1762
      %v1791 = vmul.f32 %v1755, %v1762
      %v1792 = vmul.f32 %v1756, %v1762
      %v1793 = vmul.f32 %v1757, %v1762
      %v1794 = vmul.f32 %v1758, %v1762
      %v1795 = vadd.f32 %v1695, %v1763
      %v1796 = vadd.f32 %v1696, %v1764
      %v1797 = vadd.f32 %v1697, %v1765
      %v1798 = vadd.f32 %v1698, %v1766
      %v1799 = vadd.f32 %v1699, %v1767
      %v1800 = vadd.f32 %v1700, %v1768
      %v1801 = vadd.f32 %v1701, %v1769
      %v1802 = vadd.f32 %v1702, %v1770
      %v1803 = vadd.f32 %v1703, %v1771
      %v1804 = vadd.f32 %v1704, %v1772
      %v1805 = vadd.f32 %v1705, %v1773
      %v1806 = vadd.f32 %v1706, %v1774
      %v1807 = vadd.f32 %v1707, %v1775
      %v1808 = vadd.f32 %v1708, %v1776
      %v1809 = vadd.f32 %v1709, %v1777
      %v1810 = vadd.f32 %v1710, %v1778
      %v1811 = vadd.f32 %v1711, %v1779
      %v1812 = vadd.f32 %v1712, %v1780
      %v1813 = vadd.f32 %v1713, %v1781
      %v1814 = vadd.f32 %v1714, %v1782
      %v1815 = vadd.f32 %v1715, %v1783
      %v1816 = vadd.f32 %v1716, %v1784
      %v1817 = vadd.f32 %v1717, %v1785
      %v1818 = vadd.f32 %v1718, %v1786
      %v1819 = vadd.f32 %v1719, %v1787
      %v1820 = vadd.f32 %v1720, %v1788
      %v1821 = vadd.f32 %v1721, %v1789
      %v1822 = vadd.f32 %v1722, %v1790
      %v1823 = vadd.f32 %v1723, %v1791
      %v1824 = vadd.f32 %v1724, %v1792
      %v1825 = vadd.f32 %v1725, %v1793
      %v1826 = vadd.f32 %v1726, %v1794
      %v1827 = vld [vmem:[%s1259 + $0x2] sm:$0xff]
      %v1828 = vld [vmem:[%s1259 + $0xa] sm:$0xff]
      %v1829 = vld [vmem:[%s1259 + $0x1a] sm:$0xff]
      %v1830 = vld [vmem:[%s1259 + $0x22] sm:$0xff]
      %v1831 = vld [vmem:[%s1259 + $0x32] sm:$0xff]
      %v1832 = vld [vmem:[%s1259 + $0x3a] sm:$0xff]
      %v1833 = vld [vmem:[%s1259 + $0x4a] sm:$0xff]
      %v1834 = vld [vmem:[%s1259 + $0x52] sm:$0xff]
      %v1835 = vld [vmem:[%s1259 + $0x62] sm:$0xff]
      %v1836 = vld [vmem:[%s1259 + $0x6a] sm:$0xff]
      %v1837 = vld [vmem:[%s1259 + $0x7a] sm:$0xff]
      %v1838 = vld [vmem:[%s1259 + $0x82] sm:$0xff]
      %v1839 = vld [vmem:[%s1259 + $0x92] sm:$0xff]
      %v1840 = vld [vmem:[%s1259 + $0x9a] sm:$0xff]
      %v1841 = vld [vmem:[%s1259 + $0xaa] sm:$0xff]
      %v1842 = vld [vmem:[%s1259 + $0xb2] sm:$0xff]
      %v1843 = vld [vmem:[%s1259 + $0xc2] sm:$0xff]
      %v1844 = vld [vmem:[%s1259 + $0xca] sm:$0xff]
      %v1845 = vld [vmem:[%s1259 + $0xda] sm:$0xff]
      %v1846 = vld [vmem:[%s1259 + $0xe2] sm:$0xff]
      %v1847 = vld [vmem:[%s1259 + $0xf2] sm:$0xff]
      %v1848 = vld [vmem:[%s1259 + $0xfa] sm:$0xff]
      %v1849 = vld [vmem:[%s1259 + $0x10a] sm:$0xff]
      %v1850 = vld [vmem:[%s1259 + $0x112] sm:$0xff]
      %v1851 = vld [vmem:[%s1259 + $0x122] sm:$0xff]
      %v1852 = vld [vmem:[%s1259 + $0x12a] sm:$0xff]
      %v1853 = vld [vmem:[%s1259 + $0x13a] sm:$0xff]
      %v1854 = vld [vmem:[%s1259 + $0x142] sm:$0xff]
      %v1855 = vld [vmem:[%s1259 + $0x152] sm:$0xff]
      %v1856 = vld [vmem:[%s1259 + $0x15a] sm:$0xff]
      %v1857 = vld [vmem:[%s1259 + $0x16a] sm:$0xff]
      %v1858 = vld [vmem:[%s1259 + $0x172] sm:$0xff]
      %v1859 = vlaneseq
      %v1860 = vshrl.u32 %v1859, 7
      %v1861 = vsub.s32 5, %v1860
      %v1862 = vrot.slane %v1325, %v1861
      %v1863 = vmul.f32 %v1827, %v1862
      %v1864 = vmul.f32 %v1828, %v1862
      %v1865 = vmul.f32 %v1829, %v1862
      %v1866 = vmul.f32 %v1830, %v1862
      %v1867 = vmul.f32 %v1831, %v1862
      %v1868 = vmul.f32 %v1832, %v1862
      %v1869 = vmul.f32 %v1833, %v1862
      %v1870 = vmul.f32 %v1834, %v1862
      %v1871 = vmul.f32 %v1835, %v1862
      %v1872 = vmul.f32 %v1836, %v1862
      %v1873 = vmul.f32 %v1837, %v1862
      %v1874 = vmul.f32 %v1838, %v1862
      %v1875 = vmul.f32 %v1839, %v1862
      %v1876 = vmul.f32 %v1840, %v1862
      %v1877 = vmul.f32 %v1841, %v1862
      %v1878 = vmul.f32 %v1842, %v1862
      %v1879 = vmul.f32 %v1843, %v1862
      %v1880 = vmul.f32 %v1844, %v1862
      %v1881 = vmul.f32 %v1845, %v1862
      %v1882 = vmul.f32 %v1846, %v1862
      %v1883 = vmul.f32 %v1847, %v1862
      %v1884 = vmul.f32 %v1848, %v1862
      %v1885 = vmul.f32 %v1849, %v1862
      %v1886 = vmul.f32 %v1850, %v1862
      %v1887 = vmul.f32 %v1851, %v1862
      %v1888 = vmul.f32 %v1852, %v1862
      %v1889 = vmul.f32 %v1853, %v1862
      %v1890 = vmul.f32 %v1854, %v1862
      %v1891 = vmul.f32 %v1855, %v1862
      %v1892 = vmul.f32 %v1856, %v1862
      %v1893 = vmul.f32 %v1857, %v1862
      %v1894 = vmul.f32 %v1858, %v1862
      %v1895 = vadd.f32 %v1795, %v1863
      %v1896 = vadd.f32 %v1796, %v1864
      %v1897 = vadd.f32 %v1797, %v1865
      %v1898 = vadd.f32 %v1798, %v1866
      %v1899 = vadd.f32 %v1799, %v1867
      %v1900 = vadd.f32 %v1800, %v1868
      %v1901 = vadd.f32 %v1801, %v1869
      %v1902 = vadd.f32 %v1802, %v1870
      %v1903 = vadd.f32 %v1803, %v1871
      %v1904 = vadd.f32 %v1804, %v1872
      %v1905 = vadd.f32 %v1805, %v1873
      %v1906 = vadd.f32 %v1806, %v1874
      %v1907 = vadd.f32 %v1807, %v1875
      %v1908 = vadd.f32 %v1808, %v1876
      %v1909 = vadd.f32 %v1809, %v1877
      %v1910 = vadd.f32 %v1810, %v1878
      %v1911 = vadd.f32 %v1811, %v1879
      %v1912 = vadd.f32 %v1812, %v1880
      %v1913 = vadd.f32 %v1813, %v1881
      %v1914 = vadd.f32 %v1814, %v1882
      %v1915 = vadd.f32 %v1815, %v1883
      %v1916 = vadd.f32 %v1816, %v1884
      %v1917 = vadd.f32 %v1817, %v1885
      %v1918 = vadd.f32 %v1818, %v1886
      %v1919 = vadd.f32 %v1819, %v1887
      %v1920 = vadd.f32 %v1820, %v1888
      %v1921 = vadd.f32 %v1821, %v1889
      %v1922 = vadd.f32 %v1822, %v1890
      %v1923 = vadd.f32 %v1823, %v1891
      %v1924 = vadd.f32 %v1824, %v1892
      %v1925 = vadd.f32 %v1825, %v1893
      %v1926 = vadd.f32 %v1826, %v1894
      %s1927 = scalar_lea.vmem [#allocation2], 48
      %v1928 = vld [vmem:[%s1927] sm:$0xff]
      %v1929 = vld [vmem:[%s1927 + $0x8] sm:$0xff]
      %v1930 = vld [vmem:[%s1927 + $0x18] sm:$0xff]
      %v1931 = vld [vmem:[%s1927 + $0x20] sm:$0xff]
      %v1932 = vld [vmem:[%s1927 + $0x30] sm:$0xff]
      %v1933 = vld [vmem:[%s1927 + $0x38] sm:$0xff]
      %v1934 = vld [vmem:[%s1927 + $0x48] sm:$0xff]
      %v1935 = vld [vmem:[%s1927 + $0x50] sm:$0xff]
      %v1936 = vld [vmem:[%s1927 + $0x60] sm:$0xff]
      %v1937 = vld [vmem:[%s1927 + $0x68] sm:$0xff]
      %v1938 = vld [vmem:[%s1927 + $0x78] sm:$0xff]
      %v1939 = vld [vmem:[%s1927 + $0x80] sm:$0xff]
      %v1940 = vld [vmem:[%s1927 + $0x90] sm:$0xff]
      %v1941 = vld [vmem:[%s1927 + $0x98] sm:$0xff]
      %v1942 = vld [vmem:[%s1927 + $0xa8] sm:$0xff]
      %v1943 = vld [vmem:[%s1927 + $0xb0] sm:$0xff]
      %v1944 = vld [vmem:[%s1927 + $0xc0] sm:$0xff]
      %v1945 = vld [vmem:[%s1927 + $0xc8] sm:$0xff]
      %v1946 = vld [vmem:[%s1927 + $0xd8] sm:$0xff]
      %v1947 = vld [vmem:[%s1927 + $0xe0] sm:$0xff]
      %v1948 = vld [vmem:[%s1927 + $0xf0] sm:$0xff]
      %v1949 = vld [vmem:[%s1927 + $0xf8] sm:$0xff]
      %v1950 = vld [vmem:[%s1927 + $0x108] sm:$0xff]
      %v1951 = vld [vmem:[%s1927 + $0x110] sm:$0xff]
      %v1952 = vld [vmem:[%s1927 + $0x120] sm:$0xff]
      %v1953 = vld [vmem:[%s1927 + $0x128] sm:$0xff]
      %v1954 = vld [vmem:[%s1927 + $0x138] sm:$0xff]
      %v1955 = vld [vmem:[%s1927 + $0x140] sm:$0xff]
      %v1956 = vld [vmem:[%s1927 + $0x150] sm:$0xff]
      %v1957 = vld [vmem:[%s1927 + $0x158] sm:$0xff]
      %v1958 = vld [vmem:[%s1927 + $0x168] sm:$0xff]
      %v1959 = vld [vmem:[%s1927 + $0x170] sm:$0xff]
      %v1960 = vlaneseq
      %v1961 = vshrl.u32 %v1960, 7
      %v1962 = vsub.s32 6, %v1961
      %v1963 = vrot.slane %v1325, %v1962
      %v1964 = vmul.f32 %v1928, %v1963
      %v1965 = vmul.f32 %v1929, %v1963
      %v1966 = vmul.f32 %v1930, %v1963
      %v1967 = vmul.f32 %v1931, %v1963
      %v1968 = vmul.f32 %v1932, %v1963
      %v1969 = vmul.f32 %v1933, %v1963
      %v1970 = vmul.f32 %v1934, %v1963
      %v1971 = vmul.f32 %v1935, %v1963
      %v1972 = vmul.f32 %v1936, %v1963
      %v1973 = vmul.f32 %v1937, %v1963
      %v1974 = vmul.f32 %v1938, %v1963
      %v1975 = vmul.f32 %v1939, %v1963
      %v1976 = vmul.f32 %v1940, %v1963
      %v1977 = vmul.f32 %v1941, %v1963
      %v1978 = vmul.f32 %v1942, %v1963
      %v1979 = vmul.f32 %v1943, %v1963
      %v1980 = vmul.f32 %v1944, %v1963
      %v1981 = vmul.f32 %v1945, %v1963
      %v1982 = vmul.f32 %v1946, %v1963
      %v1983 = vmul.f32 %v1947, %v1963
      %v1984 = vmul.f32 %v1948, %v1963
      %v1985 = vmul.f32 %v1949, %v1963
      %v1986 = vmul.f32 %v1950, %v1963
      %v1987 = vmul.f32 %v1951, %v1963
      %v1988 = vmul.f32 %v1952, %v1963
      %v1989 = vmul.f32 %v1953, %v1963
      %v1990 = vmul.f32 %v1954, %v1963
      %v1991 = vmul.f32 %v1955, %v1963
      %v1992 = vmul.f32 %v1956, %v1963
      %v1993 = vmul.f32 %v1957, %v1963
      %v1994 = vmul.f32 %v1958, %v1963
      %v1995 = vmul.f32 %v1959, %v1963
      %v1996 = vadd.f32 %v1895, %v1964
      %v1997 = vadd.f32 %v1896, %v1965
      %v1998 = vadd.f32 %v1897, %v1966
      %v1999 = vadd.f32 %v1898, %v1967
      %v2000 = vadd.f32 %v1899, %v1968
      %v2001 = vadd.f32 %v1900, %v1969
      %v2002 = vadd.f32 %v1901, %v1970
      %v2003 = vadd.f32 %v1902, %v1971
      %v2004 = vadd.f32 %v1903, %v1972
      %v2005 = vadd.f32 %v1904, %v1973
      %v2006 = vadd.f32 %v1905, %v1974
      %v2007 = vadd.f32 %v1906, %v1975
      %v2008 = vadd.f32 %v1907, %v1976
      %v2009 = vadd.f32 %v1908, %v1977
      %v2010 = vadd.f32 %v1909, %v1978
      %v2011 = vadd.f32 %v1910, %v1979
      %v2012 = vadd.f32 %v1911, %v1980
      %v2013 = vadd.f32 %v1912, %v1981
      %v2014 = vadd.f32 %v1913, %v1982
      %v2015 = vadd.f32 %v1914, %v1983
      %v2016 = vadd.f32 %v1915, %v1984
      %v2017 = vadd.f32 %v1916, %v1985
      %v2018 = vadd.f32 %v1917, %v1986
      %v2019 = vadd.f32 %v1918, %v1987
      %v2020 = vadd.f32 %v1919, %v1988
      %v2021 = vadd.f32 %v1920, %v1989
      %v2022 = vadd.f32 %v1921, %v1990
      %v2023 = vadd.f32 %v1922, %v1991
      %v2024 = vadd.f32 %v1923, %v1992
      %v2025 = vadd.f32 %v1924, %v1993
      %v2026 = vadd.f32 %v1925, %v1994
      %v2027 = vadd.f32 %v1926, %v1995
      %v2028 = vld [vmem:[%s1927 + $0x1] sm:$0xff]
      %v2029 = vld [vmem:[%s1927 + $0x9] sm:$0xff]
      %v2030 = vld [vmem:[%s1927 + $0x19] sm:$0xff]
      %v2031 = vld [vmem:[%s1927 + $0x21] sm:$0xff]
      %v2032 = vld [vmem:[%s1927 + $0x31] sm:$0xff]
      %v2033 = vld [vmem:[%s1927 + $0x39] sm:$0xff]
      %v2034 = vld [vmem:[%s1927 + $0x49] sm:$0xff]
      %v2035 = vld [vmem:[%s1927 + $0x51] sm:$0xff]
      %v2036 = vld [vmem:[%s1927 + $0x61] sm:$0xff]
      %v2037 = vld [vmem:[%s1927 + $0x69] sm:$0xff]
      %v2038 = vld [vmem:[%s1927 + $0x79] sm:$0xff]
      %v2039 = vld [vmem:[%s1927 + $0x81] sm:$0xff]
      %v2040 = vld [vmem:[%s1927 + $0x91] sm:$0xff]
      %v2041 = vld [vmem:[%s1927 + $0x99] sm:$0xff]
      %v2042 = vld [vmem:[%s1927 + $0xa9] sm:$0xff]
      %v2043 = vld [vmem:[%s1927 + $0xb1] sm:$0xff]
      %v2044 = vld [vmem:[%s1927 + $0xc1] sm:$0xff]
      %v2045 = vld [vmem:[%s1927 + $0xc9] sm:$0xff]
      %v2046 = vld [vmem:[%s1927 + $0xd9] sm:$0xff]
      %v2047 = vld [vmem:[%s1927 + $0xe1] sm:$0xff]
      %v2048 = vld [vmem:[%s1927 + $0xf1] sm:$0xff]
      %v2049 = vld [vmem:[%s1927 + $0xf9] sm:$0xff]
      %v2050 = vld [vmem:[%s1927 + $0x109] sm:$0xff]
      %v2051 = vld [vmem:[%s1927 + $0x111] sm:$0xff]
      %v2052 = vld [vmem:[%s1927 + $0x121] sm:$0xff]
      %v2053 = vld [vmem:[%s1927 + $0x129] sm:$0xff]
      %v2054 = vld [vmem:[%s1927 + $0x139] sm:$0xff]
      %v2055 = vld [vmem:[%s1927 + $0x141] sm:$0xff]
      %v2056 = vld [vmem:[%s1927 + $0x151] sm:$0xff]
      %v2057 = vld [vmem:[%s1927 + $0x159] sm:$0xff]
      %v2058 = vld [vmem:[%s1927 + $0x169] sm:$0xff]
      %v2059 = vld [vmem:[%s1927 + $0x171] sm:$0xff]
      %v2060 = vlaneseq
      %v2061 = vshrl.u32 %v2060, 7
      %v2062 = vsub.s32 7, %v2061
      %v2063 = vrot.slane %v1325, %v2062
      %v2064 = vmul.f32 %v2028, %v2063
      %v2065 = vmul.f32 %v2029, %v2063
      %v2066 = vmul.f32 %v2030, %v2063
      %v2067 = vmul.f32 %v2031, %v2063
      %v2068 = vmul.f32 %v2032, %v2063
      %v2069 = vmul.f32 %v2033, %v2063
      %v2070 = vmul.f32 %v2034, %v2063
      %v2071 = vmul.f32 %v2035, %v2063
      %v2072 = vmul.f32 %v2036, %v2063
      %v2073 = vmul.f32 %v2037, %v2063
      %v2074 = vmul.f32 %v2038, %v2063
      %v2075 = vmul.f32 %v2039, %v2063
      %v2076 = vmul.f32 %v2040, %v2063
      %v2077 = vmul.f32 %v2041, %v2063
      %v2078 = vmul.f32 %v2042, %v2063
      %v2079 = vmul.f32 %v2043, %v2063
      %v2080 = vmul.f32 %v2044, %v2063
      %v2081 = vmul.f32 %v2045, %v2063
      %v2082 = vmul.f32 %v2046, %v2063
      %v2083 = vmul.f32 %v2047, %v2063
      %v2084 = vmul.f32 %v2048, %v2063
      %v2085 = vmul.f32 %v2049, %v2063
      %v2086 = vmul.f32 %v2050, %v2063
      %v2087 = vmul.f32 %v2051, %v2063
      %v2088 = vmul.f32 %v2052, %v2063
      %v2089 = vmul.f32 %v2053, %v2063
      %v2090 = vmul.f32 %v2054, %v2063
      %v2091 = vmul.f32 %v2055, %v2063
      %v2092 = vmul.f32 %v2056, %v2063
      %v2093 = vmul.f32 %v2057, %v2063
      %v2094 = vmul.f32 %v2058, %v2063
      %v2095 = vmul.f32 %v2059, %v2063
      %v2096 = vadd.f32 %v1996, %v2064
      %v2097 = vadd.f32 %v1997, %v2065
      %v2098 = vadd.f32 %v1998, %v2066
      %v2099 = vadd.f32 %v1999, %v2067
      %v2100 = vadd.f32 %v2000, %v2068
      %v2101 = vadd.f32 %v2001, %v2069
      %v2102 = vadd.f32 %v2002, %v2070
      %v2103 = vadd.f32 %v2003, %v2071
      %v2104 = vadd.f32 %v2004, %v2072
      %v2105 = vadd.f32 %v2005, %v2073
      %v2106 = vadd.f32 %v2006, %v2074
      %v2107 = vadd.f32 %v2007, %v2075
      %v2108 = vadd.f32 %v2008, %v2076
      %v2109 = vadd.f32 %v2009, %v2077
      %v2110 = vadd.f32 %v2010, %v2078
      %v2111 = vadd.f32 %v2011, %v2079
      %v2112 = vadd.f32 %v2012, %v2080
      %v2113 = vadd.f32 %v2013, %v2081
      %v2114 = vadd.f32 %v2014, %v2082
      %v2115 = vadd.f32 %v2015, %v2083
      %v2116 = vadd.f32 %v2016, %v2084
      %v2117 = vadd.f32 %v2017, %v2085
      %v2118 = vadd.f32 %v2018, %v2086
      %v2119 = vadd.f32 %v2019, %v2087
      %v2120 = vadd.f32 %v2020, %v2088
      %v2121 = vadd.f32 %v2021, %v2089
      %v2122 = vadd.f32 %v2022, %v2090
      %v2123 = vadd.f32 %v2023, %v2091
      %v2124 = vadd.f32 %v2024, %v2092
      %v2125 = vadd.f32 %v2025, %v2093
      %v2126 = vadd.f32 %v2026, %v2094
      %v2127 = vadd.f32 %v2027, %v2095
      %v2128 = vld [vmem:[%s1927 + $0x2] sm:$0xff]
      %v2129 = vld [vmem:[%s1927 + $0xa] sm:$0xff]
      %v2130 = vld [vmem:[%s1927 + $0x1a] sm:$0xff]
      %v2131 = vld [vmem:[%s1927 + $0x22] sm:$0xff]
      %v2132 = vld [vmem:[%s1927 + $0x32] sm:$0xff]
      %v2133 = vld [vmem:[%s1927 + $0x3a] sm:$0xff]
      %v2134 = vld [vmem:[%s1927 + $0x4a] sm:$0xff]
      %v2135 = vld [vmem:[%s1927 + $0x52] sm:$0xff]
      %v2136 = vld [vmem:[%s1927 + $0x62] sm:$0xff]
      %v2137 = vld [vmem:[%s1927 + $0x6a] sm:$0xff]
      %v2138 = vld [vmem:[%s1927 + $0x7a] sm:$0xff]
      %v2139 = vld [vmem:[%s1927 + $0x82] sm:$0xff]
      %v2140 = vld [vmem:[%s1927 + $0x92] sm:$0xff]
      %v2141 = vld [vmem:[%s1927 + $0x9a] sm:$0xff]
      %v2142 = vld [vmem:[%s1927 + $0xaa] sm:$0xff]
      %v2143 = vld [vmem:[%s1927 + $0xb2] sm:$0xff]
      %v2144 = vld [vmem:[%s1927 + $0xc2] sm:$0xff]
      %v2145 = vld [vmem:[%s1927 + $0xca] sm:$0xff]
      %v2146 = vld [vmem:[%s1927 + $0xda] sm:$0xff]
      %v2147 = vld [vmem:[%s1927 + $0xe2] sm:$0xff]
      %v2148 = vld [vmem:[%s1927 + $0xf2] sm:$0xff]
      %v2149 = vld [vmem:[%s1927 + $0xfa] sm:$0xff]
      %v2150 = vld [vmem:[%s1927 + $0x10a] sm:$0xff]
      %v2151 = vld [vmem:[%s1927 + $0x112] sm:$0xff]
      %v2152 = vld [vmem:[%s1927 + $0x122] sm:$0xff]
      %v2153 = vld [vmem:[%s1927 + $0x12a] sm:$0xff]
      %v2154 = vld [vmem:[%s1927 + $0x13a] sm:$0xff]
      %v2155 = vld [vmem:[%s1927 + $0x142] sm:$0xff]
      %v2156 = vld [vmem:[%s1927 + $0x152] sm:$0xff]
      %v2157 = vld [vmem:[%s1927 + $0x15a] sm:$0xff]
      %v2158 = vld [vmem:[%s1927 + $0x16a] sm:$0xff]
      %v2159 = vld [vmem:[%s1927 + $0x172] sm:$0xff]
      %v2160 = vlaneseq
      %v2161 = vshrl.u32 %v2160, 7
      %v2162 = vsub.s32 0, %v2161
      %v2163 = vrot.slane %v1326, %v2162
      %v2164 = vmul.f32 %v2128, %v2163
      %v2165 = vmul.f32 %v2129, %v2163
      %v2166 = vmul.f32 %v2130, %v2163
      %v2167 = vmul.f32 %v2131, %v2163
      %v2168 = vmul.f32 %v2132, %v2163
      %v2169 = vmul.f32 %v2133, %v2163
      %v2170 = vmul.f32 %v2134, %v2163
      %v2171 = vmul.f32 %v2135, %v2163
      %v2172 = vmul.f32 %v2136, %v2163
      %v2173 = vmul.f32 %v2137, %v2163
      %v2174 = vmul.f32 %v2138, %v2163
      %v2175 = vmul.f32 %v2139, %v2163
      %v2176 = vmul.f32 %v2140, %v2163
      %v2177 = vmul.f32 %v2141, %v2163
      %v2178 = vmul.f32 %v2142, %v2163
      %v2179 = vmul.f32 %v2143, %v2163
      %v2180 = vmul.f32 %v2144, %v2163
      %v2181 = vmul.f32 %v2145, %v2163
      %v2182 = vmul.f32 %v2146, %v2163
      %v2183 = vmul.f32 %v2147, %v2163
      %v2184 = vmul.f32 %v2148, %v2163
      %v2185 = vmul.f32 %v2149, %v2163
      %v2186 = vmul.f32 %v2150, %v2163
      %v2187 = vmul.f32 %v2151, %v2163
      %v2188 = vmul.f32 %v2152, %v2163
      %v2189 = vmul.f32 %v2153, %v2163
      %v2190 = vmul.f32 %v2154, %v2163
      %v2191 = vmul.f32 %v2155, %v2163
      %v2192 = vmul.f32 %v2156, %v2163
      %v2193 = vmul.f32 %v2157, %v2163
      %v2194 = vmul.f32 %v2158, %v2163
      %v2195 = vmul.f32 %v2159, %v2163
      %v2196 = vadd.f32 %v2096, %v2164
      %v2197 = vadd.f32 %v2097, %v2165
      %v2198 = vadd.f32 %v2098, %v2166
      %v2199 = vadd.f32 %v2099, %v2167
      %v2200 = vadd.f32 %v2100, %v2168
      %v2201 = vadd.f32 %v2101, %v2169
      %v2202 = vadd.f32 %v2102, %v2170
      %v2203 = vadd.f32 %v2103, %v2171
      %v2204 = vadd.f32 %v2104, %v2172
      %v2205 = vadd.f32 %v2105, %v2173
      %v2206 = vadd.f32 %v2106, %v2174
      %v2207 = vadd.f32 %v2107, %v2175
      %v2208 = vadd.f32 %v2108, %v2176
      %v2209 = vadd.f32 %v2109, %v2177
      %v2210 = vadd.f32 %v2110, %v2178
      %v2211 = vadd.f32 %v2111, %v2179
      %v2212 = vadd.f32 %v2112, %v2180
      %v2213 = vadd.f32 %v2113, %v2181
      %v2214 = vadd.f32 %v2114, %v2182
      %v2215 = vadd.f32 %v2115, %v2183
      %v2216 = vadd.f32 %v2116, %v2184
      %v2217 = vadd.f32 %v2117, %v2185
      %v2218 = vadd.f32 %v2118, %v2186
      %v2219 = vadd.f32 %v2119, %v2187
      %v2220 = vadd.f32 %v2120, %v2188
      %v2221 = vadd.f32 %v2121, %v2189
      %v2222 = vadd.f32 %v2122, %v2190
      %v2223 = vadd.f32 %v2123, %v2191
      %v2224 = vadd.f32 %v2124, %v2192
      %v2225 = vadd.f32 %v2125, %v2193
      %v2226 = vadd.f32 %v2126, %v2194
      %v2227 = vadd.f32 %v2127, %v2195
      %v2228 = vld [vmem:[%s5] sm:$0x1]
      %v2230 = vlaneseq
      %v2231 = vshrl.u32 %v2230, 7
      %v2232 = vsub.s32 0, %v2231
      %v2233 = vrot.slane %v2228, %v2232
      %v2235 = vadd.f32 %v2196, %v2233
      %v2236 = vadd.f32 %v2197, %v2233
      %v2237 = vadd.f32 %v2198, %v2233
      %v2238 = vadd.f32 %v2199, %v2233
      %v2239 = vadd.f32 %v2200, %v2233
      %v2240 = vadd.f32 %v2201, %v2233
      %v2241 = vadd.f32 %v2202, %v2233
      %v2242 = vadd.f32 %v2203, %v2233
      %v2243 = vadd.f32 %v2204, %v2233
      %v2244 = vadd.f32 %v2205, %v2233
      %v2245 = vadd.f32 %v2206, %v2233
      %v2246 = vadd.f32 %v2207, %v2233
      %v2247 = vadd.f32 %v2208, %v2233
      %v2248 = vadd.f32 %v2209, %v2233
      %v2249 = vadd.f32 %v2210, %v2233
      %v2250 = vadd.f32 %v2211, %v2233
      %v2251 = vadd.f32 %v2212, %v2233
      %v2252 = vadd.f32 %v2213, %v2233
      %v2253 = vadd.f32 %v2214, %v2233
      %v2254 = vadd.f32 %v2215, %v2233
      %v2255 = vadd.f32 %v2216, %v2233
      %v2256 = vadd.f32 %v2217, %v2233
      %v2257 = vadd.f32 %v2218, %v2233
      %v2258 = vadd.f32 %v2219, %v2233
      %v2259 = vadd.f32 %v2220, %v2233
      %v2260 = vadd.f32 %v2221, %v2233
      %v2261 = vadd.f32 %v2222, %v2233
      %v2262 = vadd.f32 %v2223, %v2233
      %v2263 = vadd.f32 %v2224, %v2233
      %v2264 = vadd.f32 %v2225, %v2233
      %v2265 = vadd.f32 %v2226, %v2233
      %v2266 = vadd.f32 %v2227, %v2233
      %v2267 = vxor.u32 %v2235, 2147483648
      %v2268 = vxor.u32 %v2236, 2147483648
      %v2269 = vxor.u32 %v2237, 2147483648
      %v2270 = vxor.u32 %v2238, 2147483648
      %v2271 = vxor.u32 %v2239, 2147483648
      %v2272 = vxor.u32 %v2240, 2147483648
      %v2273 = vxor.u32 %v2241, 2147483648
      %v2274 = vxor.u32 %v2242, 2147483648
      %v2275 = vxor.u32 %v2243, 2147483648
      %v2276 = vxor.u32 %v2244, 2147483648
      %v2277 = vxor.u32 %v2245, 2147483648
      %v2278 = vxor.u32 %v2246, 2147483648
      %v2279 = vxor.u32 %v2247, 2147483648
      %v2280 = vxor.u32 %v2248, 2147483648
      %v2281 = vxor.u32 %v2249, 2147483648
      %v2282 = vxor.u32 %v2250, 2147483648
      %v2283 = vxor.u32 %v2251, 2147483648
      %v2284 = vxor.u32 %v2252, 2147483648
      %v2285 = vxor.u32 %v2253, 2147483648
      %v2286 = vxor.u32 %v2254, 2147483648
      %v2287 = vxor.u32 %v2255, 2147483648
      %v2288 = vxor.u32 %v2256, 2147483648
      %v2289 = vxor.u32 %v2257, 2147483648
      %v2290 = vxor.u32 %v2258, 2147483648
      %v2291 = vxor.u32 %v2259, 2147483648
      %v2292 = vxor.u32 %v2260, 2147483648
      %v2293 = vxor.u32 %v2261, 2147483648
      %v2294 = vxor.u32 %v2262, 2147483648
      %v2295 = vxor.u32 %v2263, 2147483648
      %v2296 = vxor.u32 %v2264, 2147483648
      %v2297 = vxor.u32 %v2265, 2147483648
      %v2298 = vxor.u32 %v2266, 2147483648
      %v2299 = vmul.f32 %v2267, 1.442695
      %v2300 = vpow.pop %v2299
      %v2301 = vmul.f32 %v2268, 1.442695
      %v2302 = vpow.pop %v2301
      %v2303 = vmul.f32 %v2269, 1.442695
      %v2304 = vpow.pop %v2303
      %v2305 = vmul.f32 %v2270, 1.442695
      %v2306 = vpow.pop %v2305
      %v2307 = vmul.f32 %v2271, 1.442695
      %v2308 = vpow.pop %v2307
      %v2309 = vmul.f32 %v2272, 1.442695
      %v2310 = vpow.pop %v2309
      %v2311 = vmul.f32 %v2273, 1.442695
      %v2312 = vpow.pop %v2311
      %v2313 = vmul.f32 %v2274, 1.442695
      %v2314 = vpow.pop %v2313
      %v2315 = vmul.f32 %v2275, 1.442695
      %v2316 = vpow.pop %v2315
      %v2317 = vmul.f32 %v2276, 1.442695
      %v2318 = vpow.pop %v2317
      %v2319 = vmul.f32 %v2277, 1.442695
      %v2320 = vpow.pop %v2319
      %v2321 = vmul.f32 %v2278, 1.442695
      %v2322 = vpow.pop %v2321
      %v2323 = vmul.f32 %v2279, 1.442695
      %v2324 = vpow.pop %v2323
      %v2325 = vmul.f32 %v2280, 1.442695
      %v2326 = vpow.pop %v2325
      %v2327 = vmul.f32 %v2281, 1.442695
      %v2328 = vpow.pop %v2327
      %v2329 = vmul.f32 %v2282, 1.442695
      %v2330 = vpow.pop %v2329
      %v2331 = vmul.f32 %v2283, 1.442695
      %v2332 = vpow.pop %v2331
      %v2333 = vmul.f32 %v2284, 1.442695
      %v2334 = vpow.pop %v2333
      %v2335 = vmul.f32 %v2285, 1.442695
      %v2336 = vpow.pop %v2335
      %v2337 = vmul.f32 %v2286, 1.442695
      %v2338 = vpow.pop %v2337
      %v2339 = vmul.f32 %v2287, 1.442695
      %v2340 = vpow.pop %v2339
      %v2341 = vmul.f32 %v2288, 1.442695
      %v2342 = vpow.pop %v2341
      %v2343 = vmul.f32 %v2289, 1.442695
      %v2344 = vpow.pop %v2343
      %v2345 = vmul.f32 %v2290, 1.442695
      %v2346 = vpow.pop %v2345
      %v2347 = vmul.f32 %v2291, 1.442695
      %v2348 = vpow.pop %v2347
      %v2349 = vmul.f32 %v2292, 1.442695
      %v2350 = vpow.pop %v2349
      %v2351 = vmul.f32 %v2293, 1.442695
      %v2352 = vpow.pop %v2351
      %v2353 = vmul.f32 %v2294, 1.442695
      %v2354 = vpow.pop %v2353
      %v2355 = vmul.f32 %v2295, 1.442695
      %v2356 = vpow.pop %v2355
      %v2357 = vmul.f32 %v2296, 1.442695
      %v2358 = vpow.pop %v2357
      %v2359 = vmul.f32 %v2297, 1.442695
      %v2360 = vpow.pop %v2359
      %v2361 = vmul.f32 %v2298, 1.442695
      %v2362 = vpow.pop %v2361
      %v2363 = vadd.f32 %v2300, 1.0
      %v2364 = vadd.f32 %v2302, 1.0
      %v2365 = vadd.f32 %v2304, 1.0
      %v2366 = vadd.f32 %v2306, 1.0
      %v2367 = vadd.f32 %v2308, 1.0
      %v2368 = vadd.f32 %v2310, 1.0
      %v2369 = vadd.f32 %v2312, 1.0
      %v2370 = vadd.f32 %v2314, 1.0
      %v2371 = vadd.f32 %v2316, 1.0
      %v2372 = vadd.f32 %v2318, 1.0
      %v2373 = vadd.f32 %v2320, 1.0
      %v2374 = vadd.f32 %v2322, 1.0
      %v2375 = vadd.f32 %v2324, 1.0
      %v2376 = vadd.f32 %v2326, 1.0
      %v2377 = vadd.f32 %v2328, 1.0
      %v2378 = vadd.f32 %v2330, 1.0
      %v2379 = vadd.f32 %v2332, 1.0
      %v2380 = vadd.f32 %v2334, 1.0
      %v2381 = vadd.f32 %v2336, 1.0
      %v2382 = vadd.f32 %v2338, 1.0
      %v2383 = vadd.f32 %v2340, 1.0
      %v2384 = vadd.f32 %v2342, 1.0
      %v2385 = vadd.f32 %v2344, 1.0
      %v2386 = vadd.f32 %v2346, 1.0
      %v2387 = vadd.f32 %v2348, 1.0
      %v2388 = vadd.f32 %v2350, 1.0
      %v2389 = vadd.f32 %v2352, 1.0
      %v2390 = vadd.f32 %v2354, 1.0
      %v2391 = vadd.f32 %v2356, 1.0
      %v2392 = vadd.f32 %v2358, 1.0
      %v2393 = vadd.f32 %v2360, 1.0
      %v2394 = vadd.f32 %v2362, 1.0
      %v2395 = vrcp.pop %v2363
      %v2396 = vmul.f32 1.0, %v2395
      %v2397 = vrcp.pop %v2364
      %v2398 = vmul.f32 1.0, %v2397
      %v2399 = vrcp.pop %v2365
      %v2400 = vmul.f32 1.0, %v2399
      %v2401 = vrcp.pop %v2366
      %v2402 = vmul.f32 1.0, %v2401
      %v2403 = vrcp.pop %v2367
      %v2404 = vmul.f32 1.0, %v2403
      %v2405 = vrcp.pop %v2368
      %v2406 = vmul.f32 1.0, %v2405
      %v2407 = vrcp.pop %v2369
      %v2408 = vmul.f32 1.0, %v2407
      %v2409 = vrcp.pop %v2370
      %v2410 = vmul.f32 1.0, %v2409
      %v2411 = vrcp.pop %v2371
      %v2412 = vmul.f32 1.0, %v2411
      %v2413 = vrcp.pop %v2372
      %v2414 = vmul.f32 1.0, %v2413
      %v2415 = vrcp.pop %v2373
      %v2416 = vmul.f32 1.0, %v2415
      %v2417 = vrcp.pop %v2374
      %v2418 = vmul.f32 1.0, %v2417
      %v2419 = vrcp.pop %v2375
      %v2420 = vmul.f32 1.0, %v2419
      %v2421 = vrcp.pop %v2376
      %v2422 = vmul.f32 1.0, %v2421
      %v2423 = vrcp.pop %v2377
      %v2424 = vmul.f32 1.0, %v2423
      %v2425 = vrcp.pop %v2378
      %v2426 = vmul.f32 1.0, %v2425
      %v2427 = vrcp.pop %v2379
      %v2428 = vmul.f32 1.0, %v2427
      %v2429 = vrcp.pop %v2380
      %v2430 = vmul.f32 1.0, %v2429
      %v2431 = vrcp.pop %v2381
      %v2432 = vmul.f32 1.0, %v2431
      %v2433 = vrcp.pop %v2382
      %v2434 = vmul.f32 1.0, %v2433
      %v2435 = vrcp.pop %v2383
      %v2436 = vmul.f32 1.0, %v2435
      %v2437 = vrcp.pop %v2384
      %v2438 = vmul.f32 1.0, %v2437
      %v2439 = vrcp.pop %v2385
      %v2440 = vmul.f32 1.0, %v2439
      %v2441 = vrcp.pop %v2386
      %v2442 = vmul.f32 1.0, %v2441
      %v2443 = vrcp.pop %v2387
      %v2444 = vmul.f32 1.0, %v2443
      %v2445 = vrcp.pop %v2388
      %v2446 = vmul.f32 1.0, %v2445
      %v2447 = vrcp.pop %v2389
      %v2448 = vmul.f32 1.0, %v2447
      %v2449 = vrcp.pop %v2390
      %v2450 = vmul.f32 1.0, %v2449
      %v2451 = vrcp.pop %v2391
      %v2452 = vmul.f32 1.0, %v2451
      %v2453 = vrcp.pop %v2392
      %v2454 = vmul.f32 1.0, %v2453
      %v2455 = vrcp.pop %v2393
      %v2456 = vmul.f32 1.0, %v2455
      %v2457 = vrcp.pop %v2394
      %v2458 = vmul.f32 1.0, %v2457
      %v2459 = vmul.f32 %v2235, %v2396
      %v2460 = vmul.f32 %v2236, %v2398
      %v2461 = vmul.f32 %v2237, %v2400
      %v2462 = vmul.f32 %v2238, %v2402
      %v2463 = vmul.f32 %v2239, %v2404
      %v2464 = vmul.f32 %v2240, %v2406
      %v2465 = vmul.f32 %v2241, %v2408
      %v2466 = vmul.f32 %v2242, %v2410
      %v2467 = vmul.f32 %v2243, %v2412
      %v2468 = vmul.f32 %v2244, %v2414
      %v2469 = vmul.f32 %v2245, %v2416
      %v2470 = vmul.f32 %v2246, %v2418
      %v2471 = vmul.f32 %v2247, %v2420
      %v2472 = vmul.f32 %v2248, %v2422
      %v2473 = vmul.f32 %v2249, %v2424
      %v2474 = vmul.f32 %v2250, %v2426
      %v2475 = vmul.f32 %v2251, %v2428
      %v2476 = vmul.f32 %v2252, %v2430
      %v2477 = vmul.f32 %v2253, %v2432
      %v2478 = vmul.f32 %v2254, %v2434
      %v2479 = vmul.f32 %v2255, %v2436
      %v2480 = vmul.f32 %v2256, %v2438
      %v2481 = vmul.f32 %v2257, %v2440
      %v2482 = vmul.f32 %v2258, %v2442
      %v2483 = vmul.f32 %v2259, %v2444
      %v2484 = vmul.f32 %v2260, %v2446
      %v2485 = vmul.f32 %v2261, %v2448
      %v2486 = vmul.f32 %v2262, %v2450
      %v2487 = vmul.f32 %v2263, %v2452
      %v2488 = vmul.f32 %v2264, %v2454
      %v2489 = vmul.f32 %v2265, %v2456
      %v2490 = vmul.f32 %v2266, %v2458
      %v2491 = vsel %vm818, %v2459, 0.0
      %v2492 = vsel %vm818, %v2460, 0.0
      %v2493 = vadd.f32 %v2491, %v2492
      %v2494 = vsel %vm818, %v2461, 0.0
      %v2495 = vadd.f32 %v2493, %v2494
      %v2496 = vsel %vm818, %v2462, 0.0
      %v2497 = vadd.f32 %v2495, %v2496
      %v2498 = vsel %vm818, %v2463, 0.0
      %v2499 = vadd.f32 %v2497, %v2498
      %v2500 = vsel %vm818, %v2464, 0.0
      %v2501 = vadd.f32 %v2499, %v2500
      %v2502 = vsel %vm818, %v2465, 0.0
      %v2503 = vadd.f32 %v2501, %v2502
      %v2504 = vsel %vm818, %v2466, 0.0
      %v2505 = vadd.f32 %v2503, %v2504
      %v2506 = vsel %vm818, %v2467, 0.0
      %v2507 = vadd.f32 %v2505, %v2506
      %v2508 = vsel %vm818, %v2468, 0.0
      %v2509 = vadd.f32 %v2507, %v2508
      %v2510 = vsel %vm818, %v2469, 0.0
      %v2511 = vadd.f32 %v2509, %v2510
      %v2512 = vsel %vm818, %v2470, 0.0
      %v2513 = vadd.f32 %v2511, %v2512
      %v2514 = vsel %vm818, %v2471, 0.0
      %v2515 = vadd.f32 %v2513, %v2514
      %v2516 = vsel %vm818, %v2472, 0.0
      %v2517 = vadd.f32 %v2515, %v2516
      %v2518 = vsel %vm818, %v2473, 0.0
      %v2519 = vadd.f32 %v2517, %v2518
      %v2520 = vsel %vm818, %v2474, 0.0
      %v2521 = vadd.f32 %v2519, %v2520
      %v2522 = vsel %vm818, %v2475, 0.0
      %v2523 = vadd.f32 %v2521, %v2522
      %v2524 = vsel %vm818, %v2476, 0.0
      %v2525 = vadd.f32 %v2523, %v2524
      %v2526 = vsel %vm818, %v2477, 0.0
      %v2527 = vadd.f32 %v2525, %v2526
      %v2528 = vsel %vm818, %v2478, 0.0
      %v2529 = vadd.f32 %v2527, %v2528
      %v2530 = vsel %vm818, %v2479, 0.0
      %v2531 = vadd.f32 %v2529, %v2530
      %v2532 = vsel %vm818, %v2480, 0.0
      %v2533 = vadd.f32 %v2531, %v2532
      %v2534 = vsel %vm818, %v2481, 0.0
      %v2535 = vadd.f32 %v2533, %v2534
      %v2536 = vsel %vm818, %v2482, 0.0
      %v2537 = vadd.f32 %v2535, %v2536
      %v2538 = vsel %vm818, %v2483, 0.0
      %v2539 = vadd.f32 %v2537, %v2538
      %v2540 = vsel %vm818, %v2484, 0.0
      %v2541 = vadd.f32 %v2539, %v2540
      %v2542 = vsel %vm818, %v2485, 0.0
      %v2543 = vadd.f32 %v2541, %v2542
      %v2544 = vsel %vm818, %v2486, 0.0
      %v2545 = vadd.f32 %v2543, %v2544
      %v2546 = vsel %vm818, %v2487, 0.0
      %v2547 = vadd.f32 %v2545, %v2546
      %v2548 = vsel %vm818, %v2488, 0.0
      %v2549 = vadd.f32 %v2547, %v2548
      %v2550 = vsel %vm818, %v2489, 0.0
      %v2551 = vadd.f32 %v2549, %v2550
      %v2552 = vsel %vm818, %v2490, 0.0
      %v2553 = vadd.f32 %v2551, %v2552
      %v2554 = vrot.slane %v2553, 4
      %v2555 = vadd.f32 %v2553, %v2554
      %v2556 = vrot.slane %v2555, 2
      %v2557 = vadd.f32 %v2555, %v2556
      %v2558 = vrot.slane %v2557, 1
      %v2559 = vadd.f32 %v2557, %v2558
      %v2560 = vmul.f32 %v2559, 0.00390625
      %v2561 = vpack.c.bf16 %v2560, %v2560
      %v2562 = vld [vmem:[%s6] sm:$0xf]
      %v2563 = vld [vmem:[%s6 + $0x4] sm:$0xf]
      %v2564 = vld [vmem:[%s6 + $0x8] sm:$0xf]
      %v2565 = vld [vmem:[%s6 + $0xc] sm:$0xf]
      %v2566 = vld [vmem:[%s7] sm:$0x1]
      %v2571 = vunpack.c.l.b16 %v2562
      %v2572 = vunpack.c.l.b16 %v2563
      %v2573 = vunpack.c.l.b16 %v2564
      %v2574 = vunpack.c.l.b16 %v2565
      %v2575 = vpack.c.b16 %v2572, %v2571
      %v2576 = vpack.c.b16 %v2574, %v2573
      %v2580 = vsel %vm818, %v2561, 0
      %2582 = vmatprep.subr.bf16.mxu0 0
      %2583 = vmatpush1.bf16.msra.mxu0 %v2575
      %2584 = vmatprep.subr.bf16.mxu0 0
      %2585 = vmatpush1.bf16.msra.mxu0 %v2576
      %2586 = vmatprep.subr.bf16.mxu0 0
      %2587 = vmatpush1.bf16.msra.mxu0 0
      %2588 = vmatprep.subr.bf16.mxu0 0
      %2589 = vmatpush1.bf16.msra.mxu0 0
      %2590 = vmatprep.subr.bf16.mxu0 0
      %2591 = vmatpush1.bf16.msra.mxu0 0
      %2592 = vmatprep.subr.bf16.mxu0 0
      %2593 = vmatpush1.bf16.msra.mxu0 0
      %2594 = vmatprep.subr.bf16.mxu0 0
      %2595 = vmatpush1.bf16.msra.mxu0 0
      %2596 = vmatprep.subr.bf16.mxu0 0
      %2597 = vmatpush1.bf16.msra.mxu0 0
      %2598 = vmatprep.subr.bf16.mxu0 0
      %2599 = vmatpush1.bf16.msra.mxu0 0
      %2600 = vmatprep.subr.bf16.mxu0 0
      %2601 = vmatpush1.bf16.msra.mxu0 0
      %2602 = vmatprep.subr.bf16.mxu0 0
      %2603 = vmatpush1.bf16.msra.mxu0 0
      %2604 = vmatprep.subr.bf16.mxu0 0
      %2605 = vmatpush1.bf16.msra.mxu0 0
      %2606 = vmatprep.subr.bf16.mxu0 0
      %2607 = vmatpush1.bf16.msra.mxu0 0
      %2608 = vmatprep.subr.bf16.mxu0 0
      %2609 = vmatpush1.bf16.msra.mxu0 0
      %2610 = vmatprep.subr.bf16.mxu0 0
      %2611 = vmatpush1.bf16.msra.mxu0 0
      %2612 = vmatprep.subr.bf16.mxu0 0
      %2613 = vmatpush1.bf16.msra.mxu0 0
      %2614 = vmatprep.mubr.bf16.mxu0 0
      %2615 = vmatmul.mubr.bf16.gmra.mrb[0].mxu0 %v2580
      %v2616 = vpop.f32.mrb[0].mxu0
      %v2617 = vadd.f32 %v2566, %v2616
      %v2618 = vpop.f32.mrb[0].mxu0
      %v2619 = vpop.f32.mrb[0].mxu0
      %v2620 = vpop.f32.mrb[0].mxu0
      %2621 = vdwg.mxu0
      %v2622 = vxor.u32 %v2617, 2147483648
      %v2623 = vmul.f32 %v2622, 1.442695
      %v2624 = vpow.pop %v2623
      %v2625 = vadd.f32 %v2624, 1.0
      %v2626 = vrcp.pop %v2625
      %v2627 = vmul.f32 1.0, %v2626
      %v2628 = vmul.f32 %v2617, %v2627
      %v2629 = vpack.c.bf16 %v2628, %v2628
      %v2630 = vld [vmem:[%s8] sm:$0xf]
      %v2631 = vld [vmem:[%s9] sm:$0x1]
      %vm2632 = vcmask 64512
      %v2634 = vsel %vm2632, %v2629, 0
      %vm2636 = vcmask 1043456
      %v2638 = vsel %vm2636, %v2630, 0
      %2640 = vmatprep.subr.bf16.mxu0 0
      %2641 = vmatpush1.bf16.msra.mxu0 %v2638
      %2642 = vmatprep.subr.bf16.mxu0 0
      %2643 = vmatpush1.bf16.msra.mxu0 0
      %2644 = vmatprep.subr.bf16.mxu0 0
      %2645 = vmatpush1.bf16.msra.mxu0 0
      %2646 = vmatprep.subr.bf16.mxu0 0
      %2647 = vmatpush1.bf16.msra.mxu0 0
      %2648 = vmatprep.subr.bf16.mxu0 0
      %2649 = vmatpush1.bf16.msra.mxu0 0
      %2650 = vmatprep.subr.bf16.mxu0 0
      %2651 = vmatpush1.bf16.msra.mxu0 0
      %2652 = vmatprep.subr.bf16.mxu0 0
      %2653 = vmatpush1.bf16.msra.mxu0 0
      %2654 = vmatprep.subr.bf16.mxu0 0
      %2655 = vmatpush1.bf16.msra.mxu0 0
      %2656 = vmatprep.subr.bf16.mxu0 0
      %2657 = vmatpush1.bf16.msra.mxu0 0
      %2658 = vmatprep.subr.bf16.mxu0 0
      %2659 = vmatpush1.bf16.msra.mxu0 0
      %2660 = vmatprep.subr.bf16.mxu0 0
      %2661 = vmatpush1.bf16.msra.mxu0 0
      %2662 = vmatprep.subr.bf16.mxu0 0
      %2663 = vmatpush1.bf16.msra.mxu0 0
      %2664 = vmatprep.subr.bf16.mxu0 0
      %2665 = vmatpush1.bf16.msra.mxu0 0
      %2666 = vmatprep.subr.bf16.mxu0 0
      %2667 = vmatpush1.bf16.msra.mxu0 0
      %2668 = vmatprep.subr.bf16.mxu0 0
      %2669 = vmatpush1.bf16.msra.mxu0 0
      %2670 = vmatprep.subr.bf16.mxu0 0
      %2671 = vmatpush1.bf16.msra.mxu0 0
      %2672 = vmatprep.mubr.bf16.mxu0 0
      %2673 = vmatmul.mubr.bf16.gmra.mrb[0].mxu0 %v2634
      %v2674 = vpop.f32.mrb[0].mxu0
      %v2675 = vadd.f32 %v2631, %v2674
      %v2676 = vpop.f32.mrb[0].mxu0
      %v2677 = vpop.f32.mrb[0].mxu0
      %v2678 = vpop.f32.mrb[0].mxu0
      %2679 = vdwg.mxu0
      %v2680 = vxor.u32 %v2675, 2147483648
      %v2681 = vmul.f32 %v2680, 1.442695
      %v2682 = vpow.pop %v2681
      %v2683 = vadd.f32 %v2682, 1.0
      %v2684 = vrcp.pop %v2683
      %v2685 = vmul.f32 1.0, %v2684
      %v2686 = vlaneseq
      %v2687 = vshrl.u32 %v2686, 7
      %v2688 = vsub.s32 0, %v2687
      %v2689 = vrot.slane %v2685, %v2688
      %v2690 = vmul.f32 %v2459, %v2689
      %v2691 = vmul.f32 %v2460, %v2689
      %v2692 = vmul.f32 %v2461, %v2689
      %v2693 = vmul.f32 %v2462, %v2689
      %v2694 = vmul.f32 %v2463, %v2689
      %v2695 = vmul.f32 %v2464, %v2689
      %v2696 = vmul.f32 %v2465, %v2689
      %v2697 = vmul.f32 %v2466, %v2689
      %v2698 = vmul.f32 %v2467, %v2689
      %v2699 = vmul.f32 %v2468, %v2689
      %v2700 = vmul.f32 %v2469, %v2689
      %v2701 = vmul.f32 %v2470, %v2689
      %v2702 = vmul.f32 %v2471, %v2689
      %v2703 = vmul.f32 %v2472, %v2689
      %v2704 = vmul.f32 %v2473, %v2689
      %v2705 = vmul.f32 %v2474, %v2689
      %v2706 = vmul.f32 %v2475, %v2689
      %v2707 = vmul.f32 %v2476, %v2689
      %v2708 = vmul.f32 %v2477, %v2689
      %v2709 = vmul.f32 %v2478, %v2689
      %v2710 = vmul.f32 %v2479, %v2689
      %v2711 = vmul.f32 %v2480, %v2689
      %v2712 = vmul.f32 %v2481, %v2689
      %v2713 = vmul.f32 %v2482, %v2689
      %v2714 = vmul.f32 %v2483, %v2689
      %v2715 = vmul.f32 %v2484, %v2689
      %v2716 = vmul.f32 %v2485, %v2689
      %v2717 = vmul.f32 %v2486, %v2689
      %v2718 = vmul.f32 %v2487, %v2689
      %v2719 = vmul.f32 %v2488, %v2689
      %v2720 = vmul.f32 %v2489, %v2689
      %v2721 = vmul.f32 %v2490, %v2689
      %v2722 = vpack.c.bf16 %v2691, %v2690
      %v2723 = vpack.c.bf16 %v2693, %v2692
      %v2724 = vpack.c.bf16 %v2695, %v2694
      %v2725 = vpack.c.bf16 %v2697, %v2696
      %v2726 = vpack.c.bf16 %v2699, %v2698
      %v2727 = vpack.c.bf16 %v2701, %v2700
      %v2728 = vpack.c.bf16 %v2703, %v2702
      %v2729 = vpack.c.bf16 %v2705, %v2704
      %v2730 = vpack.c.bf16 %v2707, %v2706
      %v2731 = vpack.c.bf16 %v2709, %v2708
      %v2732 = vpack.c.bf16 %v2711, %v2710
      %v2733 = vpack.c.bf16 %v2713, %v2712
      %v2734 = vpack.c.bf16 %v2715, %v2714
      %v2735 = vpack.c.bf16 %v2717, %v2716
      %v2736 = vpack.c.bf16 %v2719, %v2718
      %v2737 = vpack.c.bf16 %v2721, %v2720
      %v2738 = vld [vmem:[%s10] sm:$0xf]
      %v2739 = vld [vmem:[%s10 + $0x4] sm:$0xf]
      %v2740 = vld [vmem:[%s10 + $0x8] sm:$0xf]
      %v2741 = vld [vmem:[%s10 + $0xc] sm:$0xf]
      %v2742 = vld [vmem:[%s11] sm:$0x1]
      %v2744 = vlaneseq
      %v2745 = vshrl.u32 %v2744, 7
      %v2746 = vsub.s32 0, %v2745
      %v2747 = vrot.slane %v2742, %v2746
      %v2753 = vunpack.c.l.b16 %v2738
      %v2754 = vunpack.c.l.b16 %v2739
      %v2755 = vunpack.c.l.b16 %v2740
      %v2756 = vunpack.c.l.b16 %v2741
      %v2757 = vpack.c.b16 %v2754, %v2753
      %v2758 = vpack.c.b16 %v2756, %v2755
      %v2762 = vsel %vm818, %v2722, 0
      %v2765 = vsel %vm818, %v2723, 0
      %v2768 = vsel %vm818, %v2724, 0
      %v2771 = vsel %vm818, %v2725, 0
      %v2774 = vsel %vm818, %v2726, 0
      %v2777 = vsel %vm818, %v2727, 0
      %v2780 = vsel %vm818, %v2728, 0
      %v2783 = vsel %vm818, %v2729, 0
      %v2786 = vsel %vm818, %v2730, 0
      %v2789 = vsel %vm818, %v2731, 0
      %v2792 = vsel %vm818, %v2732, 0
      %v2795 = vsel %vm818, %v2733, 0
      %v2798 = vsel %vm818, %v2734, 0
      %v2801 = vsel %vm818, %v2735, 0
      %v2804 = vsel %vm818, %v2736, 0
      %v2807 = vsel %vm818, %v2737, 0
      %2809 = vmatprep.subr.bf16.mxu0 0
      %2810 = vmatpush1.bf16.msra.mxu0 %v2757
      %2811 = vmatprep.subr.bf16.mxu0 0
      %2812 = vmatpush1.bf16.msra.mxu0 %v2758
      %2813 = vmatprep.subr.bf16.mxu0 0
      %2814 = vmatpush1.bf16.msra.mxu0 0
      %2815 = vmatprep.subr.bf16.mxu0 0
      %2816 = vmatpush1.bf16.msra.mxu0 0
      %2817 = vmatprep.subr.bf16.mxu0 0
      %2818 = vmatpush1.bf16.msra.mxu0 0
      %2819 = vmatprep.subr.bf16.mxu0 0
      %2820 = vmatpush1.bf16.msra.mxu0 0
      %2821 = vmatprep.subr.bf16.mxu0 0
      %2822 = vmatpush1.bf16.msra.mxu0 0
      %2823 = vmatprep.subr.bf16.mxu0 0
      %2824 = vmatpush1.bf16.msra.mxu0 0
      %2825 = vmatprep.subr.bf16.mxu0 0
      %2826 = vmatpush1.bf16.msra.mxu0 0
      %2827 = vmatprep.subr.bf16.mxu0 0
      %2828 = vmatpush1.bf16.msra.mxu0 0
      %2829 = vmatprep.subr.bf16.mxu0 0
      %2830 = vmatpush1.bf16.msra.mxu0 0
      %2831 = vmatprep.subr.bf16.mxu0 0
      %2832 = vmatpush1.bf16.msra.mxu0 0
      %2833 = vmatprep.subr.bf16.mxu0 0
      %2834 = vmatpush1.bf16.msra.mxu0 0
      %2835 = vmatprep.subr.bf16.mxu0 0
      %2836 = vmatpush1.bf16.msra.mxu0 0
      %2837 = vmatprep.subr.bf16.mxu0 0
      %2838 = vmatpush1.bf16.msra.mxu0 0
      %2839 = vmatprep.subr.bf16.mxu0 0
      %2840 = vmatpush1.bf16.msra.mxu0 0
      %2841 = vmatprep.mubr.bf16.mxu0 0
      %2842 = vmatmul.mubr.bf16.gmra.mrb[0].mxu0 %v2762
      %v2843 = vpop.f32.mrb[0].mxu0
      %v2844 = vadd.f32 %v2747, %v2843
      %v2845 = vpop.f32.mrb[0].mxu0
      %v2846 = vpop.f32.mrb[0].mxu0
      %v2847 = vadd.f32 %v2747, %v2846
      %v2848 = vpop.f32.mrb[0].mxu0
      %2849 = vmatprep.mubr.bf16.mxu0 0
      %2850 = vmatmul.mubr.bf16.gmra.mrb[0].mxu0 %v2765
      %v2851 = vpop.f32.mrb[0].mxu0
      %v2852 = vadd.f32 %v2747, %v2851
      %v2853 = vpop.f32.mrb[0].mxu0
      %v2854 = vpop.f32.mrb[0].mxu0
      %v2855 = vadd.f32 %v2747, %v2854
      %v2856 = vpop.f32.mrb[0].mxu0
      %2857 = vmatprep.mubr.bf16.mxu0 0
      %2858 = vmatmul.mubr.bf16.gmra.mrb[0].mxu0 %v2768
      %v2859 = vpop.f32.mrb[0].mxu0
      %v2860 = vadd.f32 %v2747, %v2859
      %v2861 = vpop.f32.mrb[0].mxu0
      %v2862 = vpop.f32.mrb[0].mxu0
      %v2863 = vadd.f32 %v2747, %v2862
      %v2864 = vpop.f32.mrb[0].mxu0
      %2865 = vmatprep.mubr.bf16.mxu0 0
      %2866 = vmatmul.mubr.bf16.gmra.mrb[0].mxu0 %v2771
      %v2867 = vpop.f32.mrb[0].mxu0
      %v2868 = vadd.f32 %v2747, %v2867
      %v2869 = vpop.f32.mrb[0].mxu0
      %v2870 = vpop.f32.mrb[0].mxu0
      %v2871 = vadd.f32 %v2747, %v2870
      %v2872 = vpop.f32.mrb[0].mxu0
      %2873 = vmatprep.mubr.bf16.mxu0 0
      %2874 = vmatmul.mubr.bf16.gmra.mrb[0].mxu0 %v2774
      %v2875 = vpop.f32.mrb[0].mxu0
      %v2876 = vadd.f32 %v2747, %v2875
      %v2877 = vpop.f32.mrb[0].mxu0
      %v2878 = vpop.f32.mrb[0].mxu0
      %v2879 = vadd.f32 %v2747, %v2878
      %v2880 = vpop.f32.mrb[0].mxu0
      %2881 = vmatprep.mubr.bf16.mxu0 0
      %2882 = vmatmul.mubr.bf16.gmra.mrb[0].mxu0 %v2777
      %v2883 = vpop.f32.mrb[0].mxu0
      %v2884 = vadd.f32 %v2747, %v2883
      %v2885 = vpop.f32.mrb[0].mxu0
      %v2886 = vpop.f32.mrb[0].mxu0
      %v2887 = vadd.f32 %v2747, %v2886
      %v2888 = vpop.f32.mrb[0].mxu0
      %2889 = vmatprep.mubr.bf16.mxu0 0
      %2890 = vmatmul.mubr.bf16.gmra.mrb[0].mxu0 %v2780
      %v2891 = vpop.f32.mrb[0].mxu0
      %v2892 = vadd.f32 %v2747, %v2891
      %v2893 = vpop.f32.mrb[0].mxu0
      %v2894 = vpop.f32.mrb[0].mxu0
      %v2895 = vadd.f32 %v2747, %v2894
      %v2896 = vpop.f32.mrb[0].mxu0
      %2897 = vmatprep.mubr.bf16.mxu0 0
      %2898 = vmatmul.mubr.bf16.gmra.mrb[0].mxu0 %v2783
      %v2899 = vpop.f32.mrb[0].mxu0
      %v2900 = vadd.f32 %v2747, %v2899
      %v2901 = vpop.f32.mrb[0].mxu0
      %v2902 = vpop.f32.mrb[0].mxu0
      %v2903 = vadd.f32 %v2747, %v2902
      %v2904 = vpop.f32.mrb[0].mxu0
      %2905 = vmatprep.mubr.bf16.mxu0 0
      %2906 = vmatmul.mubr.bf16.gmra.mrb[0].mxu0 %v2786
      %v2907 = vpop.f32.mrb[0].mxu0
      %v2908 = vadd.f32 %v2747, %v2907
      %v2909 = vpop.f32.mrb[0].mxu0
      %v2910 = vpop.f32.mrb[0].mxu0
      %v2911 = vadd.f32 %v2747, %v2910
      %v2912 = vpop.f32.mrb[0].mxu0
      %2913 = vmatprep.mubr.bf16.mxu0 0
      %2914 = vmatmul.mubr.bf16.gmra.mrb[0].mxu0 %v2789
      %v2915 = vpop.f32.mrb[0].mxu0
      %v2916 = vadd.f32 %v2747, %v2915
      %v2917 = vpop.f32.mrb[0].mxu0
      %v2918 = vpop.f32.mrb[0].mxu0
      %v2919 = vadd.f32 %v2747, %v2918
      %v2920 = vpop.f32.mrb[0].mxu0
      %2921 = vmatprep.mubr.bf16.mxu0 0
      %2922 = vmatmul.mubr.bf16.gmra.mrb[0].mxu0 %v2792
      %v2923 = vpop.f32.mrb[0].mxu0
      %v2924 = vadd.f32 %v2747, %v2923
      %v2925 = vpop.f32.mrb[0].mxu0
      %v2926 = vpop.f32.mrb[0].mxu0
      %v2927 = vadd.f32 %v2747, %v2926
      %v2928 = vpop.f32.mrb[0].mxu0
      %2929 = vmatprep.mubr.bf16.mxu0 0
      %2930 = vmatmul.mubr.bf16.gmra.mrb[0].mxu0 %v2795
      %v2931 = vpop.f32.mrb[0].mxu0
      %v2932 = vadd.f32 %v2747, %v2931
      %v2933 = vpop.f32.mrb[0].mxu0
      %v2934 = vpop.f32.mrb[0].mxu0
      %v2935 = vadd.f32 %v2747, %v2934
      %v2936 = vpop.f32.mrb[0].mxu0
      %2937 = vmatprep.mubr.bf16.mxu0 0
      %2938 = vmatmul.mubr.bf16.gmra.mrb[0].mxu0 %v2798
      %v2939 = vpop.f32.mrb[0].mxu0
      %v2940 = vadd.f32 %v2747, %v2939
      %v2941 = vpop.f32.mrb[0].mxu0
      %v2942 = vpop.f32.mrb[0].mxu0
      %v2943 = vadd.f32 %v2747, %v2942
      %v2944 = vpop.f32.mrb[0].mxu0
      %2945 = vmatprep.mubr.bf16.mxu0 0
      %2946 = vmatmul.mubr.bf16.gmra.mrb[0].mxu0 %v2801
      %v2947 = vpop.f32.mrb[0].mxu0
      %v2948 = vadd.f32 %v2747, %v2947
      %v2949 = vpop.f32.mrb[0].mxu0
      %v2950 = vpop.f32.mrb[0].mxu0
      %v2951 = vadd.f32 %v2747, %v2950
      %v2952 = vpop.f32.mrb[0].mxu0
      %2953 = vmatprep.mubr.bf16.mxu0 0
      %2954 = vmatmul.mubr.bf16.gmra.mrb[0].mxu0 %v2804
      %v2955 = vpop.f32.mrb[0].mxu0
      %v2956 = vadd.f32 %v2747, %v2955
      %v2957 = vpop.f32.mrb[0].mxu0
      %v2958 = vpop.f32.mrb[0].mxu0
      %v2959 = vadd.f32 %v2747, %v2958
      %v2960 = vpop.f32.mrb[0].mxu0
      %2961 = vmatprep.mubr.bf16.mxu0 0
      %2962 = vmatmul.mubr.bf16.gmra.mrb[0].mxu0 %v2807
      %v2963 = vpop.f32.mrb[0].mxu0
      %v2964 = vadd.f32 %v2747, %v2963
      %v2965 = vpop.f32.mrb[0].mxu0
      %v2966 = vpop.f32.mrb[0].mxu0
      %v2967 = vadd.f32 %v2747, %v2966
      %v2968 = vpop.f32.mrb[0].mxu0
      %2969 = vdwg.mxu0
      %v2970 = vxor.u32 %v2844, 2147483648
      %v2971 = vxor.u32 %v2847, 2147483648
      %v2972 = vxor.u32 %v2852, 2147483648
      %v2973 = vxor.u32 %v2855, 2147483648
      %v2974 = vxor.u32 %v2860, 2147483648
      %v2975 = vxor.u32 %v2863, 2147483648
      %v2976 = vxor.u32 %v2868, 2147483648
      %v2977 = vxor.u32 %v2871, 2147483648
      %v2978 = vxor.u32 %v2876, 2147483648
      %v2979 = vxor.u32 %v2879, 2147483648
      %v2980 = vxor.u32 %v2884, 2147483648
      %v2981 = vxor.u32 %v2887, 2147483648
      %v2982 = vxor.u32 %v2892, 2147483648
      %v2983 = vxor.u32 %v2895, 2147483648
      %v2984 = vxor.u32 %v2900, 2147483648
      %v2985 = vxor.u32 %v2903, 2147483648
      %v2986 = vxor.u32 %v2908, 2147483648
      %v2987 = vxor.u32 %v2911, 2147483648
      %v2988 = vxor.u32 %v2916, 2147483648
      %v2989 = vxor.u32 %v2919, 2147483648
      %v2990 = vxor.u32 %v2924, 2147483648
      %v2991 = vxor.u32 %v2927, 2147483648
      %v2992 = vxor.u32 %v2932, 2147483648
      %v2993 = vxor.u32 %v2935, 2147483648
      %v2994 = vxor.u32 %v2940, 2147483648
      %v2995 = vxor.u32 %v2943, 2147483648
      %v2996 = vxor.u32 %v2948, 2147483648
      %v2997 = vxor.u32 %v2951, 2147483648
      %v2998 = vxor.u32 %v2956, 2147483648
      %v2999 = vxor.u32 %v2959, 2147483648
      %v3000 = vxor.u32 %v2964, 2147483648
      %v3001 = vxor.u32 %v2967, 2147483648
      %v3002 = vmul.f32 %v2970, 1.442695
      %v3003 = vpow.pop %v3002
      %v3004 = vmul.f32 %v2971, 1.442695
      %v3005 = vpow.pop %v3004
      %v3006 = vmul.f32 %v2972, 1.442695
      %v3007 = vpow.pop %v3006
      %v3008 = vmul.f32 %v2973, 1.442695
      %v3009 = vpow.pop %v3008
      %v3010 = vmul.f32 %v2974, 1.442695
      %v3011 = vpow.pop %v3010
      %v3012 = vmul.f32 %v2975, 1.442695
      %v3013 = vpow.pop %v3012
      %v3014 = vmul.f32 %v2976, 1.442695
      %v3015 = vpow.pop %v3014
      %v3016 = vmul.f32 %v2977, 1.442695
      %v3017 = vpow.pop %v3016
      %v3018 = vmul.f32 %v2978, 1.442695
      %v3019 = vpow.pop %v3018
      %v3020 = vmul.f32 %v2979, 1.442695
      %v3021 = vpow.pop %v3020
      %v3022 = vmul.f32 %v2980, 1.442695
      %v3023 = vpow.pop %v3022
      %v3024 = vmul.f32 %v2981, 1.442695
      %v3025 = vpow.pop %v3024
      %v3026 = vmul.f32 %v2982, 1.442695
      %v3027 = vpow.pop %v3026
      %v3028 = vmul.f32 %v2983, 1.442695
      %v3029 = vpow.pop %v3028
      %v3030 = vmul.f32 %v2984, 1.442695
      %v3031 = vpow.pop %v3030
      %v3032 = vmul.f32 %v2985, 1.442695
      %v3033 = vpow.pop %v3032
      %v3034 = vmul.f32 %v2986, 1.442695
      %v3035 = vpow.pop %v3034
      %v3036 = vmul.f32 %v2987, 1.442695
      %v3037 = vpow.pop %v3036
      %v3038 = vmul.f32 %v2988, 1.442695
      %v3039 = vpow.pop %v3038
      %v3040 = vmul.f32 %v2989, 1.442695
      %v3041 = vpow.pop %v3040
      %v3042 = vmul.f32 %v2990, 1.442695
      %v3043 = vpow.pop %v3042
      %v3044 = vmul.f32 %v2991, 1.442695
      %v3045 = vpow.pop %v3044
      %v3046 = vmul.f32 %v2992, 1.442695
      %v3047 = vpow.pop %v3046
      %v3048 = vmul.f32 %v2993, 1.442695
      %v3049 = vpow.pop %v3048
      %v3050 = vmul.f32 %v2994, 1.442695
      %v3051 = vpow.pop %v3050
      %v3052 = vmul.f32 %v2995, 1.442695
      %v3053 = vpow.pop %v3052
      %v3054 = vmul.f32 %v2996, 1.442695
      %v3055 = vpow.pop %v3054
      %v3056 = vmul.f32 %v2997, 1.442695
      %v3057 = vpow.pop %v3056
      %v3058 = vmul.f32 %v2998, 1.442695
      %v3059 = vpow.pop %v3058
      %v3060 = vmul.f32 %v2999, 1.442695
      %v3061 = vpow.pop %v3060
      %v3062 = vmul.f32 %v3000, 1.442695
      %v3063 = vpow.pop %v3062
      %v3064 = vmul.f32 %v3001, 1.442695
      %v3065 = vpow.pop %v3064
      %v3066 = vadd.f32 %v3003, 1.0
      %v3067 = vadd.f32 %v3005, 1.0
      %v3068 = vadd.f32 %v3007, 1.0
      %v3069 = vadd.f32 %v3009, 1.0
      %v3070 = vadd.f32 %v3011, 1.0
      %v3071 = vadd.f32 %v3013, 1.0
      %v3072 = vadd.f32 %v3015, 1.0
      %v3073 = vadd.f32 %v3017, 1.0
      %v3074 = vadd.f32 %v3019, 1.0
      %v3075 = vadd.f32 %v3021, 1.0
      %v3076 = vadd.f32 %v3023, 1.0
      %v3077 = vadd.f32 %v3025, 1.0
      %v3078 = vadd.f32 %v3027, 1.0
      %v3079 = vadd.f32 %v3029, 1.0
      %v3080 = vadd.f32 %v3031, 1.0
      %v3081 = vadd.f32 %v3033, 1.0
      %v3082 = vadd.f32 %v3035, 1.0
      %v3083 = vadd.f32 %v3037, 1.0
      %v3084 = vadd.f32 %v3039, 1.0
      %v3085 = vadd.f32 %v3041, 1.0
      %v3086 = vadd.f32 %v3043, 1.0
      %v3087 = vadd.f32 %v3045, 1.0
      %v3088 = vadd.f32 %v3047, 1.0
      %v3089 = vadd.f32 %v3049, 1.0
      %v3090 = vadd.f32 %v3051, 1.0
      %v3091 = vadd.f32 %v3053, 1.0
      %v3092 = vadd.f32 %v3055, 1.0
      %v3093 = vadd.f32 %v3057, 1.0
      %v3094 = vadd.f32 %v3059, 1.0
      %v3095 = vadd.f32 %v3061, 1.0
      %v3096 = vadd.f32 %v3063, 1.0
      %v3097 = vadd.f32 %v3065, 1.0
      %v3098 = vrcp.pop %v3066
      %v3099 = vmul.f32 1.0, %v3098
      %v3100 = vrcp.pop %v3067
      %v3101 = vmul.f32 1.0, %v3100
      %v3102 = vrcp.pop %v3068
      %v3103 = vmul.f32 1.0, %v3102
      %v3104 = vrcp.pop %v3069
      %v3105 = vmul.f32 1.0, %v3104
      %v3106 = vrcp.pop %v3070
      %v3107 = vmul.f32 1.0, %v3106
      %v3108 = vrcp.pop %v3071
      %v3109 = vmul.f32 1.0, %v3108
      %v3110 = vrcp.pop %v3072
      %v3111 = vmul.f32 1.0, %v3110
      %v3112 = vrcp.pop %v3073
      %v3113 = vmul.f32 1.0, %v3112
      %v3114 = vrcp.pop %v3074
      %v3115 = vmul.f32 1.0, %v3114
      %v3116 = vrcp.pop %v3075
      %v3117 = vmul.f32 1.0, %v3116
      %v3118 = vrcp.pop %v3076
      %v3119 = vmul.f32 1.0, %v3118
      %v3120 = vrcp.pop %v3077
      %v3121 = vmul.f32 1.0, %v3120
      %v3122 = vrcp.pop %v3078
      %v3123 = vmul.f32 1.0, %v3122
      %v3124 = vrcp.pop %v3079
      %v3125 = vmul.f32 1.0, %v3124
      %v3126 = vrcp.pop %v3080
      %v3127 = vmul.f32 1.0, %v3126
      %v3128 = vrcp.pop %v3081
      %v3129 = vmul.f32 1.0, %v3128
      %v3130 = vrcp.pop %v3082
      %v3131 = vmul.f32 1.0, %v3130
      %v3132 = vrcp.pop %v3083
      %v3133 = vmul.f32 1.0, %v3132
      %v3134 = vrcp.pop %v3084
      %v3135 = vmul.f32 1.0, %v3134
      %v3136 = vrcp.pop %v3085
      %v3137 = vmul.f32 1.0, %v3136
      %v3138 = vrcp.pop %v3086
      %v3139 = vmul.f32 1.0, %v3138
      %v3140 = vrcp.pop %v3087
      %v3141 = vmul.f32 1.0, %v3140
      %v3142 = vrcp.pop %v3088
      %v3143 = vmul.f32 1.0, %v3142
      %v3144 = vrcp.pop %v3089
      %v3145 = vmul.f32 1.0, %v3144
      %v3146 = vrcp.pop %v3090
      %v3147 = vmul.f32 1.0, %v3146
      %v3148 = vrcp.pop %v3091
      %v3149 = vmul.f32 1.0, %v3148
      %v3150 = vrcp.pop %v3092
      %v3151 = vmul.f32 1.0, %v3150
      %v3152 = vrcp.pop %v3093
      %v3153 = vmul.f32 1.0, %v3152
      %v3154 = vrcp.pop %v3094
      %v3155 = vmul.f32 1.0, %v3154
      %v3156 = vrcp.pop %v3095
      %v3157 = vmul.f32 1.0, %v3156
      %v3158 = vrcp.pop %v3096
      %v3159 = vmul.f32 1.0, %v3158
      %v3160 = vrcp.pop %v3097
      %v3161 = vmul.f32 1.0, %v3160
      %v3162 = vmul.f32 %v2844, %v3099
      %v3163 = vmul.f32 %v2847, %v3101
      %v3164 = vmul.f32 %v2852, %v3103
      %v3165 = vmul.f32 %v2855, %v3105
      %v3166 = vmul.f32 %v2860, %v3107
      %v3167 = vmul.f32 %v2863, %v3109
      %v3168 = vmul.f32 %v2868, %v3111
      %v3169 = vmul.f32 %v2871, %v3113
      %v3170 = vmul.f32 %v2876, %v3115
      %v3171 = vmul.f32 %v2879, %v3117
      %v3172 = vmul.f32 %v2884, %v3119
      %v3173 = vmul.f32 %v2887, %v3121
      %v3174 = vmul.f32 %v2892, %v3123
      %v3175 = vmul.f32 %v2895, %v3125
      %v3176 = vmul.f32 %v2900, %v3127
      %v3177 = vmul.f32 %v2903, %v3129
      %v3178 = vmul.f32 %v2908, %v3131
      %v3179 = vmul.f32 %v2911, %v3133
      %v3180 = vmul.f32 %v2916, %v3135
      %v3181 = vmul.f32 %v2919, %v3137
      %v3182 = vmul.f32 %v2924, %v3139
      %v3183 = vmul.f32 %v2927, %v3141
      %v3184 = vmul.f32 %v2932, %v3143
      %v3185 = vmul.f32 %v2935, %v3145
      %v3186 = vmul.f32 %v2940, %v3147
      %v3187 = vmul.f32 %v2943, %v3149
      %v3188 = vmul.f32 %v2948, %v3151
      %v3189 = vmul.f32 %v2951, %v3153
      %v3190 = vmul.f32 %v2956, %v3155
      %v3191 = vmul.f32 %v2959, %v3157
      %v3192 = vmul.f32 %v2964, %v3159
      %v3193 = vmul.f32 %v2967, %v3161
      %vm3194 = vcmask 785408
      %3195 = vst.msk [vmem:[#allocation3] sm:$0xff] %vm3194, 0.0
      %3196 = vst.msk [vmem:[#allocation3 + $0x8] sm:$0xff] %vm3194, 0.0
      %3197 = vst.msk [vmem:[#allocation3 + $0x10] sm:$0xff] %vm3194, 0.0
      %s3198 = scalar_lea.vmem [#allocation3], 408
      %3199 = vst.msk [vmem:[%s3198] sm:$0xff] %vm3194, 0.0
      %3200 = vst.msk [vmem:[%s3198 + $0x8] sm:$0xff] %vm3194, 0.0
      %3201 = vst.msk [vmem:[%s3198 + $0x10] sm:$0xff] %vm3194, 0.0
      %s3202 = scalar_lea.vmem [#allocation3], 24
      %vm3203 = vcmask 778240
      %3204 = vst.msk [vmem:[%s3202] sm:$0x1] %vm3203, 0.0
      %3205 = vst.msk [vmem:[%s3202 + $0x18] sm:$0x1] %vm3203, 0.0
      %3206 = vst.msk [vmem:[%s3202 + $0x30] sm:$0x1] %vm3203, 0.0
      %3207 = vst.msk [vmem:[%s3202 + $0x48] sm:$0x1] %vm3203, 0.0
      %3208 = vst.msk [vmem:[%s3202 + $0x60] sm:$0x1] %vm3203, 0.0
      %3209 = vst.msk [vmem:[%s3202 + $0x78] sm:$0x1] %vm3203, 0.0
      %3210 = vst.msk [vmem:[%s3202 + $0x90] sm:$0x1] %vm3203, 0.0
      %3211 = vst.msk [vmem:[%s3202 + $0xa8] sm:$0x1] %vm3203, 0.0
      %3212 = vst.msk [vmem:[%s3202 + $0xc0] sm:$0x1] %vm3203, 0.0
      %3213 = vst.msk [vmem:[%s3202 + $0xd8] sm:$0x1] %vm3203, 0.0
      %3214 = vst.msk [vmem:[%s3202 + $0xf0] sm:$0x1] %vm3203, 0.0
      %3215 = vst.msk [vmem:[%s3202 + $0x108] sm:$0x1] %vm3203, 0.0
      %3216 = vst.msk [vmem:[%s3202 + $0x120] sm:$0x1] %vm3203, 0.0
      %3217 = vst.msk [vmem:[%s3202 + $0x138] sm:$0x1] %vm3203, 0.0
      %3218 = vst.msk [vmem:[%s3202 + $0x150] sm:$0x1] %vm3203, 0.0
      %3219 = vst.msk [vmem:[%s3202 + $0x168] sm:$0x1] %vm3203, 0.0
      %3220 = vst.msk [vmem:[%s3202 + $0x11] sm:$0x1] %vm3203, 0.0
      %3221 = vst.msk [vmem:[%s3202 + $0x29] sm:$0x1] %vm3203, 0.0
      %3222 = vst.msk [vmem:[%s3202 + $0x41] sm:$0x1] %vm3203, 0.0
      %3223 = vst.msk [vmem:[%s3202 + $0x59] sm:$0x1] %vm3203, 0.0
      %3224 = vst.msk [vmem:[%s3202 + $0x71] sm:$0x1] %vm3203, 0.0
      %3225 = vst.msk [vmem:[%s3202 + $0x89] sm:$0x1] %vm3203, 0.0
      %3226 = vst.msk [vmem:[%s3202 + $0xa1] sm:$0x1] %vm3203, 0.0
      %3227 = vst.msk [vmem:[%s3202 + $0xb9] sm:$0x1] %vm3203, 0.0
      %3228 = vst.msk [vmem:[%s3202 + $0xd1] sm:$0x1] %vm3203, 0.0
      %3229 = vst.msk [vmem:[%s3202 + $0xe9] sm:$0x1] %vm3203, 0.0
      %3230 = vst.msk [vmem:[%s3202 + $0x101] sm:$0x1] %vm3203, 0.0
      %3231 = vst.msk [vmem:[%s3202 + $0x119] sm:$0x1] %vm3203, 0.0
      %3232 = vst.msk [vmem:[%s3202 + $0x131] sm:$0x1] %vm3203, 0.0
      %3233 = vst.msk [vmem:[%s3202 + $0x149] sm:$0x1] %vm3203, 0.0
      %3234 = vst.msk [vmem:[%s3202 + $0x161] sm:$0x1] %vm3203, 0.0
      %3235 = vst.msk [vmem:[%s3202 + $0x179] sm:$0x1] %vm3203, 0.0
      %3236 = vst.msk [vmem:[%s3202 + $0x1] sm:$0xff] %vm3194, %v3162
      %3237 = vst.msk [vmem:[%s3202 + $0x9] sm:$0xff] %vm3194, %v3163
      %3238 = vst.msk [vmem:[%s3202 + $0x19] sm:$0xff] %vm3194, %v3164
      %3239 = vst.msk [vmem:[%s3202 + $0x21] sm:$0xff] %vm3194, %v3165
      %3240 = vst.msk [vmem:[%s3202 + $0x31] sm:$0xff] %vm3194, %v3166
      %3241 = vst.msk [vmem:[%s3202 + $0x39] sm:$0xff] %vm3194, %v3167
      %3242 = vst.msk [vmem:[%s3202 + $0x49] sm:$0xff] %vm3194, %v3168
      %3243 = vst.msk [vmem:[%s3202 + $0x51] sm:$0xff] %vm3194, %v3169
      %3244 = vst.msk [vmem:[%s3202 + $0x61] sm:$0xff] %vm3194, %v3170
      %3245 = vst.msk [vmem:[%s3202 + $0x69] sm:$0xff] %vm3194, %v3171
      %3246 = vst.msk [vmem:[%s3202 + $0x79] sm:$0xff] %vm3194, %v3172
      %3247 = vst.msk [vmem:[%s3202 + $0x81] sm:$0xff] %vm3194, %v3173
      %3248 = vst.msk [vmem:[%s3202 + $0x91] sm:$0xff] %vm3194, %v3174
      %3249 = vst.msk [vmem:[%s3202 + $0x99] sm:$0xff] %vm3194, %v3175
      %3250 = vst.msk [vmem:[%s3202 + $0xa9] sm:$0xff] %vm3194, %v3176
      %3251 = vst.msk [vmem:[%s3202 + $0xb1] sm:$0xff] %vm3194, %v3177
      %3252 = vst.msk [vmem:[%s3202 + $0xc1] sm:$0xff] %vm3194, %v3178
      %3253 = vst.msk [vmem:[%s3202 + $0xc9] sm:$0xff] %vm3194, %v3179
      %3254 = vst.msk [vmem:[%s3202 + $0xd9] sm:$0xff] %vm3194, %v3180
      %3255 = vst.msk [vmem:[%s3202 + $0xe1] sm:$0xff] %vm3194, %v3181
      %3256 = vst.msk [vmem:[%s3202 + $0xf1] sm:$0xff] %vm3194, %v3182
      %3257 = vst.msk [vmem:[%s3202 + $0xf9] sm:$0xff] %vm3194, %v3183
      %3258 = vst.msk [vmem:[%s3202 + $0x109] sm:$0xff] %vm3194, %v3184
      %3259 = vst.msk [vmem:[%s3202 + $0x111] sm:$0xff] %vm3194, %v3185
      %3260 = vst.msk [vmem:[%s3202 + $0x121] sm:$0xff] %vm3194, %v3186
      %3261 = vst.msk [vmem:[%s3202 + $0x129] sm:$0xff] %vm3194, %v3187
      %3262 = vst.msk [vmem:[%s3202 + $0x139] sm:$0xff] %vm3194, %v3188
      %3263 = vst.msk [vmem:[%s3202 + $0x141] sm:$0xff] %vm3194, %v3189
      %3264 = vst.msk [vmem:[%s3202 + $0x151] sm:$0xff] %vm3194, %v3190
      %3265 = vst.msk [vmem:[%s3202 + $0x159] sm:$0xff] %vm3194, %v3191
      %3266 = vst.msk [vmem:[%s3202 + $0x169] sm:$0xff] %vm3194, %v3192
      %3267 = vst.msk [vmem:[%s3202 + $0x171] sm:$0xff] %vm3194, %v3193
      %v3268 = vld [vmem:[%s12] sm:$0xff]
      %v3269 = vld [vmem:[%s12 + $0x8] sm:$0x1]
      %v3270 = vld [vmem:[#allocation3] sm:$0xff]
      %v3271 = vld [vmem:[#allocation3 + $0x8] sm:$0xff]
      %v3272 = vld [vmem:[#allocation3 + $0x18] sm:$0xff]
      %v3273 = vld [vmem:[#allocation3 + $0x20] sm:$0xff]
      %v3274 = vld [vmem:[#allocation3 + $0x30] sm:$0xff]
      %v3275 = vld [vmem:[#allocation3 + $0x38] sm:$0xff]
      %v3276 = vld [vmem:[#allocation3 + $0x48] sm:$0xff]
      %v3277 = vld [vmem:[#allocation3 + $0x50] sm:$0xff]
      %v3278 = vld [vmem:[#allocation3 + $0x60] sm:$0xff]
      %v3279 = vld [vmem:[#allocation3 + $0x68] sm:$0xff]
      %v3280 = vld [vmem:[#allocation3 + $0x78] sm:$0xff]
      %v3281 = vld [vmem:[#allocation3 + $0x80] sm:$0xff]
      %v3282 = vld [vmem:[#allocation3 + $0x90] sm:$0xff]
      %v3283 = vld [vmem:[#allocation3 + $0x98] sm:$0xff]
      %v3284 = vld [vmem:[#allocation3 + $0xa8] sm:$0xff]
      %v3285 = vld [vmem:[#allocation3 + $0xb0] sm:$0xff]
      %v3286 = vld [vmem:[#allocation3 + $0xc0] sm:$0xff]
      %v3287 = vld [vmem:[#allocation3 + $0xc8] sm:$0xff]
      %v3288 = vld [vmem:[#allocation3 + $0xd8] sm:$0xff]
      %v3289 = vld [vmem:[#allocation3 + $0xe0] sm:$0xff]
      %v3290 = vld [vmem:[#allocation3 + $0xf0] sm:$0xff]
      %v3291 = vld [vmem:[#allocation3 + $0xf8] sm:$0xff]
      %v3292 = vld [vmem:[#allocation3 + $0x108] sm:$0xff]
      %v3293 = vld [vmem:[#allocation3 + $0x110] sm:$0xff]
      %v3294 = vld [vmem:[#allocation3 + $0x120] sm:$0xff]
      %v3295 = vld [vmem:[#allocation3 + $0x128] sm:$0xff]
      %v3296 = vld [vmem:[#allocation3 + $0x138] sm:$0xff]
      %v3297 = vld [vmem:[#allocation3 + $0x140] sm:$0xff]
      %v3298 = vld [vmem:[#allocation3 + $0x150] sm:$0xff]
      %v3299 = vld [vmem:[#allocation3 + $0x158] sm:$0xff]
      %v3300 = vld [vmem:[#allocation3 + $0x168] sm:$0xff]
      %v3301 = vld [vmem:[#allocation3 + $0x170] sm:$0xff]
      %v3302 = vlaneseq
      %v3303 = vshrl.u32 %v3302, 7
      %v3304 = vsub.s32 0, %v3303
      %v3305 = vrot.slane %v3268, %v3304
      %v3306 = vmul.f32 %v3270, %v3305
      %v3307 = vmul.f32 %v3271, %v3305
      %v3308 = vmul.f32 %v3272, %v3305
      %v3309 = vmul.f32 %v3273, %v3305
      %v3310 = vmul.f32 %v3274, %v3305
      %v3311 = vmul.f32 %v3275, %v3305
      %v3312 = vmul.f32 %v3276, %v3305
      %v3313 = vmul.f32 %v3277, %v3305
      %v3314 = vmul.f32 %v3278, %v3305
      %v3315 = vmul.f32 %v3279, %v3305
      %v3316 = vmul.f32 %v3280, %v3305
      %v3317 = vmul.f32 %v3281, %v3305
      %v3318 = vmul.f32 %v3282, %v3305
      %v3319 = vmul.f32 %v3283, %v3305
      %v3320 = vmul.f32 %v3284, %v3305
      %v3321 = vmul.f32 %v3285, %v3305
      %v3322 = vmul.f32 %v3286, %v3305
      %v3323 = vmul.f32 %v3287, %v3305
      %v3324 = vmul.f32 %v3288, %v3305
      %v3325 = vmul.f32 %v3289, %v3305
      %v3326 = vmul.f32 %v3290, %v3305
      %v3327 = vmul.f32 %v3291, %v3305
      %v3328 = vmul.f32 %v3292, %v3305
      %v3329 = vmul.f32 %v3293, %v3305
      %v3330 = vmul.f32 %v3294, %v3305
      %v3331 = vmul.f32 %v3295, %v3305
      %v3332 = vmul.f32 %v3296, %v3305
      %v3333 = vmul.f32 %v3297, %v3305
      %v3334 = vmul.f32 %v3298, %v3305
      %v3335 = vmul.f32 %v3299, %v3305
      %v3336 = vmul.f32 %v3300, %v3305
      %v3337 = vmul.f32 %v3301, %v3305
      %v3338 = vadd.f32 %v3306, 0.0
      %v3339 = vadd.f32 %v3307, 0.0
      %v3340 = vadd.f32 %v3308, 0.0
      %v3341 = vadd.f32 %v3309, 0.0
      %v3342 = vadd.f32 %v3310, 0.0
      %v3343 = vadd.f32 %v3311, 0.0
      %v3344 = vadd.f32 %v3312, 0.0
      %v3345 = vadd.f32 %v3313, 0.0
      %v3346 = vadd.f32 %v3314, 0.0
      %v3347 = vadd.f32 %v3315, 0.0
      %v3348 = vadd.f32 %v3316, 0.0
      %v3349 = vadd.f32 %v3317, 0.0
      %v3350 = vadd.f32 %v3318, 0.0
      %v3351 = vadd.f32 %v3319, 0.0
      %v3352 = vadd.f32 %v3320, 0.0
      %v3353 = vadd.f32 %v3321, 0.0
      %v3354 = vadd.f32 %v3322, 0.0
      %v3355 = vadd.f32 %v3323, 0.0
      %v3356 = vadd.f32 %v3324, 0.0
      %v3357 = vadd.f32 %v3325, 0.0
      %v3358 = vadd.f32 %v3326, 0.0
      %v3359 = vadd.f32 %v3327, 0.0
      %v3360 = vadd.f32 %v3328, 0.0
      %v3361 = vadd.f32 %v3329, 0.0
      %v3362 = vadd.f32 %v3330, 0.0
      %v3363 = vadd.f32 %v3331, 0.0
      %v3364 = vadd.f32 %v3332, 0.0
      %v3365 = vadd.f32 %v3333, 0.0
      %v3366 = vadd.f32 %v3334, 0.0
      %v3367 = vadd.f32 %v3335, 0.0
      %v3368 = vadd.f32 %v3336, 0.0
      %v3369 = vadd.f32 %v3337, 0.0
      %v3370 = vld [vmem:[#allocation3 + $0x1] sm:$0xff]
      %v3371 = vld [vmem:[#allocation3 + $0x9] sm:$0xff]
      %v3372 = vld [vmem:[#allocation3 + $0x19] sm:$0xff]
      %v3373 = vld [vmem:[#allocation3 + $0x21] sm:$0xff]
      %v3374 = vld [vmem:[#allocation3 + $0x31] sm:$0xff]
      %v3375 = vld [vmem:[#allocation3 + $0x39] sm:$0xff]
      %v3376 = vld [vmem:[#allocation3 + $0x49] sm:$0xff]
      %v3377 = vld [vmem:[#allocation3 + $0x51] sm:$0xff]
      %v3378 = vld [vmem:[#allocation3 + $0x61] sm:$0xff]
      %v3379 = vld [vmem:[#allocation3 + $0x69] sm:$0xff]
      %v3380 = vld [vmem:[#allocation3 + $0x79] sm:$0xff]
      %v3381 = vld [vmem:[#allocation3 + $0x81] sm:$0xff]
      %v3382 = vld [vmem:[#allocation3 + $0x91] sm:$0xff]
      %v3383 = vld [vmem:[#allocation3 + $0x99] sm:$0xff]
      %v3384 = vld [vmem:[#allocation3 + $0xa9] sm:$0xff]
      %v3385 = vld [vmem:[#allocation3 + $0xb1] sm:$0xff]
      %v3386 = vld [vmem:[#allocation3 + $0xc1] sm:$0xff]
      %v3387 = vld [vmem:[#allocation3 + $0xc9] sm:$0xff]
      %v3388 = vld [vmem:[#allocation3 + $0xd9] sm:$0xff]
      %v3389 = vld [vmem:[#allocation3 + $0xe1] sm:$0xff]
      %v3390 = vld [vmem:[#allocation3 + $0xf1] sm:$0xff]
      %v3391 = vld [vmem:[#allocation3 + $0xf9] sm:$0xff]
      %v3392 = vld [vmem:[#allocation3 + $0x109] sm:$0xff]
      %v3393 = vld [vmem:[#allocation3 + $0x111] sm:$0xff]
      %v3394 = vld [vmem:[#allocation3 + $0x121] sm:$0xff]
      %v3395 = vld [vmem:[#allocation3 + $0x129] sm:$0xff]
      %v3396 = vld [vmem:[#allocation3 + $0x139] sm:$0xff]
      %v3397 = vld [vmem:[#allocation3 + $0x141] sm:$0xff]
      %v3398 = vld [vmem:[#allocation3 + $0x151] sm:$0xff]
      %v3399 = vld [vmem:[#allocation3 + $0x159] sm:$0xff]
      %v3400 = vld [vmem:[#allocation3 + $0x169] sm:$0xff]
      %v3401 = vld [vmem:[#allocation3 + $0x171] sm:$0xff]
      %v3402 = vlaneseq
      %v3403 = vshrl.u32 %v3402, 7
      %v3404 = vsub.s32 1, %v3403
      %v3405 = vrot.slane %v3268, %v3404
      %v3406 = vmul.f32 %v3370, %v3405
      %v3407 = vmul.f32 %v3371, %v3405
      %v3408 = vmul.f32 %v3372, %v3405
      %v3409 = vmul.f32 %v3373, %v3405
      %v3410 = vmul.f32 %v3374, %v3405
      %v3411 = vmul.f32 %v3375, %v3405
      %v3412 = vmul.f32 %v3376, %v3405
      %v3413 = vmul.f32 %v3377, %v3405
      %v3414 = vmul.f32 %v3378, %v3405
      %v3415 = vmul.f32 %v3379, %v3405
      %v3416 = vmul.f32 %v3380, %v3405
      %v3417 = vmul.f32 %v3381, %v3405
      %v3418 = vmul.f32 %v3382, %v3405
      %v3419 = vmul.f32 %v3383, %v3405
      %v3420 = vmul.f32 %v3384, %v3405
      %v3421 = vmul.f32 %v3385, %v3405
      %v3422 = vmul.f32 %v3386, %v3405
      %v3423 = vmul.f32 %v3387, %v3405
      %v3424 = vmul.f32 %v3388, %v3405
      %v3425 = vmul.f32 %v3389, %v3405
      %v3426 = vmul.f32 %v3390, %v3405
      %v3427 = vmul.f32 %v3391, %v3405
      %v3428 = vmul.f32 %v3392, %v3405
      %v3429 = vmul.f32 %v3393, %v3405
      %v3430 = vmul.f32 %v3394, %v3405
      %v3431 = vmul.f32 %v3395, %v3405
      %v3432 = vmul.f32 %v3396, %v3405
      %v3433 = vmul.f32 %v3397, %v3405
      %v3434 = vmul.f32 %v3398, %v3405
      %v3435 = vmul.f32 %v3399, %v3405
      %v3436 = vmul.f32 %v3400, %v3405
      %v3437 = vmul.f32 %v3401, %v3405
      %v3438 = vadd.f32 %v3338, %v3406
      %v3439 = vadd.f32 %v3339, %v3407
      %v3440 = vadd.f32 %v3340, %v3408
      %v3441 = vadd.f32 %v3341, %v3409
      %v3442 = vadd.f32 %v3342, %v3410
      %v3443 = vadd.f32 %v3343, %v3411
      %v3444 = vadd.f32 %v3344, %v3412
      %v3445 = vadd.f32 %v3345, %v3413
      %v3446 = vadd.f32 %v3346, %v3414
      %v3447 = vadd.f32 %v3347, %v3415
      %v3448 = vadd.f32 %v3348, %v3416
      %v3449 = vadd.f32 %v3349, %v3417
      %v3450 = vadd.f32 %v3350, %v3418
      %v3451 = vadd.f32 %v3351, %v3419
      %v3452 = vadd.f32 %v3352, %v3420
      %v3453 = vadd.f32 %v3353, %v3421
      %v3454 = vadd.f32 %v3354, %v3422
      %v3455 = vadd.f32 %v3355, %v3423
      %v3456 = vadd.f32 %v3356, %v3424
      %v3457 = vadd.f32 %v3357, %v3425
      %v3458 = vadd.f32 %v3358, %v3426
      %v3459 = vadd.f32 %v3359, %v3427
      %v3460 = vadd.f32 %v3360, %v3428
      %v3461 = vadd.f32 %v3361, %v3429
      %v3462 = vadd.f32 %v3362, %v3430
      %v3463 = vadd.f32 %v3363, %v3431
      %v3464 = vadd.f32 %v3364, %v3432
      %v3465 = vadd.f32 %v3365, %v3433
      %v3466 = vadd.f32 %v3366, %v3434
      %v3467 = vadd.f32 %v3367, %v3435
      %v3468 = vadd.f32 %v3368, %v3436
      %v3469 = vadd.f32 %v3369, %v3437
      %v3470 = vld [vmem:[#allocation3 + $0x2] sm:$0xff]
      %v3471 = vld [vmem:[#allocation3 + $0xa] sm:$0xff]
      %v3472 = vld [vmem:[#allocation3 + $0x1a] sm:$0xff]
      %v3473 = vld [vmem:[#allocation3 + $0x22] sm:$0xff]
      %v3474 = vld [vmem:[#allocation3 + $0x32] sm:$0xff]
      %v3475 = vld [vmem:[#allocation3 + $0x3a] sm:$0xff]
      %v3476 = vld [vmem:[#allocation3 + $0x4a] sm:$0xff]
      %v3477 = vld [vmem:[#allocation3 + $0x52] sm:$0xff]
      %v3478 = vld [vmem:[#allocation3 + $0x62] sm:$0xff]
      %v3479 = vld [vmem:[#allocation3 + $0x6a] sm:$0xff]
      %v3480 = vld [vmem:[#allocation3 + $0x7a] sm:$0xff]
      %v3481 = vld [vmem:[#allocation3 + $0x82] sm:$0xff]
      %v3482 = vld [vmem:[#allocation3 + $0x92] sm:$0xff]
      %v3483 = vld [vmem:[#allocation3 + $0x9a] sm:$0xff]
      %v3484 = vld [vmem:[#allocation3 + $0xaa] sm:$0xff]
      %v3485 = vld [vmem:[#allocation3 + $0xb2] sm:$0xff]
      %v3486 = vld [vmem:[#allocation3 + $0xc2] sm:$0xff]
      %v3487 = vld [vmem:[#allocation3 + $0xca] sm:$0xff]
      %v3488 = vld [vmem:[#allocation3 + $0xda] sm:$0xff]
      %v3489 = vld [vmem:[#allocation3 + $0xe2] sm:$0xff]
      %v3490 = vld [vmem:[#allocation3 + $0xf2] sm:$0xff]
      %v3491 = vld [vmem:[#allocation3 + $0xfa] sm:$0xff]
      %v3492 = vld [vmem:[#allocation3 + $0x10a] sm:$0xff]
      %v3493 = vld [vmem:[#allocation3 + $0x112] sm:$0xff]
      %v3494 = vld [vmem:[#allocation3 + $0x122] sm:$0xff]
      %v3495 = vld [vmem:[#allocation3 + $0x12a] sm:$0xff]
      %v3496 = vld [vmem:[#allocation3 + $0x13a] sm:$0xff]
      %v3497 = vld [vmem:[#allocation3 + $0x142] sm:$0xff]
      %v3498 = vld [vmem:[#allocation3 + $0x152] sm:$0xff]
      %v3499 = vld [vmem:[#allocation3 + $0x15a] sm:$0xff]
      %v3500 = vld [vmem:[#allocation3 + $0x16a] sm:$0xff]
      %v3501 = vld [vmem:[#allocation3 + $0x172] sm:$0xff]
      %v3502 = vlaneseq
      %v3503 = vshrl.u32 %v3502, 7
      %v3504 = vsub.s32 2, %v3503
      %v3505 = vrot.slane %v3268, %v3504
      %v3506 = vmul.f32 %v3470, %v3505
      %v3507 = vmul.f32 %v3471, %v3505
      %v3508 = vmul.f32 %v3472, %v3505
      %v3509 = vmul.f32 %v3473, %v3505
      %v3510 = vmul.f32 %v3474, %v3505
      %v3511 = vmul.f32 %v3475, %v3505
      %v3512 = vmul.f32 %v3476, %v3505
      %v3513 = vmul.f32 %v3477, %v3505
      %v3514 = vmul.f32 %v3478, %v3505
      %v3515 = vmul.f32 %v3479, %v3505
      %v3516 = vmul.f32 %v3480, %v3505
      %v3517 = vmul.f32 %v3481, %v3505
      %v3518 = vmul.f32 %v3482, %v3505
      %v3519 = vmul.f32 %v3483, %v3505
      %v3520 = vmul.f32 %v3484, %v3505
      %v3521 = vmul.f32 %v3485, %v3505
      %v3522 = vmul.f32 %v3486, %v3505
      %v3523 = vmul.f32 %v3487, %v3505
      %v3524 = vmul.f32 %v3488, %v3505
      %v3525 = vmul.f32 %v3489, %v3505
      %v3526 = vmul.f32 %v3490, %v3505
      %v3527 = vmul.f32 %v3491, %v3505
      %v3528 = vmul.f32 %v3492, %v3505
      %v3529 = vmul.f32 %v3493, %v3505
      %v3530 = vmul.f32 %v3494, %v3505
      %v3531 = vmul.f32 %v3495, %v3505
      %v3532 = vmul.f32 %v3496, %v3505
      %v3533 = vmul.f32 %v3497, %v3505
      %v3534 = vmul.f32 %v3498, %v3505
      %v3535 = vmul.f32 %v3499, %v3505
      %v3536 = vmul.f32 %v3500, %v3505
      %v3537 = vmul.f32 %v3501, %v3505
      %v3538 = vadd.f32 %v3438, %v3506
      %v3539 = vadd.f32 %v3439, %v3507
      %v3540 = vadd.f32 %v3440, %v3508
      %v3541 = vadd.f32 %v3441, %v3509
      %v3542 = vadd.f32 %v3442, %v3510
      %v3543 = vadd.f32 %v3443, %v3511
      %v3544 = vadd.f32 %v3444, %v3512
      %v3545 = vadd.f32 %v3445, %v3513
      %v3546 = vadd.f32 %v3446, %v3514
      %v3547 = vadd.f32 %v3447, %v3515
      %v3548 = vadd.f32 %v3448, %v3516
      %v3549 = vadd.f32 %v3449, %v3517
      %v3550 = vadd.f32 %v3450, %v3518
      %v3551 = vadd.f32 %v3451, %v3519
      %v3552 = vadd.f32 %v3452, %v3520
      %v3553 = vadd.f32 %v3453, %v3521
      %v3554 = vadd.f32 %v3454, %v3522
      %v3555 = vadd.f32 %v3455, %v3523
      %v3556 = vadd.f32 %v3456, %v3524
      %v3557 = vadd.f32 %v3457, %v3525
      %v3558 = vadd.f32 %v3458, %v3526
      %v3559 = vadd.f32 %v3459, %v3527
      %v3560 = vadd.f32 %v3460, %v3528
      %v3561 = vadd.f32 %v3461, %v3529
      %v3562 = vadd.f32 %v3462, %v3530
      %v3563 = vadd.f32 %v3463, %v3531
      %v3564 = vadd.f32 %v3464, %v3532
      %v3565 = vadd.f32 %v3465, %v3533
      %v3566 = vadd.f32 %v3466, %v3534
      %v3567 = vadd.f32 %v3467, %v3535
      %v3568 = vadd.f32 %v3468, %v3536
      %v3569 = vadd.f32 %v3469, %v3537
      %v3570 = vld [vmem:[%s3202] sm:$0xff]
      %v3571 = vld [vmem:[%s3202 + $0x8] sm:$0xff]
      %v3572 = vld [vmem:[%s3202 + $0x18] sm:$0xff]
      %v3573 = vld [vmem:[%s3202 + $0x20] sm:$0xff]
      %v3574 = vld [vmem:[%s3202 + $0x30] sm:$0xff]
      %v3575 = vld [vmem:[%s3202 + $0x38] sm:$0xff]
      %v3576 = vld [vmem:[%s3202 + $0x48] sm:$0xff]
      %v3577 = vld [vmem:[%s3202 + $0x50] sm:$0xff]
      %v3578 = vld [vmem:[%s3202 + $0x60] sm:$0xff]
      %v3579 = vld [vmem:[%s3202 + $0x68] sm:$0xff]
      %v3580 = vld [vmem:[%s3202 + $0x78] sm:$0xff]
      %v3581 = vld [vmem:[%s3202 + $0x80] sm:$0xff]
      %v3582 = vld [vmem:[%s3202 + $0x90] sm:$0xff]
      %v3583 = vld [vmem:[%s3202 + $0x98] sm:$0xff]
      %v3584 = vld [vmem:[%s3202 + $0xa8] sm:$0xff]
      %v3585 = vld [vmem:[%s3202 + $0xb0] sm:$0xff]
      %v3586 = vld [vmem:[%s3202 + $0xc0] sm:$0xff]
      %v3587 = vld [vmem:[%s3202 + $0xc8] sm:$0xff]
      %v3588 = vld [vmem:[%s3202 + $0xd8] sm:$0xff]
      %v3589 = vld [vmem:[%s3202 + $0xe0] sm:$0xff]
      %v3590 = vld [vmem:[%s3202 + $0xf0] sm:$0xff]
      %v3591 = vld [vmem:[%s3202 + $0xf8] sm:$0xff]
      %v3592 = vld [vmem:[%s3202 + $0x108] sm:$0xff]
      %v3593 = vld [vmem:[%s3202 + $0x110] sm:$0xff]
      %v3594 = vld [vmem:[%s3202 + $0x120] sm:$0xff]
      %v3595 = vld [vmem:[%s3202 + $0x128] sm:$0xff]
      %v3596 = vld [vmem:[%s3202 + $0x138] sm:$0xff]
      %v3597 = vld [vmem:[%s3202 + $0x140] sm:$0xff]
      %v3598 = vld [vmem:[%s3202 + $0x150] sm:$0xff]
      %v3599 = vld [vmem:[%s3202 + $0x158] sm:$0xff]
      %v3600 = vld [vmem:[%s3202 + $0x168] sm:$0xff]
      %v3601 = vld [vmem:[%s3202 + $0x170] sm:$0xff]
      %v3602 = vlaneseq
      %v3603 = vshrl.u32 %v3602, 7
      %v3604 = vsub.s32 3, %v3603
      %v3605 = vrot.slane %v3268, %v3604
      %v3606 = vmul.f32 %v3570, %v3605
      %v3607 = vmul.f32 %v3571, %v3605
      %v3608 = vmul.f32 %v3572, %v3605
      %v3609 = vmul.f32 %v3573, %v3605
      %v3610 = vmul.f32 %v3574, %v3605
      %v3611 = vmul.f32 %v3575, %v3605
      %v3612 = vmul.f32 %v3576, %v3605
      %v3613 = vmul.f32 %v3577, %v3605
      %v3614 = vmul.f32 %v3578, %v3605
      %v3615 = vmul.f32 %v3579, %v3605
      %v3616 = vmul.f32 %v3580, %v3605
      %v3617 = vmul.f32 %v3581, %v3605
      %v3618 = vmul.f32 %v3582, %v3605
      %v3619 = vmul.f32 %v3583, %v3605
      %v3620 = vmul.f32 %v3584, %v3605
      %v3621 = vmul.f32 %v3585, %v3605
      %v3622 = vmul.f32 %v3586, %v3605
      %v3623 = vmul.f32 %v3587, %v3605
      %v3624 = vmul.f32 %v3588, %v3605
      %v3625 = vmul.f32 %v3589, %v3605
      %v3626 = vmul.f32 %v3590, %v3605
      %v3627 = vmul.f32 %v3591, %v3605
      %v3628 = vmul.f32 %v3592, %v3605
      %v3629 = vmul.f32 %v3593, %v3605
      %v3630 = vmul.f32 %v3594, %v3605
      %v3631 = vmul.f32 %v3595, %v3605
      %v3632 = vmul.f32 %v3596, %v3605
      %v3633 = vmul.f32 %v3597, %v3605
      %v3634 = vmul.f32 %v3598, %v3605
      %v3635 = vmul.f32 %v3599, %v3605
      %v3636 = vmul.f32 %v3600, %v3605
      %v3637 = vmul.f32 %v3601, %v3605
      %v3638 = vadd.f32 %v3538, %v3606
      %v3639 = vadd.f32 %v3539, %v3607
      %v3640 = vadd.f32 %v3540, %v3608
      %v3641 = vadd.f32 %v3541, %v3609
      %v3642 = vadd.f32 %v3542, %v3610
      %v3643 = vadd.f32 %v3543, %v3611
      %v3644 = vadd.f32 %v3544, %v3612
      %v3645 = vadd.f32 %v3545, %v3613
      %v3646 = vadd.f32 %v3546, %v3614
      %v3647 = vadd.f32 %v3547, %v3615
      %v3648 = vadd.f32 %v3548, %v3616
      %v3649 = vadd.f32 %v3549, %v3617
      %v3650 = vadd.f32 %v3550, %v3618
      %v3651 = vadd.f32 %v3551, %v3619
      %v3652 = vadd.f32 %v3552, %v3620
      %v3653 = vadd.f32 %v3553, %v3621
      %v3654 = vadd.f32 %v3554, %v3622
      %v3655 = vadd.f32 %v3555, %v3623
      %v3656 = vadd.f32 %v3556, %v3624
      %v3657 = vadd.f32 %v3557, %v3625
      %v3658 = vadd.f32 %v3558, %v3626
      %v3659 = vadd.f32 %v3559, %v3627
      %v3660 = vadd.f32 %v3560, %v3628
      %v3661 = vadd.f32 %v3561, %v3629
      %v3662 = vadd.f32 %v3562, %v3630
      %v3663 = vadd.f32 %v3563, %v3631
      %v3664 = vadd.f32 %v3564, %v3632
      %v3665 = vadd.f32 %v3565, %v3633
      %v3666 = vadd.f32 %v3566, %v3634
      %v3667 = vadd.f32 %v3567, %v3635
      %v3668 = vadd.f32 %v3568, %v3636
      %v3669 = vadd.f32 %v3569, %v3637
      %v3670 = vld [vmem:[%s3202 + $0x1] sm:$0xff]
      %v3671 = vld [vmem:[%s3202 + $0x9] sm:$0xff]
      %v3672 = vld [vmem:[%s3202 + $0x19] sm:$0xff]
      %v3673 = vld [vmem:[%s3202 + $0x21] sm:$0xff]
      %v3674 = vld [vmem:[%s3202 + $0x31] sm:$0xff]
      %v3675 = vld [vmem:[%s3202 + $0x39] sm:$0xff]
      %v3676 = vld [vmem:[%s3202 + $0x49] sm:$0xff]
      %v3677 = vld [vmem:[%s3202 + $0x51] sm:$0xff]
      %v3678 = vld [vmem:[%s3202 + $0x61] sm:$0xff]
      %v3679 = vld [vmem:[%s3202 + $0x69] sm:$0xff]
      %v3680 = vld [vmem:[%s3202 + $0x79] sm:$0xff]
      %v3681 = vld [vmem:[%s3202 + $0x81] sm:$0xff]
      %v3682 = vld [vmem:[%s3202 + $0x91] sm:$0xff]
      %v3683 = vld [vmem:[%s3202 + $0x99] sm:$0xff]
      %v3684 = vld [vmem:[%s3202 + $0xa9] sm:$0xff]
      %v3685 = vld [vmem:[%s3202 + $0xb1] sm:$0xff]
      %v3686 = vld [vmem:[%s3202 + $0xc1] sm:$0xff]
      %v3687 = vld [vmem:[%s3202 + $0xc9] sm:$0xff]
      %v3688 = vld [vmem:[%s3202 + $0xd9] sm:$0xff]
      %v3689 = vld [vmem:[%s3202 + $0xe1] sm:$0xff]
      %v3690 = vld [vmem:[%s3202 + $0xf1] sm:$0xff]
      %v3691 = vld [vmem:[%s3202 + $0xf9] sm:$0xff]
      %v3692 = vld [vmem:[%s3202 + $0x109] sm:$0xff]
      %v3693 = vld [vmem:[%s3202 + $0x111] sm:$0xff]
      %v3694 = vld [vmem:[%s3202 + $0x121] sm:$0xff]
      %v3695 = vld [vmem:[%s3202 + $0x129] sm:$0xff]
      %v3696 = vld [vmem:[%s3202 + $0x139] sm:$0xff]
      %v3697 = vld [vmem:[%s3202 + $0x141] sm:$0xff]
      %v3698 = vld [vmem:[%s3202 + $0x151] sm:$0xff]
      %v3699 = vld [vmem:[%s3202 + $0x159] sm:$0xff]
      %v3700 = vld [vmem:[%s3202 + $0x169] sm:$0xff]
      %v3701 = vld [vmem:[%s3202 + $0x171] sm:$0xff]
      %v3702 = vlaneseq
      %v3703 = vshrl.u32 %v3702, 7
      %v3704 = vsub.s32 4, %v3703
      %v3705 = vrot.slane %v3268, %v3704
      %v3706 = vmul.f32 %v3670, %v3705
      %v3707 = vmul.f32 %v3671, %v3705
      %v3708 = vmul.f32 %v3672, %v3705
      %v3709 = vmul.f32 %v3673, %v3705
      %v3710 = vmul.f32 %v3674, %v3705
      %v3711 = vmul.f32 %v3675, %v3705
      %v3712 = vmul.f32 %v3676, %v3705
      %v3713 = vmul.f32 %v3677, %v3705
      %v3714 = vmul.f32 %v3678, %v3705
      %v3715 = vmul.f32 %v3679, %v3705
      %v3716 = vmul.f32 %v3680, %v3705
      %v3717 = vmul.f32 %v3681, %v3705
      %v3718 = vmul.f32 %v3682, %v3705
      %v3719 = vmul.f32 %v3683, %v3705
      %v3720 = vmul.f32 %v3684, %v3705
      %v3721 = vmul.f32 %v3685, %v3705
      %v3722 = vmul.f32 %v3686, %v3705
      %v3723 = vmul.f32 %v3687, %v3705
      %v3724 = vmul.f32 %v3688, %v3705
      %v3725 = vmul.f32 %v3689, %v3705
      %v3726 = vmul.f32 %v3690, %v3705
      %v3727 = vmul.f32 %v3691, %v3705
      %v3728 = vmul.f32 %v3692, %v3705
      %v3729 = vmul.f32 %v3693, %v3705
      %v3730 = vmul.f32 %v3694, %v3705
      %v3731 = vmul.f32 %v3695, %v3705
      %v3732 = vmul.f32 %v3696, %v3705
      %v3733 = vmul.f32 %v3697, %v3705
      %v3734 = vmul.f32 %v3698, %v3705
      %v3735 = vmul.f32 %v3699, %v3705
      %v3736 = vmul.f32 %v3700, %v3705
      %v3737 = vmul.f32 %v3701, %v3705
      %v3738 = vadd.f32 %v3638, %v3706
      %v3739 = vadd.f32 %v3639, %v3707
      %v3740 = vadd.f32 %v3640, %v3708
      %v3741 = vadd.f32 %v3641, %v3709
      %v3742 = vadd.f32 %v3642, %v3710
      %v3743 = vadd.f32 %v3643, %v3711
      %v3744 = vadd.f32 %v3644, %v3712
      %v3745 = vadd.f32 %v3645, %v3713
      %v3746 = vadd.f32 %v3646, %v3714
      %v3747 = vadd.f32 %v3647, %v3715
      %v3748 = vadd.f32 %v3648, %v3716
      %v3749 = vadd.f32 %v3649, %v3717
      %v3750 = vadd.f32 %v3650, %v3718
      %v3751 = vadd.f32 %v3651, %v3719
      %v3752 = vadd.f32 %v3652, %v3720
      %v3753 = vadd.f32 %v3653, %v3721
      %v3754 = vadd.f32 %v3654, %v3722
      %v3755 = vadd.f32 %v3655, %v3723
      %v3756 = vadd.f32 %v3656, %v3724
      %v3757 = vadd.f32 %v3657, %v3725
      %v3758 = vadd.f32 %v3658, %v3726
      %v3759 = vadd.f32 %v3659, %v3727
      %v3760 = vadd.f32 %v3660, %v3728
      %v3761 = vadd.f32 %v3661, %v3729
      %v3762 = vadd.f32 %v3662, %v3730
      %v3763 = vadd.f32 %v3663, %v3731
      %v3764 = vadd.f32 %v3664, %v3732
      %v3765 = vadd.f32 %v3665, %v3733
      %v3766 = vadd.f32 %v3666, %v3734
      %v3767 = vadd.f32 %v3667, %v3735
      %v3768 = vadd.f32 %v3668, %v3736
      %v3769 = vadd.f32 %v3669, %v3737
      %v3770 = vld [vmem:[%s3202 + $0x2] sm:$0xff]
      %v3771 = vld [vmem:[%s3202 + $0xa] sm:$0xff]
      %v3772 = vld [vmem:[%s3202 + $0x1a] sm:$0xff]
      %v3773 = vld [vmem:[%s3202 + $0x22] sm:$0xff]
      %v3774 = vld [vmem:[%s3202 + $0x32] sm:$0xff]
      %v3775 = vld [vmem:[%s3202 + $0x3a] sm:$0xff]
      %v3776 = vld [vmem:[%s3202 + $0x4a] sm:$0xff]
      %v3777 = vld [vmem:[%s3202 + $0x52] sm:$0xff]
      %v3778 = vld [vmem:[%s3202 + $0x62] sm:$0xff]
      %v3779 = vld [vmem:[%s3202 + $0x6a] sm:$0xff]
      %v3780 = vld [vmem:[%s3202 + $0x7a] sm:$0xff]
      %v3781 = vld [vmem:[%s3202 + $0x82] sm:$0xff]
      %v3782 = vld [vmem:[%s3202 + $0x92] sm:$0xff]
      %v3783 = vld [vmem:[%s3202 + $0x9a] sm:$0xff]
      %v3784 = vld [vmem:[%s3202 + $0xaa] sm:$0xff]
      %v3785 = vld [vmem:[%s3202 + $0xb2] sm:$0xff]
      %v3786 = vld [vmem:[%s3202 + $0xc2] sm:$0xff]
      %v3787 = vld [vmem:[%s3202 + $0xca] sm:$0xff]
      %v3788 = vld [vmem:[%s3202 + $0xda] sm:$0xff]
      %v3789 = vld [vmem:[%s3202 + $0xe2] sm:$0xff]
      %v3790 = vld [vmem:[%s3202 + $0xf2] sm:$0xff]
      %v3791 = vld [vmem:[%s3202 + $0xfa] sm:$0xff]
      %v3792 = vld [vmem:[%s3202 + $0x10a] sm:$0xff]
      %v3793 = vld [vmem:[%s3202 + $0x112] sm:$0xff]
      %v3794 = vld [vmem:[%s3202 + $0x122] sm:$0xff]
      %v3795 = vld [vmem:[%s3202 + $0x12a] sm:$0xff]
      %v3796 = vld [vmem:[%s3202 + $0x13a] sm:$0xff]
      %v3797 = vld [vmem:[%s3202 + $0x142] sm:$0xff]
      %v3798 = vld [vmem:[%s3202 + $0x152] sm:$0xff]
      %v3799 = vld [vmem:[%s3202 + $0x15a] sm:$0xff]
      %v3800 = vld [vmem:[%s3202 + $0x16a] sm:$0xff]
      %v3801 = vld [vmem:[%s3202 + $0x172] sm:$0xff]
      %v3802 = vlaneseq
      %v3803 = vshrl.u32 %v3802, 7
      %v3804 = vsub.s32 5, %v3803
      %v3805 = vrot.slane %v3268, %v3804
      %v3806 = vmul.f32 %v3770, %v3805
      %v3807 = vmul.f32 %v3771, %v3805
      %v3808 = vmul.f32 %v3772, %v3805
      %v3809 = vmul.f32 %v3773, %v3805
      %v3810 = vmul.f32 %v3774, %v3805
      %v3811 = vmul.f32 %v3775, %v3805
      %v3812 = vmul.f32 %v3776, %v3805
      %v3813 = vmul.f32 %v3777, %v3805
      %v3814 = vmul.f32 %v3778, %v3805
      %v3815 = vmul.f32 %v3779, %v3805
      %v3816 = vmul.f32 %v3780, %v3805
      %v3817 = vmul.f32 %v3781, %v3805
      %v3818 = vmul.f32 %v3782, %v3805
      %v3819 = vmul.f32 %v3783, %v3805
      %v3820 = vmul.f32 %v3784, %v3805
      %v3821 = vmul.f32 %v3785, %v3805
      %v3822 = vmul.f32 %v3786, %v3805
      %v3823 = vmul.f32 %v3787, %v3805
      %v3824 = vmul.f32 %v3788, %v3805
      %v3825 = vmul.f32 %v3789, %v3805
      %v3826 = vmul.f32 %v3790, %v3805
      %v3827 = vmul.f32 %v3791, %v3805
      %v3828 = vmul.f32 %v3792, %v3805
      %v3829 = vmul.f32 %v3793, %v3805
      %v3830 = vmul.f32 %v3794, %v3805
      %v3831 = vmul.f32 %v3795, %v3805
      %v3832 = vmul.f32 %v3796, %v3805
      %v3833 = vmul.f32 %v3797, %v3805
      %v3834 = vmul.f32 %v3798, %v3805
      %v3835 = vmul.f32 %v3799, %v3805
      %v3836 = vmul.f32 %v3800, %v3805
      %v3837 = vmul.f32 %v3801, %v3805
      %v3838 = vadd.f32 %v3738, %v3806
      %v3839 = vadd.f32 %v3739, %v3807
      %v3840 = vadd.f32 %v3740, %v3808
      %v3841 = vadd.f32 %v3741, %v3809
      %v3842 = vadd.f32 %v3742, %v3810
      %v3843 = vadd.f32 %v3743, %v3811
      %v3844 = vadd.f32 %v3744, %v3812
      %v3845 = vadd.f32 %v3745, %v3813
      %v3846 = vadd.f32 %v3746, %v3814
      %v3847 = vadd.f32 %v3747, %v3815
      %v3848 = vadd.f32 %v3748, %v3816
      %v3849 = vadd.f32 %v3749, %v3817
      %v3850 = vadd.f32 %v3750, %v3818
      %v3851 = vadd.f32 %v3751, %v3819
      %v3852 = vadd.f32 %v3752, %v3820
      %v3853 = vadd.f32 %v3753, %v3821
      %v3854 = vadd.f32 %v3754, %v3822
      %v3855 = vadd.f32 %v3755, %v3823
      %v3856 = vadd.f32 %v3756, %v3824
      %v3857 = vadd.f32 %v3757, %v3825
      %v3858 = vadd.f32 %v3758, %v3826
      %v3859 = vadd.f32 %v3759, %v3827
      %v3860 = vadd.f32 %v3760, %v3828
      %v3861 = vadd.f32 %v3761, %v3829
      %v3862 = vadd.f32 %v3762, %v3830
      %v3863 = vadd.f32 %v3763, %v3831
      %v3864 = vadd.f32 %v3764, %v3832
      %v3865 = vadd.f32 %v3765, %v3833
      %v3866 = vadd.f32 %v3766, %v3834
      %v3867 = vadd.f32 %v3767, %v3835
      %v3868 = vadd.f32 %v3768, %v3836
      %v3869 = vadd.f32 %v3769, %v3837
      %s3870 = scalar_lea.vmem [#allocation3], 48
      %v3871 = vld [vmem:[%s3870] sm:$0xff]
      %v3872 = vld [vmem:[%s3870 + $0x8] sm:$0xff]
      %v3873 = vld [vmem:[%s3870 + $0x18] sm:$0xff]
      %v3874 = vld [vmem:[%s3870 + $0x20] sm:$0xff]
      %v3875 = vld [vmem:[%s3870 + $0x30] sm:$0xff]
      %v3876 = vld [vmem:[%s3870 + $0x38] sm:$0xff]
      %v3877 = vld [vmem:[%s3870 + $0x48] sm:$0xff]
      %v3878 = vld [vmem:[%s3870 + $0x50] sm:$0xff]
      %v3879 = vld [vmem:[%s3870 + $0x60] sm:$0xff]
      %v3880 = vld [vmem:[%s3870 + $0x68] sm:$0xff]
      %v3881 = vld [vmem:[%s3870 + $0x78] sm:$0xff]
      %v3882 = vld [vmem:[%s3870 + $0x80] sm:$0xff]
      %v3883 = vld [vmem:[%s3870 + $0x90] sm:$0xff]
      %v3884 = vld [vmem:[%s3870 + $0x98] sm:$0xff]
      %v3885 = vld [vmem:[%s3870 + $0xa8] sm:$0xff]
      %v3886 = vld [vmem:[%s3870 + $0xb0] sm:$0xff]
      %v3887 = vld [vmem:[%s3870 + $0xc0] sm:$0xff]
      %v3888 = vld [vmem:[%s3870 + $0xc8] sm:$0xff]
      %v3889 = vld [vmem:[%s3870 + $0xd8] sm:$0xff]
      %v3890 = vld [vmem:[%s3870 + $0xe0] sm:$0xff]
      %v3891 = vld [vmem:[%s3870 + $0xf0] sm:$0xff]
      %v3892 = vld [vmem:[%s3870 + $0xf8] sm:$0xff]
      %v3893 = vld [vmem:[%s3870 + $0x108] sm:$0xff]
      %v3894 = vld [vmem:[%s3870 + $0x110] sm:$0xff]
      %v3895 = vld [vmem:[%s3870 + $0x120] sm:$0xff]
      %v3896 = vld [vmem:[%s3870 + $0x128] sm:$0xff]
      %v3897 = vld [vmem:[%s3870 + $0x138] sm:$0xff]
      %v3898 = vld [vmem:[%s3870 + $0x140] sm:$0xff]
      %v3899 = vld [vmem:[%s3870 + $0x150] sm:$0xff]
      %v3900 = vld [vmem:[%s3870 + $0x158] sm:$0xff]
      %v3901 = vld [vmem:[%s3870 + $0x168] sm:$0xff]
      %v3902 = vld [vmem:[%s3870 + $0x170] sm:$0xff]
      %v3903 = vlaneseq
      %v3904 = vshrl.u32 %v3903, 7
      %v3905 = vsub.s32 6, %v3904
      %v3906 = vrot.slane %v3268, %v3905
      %v3907 = vmul.f32 %v3871, %v3906
      %v3908 = vmul.f32 %v3872, %v3906
      %v3909 = vmul.f32 %v3873, %v3906
      %v3910 = vmul.f32 %v3874, %v3906
      %v3911 = vmul.f32 %v3875, %v3906
      %v3912 = vmul.f32 %v3876, %v3906
      %v3913 = vmul.f32 %v3877, %v3906
      %v3914 = vmul.f32 %v3878, %v3906
      %v3915 = vmul.f32 %v3879, %v3906
      %v3916 = vmul.f32 %v3880, %v3906
      %v3917 = vmul.f32 %v3881, %v3906
      %v3918 = vmul.f32 %v3882, %v3906
      %v3919 = vmul.f32 %v3883, %v3906
      %v3920 = vmul.f32 %v3884, %v3906
      %v3921 = vmul.f32 %v3885, %v3906
      %v3922 = vmul.f32 %v3886, %v3906
      %v3923 = vmul.f32 %v3887, %v3906
      %v3924 = vmul.f32 %v3888, %v3906
      %v3925 = vmul.f32 %v3889, %v3906
      %v3926 = vmul.f32 %v3890, %v3906
      %v3927 = vmul.f32 %v3891, %v3906
      %v3928 = vmul.f32 %v3892, %v3906
      %v3929 = vmul.f32 %v3893, %v3906
      %v3930 = vmul.f32 %v3894, %v3906
      %v3931 = vmul.f32 %v3895, %v3906
      %v3932 = vmul.f32 %v3896, %v3906
      %v3933 = vmul.f32 %v3897, %v3906
      %v3934 = vmul.f32 %v3898, %v3906
      %v3935 = vmul.f32 %v3899, %v3906
      %v3936 = vmul.f32 %v3900, %v3906
      %v3937 = vmul.f32 %v3901, %v3906
      %v3938 = vmul.f32 %v3902, %v3906
      %v3939 = vadd.f32 %v3838, %v3907
      %v3940 = vadd.f32 %v3839, %v3908
      %v3941 = vadd.f32 %v3840, %v3909
      %v3942 = vadd.f32 %v3841, %v3910
      %v3943 = vadd.f32 %v3842, %v3911
      %v3944 = vadd.f32 %v3843, %v3912
      %v3945 = vadd.f32 %v3844, %v3913
      %v3946 = vadd.f32 %v3845, %v3914
      %v3947 = vadd.f32 %v3846, %v3915
      %v3948 = vadd.f32 %v3847, %v3916
      %v3949 = vadd.f32 %v3848, %v3917
      %v3950 = vadd.f32 %v3849, %v3918
      %v3951 = vadd.f32 %v3850, %v3919
      %v3952 = vadd.f32 %v3851, %v3920
      %v3953 = vadd.f32 %v3852, %v3921
      %v3954 = vadd.f32 %v3853, %v3922
      %v3955 = vadd.f32 %v3854, %v3923
      %v3956 = vadd.f32 %v3855, %v3924
      %v3957 = vadd.f32 %v3856, %v3925
      %v3958 = vadd.f32 %v3857, %v3926
      %v3959 = vadd.f32 %v3858, %v3927
      %v3960 = vadd.f32 %v3859, %v3928
      %v3961 = vadd.f32 %v3860, %v3929
      %v3962 = vadd.f32 %v3861, %v3930
      %v3963 = vadd.f32 %v3862, %v3931
      %v3964 = vadd.f32 %v3863, %v3932
      %v3965 = vadd.f32 %v3864, %v3933
      %v3966 = vadd.f32 %v3865, %v3934
      %v3967 = vadd.f32 %v3866, %v3935
      %v3968 = vadd.f32 %v3867, %v3936
      %v3969 = vadd.f32 %v3868, %v3937
      %v3970 = vadd.f32 %v3869, %v3938
      %v3971 = vld [vmem:[%s3870 + $0x1] sm:$0xff]
      %v3972 = vld [vmem:[%s3870 + $0x9] sm:$0xff]
      %v3973 = vld [vmem:[%s3870 + $0x19] sm:$0xff]
      %v3974 = vld [vmem:[%s3870 + $0x21] sm:$0xff]
      %v3975 = vld [vmem:[%s3870 + $0x31] sm:$0xff]
      %v3976 = vld [vmem:[%s3870 + $0x39] sm:$0xff]
      %v3977 = vld [vmem:[%s3870 + $0x49] sm:$0xff]
      %v3978 = vld [vmem:[%s3870 + $0x51] sm:$0xff]
      %v3979 = vld [vmem:[%s3870 + $0x61] sm:$0xff]
      %v3980 = vld [vmem:[%s3870 + $0x69] sm:$0xff]
      %v3981 = vld [vmem:[%s3870 + $0x79] sm:$0xff]
      %v3982 = vld [vmem:[%s3870 + $0x81] sm:$0xff]
      %v3983 = vld [vmem:[%s3870 + $0x91] sm:$0xff]
      %v3984 = vld [vmem:[%s3870 + $0x99] sm:$0xff]
      %v3985 = vld [vmem:[%s3870 + $0xa9] sm:$0xff]
      %v3986 = vld [vmem:[%s3870 + $0xb1] sm:$0xff]
      %v3987 = vld [vmem:[%s3870 + $0xc1] sm:$0xff]
      %v3988 = vld [vmem:[%s3870 + $0xc9] sm:$0xff]
      %v3989 = vld [vmem:[%s3870 + $0xd9] sm:$0xff]
      %v3990 = vld [vmem:[%s3870 + $0xe1] sm:$0xff]
      %v3991 = vld [vmem:[%s3870 + $0xf1] sm:$0xff]
      %v3992 = vld [vmem:[%s3870 + $0xf9] sm:$0xff]
      %v3993 = vld [vmem:[%s3870 + $0x109] sm:$0xff]
      %v3994 = vld [vmem:[%s3870 + $0x111] sm:$0xff]
      %v3995 = vld [vmem:[%s3870 + $0x121] sm:$0xff]
      %v3996 = vld [vmem:[%s3870 + $0x129] sm:$0xff]
      %v3997 = vld [vmem:[%s3870 + $0x139] sm:$0xff]
      %v3998 = vld [vmem:[%s3870 + $0x141] sm:$0xff]
      %v3999 = vld [vmem:[%s3870 + $0x151] sm:$0xff]
      %v4000 = vld [vmem:[%s3870 + $0x159] sm:$0xff]
      %v4001 = vld [vmem:[%s3870 + $0x169] sm:$0xff]
      %v4002 = vld [vmem:[%s3870 + $0x171] sm:$0xff]
      %v4003 = vlaneseq
      %v4004 = vshrl.u32 %v4003, 7
      %v4005 = vsub.s32 7, %v4004
      %v4006 = vrot.slane %v3268, %v4005
      %v4007 = vmul.f32 %v3971, %v4006
      %v4008 = vmul.f32 %v3972, %v4006
      %v4009 = vmul.f32 %v3973, %v4006
      %v4010 = vmul.f32 %v3974, %v4006
      %v4011 = vmul.f32 %v3975, %v4006
      %v4012 = vmul.f32 %v3976, %v4006
      %v4013 = vmul.f32 %v3977, %v4006
      %v4014 = vmul.f32 %v3978, %v4006
      %v4015 = vmul.f32 %v3979, %v4006
      %v4016 = vmul.f32 %v3980, %v4006
      %v4017 = vmul.f32 %v3981, %v4006
      %v4018 = vmul.f32 %v3982, %v4006
      %v4019 = vmul.f32 %v3983, %v4006
      %v4020 = vmul.f32 %v3984, %v4006
      %v4021 = vmul.f32 %v3985, %v4006
      %v4022 = vmul.f32 %v3986, %v4006
      %v4023 = vmul.f32 %v3987, %v4006
      %v4024 = vmul.f32 %v3988, %v4006
      %v4025 = vmul.f32 %v3989, %v4006
      %v4026 = vmul.f32 %v3990, %v4006
      %v4027 = vmul.f32 %v3991, %v4006
      %v4028 = vmul.f32 %v3992, %v4006
      %v4029 = vmul.f32 %v3993, %v4006
      %v4030 = vmul.f32 %v3994, %v4006
      %v4031 = vmul.f32 %v3995, %v4006
      %v4032 = vmul.f32 %v3996, %v4006
      %v4033 = vmul.f32 %v3997, %v4006
      %v4034 = vmul.f32 %v3998, %v4006
      %v4035 = vmul.f32 %v3999, %v4006
      %v4036 = vmul.f32 %v4000, %v4006
      %v4037 = vmul.f32 %v4001, %v4006
      %v4038 = vmul.f32 %v4002, %v4006
      %v4039 = vadd.f32 %v3939, %v4007
      %v4040 = vadd.f32 %v3940, %v4008
      %v4041 = vadd.f32 %v3941, %v4009
      %v4042 = vadd.f32 %v3942, %v4010
      %v4043 = vadd.f32 %v3943, %v4011
      %v4044 = vadd.f32 %v3944, %v4012
      %v4045 = vadd.f32 %v3945, %v4013
      %v4046 = vadd.f32 %v3946, %v4014
      %v4047 = vadd.f32 %v3947, %v4015
      %v4048 = vadd.f32 %v3948, %v4016
      %v4049 = vadd.f32 %v3949, %v4017
      %v4050 = vadd.f32 %v3950, %v4018
      %v4051 = vadd.f32 %v3951, %v4019
      %v4052 = vadd.f32 %v3952, %v4020
      %v4053 = vadd.f32 %v3953, %v4021
      %v4054 = vadd.f32 %v3954, %v4022
      %v4055 = vadd.f32 %v3955, %v4023
      %v4056 = vadd.f32 %v3956, %v4024
      %v4057 = vadd.f32 %v3957, %v4025
      %v4058 = vadd.f32 %v3958, %v4026
      %v4059 = vadd.f32 %v3959, %v4027
      %v4060 = vadd.f32 %v3960, %v4028
      %v4061 = vadd.f32 %v3961, %v4029
      %v4062 = vadd.f32 %v3962, %v4030
      %v4063 = vadd.f32 %v3963, %v4031
      %v4064 = vadd.f32 %v3964, %v4032
      %v4065 = vadd.f32 %v3965, %v4033
      %v4066 = vadd.f32 %v3966, %v4034
      %v4067 = vadd.f32 %v3967, %v4035
      %v4068 = vadd.f32 %v3968, %v4036
      %v4069 = vadd.f32 %v3969, %v4037
      %v4070 = vadd.f32 %v3970, %v4038
      %v4071 = vld [vmem:[%s3870 + $0x2] sm:$0xff]
      %v4072 = vld [vmem:[%s3870 + $0xa] sm:$0xff]
      %v4073 = vld [vmem:[%s3870 + $0x1a] sm:$0xff]
      %v4074 = vld [vmem:[%s3870 + $0x22] sm:$0xff]
      %v4075 = vld [vmem:[%s3870 + $0x32] sm:$0xff]
      %v4076 = vld [vmem:[%s3870 + $0x3a] sm:$0xff]
      %v4077 = vld [vmem:[%s3870 + $0x4a] sm:$0xff]
      %v4078 = vld [vmem:[%s3870 + $0x52] sm:$0xff]
      %v4079 = vld [vmem:[%s3870 + $0x62] sm:$0xff]
      %v4080 = vld [vmem:[%s3870 + $0x6a] sm:$0xff]
      %v4081 = vld [vmem:[%s3870 + $0x7a] sm:$0xff]
      %v4082 = vld [vmem:[%s3870 + $0x82] sm:$0xff]
      %v4083 = vld [vmem:[%s3870 + $0x92] sm:$0xff]
      %v4084 = vld [vmem:[%s3870 + $0x9a] sm:$0xff]
      %v4085 = vld [vmem:[%s3870 + $0xaa] sm:$0xff]
      %v4086 = vld [vmem:[%s3870 + $0xb2] sm:$0xff]
      %v4087 = vld [vmem:[%s3870 + $0xc2] sm:$0xff]
      %v4088 = vld [vmem:[%s3870 + $0xca] sm:$0xff]
      %v4089 = vld [vmem:[%s3870 + $0xda] sm:$0xff]
      %v4090 = vld [vmem:[%s3870 + $0xe2] sm:$0xff]
      %v4091 = vld [vmem:[%s3870 + $0xf2] sm:$0xff]
      %v4092 = vld [vmem:[%s3870 + $0xfa] sm:$0xff]
      %v4093 = vld [vmem:[%s3870 + $0x10a] sm:$0xff]
      %v4094 = vld [vmem:[%s3870 + $0x112] sm:$0xff]
      %v4095 = vld [vmem:[%s3870 + $0x122] sm:$0xff]
      %v4096 = vld [vmem:[%s3870 + $0x12a] sm:$0xff]
      %v4097 = vld [vmem:[%s3870 + $0x13a] sm:$0xff]
      %v4098 = vld [vmem:[%s3870 + $0x142] sm:$0xff]
      %v4099 = vld [vmem:[%s3870 + $0x152] sm:$0xff]
      %v4100 = vld [vmem:[%s3870 + $0x15a] sm:$0xff]
      %v4101 = vld [vmem:[%s3870 + $0x16a] sm:$0xff]
      %v4102 = vld [vmem:[%s3870 + $0x172] sm:$0xff]
      %v4103 = vlaneseq
      %v4104 = vshrl.u32 %v4103, 7
      %v4105 = vsub.s32 0, %v4104
      %v4106 = vrot.slane %v3269, %v4105
      %v4107 = vmul.f32 %v4071, %v4106
      %v4108 = vmul.f32 %v4072, %v4106
      %v4109 = vmul.f32 %v4073, %v4106
      %v4110 = vmul.f32 %v4074, %v4106
      %v4111 = vmul.f32 %v4075, %v4106
      %v4112 = vmul.f32 %v4076, %v4106
      %v4113 = vmul.f32 %v4077, %v4106
      %v4114 = vmul.f32 %v4078, %v4106
      %v4115 = vmul.f32 %v4079, %v4106
      %v4116 = vmul.f32 %v4080, %v4106
      %v4117 = vmul.f32 %v4081, %v4106
      %v4118 = vmul.f32 %v4082, %v4106
      %v4119 = vmul.f32 %v4083, %v4106
      %v4120 = vmul.f32 %v4084, %v4106
      %v4121 = vmul.f32 %v4085, %v4106
      %v4122 = vmul.f32 %v4086, %v4106
      %v4123 = vmul.f32 %v4087, %v4106
      %v4124 = vmul.f32 %v4088, %v4106
      %v4125 = vmul.f32 %v4089, %v4106
      %v4126 = vmul.f32 %v4090, %v4106
      %v4127 = vmul.f32 %v4091, %v4106
      %v4128 = vmul.f32 %v4092, %v4106
      %v4129 = vmul.f32 %v4093, %v4106
      %v4130 = vmul.f32 %v4094, %v4106
      %v4131 = vmul.f32 %v4095, %v4106
      %v4132 = vmul.f32 %v4096, %v4106
      %v4133 = vmul.f32 %v4097, %v4106
      %v4134 = vmul.f32 %v4098, %v4106
      %v4135 = vmul.f32 %v4099, %v4106
      %v4136 = vmul.f32 %v4100, %v4106
      %v4137 = vmul.f32 %v4101, %v4106
      %v4138 = vmul.f32 %v4102, %v4106
      %v4139 = vadd.f32 %v4039, %v4107
      %v4140 = vadd.f32 %v4040, %v4108
      %v4141 = vadd.f32 %v4041, %v4109
      %v4142 = vadd.f32 %v4042, %v4110
      %v4143 = vadd.f32 %v4043, %v4111
      %v4144 = vadd.f32 %v4044, %v4112
      %v4145 = vadd.f32 %v4045, %v4113
      %v4146 = vadd.f32 %v4046, %v4114
      %v4147 = vadd.f32 %v4047, %v4115
      %v4148 = vadd.f32 %v4048, %v4116
      %v4149 = vadd.f32 %v4049, %v4117
      %v4150 = vadd.f32 %v4050, %v4118
      %v4151 = vadd.f32 %v4051, %v4119
      %v4152 = vadd.f32 %v4052, %v4120
      %v4153 = vadd.f32 %v4053, %v4121
      %v4154 = vadd.f32 %v4054, %v4122
      %v4155 = vadd.f32 %v4055, %v4123
      %v4156 = vadd.f32 %v4056, %v4124
      %v4157 = vadd.f32 %v4057, %v4125
      %v4158 = vadd.f32 %v4058, %v4126
      %v4159 = vadd.f32 %v4059, %v4127
      %v4160 = vadd.f32 %v4060, %v4128
      %v4161 = vadd.f32 %v4061, %v4129
      %v4162 = vadd.f32 %v4062, %v4130
      %v4163 = vadd.f32 %v4063, %v4131
      %v4164 = vadd.f32 %v4064, %v4132
      %v4165 = vadd.f32 %v4065, %v4133
      %v4166 = vadd.f32 %v4066, %v4134
      %v4167 = vadd.f32 %v4067, %v4135
      %v4168 = vadd.f32 %v4068, %v4136
      %v4169 = vadd.f32 %v4069, %v4137
      %v4170 = vadd.f32 %v4070, %v4138
      %v4171 = vld [vmem:[%s13] sm:$0x1]
      %v4173 = vlaneseq
      %v4174 = vshrl.u32 %v4173, 7
      %v4175 = vsub.s32 0, %v4174
      %v4176 = vrot.slane %v4171, %v4175
      %v4178 = vadd.f32 %v4139, %v4176
      %v4179 = vadd.f32 %v4140, %v4176
      %v4180 = vadd.f32 %v4141, %v4176
      %v4181 = vadd.f32 %v4142, %v4176
      %v4182 = vadd.f32 %v4143, %v4176
      %v4183 = vadd.f32 %v4144, %v4176
      %v4184 = vadd.f32 %v4145, %v4176
      %v4185 = vadd.f32 %v4146, %v4176
      %v4186 = vadd.f32 %v4147, %v4176
      %v4187 = vadd.f32 %v4148, %v4176
      %v4188 = vadd.f32 %v4149, %v4176
      %v4189 = vadd.f32 %v4150, %v4176
      %v4190 = vadd.f32 %v4151, %v4176
      %v4191 = vadd.f32 %v4152, %v4176
      %v4192 = vadd.f32 %v4153, %v4176
      %v4193 = vadd.f32 %v4154, %v4176
      %v4194 = vadd.f32 %v4155, %v4176
      %v4195 = vadd.f32 %v4156, %v4176
      %v4196 = vadd.f32 %v4157, %v4176
      %v4197 = vadd.f32 %v4158, %v4176
      %v4198 = vadd.f32 %v4159, %v4176
      %v4199 = vadd.f32 %v4160, %v4176
      %v4200 = vadd.f32 %v4161, %v4176
      %v4201 = vadd.f32 %v4162, %v4176
      %v4202 = vadd.f32 %v4163, %v4176
      %v4203 = vadd.f32 %v4164, %v4176
      %v4204 = vadd.f32 %v4165, %v4176
      %v4205 = vadd.f32 %v4166, %v4176
      %v4206 = vadd.f32 %v4167, %v4176
      %v4207 = vadd.f32 %v4168, %v4176
      %v4208 = vadd.f32 %v4169, %v4176
      %v4209 = vadd.f32 %v4170, %v4176
      %v4210 = vld [vmem:[%s1] sm:$0xff]
      %v4211 = vld [vmem:[%s1 + $0x8] sm:$0xff]
      %v4212 = vld [vmem:[%s1 + $0x10] sm:$0xff]
      %v4213 = vld [vmem:[%s1 + $0x18] sm:$0xff]
      %v4214 = vld [vmem:[%s1 + $0x20] sm:$0xff]
      %v4215 = vld [vmem:[%s1 + $0x28] sm:$0xff]
      %v4216 = vld [vmem:[%s1 + $0x30] sm:$0xff]
      %v4217 = vld [vmem:[%s1 + $0x38] sm:$0xff]
      %v4218 = vpack.c.bf16 %v4179, %v4178
      %v4219 = vpack.c.bf16 %v4181, %v4180
      %v4220 = vpack.c.bf16 %v4183, %v4182
      %v4221 = vpack.c.bf16 %v4185, %v4184
      %v4222 = vpack.c.bf16 %v4187, %v4186
      %v4223 = vpack.c.bf16 %v4189, %v4188
      %v4224 = vpack.c.bf16 %v4191, %v4190
      %v4225 = vpack.c.bf16 %v4193, %v4192
      %v4226 = vpack.c.bf16 %v4195, %v4194
      %v4227 = vpack.c.bf16 %v4197, %v4196
      %v4228 = vpack.c.bf16 %v4199, %v4198
      %v4229 = vpack.c.bf16 %v4201, %v4200
      %v4230 = vpack.c.bf16 %v4203, %v4202
      %v4231 = vpack.c.bf16 %v4205, %v4204
      %v4232 = vpack.c.bf16 %v4207, %v4206
      %v4233 = vpack.c.bf16 %v4209, %v4208
      %v4242 = vunpack.c.l.b16 %v4210
      %v4243 = vunpack.c.h.b16 %v4210
      %v4244 = vunpack.c.l.b16 %v4211
      %v4245 = vunpack.c.h.b16 %v4211
      %v4246 = vunpack.c.l.b16 %v4212
      %v4247 = vunpack.c.h.b16 %v4212
      %v4248 = vunpack.c.l.b16 %v4213
      %v4249 = vunpack.c.h.b16 %v4213
      %v4250 = vunpack.c.l.b16 %v4214
      %v4251 = vunpack.c.h.b16 %v4214
      %v4252 = vunpack.c.l.b16 %v4215
      %v4253 = vunpack.c.h.b16 %v4215
      %v4254 = vunpack.c.l.b16 %v4216
      %v4255 = vunpack.c.h.b16 %v4216
      %v4256 = vunpack.c.l.b16 %v4217
      %v4257 = vunpack.c.h.b16 %v4217
      %v4258 = vpack.c.b16 %v4244, %v4242
      %v4259 = vpack.c.b16 %v4245, %v4243
      %v4260 = vpack.c.b16 %v4248, %v4246
      %v4261 = vpack.c.b16 %v4249, %v4247
      %v4262 = vpack.c.b16 %v4252, %v4250
      %v4263 = vpack.c.b16 %v4253, %v4251
      %v4264 = vpack.c.b16 %v4256, %v4254
      %v4265 = vpack.c.b16 %v4257, %v4255
      %4274 = vmatprep.subr.bf16.mxu0 0
      %4275 = vmatpush1.bf16.msra.mxu0 %v4218
      %4276 = vmatprep.subr.bf16.mxu0 0
      %4277 = vmatpush1.bf16.msra.mxu0 %v4219
      %4278 = vmatprep.subr.bf16.mxu0 0
      %4279 = vmatpush1.bf16.msra.mxu0 %v4220
      %4280 = vmatprep.subr.bf16.mxu0 0
      %4281 = vmatpush1.bf16.msra.mxu0 %v4221
      %4282 = vmatprep.subr.bf16.mxu0 0
      %4283 = vmatpush1.bf16.msra.mxu0 %v4222
      %4284 = vmatprep.subr.bf16.mxu0 0
      %4285 = vmatpush1.bf16.msra.mxu0 %v4223
      %4286 = vmatprep.subr.bf16.mxu0 0
      %4287 = vmatpush1.bf16.msra.mxu0 %v4224
      %4288 = vmatprep.subr.bf16.mxu0 0
      %4289 = vmatpush1.bf16.msra.mxu0 %v4225
      %4290 = vmatprep.subr.bf16.mxu0 0
      %4291 = vmatpush1.bf16.msra.mxu0 %v4226
      %4292 = vmatprep.subr.bf16.mxu0 0
      %4293 = vmatpush1.bf16.msra.mxu0 %v4227
      %4294 = vmatprep.subr.bf16.mxu0 0
      %4295 = vmatpush1.bf16.msra.mxu0 %v4228
      %4296 = vmatprep.subr.bf16.mxu0 0
      %4297 = vmatpush1.bf16.msra.mxu0 %v4229
      %4298 = vmatprep.subr.bf16.mxu0 0
      %4299 = vmatpush1.bf16.msra.mxu0 %v4230
      %4300 = vmatprep.subr.bf16.mxu0 0
      %4301 = vmatpush1.bf16.msra.mxu0 %v4231
      %4302 = vmatprep.subr.bf16.mxu0 0
      %4303 = vmatpush1.bf16.msra.mxu0 %v4232
      %4304 = vmatprep.subr.bf16.mxu0 0
      %4305 = vmatpush1.bf16.msra.mxu0 %v4233
      %4306 = vmatprep.mubr.bf16.mxu0 %v4259
      %4307 = vmatmul.mubr.bf16.gmra.mrb[0].mxu0 %v4258
      %v4308 = vpop.f32.mrb[0].mxu0
      %v4309 = vadd.f32 0.0, %v4308
      %v4310 = vpop.f32.mrb[0].mxu0
      %v4311 = vpop.f32.mrb[0].mxu0
      %v4312 = vadd.f32 0.0, %v4311
      %v4313 = vpop.f32.mrb[0].mxu0
      %4314 = vmatprep.mubr.bf16.mxu0 %v4261
      %4315 = vmatmul.mubr.bf16.gmra.mrb[0].mxu0 %v4260
      %v4316 = vpop.f32.mrb[0].mxu0
      %v4317 = vadd.f32 0.0, %v4316
      %v4318 = vpop.f32.mrb[0].mxu0
      %v4319 = vpop.f32.mrb[0].mxu0
      %v4320 = vadd.f32 0.0, %v4319
      %v4321 = vpop.f32.mrb[0].mxu0
      %4322 = vmatprep.mubr.bf16.mxu0 %v4263
      %4323 = vmatmul.mubr.bf16.gmra.mrb[0].mxu0 %v4262
      %v4324 = vpop.f32.mrb[0].mxu0
      %v4325 = vadd.f32 0.0, %v4324
      %v4326 = vpop.f32.mrb[0].mxu0
      %v4327 = vpop.f32.mrb[0].mxu0
      %v4328 = vadd.f32 0.0, %v4327
      %v4329 = vpop.f32.mrb[0].mxu0
      %4330 = vmatprep.mubr.bf16.mxu0 %v4265
      %4331 = vmatmul.mubr.bf16.gmra.mrb[0].mxu0 %v4264
      %v4332 = vpop.f32.mrb[0].mxu0
      %v4333 = vadd.f32 0.0, %v4332
      %v4334 = vpop.f32.mrb[0].mxu0
      %v4335 = vpop.f32.mrb[0].mxu0
      %v4336 = vadd.f32 0.0, %v4335
      %v4337 = vpop.f32.mrb[0].mxu0
      %4338 = vdwg.mxu0
      %4339 = vst.msk [vmem:[#allocation4] sm:$0xff] %vm3194, %v4309
      %4340 = vst.msk [vmem:[#allocation4 + $0x8] sm:$0xff] %vm3194, %v4312
      %4341 = vst.msk [vmem:[#allocation4 + $0x10] sm:$0xff] %vm3194, %v4317
      %4342 = vst.msk [vmem:[#allocation4 + $0x18] sm:$0xff] %vm3194, %v4320
      %4343 = vst.msk [vmem:[#allocation4 + $0x20] sm:$0xff] %vm3194, %v4325
      %4344 = vst.msk [vmem:[#allocation4 + $0x28] sm:$0xff] %vm3194, %v4328
      %4345 = vst.msk [vmem:[#allocation4 + $0x30] sm:$0xff] %vm3194, %v4333
      %4346 = vst.msk [vmem:[#allocation4 + $0x38] sm:$0xff] %vm3194, %v4336
      %v4347 = vld [vmem:[#allocation4] sm:$0xff]
      %v4348 = vld [vmem:[#allocation4 + $0x8] sm:$0xff]
      %v4349 = vld [vmem:[#allocation4 + $0x10] sm:$0xff]
      %v4350 = vld [vmem:[#allocation4 + $0x18] sm:$0xff]
      %v4351 = vld [vmem:[#allocation4 + $0x20] sm:$0xff]
      %v4352 = vld [vmem:[#allocation4 + $0x28] sm:$0xff]
      %v4353 = vld [vmem:[#allocation4 + $0x30] sm:$0xff]
      %v4354 = vld [vmem:[#allocation4 + $0x38] sm:$0xff]
      %v4355 = vxor.u32 %v4347, 2147483648
      %v4356 = vxor.u32 %v4348, 2147483648
      %v4357 = vxor.u32 %v4349, 2147483648
      %v4358 = vxor.u32 %v4350, 2147483648
      %v4359 = vxor.u32 %v4351, 2147483648
      %v4360 = vxor.u32 %v4352, 2147483648
      %v4361 = vxor.u32 %v4353, 2147483648
      %v4362 = vxor.u32 %v4354, 2147483648
      %v4363 = vmul.f32 %v4355, 1.442695
      %v4364 = vpow.pop %v4363
      %v4365 = vmul.f32 %v4356, 1.442695
      %v4366 = vpow.pop %v4365
      %v4367 = vmul.f32 %v4357, 1.442695
      %v4368 = vpow.pop %v4367
      %v4369 = vmul.f32 %v4358, 1.442695
      %v4370 = vpow.pop %v4369
      %v4371 = vmul.f32 %v4359, 1.442695
      %v4372 = vpow.pop %v4371
      %v4373 = vmul.f32 %v4360, 1.442695
      %v4374 = vpow.pop %v4373
      %v4375 = vmul.f32 %v4361, 1.442695
      %v4376 = vpow.pop %v4375
      %v4377 = vmul.f32 %v4362, 1.442695
      %v4378 = vpow.pop %v4377
      %v4379 = vadd.f32 %v4364, 1.0
      %v4380 = vadd.f32 %v4366, 1.0
      %v4381 = vadd.f32 %v4368, 1.0
      %v4382 = vadd.f32 %v4370, 1.0
      %v4383 = vadd.f32 %v4372, 1.0
      %v4384 = vadd.f32 %v4374, 1.0
      %v4385 = vadd.f32 %v4376, 1.0
      %v4386 = vadd.f32 %v4378, 1.0
      %v4387 = vrcp.pop %v4379
      %v4388 = vmul.f32 1.0, %v4387
      %v4389 = vrcp.pop %v4380
      %v4390 = vmul.f32 1.0, %v4389
      %v4391 = vrcp.pop %v4381
      %v4392 = vmul.f32 1.0, %v4391
      %v4393 = vrcp.pop %v4382
      %v4394 = vmul.f32 1.0, %v4393
      %v4395 = vrcp.pop %v4383
      %v4396 = vmul.f32 1.0, %v4395
      %v4397 = vrcp.pop %v4384
      %v4398 = vmul.f32 1.0, %v4397
      %v4399 = vrcp.pop %v4385
      %v4400 = vmul.f32 1.0, %v4399
      %v4401 = vrcp.pop %v4386
      %v4402 = vmul.f32 1.0, %v4401
      %v4403 = vmul.f32 %v4347, %v4388
      %v4404 = vmul.f32 %v4348, %v4390
      %v4405 = vmul.f32 %v4349, %v4392
      %v4406 = vmul.f32 %v4350, %v4394
      %v4407 = vmul.f32 %v4351, %v4396
      %v4408 = vmul.f32 %v4352, %v4398
      %v4409 = vmul.f32 %v4353, %v4400
      %v4410 = vmul.f32 %v4354, %v4402
      %v4411 = vsel %vm3194, %v4403, 0.0
      %v4412 = vsel %vm3194, %v4404, 0.0
      %v4413 = vadd.f32 %v4411, %v4412
      %v4414 = vsel %vm3194, %v4405, 0.0
      %v4415 = vadd.f32 %v4413, %v4414
      %v4416 = vsel %vm3194, %v4406, 0.0
      %v4417 = vadd.f32 %v4415, %v4416
      %v4418 = vsel %vm3194, %v4407, 0.0
      %v4419 = vadd.f32 %v4417, %v4418
      %v4420 = vsel %vm3194, %v4408, 0.0
      %v4421 = vadd.f32 %v4419, %v4420
      %v4422 = vsel %vm3194, %v4409, 0.0
      %v4423 = vadd.f32 %v4421, %v4422
      %v4424 = vsel %vm3194, %v4410, 0.0
      %v4425 = vadd.f32 %v4423, %v4424
      %v4426 = vrot.slane %v4425, 4
      %v4427 = vadd.f32 %v4425, %v4426
      %v4428 = vrot.slane %v4427, 2
      %v4429 = vadd.f32 %v4427, %v4428
      %v4430 = vrot.slane %v4429, 1
      %v4431 = vadd.f32 %v4429, %v4430
      %v4432 = vmul.f32 %v4431, 0.015625
      %v4433 = vpack.c.bf16 %v4432, %v4432
      %v4434 = vld [vmem:[%s14] sm:$0xf]
      %v4435 = vld [vmem:[%s14 + $0x4] sm:$0xf]
      %v4436 = vld [vmem:[%s14 + $0x8] sm:$0xf]
      %v4437 = vld [vmem:[%s14 + $0xc] sm:$0xf]
      %v4438 = vld [vmem:[%s14 + $0x10] sm:$0xf]
      %v4439 = vld [vmem:[%s14 + $0x14] sm:$0xf]
      %v4440 = vld [vmem:[%s14 + $0x18] sm:$0xf]
      %v4441 = vld [vmem:[%s14 + $0x1c] sm:$0xf]
      %v4442 = vld [vmem:[%s14 + $0x20] sm:$0xf]
      %v4443 = vld [vmem:[%s14 + $0x24] sm:$0xf]
      %v4444 = vld [vmem:[%s14 + $0x28] sm:$0xf]
      %v4445 = vld [vmem:[%s14 + $0x2c] sm:$0xf]
      %v4446 = vld [vmem:[%s15] sm:$0x1]
      %v4459 = vunpack.c.l.b16 %v4434
      %v4460 = vunpack.c.l.b16 %v4435
      %v4461 = vunpack.c.l.b16 %v4436
      %v4462 = vunpack.c.l.b16 %v4437
      %v4463 = vunpack.c.l.b16 %v4438
      %v4464 = vunpack.c.l.b16 %v4439
      %v4465 = vunpack.c.l.b16 %v4440
      %v4466 = vunpack.c.l.b16 %v4441
      %v4467 = vunpack.c.l.b16 %v4442
      %v4468 = vunpack.c.l.b16 %v4443
      %v4469 = vunpack.c.l.b16 %v4444
      %v4470 = vunpack.c.l.b16 %v4445
      %v4471 = vpack.c.b16 %v4460, %v4459
      %v4472 = vpack.c.b16 %v4462, %v4461
      %v4473 = vpack.c.b16 %v4464, %v4463
      %v4474 = vpack.c.b16 %v4466, %v4465
      %v4475 = vpack.c.b16 %v4468, %v4467
      %v4476 = vpack.c.b16 %v4470, %v4469
      %v4484 = vsel %vm3194, %v4433, 0
      %4486 = vmatprep.subr.bf16.mxu0 0
      %4487 = vmatpush1.bf16.msra.mxu0 %v4471
      %4488 = vmatprep.subr.bf16.mxu0 0
      %4489 = vmatpush1.bf16.msra.mxu0 %v4472
      %4490 = vmatprep.subr.bf16.mxu0 0
      %4491 = vmatpush1.bf16.msra.mxu0 %v4473
      %4492 = vmatprep.subr.bf16.mxu0 0
      %4493 = vmatpush1.bf16.msra.mxu0 %v4474
      %4494 = vmatprep.subr.bf16.mxu0 0
      %4495 = vmatpush1.bf16.msra.mxu0 %v4475
      %4496 = vmatprep.subr.bf16.mxu0 0
      %4497 = vmatpush1.bf16.msra.mxu0 %v4476
      %4498 = vmatprep.subr.bf16.mxu0 0
      %4499 = vmatpush1.bf16.msra.mxu0 0
      %4500 = vmatprep.subr.bf16.mxu0 0
      %4501 = vmatpush1.bf16.msra.mxu0 0
      %4502 = vmatprep.subr.bf16.mxu0 0
      %4503 = vmatpush1.bf16.msra.mxu0 0
      %4504 = vmatprep.subr.bf16.mxu0 0
      %4505 = vmatpush1.bf16.msra.mxu0 0
      %4506 = vmatprep.subr.bf16.mxu0 0
      %4507 = vmatpush1.bf16.msra.mxu0 0
      %4508 = vmatprep.subr.bf16.mxu0 0
      %4509 = vmatpush1.bf16.msra.mxu0 0
      %4510 = vmatprep.subr.bf16.mxu0 0
      %4511 = vmatpush1.bf16.msra.mxu0 0
      %4512 = vmatprep.subr.bf16.mxu0 0
      %4513 = vmatpush1.bf16.msra.mxu0 0
      %4514 = vmatprep.subr.bf16.mxu0 0
      %4515 = vmatpush1.bf16.msra.mxu0 0
      %4516 = vmatprep.subr.bf16.mxu0 0
      %4517 = vmatpush1.bf16.msra.mxu0 0
      %4518 = vmatprep.mubr.bf16.mxu0 0
      %4519 = vmatmul.mubr.bf16.gmra.mrb[0].mxu0 %v4484
      %v4520 = vpop.f32.mrb[0].mxu0
      %v4521 = vadd.f32 %v4446, %v4520
      %v4522 = vpop.f32.mrb[0].mxu0
      %v4523 = vpop.f32.mrb[0].mxu0
      %v4524 = vpop.f32.mrb[0].mxu0
      %4525 = vdwg.mxu0
      %v4526 = vxor.u32 %v4521, 2147483648
      %v4527 = vmul.f32 %v4526, 1.442695
      %v4528 = vpow.pop %v4527
      %v4529 = vadd.f32 %v4528, 1.0
      %v4530 = vrcp.pop %v4529
      %v4531 = vmul.f32 1.0, %v4530
      %v4532 = vmul.f32 %v4521, %v4531
      %v4533 = vpack.c.bf16 %v4532, %v4532
      %v4534 = vld [vmem:[%s16] sm:$0x3]
      %v4535 = vld [vmem:[%s17] sm:$0x1]
      %vm4536 = vcmask 31744
      %v4538 = vsel %vm4536, %v4533, 0
      %vm4540 = vcmask 1041408
      %v4542 = vsel %vm4540, %v4534, 0
      %4544 = vmatprep.subr.bf16.mxu0 0
      %4545 = vmatpush1.bf16.msra.mxu0 %v4542
      %4546 = vmatprep.subr.bf16.mxu0 0
      %4547 = vmatpush1.bf16.msra.mxu0 0
      %4548 = vmatprep.subr.bf16.mxu0 0
      %4549 = vmatpush1.bf16.msra.mxu0 0
      %4550 = vmatprep.subr.bf16.mxu0 0
      %4551 = vmatpush1.bf16.msra.mxu0 0
      %4552 = vmatprep.subr.bf16.mxu0 0
      %4553 = vmatpush1.bf16.msra.mxu0 0
      %4554 = vmatprep.subr.bf16.mxu0 0
      %4555 = vmatpush1.bf16.msra.mxu0 0
      %4556 = vmatprep.subr.bf16.mxu0 0
      %4557 = vmatpush1.bf16.msra.mxu0 0
      %4558 = vmatprep.subr.bf16.mxu0 0
      %4559 = vmatpush1.bf16.msra.mxu0 0
      %4560 = vmatprep.subr.bf16.mxu0 0
      %4561 = vmatpush1.bf16.msra.mxu0 0
      %4562 = vmatprep.subr.bf16.mxu0 0
      %4563 = vmatpush1.bf16.msra.mxu0 0
      %4564 = vmatprep.subr.bf16.mxu0 0
      %4565 = vmatpush1.bf16.msra.mxu0 0
      %4566 = vmatprep.subr.bf16.mxu0 0
      %4567 = vmatpush1.bf16.msra.mxu0 0
      %4568 = vmatprep.subr.bf16.mxu0 0
      %4569 = vmatpush1.bf16.msra.mxu0 0
      %4570 = vmatprep.subr.bf16.mxu0 0
      %4571 = vmatpush1.bf16.msra.mxu0 0
      %4572 = vmatprep.subr.bf16.mxu0 0
      %4573 = vmatpush1.bf16.msra.mxu0 0
      %4574 = vmatprep.subr.bf16.mxu0 0
      %4575 = vmatpush1.bf16.msra.mxu0 0
      %4576 = vmatprep.mubr.bf16.mxu0 0
      %4577 = vmatmul.mubr.bf16.gmra.mrb[0].mxu0 %v4538
      %v4578 = vpop.f32.mrb[0].mxu0
      %v4579 = vadd.f32 %v4535, %v4578
      %v4580 = vpop.f32.mrb[0].mxu0
      %v4581 = vpop.f32.mrb[0].mxu0
      %v4582 = vpop.f32.mrb[0].mxu0
      %4583 = vdwg.mxu0
      %v4584 = vxor.u32 %v4579, 2147483648
      %v4585 = vmul.f32 %v4584, 1.442695
      %v4586 = vpow.pop %v4585
      %v4587 = vadd.f32 %v4586, 1.0
      %v4588 = vrcp.pop %v4587
      %v4589 = vmul.f32 1.0, %v4588
      %v4590 = vlaneseq
      %v4591 = vshrl.u32 %v4590, 7
      %v4592 = vsub.s32 0, %v4591
      %v4593 = vrot.slane %v4589, %v4592
      %v4594 = vmul.f32 %v4403, %v4593
      %v4595 = vmul.f32 %v4404, %v4593
      %v4596 = vmul.f32 %v4405, %v4593
      %v4597 = vmul.f32 %v4406, %v4593
      %v4598 = vmul.f32 %v4407, %v4593
      %v4599 = vmul.f32 %v4408, %v4593
      %v4600 = vmul.f32 %v4409, %v4593
      %v4601 = vmul.f32 %v4410, %v4593
      %v4602 = vpack.c.bf16 %v4595, %v4594
      %v4603 = vpack.c.bf16 %v4597, %v4596
      %v4604 = vpack.c.bf16 %v4599, %v4598
      %v4605 = vpack.c.bf16 %v4601, %v4600
      %v4606 = vld [vmem:[%s18] sm:$0xff]
      %v4607 = vld [vmem:[%s18 + $0x8] sm:$0xff]
      %v4608 = vld [vmem:[%s18 + $0x10] sm:$0xff]
      %v4609 = vld [vmem:[%s18 + $0x18] sm:$0xff]
      %v4610 = vld [vmem:[%s18 + $0x20] sm:$0xff]
      %v4611 = vld [vmem:[%s18 + $0x28] sm:$0xff]
      %v4612 = vld [vmem:[%s18 + $0x30] sm:$0xff]
      %v4613 = vld [vmem:[%s18 + $0x38] sm:$0xff]
      %v4614 = vld [vmem:[%s18 + $0x40] sm:$0xff]
      %v4615 = vld [vmem:[%s18 + $0x48] sm:$0xff]
      %v4616 = vld [vmem:[%s18 + $0x50] sm:$0xff]
      %v4617 = vld [vmem:[%s18 + $0x58] sm:$0xff]
      %v4618 = vld [vmem:[%s18 + $0x60] sm:$0xff]
      %v4619 = vld [vmem:[%s18 + $0x68] sm:$0xff]
      %v4620 = vld [vmem:[%s18 + $0x70] sm:$0xff]
      %v4621 = vld [vmem:[%s18 + $0x78] sm:$0xff]
      %v4622 = vld [vmem:[%s18 + $0x80] sm:$0xff]
      %v4623 = vld [vmem:[%s18 + $0x88] sm:$0xff]
      %v4624 = vld [vmem:[%s18 + $0x90] sm:$0xff]
      %v4625 = vld [vmem:[%s18 + $0x98] sm:$0xff]
      %v4626 = vld [vmem:[%s18 + $0xa0] sm:$0xff]
      %v4627 = vld [vmem:[%s18 + $0xa8] sm:$0xff]
      %v4628 = vld [vmem:[%s18 + $0xb0] sm:$0xff]
      %v4629 = vld [vmem:[%s18 + $0xb8] sm:$0xff]
      %v4630 = vld [vmem:[%s18 + $0xc0] sm:$0xff]
      %v4631 = vld [vmem:[%s18 + $0xc8] sm:$0xff]
      %v4632 = vld [vmem:[%s18 + $0xd0] sm:$0xff]
      %v4633 = vld [vmem:[%s18 + $0xd8] sm:$0xff]
      %v4634 = vld [vmem:[%s18 + $0xe0] sm:$0xff]
      %v4635 = vld [vmem:[%s18 + $0xe8] sm:$0xff]
      %v4636 = vld [vmem:[%s18 + $0xf0] sm:$0xff]
      %v4637 = vld [vmem:[%s18 + $0xf8] sm:$0xff]
      %v4638 = vld [vmem:[%s18 + $0x100] sm:$0xff]
      %v4639 = vld [vmem:[%s18 + $0x108] sm:$0xff]
      %v4640 = vld [vmem:[%s18 + $0x110] sm:$0xff]
      %v4641 = vld [vmem:[%s18 + $0x118] sm:$0xff]
      %v4642 = vld [vmem:[%s18 + $0x120] sm:$0xff]
      %v4643 = vld [vmem:[%s18 + $0x128] sm:$0xff]
      %v4644 = vld [vmem:[%s18 + $0x130] sm:$0xff]
      %v4645 = vld [vmem:[%s18 + $0x138] sm:$0xff]
      %v4646 = vld [vmem:[%s18 + $0x140] sm:$0xff]
      %v4647 = vld [vmem:[%s18 + $0x148] sm:$0xff]
      %v4648 = vld [vmem:[%s18 + $0x150] sm:$0xff]
      %v4649 = vld [vmem:[%s18 + $0x158] sm:$0xff]
      %v4650 = vld [vmem:[%s18 + $0x160] sm:$0xff]
      %v4651 = vld [vmem:[%s18 + $0x168] sm:$0xff]
      %v4652 = vld [vmem:[%s18 + $0x170] sm:$0xff]
      %v4653 = vld [vmem:[%s18 + $0x178] sm:$0xff]
      %v4654 = vld [vmem:[%s18 + $0x180] sm:$0xff]
      %v4655 = vld [vmem:[%s18 + $0x188] sm:$0xff]
      %v4656 = vld [vmem:[%s18 + $0x190] sm:$0xff]
      %v4657 = vld [vmem:[%s18 + $0x198] sm:$0xff]
      %v4658 = vld [vmem:[%s18 + $0x1a0] sm:$0xff]
      %v4659 = vld [vmem:[%s18 + $0x1a8] sm:$0xff]
      %v4660 = vld [vmem:[%s18 + $0x1b0] sm:$0xff]
      %v4661 = vld [vmem:[%s18 + $0x1b8] sm:$0xff]
      %v4662 = vld [vmem:[%s18 + $0x1c0] sm:$0xff]
      %v4663 = vld [vmem:[%s18 + $0x1c8] sm:$0xff]
      %v4664 = vld [vmem:[%s18 + $0x1d0] sm:$0xff]
      %v4665 = vld [vmem:[%s18 + $0x1d8] sm:$0xff]
      %v4666 = vld [vmem:[%s19] sm:$0xff]
      %v4667 = vld [vmem:[%s19 + $0x8] sm:$0x3]
      %v4670 = vlaneseq
      %v4671 = vshrl.u32 %v4670, 7
      %v4672 = vsub.s32 0, %v4671
      %v4673 = vrot.slane %v4666, %v4672
      %v4674 = vlaneseq
      %v4675 = vshrl.u32 %v4674, 7
      %v4676 = vsub.s32 1, %v4675
      %v4677 = vrot.slane %v4666, %v4676
      %v4678 = vlaneseq
      %v4679 = vshrl.u32 %v4678, 7
      %v4680 = vsub.s32 2, %v4679
      %v4681 = vrot.slane %v4666, %v4680
      %v4682 = vlaneseq
      %v4683 = vshrl.u32 %v4682, 7
      %v4684 = vsub.s32 3, %v4683
      %v4685 = vrot.slane %v4666, %v4684
      %v4686 = vlaneseq
      %v4687 = vshrl.u32 %v4686, 7
      %v4688 = vsub.s32 4, %v4687
      %v4689 = vrot.slane %v4666, %v4688
      %v4690 = vlaneseq
      %v4691 = vshrl.u32 %v4690, 7
      %v4692 = vsub.s32 5, %v4691
      %v4693 = vrot.slane %v4666, %v4692
      %v4694 = vlaneseq
      %v4695 = vshrl.u32 %v4694, 7
      %v4696 = vsub.s32 6, %v4695
      %v4697 = vrot.slane %v4666, %v4696
      %v4698 = vlaneseq
      %v4699 = vshrl.u32 %v4698, 7
      %v4700 = vsub.s32 7, %v4699
      %v4701 = vrot.slane %v4666, %v4700
      %v4702 = vlaneseq
      %v4703 = vshrl.u32 %v4702, 7
      %v4704 = vsub.s32 0, %v4703
      %v4705 = vrot.slane %v4667, %v4704
      %v4706 = vlaneseq
      %v4707 = vshrl.u32 %v4706, 7
      %v4708 = vsub.s32 1, %v4707
      %v4709 = vrot.slane %v4667, %v4708
      %v4780 = vunpack.c.l.b16 %v4606
      %v4781 = vunpack.c.h.b16 %v4606
      %v4782 = vunpack.c.l.b16 %v4607
      %v4783 = vunpack.c.h.b16 %v4607
      %v4784 = vunpack.c.l.b16 %v4608
      %v4785 = vunpack.c.h.b16 %v4608
      %v4786 = vunpack.c.l.b16 %v4609
      %v4787 = vunpack.c.h.b16 %v4609
      %v4788 = vunpack.c.l.b16 %v4610
      %v4789 = vunpack.c.h.b16 %v4610
      %v4790 = vunpack.c.l.b16 %v4611
      %v4791 = vunpack.c.h.b16 %v4611
      %v4792 = vunpack.c.l.b16 %v4612
      %v4793 = vunpack.c.h.b16 %v4612
      %v4794 = vunpack.c.l.b16 %v4613
      %v4795 = vunpack.c.h.b16 %v4613
      %v4796 = vunpack.c.l.b16 %v4614
      %v4797 = vunpack.c.h.b16 %v4614
      %v4798 = vunpack.c.l.b16 %v4615
      %v4799 = vunpack.c.h.b16 %v4615
      %v4800 = vunpack.c.l.b16 %v4616
      %v4801 = vunpack.c.h.b16 %v4616
      %v4802 = vunpack.c.l.b16 %v4617
      %v4803 = vunpack.c.h.b16 %v4617
      %v4804 = vunpack.c.l.b16 %v4618
      %v4805 = vunpack.c.h.b16 %v4618
      %v4806 = vunpack.c.l.b16 %v4619
      %v4807 = vunpack.c.h.b16 %v4619
      %v4808 = vunpack.c.l.b16 %v4620
      %v4809 = vunpack.c.h.b16 %v4620
      %v4810 = vunpack.c.l.b16 %v4621
      %v4811 = vunpack.c.h.b16 %v4621
      %v4812 = vunpack.c.l.b16 %v4622
      %v4813 = vunpack.c.h.b16 %v4622
      %v4814 = vunpack.c.l.b16 %v4623
      %v4815 = vunpack.c.h.b16 %v4623
      %v4816 = vunpack.c.l.b16 %v4624
      %v4817 = vunpack.c.h.b16 %v4624
      %v4818 = vunpack.c.l.b16 %v4625
      %v4819 = vunpack.c.h.b16 %v4625
      %v4820 = vunpack.c.l.b16 %v4626
      %v4821 = vunpack.c.h.b16 %v4626
      %v4822 = vunpack.c.l.b16 %v4627
      %v4823 = vunpack.c.h.b16 %v4627
      %v4824 = vunpack.c.l.b16 %v4628
      %v4825 = vunpack.c.h.b16 %v4628
      %v4826 = vunpack.c.l.b16 %v4629
      %v4827 = vunpack.c.h.b16 %v4629
      %v4828 = vunpack.c.l.b16 %v4630
      %v4829 = vunpack.c.h.b16 %v4630
      %v4830 = vunpack.c.l.b16 %v4631
      %v4831 = vunpack.c.h.b16 %v4631
      %v4832 = vunpack.c.l.b16 %v4632
      %v4833 = vunpack.c.h.b16 %v4632
      %v4834 = vunpack.c.l.b16 %v4633
      %v4835 = vunpack.c.h.b16 %v4633
      %v4836 = vunpack.c.l.b16 %v4634
      %v4837 = vunpack.c.h.b16 %v4634
      %v4838 = vunpack.c.l.b16 %v4635
      %v4839 = vunpack.c.h.b16 %v4635
      %v4840 = vunpack.c.l.b16 %v4636
      %v4841 = vunpack.c.h.b16 %v4636
      %v4842 = vunpack.c.l.b16 %v4637
      %v4843 = vunpack.c.h.b16 %v4637
      %v4844 = vunpack.c.l.b16 %v4638
      %v4845 = vunpack.c.h.b16 %v4638
      %v4846 = vunpack.c.l.b16 %v4639
      %v4847 = vunpack.c.h.b16 %v4639
      %v4848 = vunpack.c.l.b16 %v4640
      %v4849 = vunpack.c.h.b16 %v4640
      %v4850 = vunpack.c.l.b16 %v4641
      %v4851 = vunpack.c.h.b16 %v4641
      %v4852 = vunpack.c.l.b16 %v4642
      %v4853 = vunpack.c.h.b16 %v4642
      %v4854 = vunpack.c.l.b16 %v4643
      %v4855 = vunpack.c.h.b16 %v4643
      %v4856 = vunpack.c.l.b16 %v4644
      %v4857 = vunpack.c.h.b16 %v4644
      %v4858 = vunpack.c.l.b16 %v4645
      %v4859 = vunpack.c.h.b16 %v4645
      %v4860 = vunpack.c.l.b16 %v4646
      %v4861 = vunpack.c.h.b16 %v4646
      %v4862 = vunpack.c.l.b16 %v4647
      %v4863 = vunpack.c.h.b16 %v4647
      %v4864 = vunpack.c.l.b16 %v4648
      %v4865 = vunpack.c.h.b16 %v4648
      %v4866 = vunpack.c.l.b16 %v4649
      %v4867 = vunpack.c.h.b16 %v4649
      %v4868 = vunpack.c.l.b16 %v4650
      %v4869 = vunpack.c.h.b16 %v4650
      %v4870 = vunpack.c.l.b16 %v4651
      %v4871 = vunpack.c.h.b16 %v4651
      %v4872 = vunpack.c.l.b16 %v4652
      %v4873 = vunpack.c.h.b16 %v4652
      %v4874 = vunpack.c.l.b16 %v4653
      %v4875 = vunpack.c.h.b16 %v4653
      %v4876 = vunpack.c.l.b16 %v4654
      %v4877 = vunpack.c.h.b16 %v4654
      %v4878 = vunpack.c.l.b16 %v4655
      %v4879 = vunpack.c.h.b16 %v4655
      %v4880 = vunpack.c.l.b16 %v4656
      %v4881 = vunpack.c.h.b16 %v4656
      %v4882 = vunpack.c.l.b16 %v4657
      %v4883 = vunpack.c.h.b16 %v4657
      %v4884 = vunpack.c.l.b16 %v4658
      %v4885 = vunpack.c.h.b16 %v4658
      %v4886 = vunpack.c.l.b16 %v4659
      %v4887 = vunpack.c.h.b16 %v4659
      %v4888 = vunpack.c.l.b16 %v4660
      %v4889 = vunpack.c.h.b16 %v4660
      %v4890 = vunpack.c.l.b16 %v4661
      %v4891 = vunpack.c.h.b16 %v4661
      %v4892 = vunpack.c.l.b16 %v4662
      %v4893 = vunpack.c.h.b16 %v4662
      %v4894 = vunpack.c.l.b16 %v4663
      %v4895 = vunpack.c.h.b16 %v4663
      %v4896 = vunpack.c.l.b16 %v4664
      %v4897 = vunpack.c.h.b16 %v4664
      %v4898 = vunpack.c.l.b16 %v4665
      %v4899 = vunpack.c.h.b16 %v4665
      %v4900 = vpack.c.b16 %v4790, %v4780
      %v4901 = vpack.c.b16 %v4791, %v4781
      %v4902 = vpack.c.b16 %v4792, %v4782
      %v4903 = vpack.c.b16 %v4793, %v4783
      %v4904 = vpack.c.b16 %v4794, %v4784
      %v4905 = vpack.c.b16 %v4795, %v4785
      %v4906 = vpack.c.b16 %v4796, %v4786
      %v4907 = vpack.c.b16 %v4797, %v4787
      %v4908 = vpack.c.b16 %v4798, %v4788
      %v4909 = vpack.c.b16 %v4799, %v4789
      %v4910 = vpack.c.b16 %v4810, %v4800
      %v4911 = vpack.c.b16 %v4811, %v4801
      %v4912 = vpack.c.b16 %v4812, %v4802
      %v4913 = vpack.c.b16 %v4813, %v4803
      %v4914 = vpack.c.b16 %v4814, %v4804
      %v4915 = vpack.c.b16 %v4815, %v4805
      %v4916 = vpack.c.b16 %v4816, %v4806
      %v4917 = vpack.c.b16 %v4817, %v4807
      %v4918 = vpack.c.b16 %v4818, %v4808
      %v4919 = vpack.c.b16 %v4819, %v4809
      %v4920 = vpack.c.b16 %v4830, %v4820
      %v4921 = vpack.c.b16 %v4831, %v4821
      %v4922 = vpack.c.b16 %v4832, %v4822
      %v4923 = vpack.c.b16 %v4833, %v4823
      %v4924 = vpack.c.b16 %v4834, %v4824
      %v4925 = vpack.c.b16 %v4835, %v4825
      %v4926 = vpack.c.b16 %v4836, %v4826
      %v4927 = vpack.c.b16 %v4837, %v4827
      %v4928 = vpack.c.b16 %v4838, %v4828
      %v4929 = vpack.c.b16 %v4839, %v4829
      %v4930 = vpack.c.b16 %v4850, %v4840
      %v4931 = vpack.c.b16 %v4851, %v4841
      %v4932 = vpack.c.b16 %v4852, %v4842
      %v4933 = vpack.c.b16 %v4853, %v4843
      %v4934 = vpack.c.b16 %v4854, %v4844
      %v4935 = vpack.c.b16 %v4855, %v4845
      %v4936 = vpack.c.b16 %v4856, %v4846
      %v4937 = vpack.c.b16 %v4857, %v4847
      %v4938 = vpack.c.b16 %v4858, %v4848
      %v4939 = vpack.c.b16 %v4859, %v4849
      %v4940 = vpack.c.b16 %v4870, %v4860
      %v4941 = vpack.c.b16 %v4871, %v4861
      %v4942 = vpack.c.b16 %v4872, %v4862
      %v4943 = vpack.c.b16 %v4873, %v4863
      %v4944 = vpack.c.b16 %v4874, %v4864
      %v4945 = vpack.c.b16 %v4875, %v4865
      %v4946 = vpack.c.b16 %v4876, %v4866
      %v4947 = vpack.c.b16 %v4877, %v4867
      %v4948 = vpack.c.b16 %v4878, %v4868
      %v4949 = vpack.c.b16 %v4879, %v4869
      %v4950 = vpack.c.b16 %v4890, %v4880
      %v4951 = vpack.c.b16 %v4891, %v4881
      %v4952 = vpack.c.b16 %v4892, %v4882
      %v4953 = vpack.c.b16 %v4893, %v4883
      %v4954 = vpack.c.b16 %v4894, %v4884
      %v4955 = vpack.c.b16 %v4895, %v4885
      %v4956 = vpack.c.b16 %v4896, %v4886
      %v4957 = vpack.c.b16 %v4897, %v4887
      %v4958 = vpack.c.b16 %v4898, %v4888
      %v4959 = vpack.c.b16 %v4899, %v4889
      %v5021 = vsel %vm3194, %v4602, 0
      %v5024 = vsel %vm3194, %v4603, 0
      %v5027 = vsel %vm3194, %v4604, 0
      %v5030 = vsel %vm3194, %v4605, 0
      %5032 = vmatprep.subr.bf16.mxu0 %v4901
      %5033 = vmatpush1.bf16.msra.mxu0 %v4900
      %5034 = vmatprep.subr.bf16.mxu0 %v4911
      %5035 = vmatpush1.bf16.msra.mxu0 %v4910
      %5036 = vmatprep.subr.bf16.mxu0 %v4921
      %5037 = vmatpush1.bf16.msra.mxu0 %v4920
      %5038 = vmatprep.subr.bf16.mxu0 %v4931
      %5039 = vmatpush1.bf16.msra.mxu0 %v4930
      %5040 = vmatprep.subr.bf16.mxu0 %v4941
      %5041 = vmatpush1.bf16.msra.mxu0 %v4940
      %5042 = vmatprep.subr.bf16.mxu0 %v4951
      %5043 = vmatpush1.bf16.msra.mxu0 %v4950
      %5044 = vmatprep.subr.bf16.mxu0 0
      %5045 = vmatpush1.bf16.msra.mxu0 0
      %5046 = vmatprep.subr.bf16.mxu0 0
      %5047 = vmatpush1.bf16.msra.mxu0 0
      %5048 = vmatprep.subr.bf16.mxu0 0
      %5049 = vmatpush1.bf16.msra.mxu0 0
      %5050 = vmatprep.subr.bf16.mxu0 0
      %5051 = vmatpush1.bf16.msra.mxu0 0
      %5052 = vmatprep.subr.bf16.mxu0 0
      %5053 = vmatpush1.bf16.msra.mxu0 0
      %5054 = vmatprep.subr.bf16.mxu0 0
      %5055 = vmatpush1.bf16.msra.mxu0 0
      %5056 = vmatprep.subr.bf16.mxu0 0
      %5057 = vmatpush1.bf16.msra.mxu0 0
      %5058 = vmatprep.subr.bf16.mxu0 0
      %5059 = vmatpush1.bf16.msra.mxu0 0
      %5060 = vmatprep.subr.bf16.mxu0 0
      %5061 = vmatpush1.bf16.msra.mxu0 0
      %5062 = vmatprep.subr.bf16.mxu0 0
      %5063 = vmatpush1.bf16.msra.mxu0 0
      %5064 = vmatprep.mubr.bf16.mxu0 0
      %5065 = vmatmul.mubr.bf16.gmra.mrb[0].mxu0 %v5021
      %v5066 = vpop.f32.mrb[0].mxu0
      %v5067 = vadd.f32 %v4673, %v5066
      %v5068 = vpop.f32.mrb[0].mxu0
      %v5069 = vadd.f32 %v4677, %v5068
      %v5070 = vpop.f32.mrb[0].mxu0
      %v5071 = vadd.f32 %v4673, %v5070
      %v5072 = vpop.f32.mrb[0].mxu0
      %v5073 = vadd.f32 %v4677, %v5072
      %5074 = vmatprep.mubr.bf16.mxu0 0
      %5075 = vmatmul.mubr.bf16.gmra.mrb[0].mxu0 %v5024
      %v5076 = vpop.f32.mrb[0].mxu0
      %v5077 = vadd.f32 %v4673, %v5076
      %v5078 = vpop.f32.mrb[0].mxu0
      %v5079 = vadd.f32 %v4677, %v5078
      %v5080 = vpop.f32.mrb[0].mxu0
      %v5081 = vadd.f32 %v4673, %v5080
      %v5082 = vpop.f32.mrb[0].mxu0
      %v5083 = vadd.f32 %v4677, %v5082
      %5084 = vmatprep.mubr.bf16.mxu0 0
      %5085 = vmatmul.mubr.bf16.gmra.mrb[0].mxu0 %v5027
      %v5086 = vpop.f32.mrb[0].mxu0
      %v5087 = vadd.f32 %v4673, %v5086
      %v5088 = vpop.f32.mrb[0].mxu0
      %v5089 = vadd.f32 %v4677, %v5088
      %v5090 = vpop.f32.mrb[0].mxu0
      %v5091 = vadd.f32 %v4673, %v5090
      %v5092 = vpop.f32.mrb[0].mxu0
      %v5093 = vadd.f32 %v4677, %v5092
      %5094 = vmatprep.mubr.bf16.mxu0 0
      %5095 = vmatmul.mubr.bf16.gmra.mrb[0].mxu0 %v5030
      %v5096 = vpop.f32.mrb[0].mxu0
      %v5097 = vadd.f32 %v4673, %v5096
      %v5098 = vpop.f32.mrb[0].mxu0
      %v5099 = vadd.f32 %v4677, %v5098
      %v5100 = vpop.f32.mrb[0].mxu0
      %v5101 = vadd.f32 %v4673, %v5100
      %v5102 = vpop.f32.mrb[0].mxu0
      %v5103 = vadd.f32 %v4677, %v5102
      %5104 = vdwg.mxu0
      %5105 = vmatprep.subr.bf16.mxu0 %v4903
      %5106 = vmatpush1.bf16.msra.mxu0 %v4902
      %5107 = vmatprep.subr.bf16.mxu0 %v4913
      %5108 = vmatpush1.bf16.msra.mxu0 %v4912
      %5109 = vmatprep.subr.bf16.mxu0 %v4923
      %5110 = vmatpush1.bf16.msra.mxu0 %v4922
      %5111 = vmatprep.subr.bf16.mxu0 %v4933
      %5112 = vmatpush1.bf16.msra.mxu0 %v4932
      %5113 = vmatprep.subr.bf16.mxu0 %v4943
      %5114 = vmatpush1.bf16.msra.mxu0 %v4942
      %5115 = vmatprep.subr.bf16.mxu0 %v4953
      %5116 = vmatpush1.bf16.msra.mxu0 %v4952
      %5117 = vmatprep.subr.bf16.mxu0 0
      %5118 = vmatpush1.bf16.msra.mxu0 0
      %5119 = vmatprep.subr.bf16.mxu0 0
      %5120 = vmatpush1.bf16.msra.mxu0 0
      %5121 = vmatprep.subr.bf16.mxu0 0
      %5122 = vmatpush1.bf16.msra.mxu0 0
      %5123 = vmatprep.subr.bf16.mxu0 0
      %5124 = vmatpush1.bf16.msra.mxu0 0
      %5125 = vmatprep.subr.bf16.mxu0 0
      %5126 = vmatpush1.bf16.msra.mxu0 0
      %5127 = vmatprep.subr.bf16.mxu0 0
      %5128 = vmatpush1.bf16.msra.mxu0 0
      %5129 = vmatprep.subr.bf16.mxu0 0
      %5130 = vmatpush1.bf16.msra.mxu0 0
      %5131 = vmatprep.subr.bf16.mxu0 0
      %5132 = vmatpush1.bf16.msra.mxu0 0
      %5133 = vmatprep.subr.bf16.mxu0 0
      %5134 = vmatpush1.bf16.msra.mxu0 0
      %5135 = vmatprep.subr.bf16.mxu0 0
      %5136 = vmatpush1.bf16.msra.mxu0 0
      %5137 = vmatprep.mubr.bf16.mxu0 0
      %5138 = vmatmul.mubr.bf16.gmra.mrb[0].mxu0 %v5021
      %v5139 = vpop.f32.mrb[0].mxu0
      %v5140 = vadd.f32 %v4681, %v5139
      %v5141 = vpop.f32.mrb[0].mxu0
      %v5142 = vadd.f32 %v4685, %v5141
      %v5143 = vpop.f32.mrb[0].mxu0
      %v5144 = vadd.f32 %v4681, %v5143
      %v5145 = vpop.f32.mrb[0].mxu0
      %v5146 = vadd.f32 %v4685, %v5145
      %5147 = vmatprep.mubr.bf16.mxu0 0
      %5148 = vmatmul.mubr.bf16.gmra.mrb[0].mxu0 %v5024
      %v5149 = vpop.f32.mrb[0].mxu0
      %v5150 = vadd.f32 %v4681, %v5149
      %v5151 = vpop.f32.mrb[0].mxu0
      %v5152 = vadd.f32 %v4685, %v5151
      %v5153 = vpop.f32.mrb[0].mxu0
      %v5154 = vadd.f32 %v4681, %v5153
      %v5155 = vpop.f32.mrb[0].mxu0
      %v5156 = vadd.f32 %v4685, %v5155
      %5157 = vmatprep.mubr.bf16.mxu0 0
      %5158 = vmatmul.mubr.bf16.gmra.mrb[0].mxu0 %v5027
      %v5159 = vpop.f32.mrb[0].mxu0
      %v5160 = vadd.f32 %v4681, %v5159
      %v5161 = vpop.f32.mrb[0].mxu0
      %v5162 = vadd.f32 %v4685, %v5161
      %v5163 = vpop.f32.mrb[0].mxu0
      %v5164 = vadd.f32 %v4681, %v5163
      %v5165 = vpop.f32.mrb[0].mxu0
      %v5166 = vadd.f32 %v4685, %v5165
      %5167 = vmatprep.mubr.bf16.mxu0 0
      %5168 = vmatmul.mubr.bf16.gmra.mrb[0].mxu0 %v5030
      %v5169 = vpop.f32.mrb[0].mxu0
      %v5170 = vadd.f32 %v4681, %v5169
      %v5171 = vpop.f32.mrb[0].mxu0
      %v5172 = vadd.f32 %v4685, %v5171
      %v5173 = vpop.f32.mrb[0].mxu0
      %v5174 = vadd.f32 %v4681, %v5173
      %v5175 = vpop.f32.mrb[0].mxu0
      %v5176 = vadd.f32 %v4685, %v5175
      %5177 = vdwg.mxu0
      %5178 = vmatprep.subr.bf16.mxu0 %v4905
      %5179 = vmatpush1.bf16.msra.mxu0 %v4904
      %5180 = vmatprep.subr.bf16.mxu0 %v4915
      %5181 = vmatpush1.bf16.msra.mxu0 %v4914
      %5182 = vmatprep.subr.bf16.mxu0 %v4925
      %5183 = vmatpush1.bf16.msra.mxu0 %v4924
      %5184 = vmatprep.subr.bf16.mxu0 %v4935
      %5185 = vmatpush1.bf16.msra.mxu0 %v4934
      %5186 = vmatprep.subr.bf16.mxu0 %v4945
      %5187 = vmatpush1.bf16.msra.mxu0 %v4944
      %5188 = vmatprep.subr.bf16.mxu0 %v4955
      %5189 = vmatpush1.bf16.msra.mxu0 %v4954
      %5190 = vmatprep.subr.bf16.mxu0 0
      %5191 = vmatpush1.bf16.msra.mxu0 0
      %5192 = vmatprep.subr.bf16.mxu0 0
      %5193 = vmatpush1.bf16.msra.mxu0 0
      %5194 = vmatprep.subr.bf16.mxu0 0
      %5195 = vmatpush1.bf16.msra.mxu0 0
      %5196 = vmatprep.subr.bf16.mxu0 0
      %5197 = vmatpush1.bf16.msra.mxu0 0
      %5198 = vmatprep.subr.bf16.mxu0 0
      %5199 = vmatpush1.bf16.msra.mxu0 0
      %5200 = vmatprep.subr.bf16.mxu0 0
      %5201 = vmatpush1.bf16.msra.mxu0 0
      %5202 = vmatprep.subr.bf16.mxu0 0
      %5203 = vmatpush1.bf16.msra.mxu0 0
      %5204 = vmatprep.subr.bf16.mxu0 0
      %5205 = vmatpush1.bf16.msra.mxu0 0
      %5206 = vmatprep.subr.bf16.mxu0 0
      %5207 = vmatpush1.bf16.msra.mxu0 0
      %5208 = vmatprep.subr.bf16.mxu0 0
      %5209 = vmatpush1.bf16.msra.mxu0 0
      %5210 = vmatprep.mubr.bf16.mxu0 0
      %5211 = vmatmul.mubr.bf16.gmra.mrb[0].mxu0 %v5021
      %v5212 = vpop.f32.mrb[0].mxu0
      %v5213 = vadd.f32 %v4689, %v5212
      %v5214 = vpop.f32.mrb[0].mxu0
      %v5215 = vadd.f32 %v4693, %v5214
      %v5216 = vpop.f32.mrb[0].mxu0
      %v5217 = vadd.f32 %v4689, %v5216
      %v5218 = vpop.f32.mrb[0].mxu0
      %v5219 = vadd.f32 %v4693, %v5218
      %5220 = vmatprep.mubr.bf16.mxu0 0
      %5221 = vmatmul.mubr.bf16.gmra.mrb[0].mxu0 %v5024
      %v5222 = vpop.f32.mrb[0].mxu0
      %v5223 = vadd.f32 %v4689, %v5222
      %v5224 = vpop.f32.mrb[0].mxu0
      %v5225 = vadd.f32 %v4693, %v5224
      %v5226 = vpop.f32.mrb[0].mxu0
      %v5227 = vadd.f32 %v4689, %v5226
      %v5228 = vpop.f32.mrb[0].mxu0
      %v5229 = vadd.f32 %v4693, %v5228
      %5230 = vmatprep.mubr.bf16.mxu0 0
      %5231 = vmatmul.mubr.bf16.gmra.mrb[0].mxu0 %v5027
      %v5232 = vpop.f32.mrb[0].mxu0
      %v5233 = vadd.f32 %v4689, %v5232
      %v5234 = vpop.f32.mrb[0].mxu0
      %v5235 = vadd.f32 %v4693, %v5234
      %v5236 = vpop.f32.mrb[0].mxu0
      %v5237 = vadd.f32 %v4689, %v5236
      %v5238 = vpop.f32.mrb[0].mxu0
      %v5239 = vadd.f32 %v4693, %v5238
      %5240 = vmatprep.mubr.bf16.mxu0 0
      %5241 = vmatmul.mubr.bf16.gmra.mrb[0].mxu0 %v5030
      %v5242 = vpop.f32.mrb[0].mxu0
      %v5243 = vadd.f32 %v4689, %v5242
      %v5244 = vpop.f32.mrb[0].mxu0
      %v5245 = vadd.f32 %v4693, %v5244
      %v5246 = vpop.f32.mrb[0].mxu0
      %v5247 = vadd.f32 %v4689, %v5246
      %v5248 = vpop.f32.mrb[0].mxu0
      %v5249 = vadd.f32 %v4693, %v5248
      %5250 = vdwg.mxu0
      %5251 = vmatprep.subr.bf16.mxu0 %v4907
      %5252 = vmatpush1.bf16.msra.mxu0 %v4906
      %5253 = vmatprep.subr.bf16.mxu0 %v4917
      %5254 = vmatpush1.bf16.msra.mxu0 %v4916
      %5255 = vmatprep.subr.bf16.mxu0 %v4927
      %5256 = vmatpush1.bf16.msra.mxu0 %v4926
      %5257 = vmatprep.subr.bf16.mxu0 %v4937
      %5258 = vmatpush1.bf16.msra.mxu0 %v4936
      %5259 = vmatprep.subr.bf16.mxu0 %v4947
      %5260 = vmatpush1.bf16.msra.mxu0 %v4946
      %5261 = vmatprep.subr.bf16.mxu0 %v4957
      %5262 = vmatpush1.bf16.msra.mxu0 %v4956
      %5263 = vmatprep.subr.bf16.mxu0 0
      %5264 = vmatpush1.bf16.msra.mxu0 0
      %5265 = vmatprep.subr.bf16.mxu0 0
      %5266 = vmatpush1.bf16.msra.mxu0 0
      %5267 = vmatprep.subr.bf16.mxu0 0
      %5268 = vmatpush1.bf16.msra.mxu0 0
      %5269 = vmatprep.subr.bf16.mxu0 0
      %5270 = vmatpush1.bf16.msra.mxu0 0
      %5271 = vmatprep.subr.bf16.mxu0 0
      %5272 = vmatpush1.bf16.msra.mxu0 0
      %5273 = vmatprep.subr.bf16.mxu0 0
      %5274 = vmatpush1.bf16.msra.mxu0 0
      %5275 = vmatprep.subr.bf16.mxu0 0
      %5276 = vmatpush1.bf16.msra.mxu0 0
      %5277 = vmatprep.subr.bf16.mxu0 0
      %5278 = vmatpush1.bf16.msra.mxu0 0
      %5279 = vmatprep.subr.bf16.mxu0 0
      %5280 = vmatpush1.bf16.msra.mxu0 0
      %5281 = vmatprep.subr.bf16.mxu0 0
      %5282 = vmatpush1.bf16.msra.mxu0 0
      %5283 = vmatprep.mubr.bf16.mxu0 0
      %5284 = vmatmul.mubr.bf16.gmra.mrb[0].mxu0 %v5021
      %v5285 = vpop.f32.mrb[0].mxu0
      %v5286 = vadd.f32 %v4697, %v5285
      %v5287 = vpop.f32.mrb[0].mxu0
      %v5288 = vadd.f32 %v4701, %v5287
      %v5289 = vpop.f32.mrb[0].mxu0
      %v5290 = vadd.f32 %v4697, %v5289
      %v5291 = vpop.f32.mrb[0].mxu0
      %v5292 = vadd.f32 %v4701, %v5291
      %5293 = vmatprep.mubr.bf16.mxu0 0
      %5294 = vmatmul.mubr.bf16.gmra.mrb[0].mxu0 %v5024
      %v5295 = vpop.f32.mrb[0].mxu0
      %v5296 = vadd.f32 %v4697, %v5295
      %v5297 = vpop.f32.mrb[0].mxu0
      %v5298 = vadd.f32 %v4701, %v5297
      %v5299 = vpop.f32.mrb[0].mxu0
      %v5300 = vadd.f32 %v4697, %v5299
      %v5301 = vpop.f32.mrb[0].mxu0
      %v5302 = vadd.f32 %v4701, %v5301
      %5303 = vmatprep.mubr.bf16.mxu0 0
      %5304 = vmatmul.mubr.bf16.gmra.mrb[0].mxu0 %v5027
      %v5305 = vpop.f32.mrb[0].mxu0
      %v5306 = vadd.f32 %v4697, %v5305
      %v5307 = vpop.f32.mrb[0].mxu0
      %v5308 = vadd.f32 %v4701, %v5307
      %v5309 = vpop.f32.mrb[0].mxu0
      %v5310 = vadd.f32 %v4697, %v5309
      %v5311 = vpop.f32.mrb[0].mxu0
      %v5312 = vadd.f32 %v4701, %v5311
      %5313 = vmatprep.mubr.bf16.mxu0 0
      %5314 = vmatmul.mubr.bf16.gmra.mrb[0].mxu0 %v5030
      %v5315 = vpop.f32.mrb[0].mxu0
      %v5316 = vadd.f32 %v4697, %v5315
      %v5317 = vpop.f32.mrb[0].mxu0
      %v5318 = vadd.f32 %v4701, %v5317
      %v5319 = vpop.f32.mrb[0].mxu0
      %v5320 = vadd.f32 %v4697, %v5319
      %v5321 = vpop.f32.mrb[0].mxu0
      %v5322 = vadd.f32 %v4701, %v5321
      %5323 = vdwg.mxu0
      %5324 = vmatprep.subr.bf16.mxu0 %v4909
      %5325 = vmatpush1.bf16.msra.mxu0 %v4908
      %5326 = vmatprep.subr.bf16.mxu0 %v4919
      %5327 = vmatpush1.bf16.msra.mxu0 %v4918
      %5328 = vmatprep.subr.bf16.mxu0 %v4929
      %5329 = vmatpush1.bf16.msra.mxu0 %v4928
      %5330 = vmatprep.subr.bf16.mxu0 %v4939
      %5331 = vmatpush1.bf16.msra.mxu0 %v4938
      %5332 = vmatprep.subr.bf16.mxu0 %v4949
      %5333 = vmatpush1.bf16.msra.mxu0 %v4948
      %5334 = vmatprep.subr.bf16.mxu0 %v4959
      %5335 = vmatpush1.bf16.msra.mxu0 %v4958
      %5336 = vmatprep.subr.bf16.mxu0 0
      %5337 = vmatpush1.bf16.msra.mxu0 0
      %5338 = vmatprep.subr.bf16.mxu0 0
      %5339 = vmatpush1.bf16.msra.mxu0 0
      %5340 = vmatprep.subr.bf16.mxu0 0
      %5341 = vmatpush1.bf16.msra.mxu0 0
      %5342 = vmatprep.subr.bf16.mxu0 0
      %5343 = vmatpush1.bf16.msra.mxu0 0
      %5344 = vmatprep.subr.bf16.mxu0 0
      %5345 = vmatpush1.bf16.msra.mxu0 0
      %5346 = vmatprep.subr.bf16.mxu0 0
      %5347 = vmatpush1.bf16.msra.mxu0 0
      %5348 = vmatprep.subr.bf16.mxu0 0
      %5349 = vmatpush1.bf16.msra.mxu0 0
      %5350 = vmatprep.subr.bf16.mxu0 0
      %5351 = vmatpush1.bf16.msra.mxu0 0
      %5352 = vmatprep.subr.bf16.mxu0 0
      %5353 = vmatpush1.bf16.msra.mxu0 0
      %5354 = vmatprep.subr.bf16.mxu0 0
      %5355 = vmatpush1.bf16.msra.mxu0 0
      %5356 = vmatprep.mubr.bf16.mxu0 0
      %5357 = vmatmul.mubr.bf16.gmra.mrb[0].mxu0 %v5021
      %v5358 = vpop.f32.mrb[0].mxu0
      %v5359 = vadd.f32 %v4705, %v5358
      %v5360 = vpop.f32.mrb[0].mxu0
      %v5361 = vadd.f32 %v4709, %v5360
      %v5362 = vpop.f32.mrb[0].mxu0
      %v5363 = vadd.f32 %v4705, %v5362
      %v5364 = vpop.f32.mrb[0].mxu0
      %v5365 = vadd.f32 %v4709, %v5364
      %5366 = vmatprep.mubr.bf16.mxu0 0
      %5367 = vmatmul.mubr.bf16.gmra.mrb[0].mxu0 %v5024
      %v5368 = vpop.f32.mrb[0].mxu0
      %v5369 = vadd.f32 %v4705, %v5368
      %v5370 = vpop.f32.mrb[0].mxu0
      %v5371 = vadd.f32 %v4709, %v5370
      %v5372 = vpop.f32.mrb[0].mxu0
      %v5373 = vadd.f32 %v4705, %v5372
      %v5374 = vpop.f32.mrb[0].mxu0
      %v5375 = vadd.f32 %v4709, %v5374
      %5376 = vmatprep.mubr.bf16.mxu0 0
      %5377 = vmatmul.mubr.bf16.gmra.mrb[0].mxu0 %v5027
      %v5378 = vpop.f32.mrb[0].mxu0
      %v5379 = vadd.f32 %v4705, %v5378
      %v5380 = vpop.f32.mrb[0].mxu0
      %v5381 = vadd.f32 %v4709, %v5380
      %v5382 = vpop.f32.mrb[0].mxu0
      %v5383 = vadd.f32 %v4705, %v5382
      %v5384 = vpop.f32.mrb[0].mxu0
      %v5385 = vadd.f32 %v4709, %v5384
      %5386 = vmatprep.mubr.bf16.mxu0 0
      %5387 = vmatmul.mubr.bf16.gmra.mrb[0].mxu0 %v5030
      %v5388 = vpop.f32.mrb[0].mxu0
      %v5389 = vadd.f32 %v4705, %v5388
      %v5390 = vpop.f32.mrb[0].mxu0
      %v5391 = vadd.f32 %v4709, %v5390
      %v5392 = vpop.f32.mrb[0].mxu0
      %v5393 = vadd.f32 %v4705, %v5392
      %v5394 = vpop.f32.mrb[0].mxu0
      %v5395 = vadd.f32 %v4709, %v5394
      %5396 = vdwg.mxu0
      %v5397 = vxor.u32 %v5067, 2147483648
      %v5398 = vxor.u32 %v5069, 2147483648
      %v5399 = vxor.u32 %v5140, 2147483648
      %v5400 = vxor.u32 %v5142, 2147483648
      %v5401 = vxor.u32 %v5213, 2147483648
      %v5402 = vxor.u32 %v5215, 2147483648
      %v5403 = vxor.u32 %v5286, 2147483648
      %v5404 = vxor.u32 %v5288, 2147483648
      %v5405 = vxor.u32 %v5359, 2147483648
      %v5406 = vxor.u32 %v5361, 2147483648
      %v5407 = vxor.u32 %v5071, 2147483648
      %v5408 = vxor.u32 %v5073, 2147483648
      %v5409 = vxor.u32 %v5144, 2147483648
      %v5410 = vxor.u32 %v5146, 2147483648
      %v5411 = vxor.u32 %v5217, 2147483648
      %v5412 = vxor.u32 %v5219, 2147483648
      %v5413 = vxor.u32 %v5290, 2147483648
      %v5414 = vxor.u32 %v5292, 2147483648
      %v5415 = vxor.u32 %v5363, 2147483648
      %v5416 = vxor.u32 %v5365, 2147483648
      %v5417 = vxor.u32 %v5077, 2147483648
      %v5418 = vxor.u32 %v5079, 2147483648
      %v5419 = vxor.u32 %v5150, 2147483648
      %v5420 = vxor.u32 %v5152, 2147483648
      %v5421 = vxor.u32 %v5223, 2147483648
      %v5422 = vxor.u32 %v5225, 2147483648
      %v5423 = vxor.u32 %v5296, 2147483648
      %v5424 = vxor.u32 %v5298, 2147483648
      %v5425 = vxor.u32 %v5369, 2147483648
      %v5426 = vxor.u32 %v5371, 2147483648
      %v5427 = vxor.u32 %v5081, 2147483648
      %v5428 = vxor.u32 %v5083, 2147483648
      %v5429 = vxor.u32 %v5154, 2147483648
      %v5430 = vxor.u32 %v5156, 2147483648
      %v5431 = vxor.u32 %v5227, 2147483648
      %v5432 = vxor.u32 %v5229, 2147483648
      %v5433 = vxor.u32 %v5300, 2147483648
      %v5434 = vxor.u32 %v5302, 2147483648
      %v5435 = vxor.u32 %v5373, 2147483648
      %v5436 = vxor.u32 %v5375, 2147483648
      %v5437 = vxor.u32 %v5087, 2147483648
      %v5438 = vxor.u32 %v5089, 2147483648
      %v5439 = vxor.u32 %v5160, 2147483648
      %v5440 = vxor.u32 %v5162, 2147483648
      %v5441 = vxor.u32 %v5233, 2147483648
      %v5442 = vxor.u32 %v5235, 2147483648
      %v5443 = vxor.u32 %v5306, 2147483648
      %v5444 = vxor.u32 %v5308, 2147483648
      %v5445 = vxor.u32 %v5379, 2147483648
      %v5446 = vxor.u32 %v5381, 2147483648
      %v5447 = vxor.u32 %v5091, 2147483648
      %v5448 = vxor.u32 %v5093, 2147483648
      %v5449 = vxor.u32 %v5164, 2147483648
      %v5450 = vxor.u32 %v5166, 2147483648
      %v5451 = vxor.u32 %v5237, 2147483648
      %v5452 = vxor.u32 %v5239, 2147483648
      %v5453 = vxor.u32 %v5310, 2147483648
      %v5454 = vxor.u32 %v5312, 2147483648
      %v5455 = vxor.u32 %v5383, 2147483648
      %v5456 = vxor.u32 %v5385, 2147483648
      %v5457 = vxor.u32 %v5097, 2147483648
      %v5458 = vxor.u32 %v5099, 2147483648
      %v5459 = vxor.u32 %v5170, 2147483648
      %v5460 = vxor.u32 %v5172, 2147483648
      %v5461 = vxor.u32 %v5243, 2147483648
      %v5462 = vxor.u32 %v5245, 2147483648
      %v5463 = vxor.u32 %v5316, 2147483648
      %v5464 = vxor.u32 %v5318, 2147483648
      %v5465 = vxor.u32 %v5389, 2147483648
      %v5466 = vxor.u32 %v5391, 2147483648
      %v5467 = vxor.u32 %v5101, 2147483648
      %v5468 = vxor.u32 %v5103, 2147483648
      %v5469 = vxor.u32 %v5174, 2147483648
      %v5470 = vxor.u32 %v5176, 2147483648
      %v5471 = vxor.u32 %v5247, 2147483648
      %v5472 = vxor.u32 %v5249, 2147483648
      %v5473 = vxor.u32 %v5320, 2147483648
      %v5474 = vxor.u32 %v5322, 2147483648
      %v5475 = vxor.u32 %v5393, 2147483648
      %v5476 = vxor.u32 %v5395, 2147483648
      %v5477 = vmul.f32 %v5397, 1.442695
      %v5478 = vpow.pop %v5477
      %v5479 = vmul.f32 %v5398, 1.442695
      %v5480 = vpow.pop %v5479
      %v5481 = vmul.f32 %v5399, 1.442695
      %v5482 = vpow.pop %v5481
      %v5483 = vmul.f32 %v5400, 1.442695
      %v5484 = vpow.pop %v5483
      %v5485 = vmul.f32 %v5401, 1.442695
      %v5486 = vpow.pop %v5485
      %v5487 = vmul.f32 %v5402, 1.442695
      %v5488 = vpow.pop %v5487
      %v5489 = vmul.f32 %v5403, 1.442695
      %v5490 = vpow.pop %v5489
      %v5491 = vmul.f32 %v5404, 1.442695
      %v5492 = vpow.pop %v5491
      %v5493 = vmul.f32 %v5405, 1.442695
      %v5494 = vpow.pop %v5493
      %v5495 = vmul.f32 %v5406, 1.442695
      %v5496 = vpow.pop %v5495
      %v5497 = vmul.f32 %v5407, 1.442695
      %v5498 = vpow.pop %v5497
      %v5499 = vmul.f32 %v5408, 1.442695
      %v5500 = vpow.pop %v5499
      %v5501 = vmul.f32 %v5409, 1.442695
      %v5502 = vpow.pop %v5501
      %v5503 = vmul.f32 %v5410, 1.442695
      %v5504 = vpow.pop %v5503
      %v5505 = vmul.f32 %v5411, 1.442695
      %v5506 = vpow.pop %v5505
      %v5507 = vmul.f32 %v5412, 1.442695
      %v5508 = vpow.pop %v5507
      %v5509 = vmul.f32 %v5413, 1.442695
      %v5510 = vpow.pop %v5509
      %v5511 = vmul.f32 %v5414, 1.442695
      %v5512 = vpow.pop %v5511
      %v5513 = vmul.f32 %v5415, 1.442695
      %v5514 = vpow.pop %v5513
      %v5515 = vmul.f32 %v5416, 1.442695
      %v5516 = vpow.pop %v5515
      %v5517 = vmul.f32 %v5417, 1.442695
      %v5518 = vpow.pop %v5517
      %v5519 = vmul.f32 %v5418, 1.442695
      %v5520 = vpow.pop %v5519
      %v5521 = vmul.f32 %v5419, 1.442695
      %v5522 = vpow.pop %v5521
      %v5523 = vmul.f32 %v5420, 1.442695
      %v5524 = vpow.pop %v5523
      %v5525 = vmul.f32 %v5421, 1.442695
      %v5526 = vpow.pop %v5525
      %v5527 = vmul.f32 %v5422, 1.442695
      %v5528 = vpow.pop %v5527
      %v5529 = vmul.f32 %v5423, 1.442695
      %v5530 = vpow.pop %v5529
      %v5531 = vmul.f32 %v5424, 1.442695
      %v5532 = vpow.pop %v5531
      %v5533 = vmul.f32 %v5425, 1.442695
      %v5534 = vpow.pop %v5533
      %v5535 = vmul.f32 %v5426, 1.442695
      %v5536 = vpow.pop %v5535
      %v5537 = vmul.f32 %v5427, 1.442695
      %v5538 = vpow.pop %v5537
      %v5539 = vmul.f32 %v5428, 1.442695
      %v5540 = vpow.pop %v5539
      %v5541 = vmul.f32 %v5429, 1.442695
      %v5542 = vpow.pop %v5541
      %v5543 = vmul.f32 %v5430, 1.442695
      %v5544 = vpow.pop %v5543
      %v5545 = vmul.f32 %v5431, 1.442695
      %v5546 = vpow.pop %v5545
      %v5547 = vmul.f32 %v5432, 1.442695
      %v5548 = vpow.pop %v5547
      %v5549 = vmul.f32 %v5433, 1.442695
      %v5550 = vpow.pop %v5549
      %v5551 = vmul.f32 %v5434, 1.442695
      %v5552 = vpow.pop %v5551
      %v5553 = vmul.f32 %v5435, 1.442695
      %v5554 = vpow.pop %v5553
      %v5555 = vmul.f32 %v5436, 1.442695
      %v5556 = vpow.pop %v5555
      %v5557 = vmul.f32 %v5437, 1.442695
      %v5558 = vpow.pop %v5557
      %v5559 = vmul.f32 %v5438, 1.442695
      %v5560 = vpow.pop %v5559
      %v5561 = vmul.f32 %v5439, 1.442695
      %v5562 = vpow.pop %v5561
      %v5563 = vmul.f32 %v5440, 1.442695
      %v5564 = vpow.pop %v5563
      %v5565 = vmul.f32 %v5441, 1.442695
      %v5566 = vpow.pop %v5565
      %v5567 = vmul.f32 %v5442, 1.442695
      %v5568 = vpow.pop %v5567
      %v5569 = vmul.f32 %v5443, 1.442695
      %v5570 = vpow.pop %v5569
      %v5571 = vmul.f32 %v5444, 1.442695
      %v5572 = vpow.pop %v5571
      %v5573 = vmul.f32 %v5445, 1.442695
      %v5574 = vpow.pop %v5573
      %v5575 = vmul.f32 %v5446, 1.442695
      %v5576 = vpow.pop %v5575
      %v5577 = vmul.f32 %v5447, 1.442695
      %v5578 = vpow.pop %v5577
      %v5579 = vmul.f32 %v5448, 1.442695
      %v5580 = vpow.pop %v5579
      %v5581 = vmul.f32 %v5449, 1.442695
      %v5582 = vpow.pop %v5581
      %v5583 = vmul.f32 %v5450, 1.442695
      %v5584 = vpow.pop %v5583
      %v5585 = vmul.f32 %v5451, 1.442695
      %v5586 = vpow.pop %v5585
      %v5587 = vmul.f32 %v5452, 1.442695
      %v5588 = vpow.pop %v5587
      %v5589 = vmul.f32 %v5453, 1.442695
      %v5590 = vpow.pop %v5589
      %v5591 = vmul.f32 %v5454, 1.442695
      %v5592 = vpow.pop %v5591
      %v5593 = vmul.f32 %v5455, 1.442695
      %v5594 = vpow.pop %v5593
      %v5595 = vmul.f32 %v5456, 1.442695
      %v5596 = vpow.pop %v5595
      %v5597 = vmul.f32 %v5457, 1.442695
      %v5598 = vpow.pop %v5597
      %v5599 = vmul.f32 %v5458, 1.442695
      %v5600 = vpow.pop %v5599
      %v5601 = vmul.f32 %v5459, 1.442695
      %v5602 = vpow.pop %v5601
      %v5603 = vmul.f32 %v5460, 1.442695
      %v5604 = vpow.pop %v5603
      %v5605 = vmul.f32 %v5461, 1.442695
      %v5606 = vpow.pop %v5605
      %v5607 = vmul.f32 %v5462, 1.442695
      %v5608 = vpow.pop %v5607
      %v5609 = vmul.f32 %v5463, 1.442695
      %v5610 = vpow.pop %v5609
      %v5611 = vmul.f32 %v5464, 1.442695
      %v5612 = vpow.pop %v5611
      %v5613 = vmul.f32 %v5465, 1.442695
      %v5614 = vpow.pop %v5613
      %v5615 = vmul.f32 %v5466, 1.442695
      %v5616 = vpow.pop %v5615
      %v5617 = vmul.f32 %v5467, 1.442695
      %v5618 = vpow.pop %v5617
      %v5619 = vmul.f32 %v5468, 1.442695
      %v5620 = vpow.pop %v5619
      %v5621 = vmul.f32 %v5469, 1.442695
      %v5622 = vpow.pop %v5621
      %v5623 = vmul.f32 %v5470, 1.442695
      %v5624 = vpow.pop %v5623
      %v5625 = vmul.f32 %v5471, 1.442695
      %v5626 = vpow.pop %v5625
      %v5627 = vmul.f32 %v5472, 1.442695
      %v5628 = vpow.pop %v5627
      %v5629 = vmul.f32 %v5473, 1.442695
      %v5630 = vpow.pop %v5629
      %v5631 = vmul.f32 %v5474, 1.442695
      %v5632 = vpow.pop %v5631
      %v5633 = vmul.f32 %v5475, 1.442695
      %v5634 = vpow.pop %v5633
      %v5635 = vmul.f32 %v5476, 1.442695
      %v5636 = vpow.pop %v5635
      %v5637 = vadd.f32 %v5478, 1.0
      %v5638 = vadd.f32 %v5480, 1.0
      %v5639 = vadd.f32 %v5482, 1.0
      %v5640 = vadd.f32 %v5484, 1.0
      %v5641 = vadd.f32 %v5486, 1.0
      %v5642 = vadd.f32 %v5488, 1.0
      %v5643 = vadd.f32 %v5490, 1.0
      %v5644 = vadd.f32 %v5492, 1.0
      %v5645 = vadd.f32 %v5494, 1.0
      %v5646 = vadd.f32 %v5496, 1.0
      %v5647 = vadd.f32 %v5498, 1.0
      %v5648 = vadd.f32 %v5500, 1.0
      %v5649 = vadd.f32 %v5502, 1.0
      %v5650 = vadd.f32 %v5504, 1.0
      %v5651 = vadd.f32 %v5506, 1.0
      %v5652 = vadd.f32 %v5508, 1.0
      %v5653 = vadd.f32 %v5510, 1.0
      %v5654 = vadd.f32 %v5512, 1.0
      %v5655 = vadd.f32 %v5514, 1.0
      %v5656 = vadd.f32 %v5516, 1.0
      %v5657 = vadd.f32 %v5518, 1.0
      %v5658 = vadd.f32 %v5520, 1.0
      %v5659 = vadd.f32 %v5522, 1.0
      %v5660 = vadd.f32 %v5524, 1.0
      %v5661 = vadd.f32 %v5526, 1.0
      %v5662 = vadd.f32 %v5528, 1.0
      %v5663 = vadd.f32 %v5530, 1.0
      %v5664 = vadd.f32 %v5532, 1.0
      %v5665 = vadd.f32 %v5534, 1.0
      %v5666 = vadd.f32 %v5536, 1.0
      %v5667 = vadd.f32 %v5538, 1.0
      %v5668 = vadd.f32 %v5540, 1.0
      %v5669 = vadd.f32 %v5542, 1.0
      %v5670 = vadd.f32 %v5544, 1.0
      %v5671 = vadd.f32 %v5546, 1.0
      %v5672 = vadd.f32 %v5548, 1.0
      %v5673 = vadd.f32 %v5550, 1.0
      %v5674 = vadd.f32 %v5552, 1.0
      %v5675 = vadd.f32 %v5554, 1.0
      %v5676 = vadd.f32 %v5556, 1.0
      %v5677 = vadd.f32 %v5558, 1.0
      %v5678 = vadd.f32 %v5560, 1.0
      %v5679 = vadd.f32 %v5562, 1.0
      %v5680 = vadd.f32 %v5564, 1.0
      %v5681 = vadd.f32 %v5566, 1.0
      %v5682 = vadd.f32 %v5568, 1.0
      %v5683 = vadd.f32 %v5570, 1.0
      %v5684 = vadd.f32 %v5572, 1.0
      %v5685 = vadd.f32 %v5574, 1.0
      %v5686 = vadd.f32 %v5576, 1.0
      %v5687 = vadd.f32 %v5578, 1.0
      %v5688 = vadd.f32 %v5580, 1.0
      %v5689 = vadd.f32 %v5582, 1.0
      %v5690 = vadd.f32 %v5584, 1.0
      %v5691 = vadd.f32 %v5586, 1.0
      %v5692 = vadd.f32 %v5588, 1.0
      %v5693 = vadd.f32 %v5590, 1.0
      %v5694 = vadd.f32 %v5592, 1.0
      %v5695 = vadd.f32 %v5594, 1.0
      %v5696 = vadd.f32 %v5596, 1.0
      %v5697 = vadd.f32 %v5598, 1.0
      %v5698 = vadd.f32 %v5600, 1.0
      %v5699 = vadd.f32 %v5602, 1.0
      %v5700 = vadd.f32 %v5604, 1.0
      %v5701 = vadd.f32 %v5606, 1.0
      %v5702 = vadd.f32 %v5608, 1.0
      %v5703 = vadd.f32 %v5610, 1.0
      %v5704 = vadd.f32 %v5612, 1.0
      %v5705 = vadd.f32 %v5614, 1.0
      %v5706 = vadd.f32 %v5616, 1.0
      %v5707 = vadd.f32 %v5618, 1.0
      %v5708 = vadd.f32 %v5620, 1.0
      %v5709 = vadd.f32 %v5622, 1.0
      %v5710 = vadd.f32 %v5624, 1.0
      %v5711 = vadd.f32 %v5626, 1.0
      %v5712 = vadd.f32 %v5628, 1.0
      %v5713 = vadd.f32 %v5630, 1.0
      %v5714 = vadd.f32 %v5632, 1.0
      %v5715 = vadd.f32 %v5634, 1.0
      %v5716 = vadd.f32 %v5636, 1.0
      %v5717 = vrcp.pop %v5637
      %v5718 = vmul.f32 1.0, %v5717
      %v5719 = vrcp.pop %v5638
      %v5720 = vmul.f32 1.0, %v5719
      %v5721 = vrcp.pop %v5639
      %v5722 = vmul.f32 1.0, %v5721
      %v5723 = vrcp.pop %v5640
      %v5724 = vmul.f32 1.0, %v5723
      %v5725 = vrcp.pop %v5641
      %v5726 = vmul.f32 1.0, %v5725
      %v5727 = vrcp.pop %v5642
      %v5728 = vmul.f32 1.0, %v5727
      %v5729 = vrcp.pop %v5643
      %v5730 = vmul.f32 1.0, %v5729
      %v5731 = vrcp.pop %v5644
      %v5732 = vmul.f32 1.0, %v5731
      %v5733 = vrcp.pop %v5645
      %v5734 = vmul.f32 1.0, %v5733
      %v5735 = vrcp.pop %v5646
      %v5736 = vmul.f32 1.0, %v5735
      %v5737 = vrcp.pop %v5647
      %v5738 = vmul.f32 1.0, %v5737
      %v5739 = vrcp.pop %v5648
      %v5740 = vmul.f32 1.0, %v5739
      %v5741 = vrcp.pop %v5649
      %v5742 = vmul.f32 1.0, %v5741
      %v5743 = vrcp.pop %v5650
      %v5744 = vmul.f32 1.0, %v5743
      %v5745 = vrcp.pop %v5651
      %v5746 = vmul.f32 1.0, %v5745
      %v5747 = vrcp.pop %v5652
      %v5748 = vmul.f32 1.0, %v5747
      %v5749 = vrcp.pop %v5653
      %v5750 = vmul.f32 1.0, %v5749
      %v5751 = vrcp.pop %v5654
      %v5752 = vmul.f32 1.0, %v5751
      %v5753 = vrcp.pop %v5655
      %v5754 = vmul.f32 1.0, %v5753
      %v5755 = vrcp.pop %v5656
      %v5756 = vmul.f32 1.0, %v5755
      %v5757 = vrcp.pop %v5657
      %v5758 = vmul.f32 1.0, %v5757
      %v5759 = vrcp.pop %v5658
      %v5760 = vmul.f32 1.0, %v5759
      %v5761 = vrcp.pop %v5659
      %v5762 = vmul.f32 1.0, %v5761
      %v5763 = vrcp.pop %v5660
      %v5764 = vmul.f32 1.0, %v5763
      %v5765 = vrcp.pop %v5661
      %v5766 = vmul.f32 1.0, %v5765
      %v5767 = vrcp.pop %v5662
      %v5768 = vmul.f32 1.0, %v5767
      %v5769 = vrcp.pop %v5663
      %v5770 = vmul.f32 1.0, %v5769
      %v5771 = vrcp.pop %v5664
      %v5772 = vmul.f32 1.0, %v5771
      %v5773 = vrcp.pop %v5665
      %v5774 = vmul.f32 1.0, %v5773
      %v5775 = vrcp.pop %v5666
      %v5776 = vmul.f32 1.0, %v5775
      %v5777 = vrcp.pop %v5667
      %v5778 = vmul.f32 1.0, %v5777
      %v5779 = vrcp.pop %v5668
      %v5780 = vmul.f32 1.0, %v5779
      %v5781 = vrcp.pop %v5669
      %v5782 = vmul.f32 1.0, %v5781
      %v5783 = vrcp.pop %v5670
      %v5784 = vmul.f32 1.0, %v5783
      %v5785 = vrcp.pop %v5671
      %v5786 = vmul.f32 1.0, %v5785
      %v5787 = vrcp.pop %v5672
      %v5788 = vmul.f32 1.0, %v5787
      %v5789 = vrcp.pop %v5673
      %v5790 = vmul.f32 1.0, %v5789
      %v5791 = vrcp.pop %v5674
      %v5792 = vmul.f32 1.0, %v5791
      %v5793 = vrcp.pop %v5675
      %v5794 = vmul.f32 1.0, %v5793
      %v5795 = vrcp.pop %v5676
      %v5796 = vmul.f32 1.0, %v5795
      %v5797 = vrcp.pop %v5677
      %v5798 = vmul.f32 1.0, %v5797
      %v5799 = vrcp.pop %v5678
      %v5800 = vmul.f32 1.0, %v5799
      %v5801 = vrcp.pop %v5679
      %v5802 = vmul.f32 1.0, %v5801
      %v5803 = vrcp.pop %v5680
      %v5804 = vmul.f32 1.0, %v5803
      %v5805 = vrcp.pop %v5681
      %v5806 = vmul.f32 1.0, %v5805
      %v5807 = vrcp.pop %v5682
      %v5808 = vmul.f32 1.0, %v5807
      %v5809 = vrcp.pop %v5683
      %v5810 = vmul.f32 1.0, %v5809
      %v5811 = vrcp.pop %v5684
      %v5812 = vmul.f32 1.0, %v5811
      %v5813 = vrcp.pop %v5685
      %v5814 = vmul.f32 1.0, %v5813
      %v5815 = vrcp.pop %v5686
      %v5816 = vmul.f32 1.0, %v5815
      %v5817 = vrcp.pop %v5687
      %v5818 = vmul.f32 1.0, %v5817
      %v5819 = vrcp.pop %v5688
      %v5820 = vmul.f32 1.0, %v5819
      %v5821 = vrcp.pop %v5689
      %v5822 = vmul.f32 1.0, %v5821
      %v5823 = vrcp.pop %v5690
      %v5824 = vmul.f32 1.0, %v5823
      %v5825 = vrcp.pop %v5691
      %v5826 = vmul.f32 1.0, %v5825
      %v5827 = vrcp.pop %v5692
      %v5828 = vmul.f32 1.0, %v5827
      %v5829 = vrcp.pop %v5693
      %v5830 = vmul.f32 1.0, %v5829
      %v5831 = vrcp.pop %v5694
      %v5832 = vmul.f32 1.0, %v5831
      %v5833 = vrcp.pop %v5695
      %v5834 = vmul.f32 1.0, %v5833
      %v5835 = vrcp.pop %v5696
      %v5836 = vmul.f32 1.0, %v5835
      %v5837 = vrcp.pop %v5697
      %v5838 = vmul.f32 1.0, %v5837
      %v5839 = vrcp.pop %v5698
      %v5840 = vmul.f32 1.0, %v5839
      %v5841 = vrcp.pop %v5699
      %v5842 = vmul.f32 1.0, %v5841
      %v5843 = vrcp.pop %v5700
      %v5844 = vmul.f32 1.0, %v5843
      %v5845 = vrcp.pop %v5701
      %v5846 = vmul.f32 1.0, %v5845
      %v5847 = vrcp.pop %v5702
      %v5848 = vmul.f32 1.0, %v5847
      %v5849 = vrcp.pop %v5703
      %v5850 = vmul.f32 1.0, %v5849
      %v5851 = vrcp.pop %v5704
      %v5852 = vmul.f32 1.0, %v5851
      %v5853 = vrcp.pop %v5705
      %v5854 = vmul.f32 1.0, %v5853
      %v5855 = vrcp.pop %v5706
      %v5856 = vmul.f32 1.0, %v5855
      %v5857 = vrcp.pop %v5707
      %v5858 = vmul.f32 1.0, %v5857
      %v5859 = vrcp.pop %v5708
      %v5860 = vmul.f32 1.0, %v5859
      %v5861 = vrcp.pop %v5709
      %v5862 = vmul.f32 1.0, %v5861
      %v5863 = vrcp.pop %v5710
      %v5864 = vmul.f32 1.0, %v5863
      %v5865 = vrcp.pop %v5711
      %v5866 = vmul.f32 1.0, %v5865
      %v5867 = vrcp.pop %v5712
      %v5868 = vmul.f32 1.0, %v5867
      %v5869 = vrcp.pop %v5713
      %v5870 = vmul.f32 1.0, %v5869
      %v5871 = vrcp.pop %v5714
      %v5872 = vmul.f32 1.0, %v5871
      %v5873 = vrcp.pop %v5715
      %v5874 = vmul.f32 1.0, %v5873
      %v5875 = vrcp.pop %v5716
      %v5876 = vmul.f32 1.0, %v5875
      %v5877 = vmul.f32 %v5067, %v5718
      %v5878 = vmul.f32 %v5069, %v5720
      %v5879 = vmul.f32 %v5140, %v5722
      %v5880 = vmul.f32 %v5142, %v5724
      %v5881 = vmul.f32 %v5213, %v5726
      %v5882 = vmul.f32 %v5215, %v5728
      %v5883 = vmul.f32 %v5286, %v5730
      %v5884 = vmul.f32 %v5288, %v5732
      %v5885 = vmul.f32 %v5359, %v5734
      %v5886 = vmul.f32 %v5361, %v5736
      %v5887 = vmul.f32 %v5071, %v5738
      %v5888 = vmul.f32 %v5073, %v5740
      %v5889 = vmul.f32 %v5144, %v5742
      %v5890 = vmul.f32 %v5146, %v5744
      %v5891 = vmul.f32 %v5217, %v5746
      %v5892 = vmul.f32 %v5219, %v5748
      %v5893 = vmul.f32 %v5290, %v5750
      %v5894 = vmul.f32 %v5292, %v5752
      %v5895 = vmul.f32 %v5363, %v5754
      %v5896 = vmul.f32 %v5365, %v5756
      %v5897 = vmul.f32 %v5077, %v5758
      %v5898 = vmul.f32 %v5079, %v5760
      %v5899 = vmul.f32 %v5150, %v5762
      %v5900 = vmul.f32 %v5152, %v5764
      %v5901 = vmul.f32 %v5223, %v5766
      %v5902 = vmul.f32 %v5225, %v5768
      %v5903 = vmul.f32 %v5296, %v5770
      %v5904 = vmul.f32 %v5298, %v5772
      %v5905 = vmul.f32 %v5369, %v5774
      %v5906 = vmul.f32 %v5371, %v5776
      %v5907 = vmul.f32 %v5081, %v5778
      %v5908 = vmul.f32 %v5083, %v5780
      %v5909 = vmul.f32 %v5154, %v5782
      %v5910 = vmul.f32 %v5156, %v5784
      %v5911 = vmul.f32 %v5227, %v5786
      %v5912 = vmul.f32 %v5229, %v5788
      %v5913 = vmul.f32 %v5300, %v5790
      %v5914 = vmul.f32 %v5302, %v5792
      %v5915 = vmul.f32 %v5373, %v5794
      %v5916 = vmul.f32 %v5375, %v5796
      %v5917 = vmul.f32 %v5087, %v5798
      %v5918 = vmul.f32 %v5089, %v5800
      %v5919 = vmul.f32 %v5160, %v5802
      %v5920 = vmul.f32 %v5162, %v5804
      %v5921 = vmul.f32 %v5233, %v5806
      %v5922 = vmul.f32 %v5235, %v5808
      %v5923 = vmul.f32 %v5306, %v5810
      %v5924 = vmul.f32 %v5308, %v5812
      %v5925 = vmul.f32 %v5379, %v5814
      %v5926 = vmul.f32 %v5381, %v5816
      %v5927 = vmul.f32 %v5091, %v5818
      %v5928 = vmul.f32 %v5093, %v5820
      %v5929 = vmul.f32 %v5164, %v5822
      %v5930 = vmul.f32 %v5166, %v5824
      %v5931 = vmul.f32 %v5237, %v5826
      %v5932 = vmul.f32 %v5239, %v5828
      %v5933 = vmul.f32 %v5310, %v5830
      %v5934 = vmul.f32 %v5312, %v5832
      %v5935 = vmul.f32 %v5383, %v5834
      %v5936 = vmul.f32 %v5385, %v5836
      %v5937 = vmul.f32 %v5097, %v5838
      %v5938 = vmul.f32 %v5099, %v5840
      %v5939 = vmul.f32 %v5170, %v5842
      %v5940 = vmul.f32 %v5172, %v5844
      %v5941 = vmul.f32 %v5243, %v5846
      %v5942 = vmul.f32 %v5245, %v5848
      %v5943 = vmul.f32 %v5316, %v5850
      %v5944 = vmul.f32 %v5318, %v5852
      %v5945 = vmul.f32 %v5389, %v5854
      %v5946 = vmul.f32 %v5391, %v5856
      %v5947 = vmul.f32 %v5101, %v5858
      %v5948 = vmul.f32 %v5103, %v5860
      %v5949 = vmul.f32 %v5174, %v5862
      %v5950 = vmul.f32 %v5176, %v5864
      %v5951 = vmul.f32 %v5247, %v5866
      %v5952 = vmul.f32 %v5249, %v5868
      %v5953 = vmul.f32 %v5320, %v5870
      %v5954 = vmul.f32 %v5322, %v5872
      %v5955 = vmul.f32 %v5393, %v5874
      %v5956 = vmul.f32 %v5395, %v5876
      %v5957 = vadd.f32 %v5877, %v5887
      %v5958 = vadd.f32 %v5957, %v5897
      %v5959 = vadd.f32 %v5958, %v5907
      %v5960 = vadd.f32 %v5959, %v5917
      %v5961 = vadd.f32 %v5960, %v5927
      %v5962 = vadd.f32 %v5961, %v5937
      %v5963 = vadd.f32 %v5962, %v5947
      %v5964 = vrot.slane %v5963, 4
      %v5965 = vadd.f32 %v5963, %v5964
      %v5966 = vrot.slane %v5965, 2
      %v5967 = vadd.f32 %v5965, %v5966
      %v5968 = vrot.slane %v5967, 1
      %v5969 = vadd.f32 %v5967, %v5968
      %v5970 = vadd.f32 %v5878, %v5888
      %v5971 = vadd.f32 %v5970, %v5898
      %v5972 = vadd.f32 %v5971, %v5908
      %v5973 = vadd.f32 %v5972, %v5918
      %v5974 = vadd.f32 %v5973, %v5928
      %v5975 = vadd.f32 %v5974, %v5938
      %v5976 = vadd.f32 %v5975, %v5948
      %v5977 = vrot.slane %v5976, 4
      %v5978 = vadd.f32 %v5976, %v5977
      %v5979 = vrot.slane %v5978, 2
      %v5980 = vadd.f32 %v5978, %v5979
      %v5981 = vrot.slane %v5980, 1
      %v5982 = vadd.f32 %v5980, %v5981
      %v5983 = vadd.f32 %v5879, %v5889
      %v5984 = vadd.f32 %v5983, %v5899
      %v5985 = vadd.f32 %v5984, %v5909
      %v5986 = vadd.f32 %v5985, %v5919
      %v5987 = vadd.f32 %v5986, %v5929
      %v5988 = vadd.f32 %v5987, %v5939
      %v5989 = vadd.f32 %v5988, %v5949
      %v5990 = vrot.slane %v5989, 4
      %v5991 = vadd.f32 %v5989, %v5990
      %v5992 = vrot.slane %v5991, 2
      %v5993 = vadd.f32 %v5991, %v5992
      %v5994 = vrot.slane %v5993, 1
      %v5995 = vadd.f32 %v5993, %v5994
      %v5996 = vadd.f32 %v5880, %v5890
      %v5997 = vadd.f32 %v5996, %v5900
      %v5998 = vadd.f32 %v5997, %v5910
      %v5999 = vadd.f32 %v5998, %v5920
      %v6000 = vadd.f32 %v5999, %v5930
      %v6001 = vadd.f32 %v6000, %v5940
      %v6002 = vadd.f32 %v6001, %v5950
      %v6003 = vrot.slane %v6002, 4
      %v6004 = vadd.f32 %v6002, %v6003
      %v6005 = vrot.slane %v6004, 2
      %v6006 = vadd.f32 %v6004, %v6005
      %v6007 = vrot.slane %v6006, 1
      %v6008 = vadd.f32 %v6006, %v6007
      %v6009 = vadd.f32 %v5881, %v5891
      %v6010 = vadd.f32 %v6009, %v5901
      %v6011 = vadd.f32 %v6010, %v5911
      %v6012 = vadd.f32 %v6011, %v5921
      %v6013 = vadd.f32 %v6012, %v5931
      %v6014 = vadd.f32 %v6013, %v5941
      %v6015 = vadd.f32 %v6014, %v5951
      %v6016 = vrot.slane %v6015, 4
      %v6017 = vadd.f32 %v6015, %v6016
      %v6018 = vrot.slane %v6017, 2
      %v6019 = vadd.f32 %v6017, %v6018
      %v6020 = vrot.slane %v6019, 1
      %v6021 = vadd.f32 %v6019, %v6020
      %v6022 = vadd.f32 %v5882, %v5892
      %v6023 = vadd.f32 %v6022, %v5902
      %v6024 = vadd.f32 %v6023, %v5912
      %v6025 = vadd.f32 %v6024, %v5922
      %v6026 = vadd.f32 %v6025, %v5932
      %v6027 = vadd.f32 %v6026, %v5942
      %v6028 = vadd.f32 %v6027, %v5952
      %v6029 = vrot.slane %v6028, 4
      %v6030 = vadd.f32 %v6028, %v6029
      %v6031 = vrot.slane %v6030, 2
      %v6032 = vadd.f32 %v6030, %v6031
      %v6033 = vrot.slane %v6032, 1
      %v6034 = vadd.f32 %v6032, %v6033
      %v6035 = vadd.f32 %v5883, %v5893
      %v6036 = vadd.f32 %v6035, %v5903
      %v6037 = vadd.f32 %v6036, %v5913
      %v6038 = vadd.f32 %v6037, %v5923
      %v6039 = vadd.f32 %v6038, %v5933
      %v6040 = vadd.f32 %v6039, %v5943
      %v6041 = vadd.f32 %v6040, %v5953
      %v6042 = vrot.slane %v6041, 4
      %v6043 = vadd.f32 %v6041, %v6042
      %v6044 = vrot.slane %v6043, 2
      %v6045 = vadd.f32 %v6043, %v6044
      %v6046 = vrot.slane %v6045, 1
      %v6047 = vadd.f32 %v6045, %v6046
      %v6048 = vadd.f32 %v5884, %v5894
      %v6049 = vadd.f32 %v6048, %v5904
      %v6050 = vadd.f32 %v6049, %v5914
      %v6051 = vadd.f32 %v6050, %v5924
      %v6052 = vadd.f32 %v6051, %v5934
      %v6053 = vadd.f32 %v6052, %v5944
      %v6054 = vadd.f32 %v6053, %v5954
      %v6055 = vrot.slane %v6054, 4
      %v6056 = vadd.f32 %v6054, %v6055
      %v6057 = vrot.slane %v6056, 2
      %v6058 = vadd.f32 %v6056, %v6057
      %v6059 = vrot.slane %v6058, 1
      %v6060 = vadd.f32 %v6058, %v6059
      %v6061 = vadd.f32 %v5885, %v5895
      %v6062 = vadd.f32 %v6061, %v5905
      %v6063 = vadd.f32 %v6062, %v5915
      %v6064 = vadd.f32 %v6063, %v5925
      %v6065 = vadd.f32 %v6064, %v5935
      %v6066 = vadd.f32 %v6065, %v5945
      %v6067 = vadd.f32 %v6066, %v5955
      %v6068 = vrot.slane %v6067, 4
      %v6069 = vadd.f32 %v6067, %v6068
      %v6070 = vrot.slane %v6069, 2
      %v6071 = vadd.f32 %v6069, %v6070
      %v6072 = vrot.slane %v6071, 1
      %v6073 = vadd.f32 %v6071, %v6072
      %v6074 = vadd.f32 %v5886, %v5896
      %v6075 = vadd.f32 %v6074, %v5906
      %v6076 = vadd.f32 %v6075, %v5916
      %v6077 = vadd.f32 %v6076, %v5926
      %v6078 = vadd.f32 %v6077, %v5936
      %v6079 = vadd.f32 %v6078, %v5946
      %v6080 = vadd.f32 %v6079, %v5956
      %v6081 = vrot.slane %v6080, 4
      %v6082 = vadd.f32 %v6080, %v6081
      %v6083 = vrot.slane %v6082, 2
      %v6084 = vadd.f32 %v6082, %v6083
      %v6085 = vrot.slane %v6084, 1
      %v6086 = vadd.f32 %v6084, %v6085
      %v6087 = vmul.f32 %v5969, 0.015625
      %v6088 = vmul.f32 %v5982, 0.015625
      %v6089 = vmul.f32 %v5995, 0.015625
      %v6090 = vmul.f32 %v6008, 0.015625
      %v6091 = vmul.f32 %v6021, 0.015625
      %v6092 = vmul.f32 %v6034, 0.015625
      %v6093 = vmul.f32 %v6047, 0.015625
      %v6094 = vmul.f32 %v6060, 0.015625
      %v6095 = vmul.f32 %v6073, 0.015625
      %v6096 = vmul.f32 %v6086, 0.015625
      %v6097 = vpack.c.bf16 %v6087, %v6087
      %v6098 = vpack.c.bf16 %v6088, %v6088
      %v6099 = vpack.c.bf16 %v6089, %v6089
      %v6100 = vpack.c.bf16 %v6090, %v6090
      %v6101 = vpack.c.bf16 %v6091, %v6091
      %v6102 = vpack.c.bf16 %v6092, %v6092
      %v6103 = vpack.c.bf16 %v6093, %v6093
      %v6104 = vpack.c.bf16 %v6094, %v6094
      %v6105 = vpack.c.bf16 %v6095, %v6095
      %v6106 = vpack.c.bf16 %v6096, %v6096
      %v6107 = vld [vmem:[%s20] sm:$0xff]
      %v6108 = vld [vmem:[%s20 + $0x8] sm:$0xff]
      %v6109 = vld [vmem:[%s20 + $0x10] sm:$0xff]
      %v6110 = vld [vmem:[%s20 + $0x18] sm:$0xff]
      %v6111 = vld [vmem:[%s20 + $0x20] sm:$0xff]
      %v6112 = vld [vmem:[%s20 + $0x28] sm:$0xff]
      %v6113 = vld [vmem:[%s20 + $0x30] sm:$0xff]
      %v6114 = vld [vmem:[%s20 + $0x38] sm:$0xff]
      %v6115 = vld [vmem:[%s20 + $0x40] sm:$0xff]
      %v6116 = vld [vmem:[%s20 + $0x48] sm:$0xff]
      %v6117 = vld [vmem:[%s20 + $0x50] sm:$0xff]
      %v6118 = vld [vmem:[%s20 + $0x58] sm:$0xff]
      %v6119 = vld [vmem:[%s20 + $0x60] sm:$0xff]
      %v6120 = vld [vmem:[%s20 + $0x68] sm:$0xff]
      %v6121 = vld [vmem:[%s20 + $0x70] sm:$0xff]
      %v6122 = vld [vmem:[%s20 + $0x78] sm:$0xff]
      %v6123 = vld [vmem:[%s20 + $0x80] sm:$0xff]
      %v6124 = vld [vmem:[%s20 + $0x88] sm:$0xff]
      %v6125 = vld [vmem:[%s20 + $0x90] sm:$0xff]
      %v6126 = vld [vmem:[%s20 + $0x98] sm:$0xff]
      %v6127 = vld [vmem:[%s20 + $0xa0] sm:$0xff]
      %v6128 = vld [vmem:[%s20 + $0xa8] sm:$0xff]
      %v6129 = vld [vmem:[%s20 + $0xb0] sm:$0xff]
      %v6130 = vld [vmem:[%s20 + $0xb8] sm:$0xff]
      %v6131 = vld [vmem:[%s20 + $0xc0] sm:$0xff]
      %v6132 = vld [vmem:[%s20 + $0xc8] sm:$0xff]
      %v6133 = vld [vmem:[%s20 + $0xd0] sm:$0xff]
      %v6134 = vld [vmem:[%s20 + $0xd8] sm:$0xff]
      %v6135 = vld [vmem:[%s20 + $0xe0] sm:$0xff]
      %v6136 = vld [vmem:[%s20 + $0xe8] sm:$0xff]
      %v6137 = vld [vmem:[%s20 + $0xf0] sm:$0xff]
      %v6138 = vld [vmem:[%s20 + $0xf8] sm:$0xff]
      %v6139 = vld [vmem:[%s20 + $0x100] sm:$0xff]
      %v6140 = vld [vmem:[%s20 + $0x108] sm:$0xff]
      %v6141 = vld [vmem:[%s20 + $0x110] sm:$0xff]
      %v6142 = vld [vmem:[%s20 + $0x118] sm:$0xff]
      %v6143 = vld [vmem:[%s20 + $0x120] sm:$0xff]
      %v6144 = vld [vmem:[%s20 + $0x128] sm:$0xff]
      %v6145 = vld [vmem:[%s20 + $0x130] sm:$0xff]
      %v6146 = vld [vmem:[%s20 + $0x138] sm:$0xff]
      %v6147 = vld [vmem:[%s20 + $0x140] sm:$0xff]
      %v6148 = vld [vmem:[%s20 + $0x148] sm:$0xff]
      %v6149 = vld [vmem:[%s20 + $0x150] sm:$0xff]
      %v6150 = vld [vmem:[%s20 + $0x158] sm:$0xff]
      %v6151 = vld [vmem:[%s20 + $0x160] sm:$0xff]
      %v6152 = vld [vmem:[%s20 + $0x168] sm:$0xff]
      %v6153 = vld [vmem:[%s20 + $0x170] sm:$0xff]
      %v6154 = vld [vmem:[%s20 + $0x178] sm:$0xff]
      %v6155 = vld [vmem:[%s20 + $0x180] sm:$0xff]
      %v6156 = vld [vmem:[%s20 + $0x188] sm:$0xff]
      %v6157 = vld [vmem:[%s20 + $0x190] sm:$0xff]
      %v6158 = vld [vmem:[%s20 + $0x198] sm:$0xff]
      %v6159 = vld [vmem:[%s20 + $0x1a0] sm:$0xff]
      %v6160 = vld [vmem:[%s20 + $0x1a8] sm:$0xff]
      %v6161 = vld [vmem:[%s20 + $0x1b0] sm:$0xff]
      %v6162 = vld [vmem:[%s20 + $0x1b8] sm:$0xff]
      %v6163 = vld [vmem:[%s20 + $0x1c0] sm:$0xff]
      %v6164 = vld [vmem:[%s20 + $0x1c8] sm:$0xff]
      %v6165 = vld [vmem:[%s20 + $0x1d0] sm:$0xff]
      %v6166 = vld [vmem:[%s20 + $0x1d8] sm:$0xff]
      %v6167 = vld [vmem:[%s20 + $0x1e0] sm:$0xff]
      %v6168 = vld [vmem:[%s20 + $0x1e8] sm:$0xff]
      %v6169 = vld [vmem:[%s20 + $0x1f0] sm:$0xff]
      %v6170 = vld [vmem:[%s20 + $0x1f8] sm:$0xff]
      %v6171 = vld [vmem:[%s20 + $0x200] sm:$0xff]
      %v6172 = vld [vmem:[%s20 + $0x208] sm:$0xff]
      %v6173 = vld [vmem:[%s20 + $0x210] sm:$0xff]
      %v6174 = vld [vmem:[%s20 + $0x218] sm:$0xff]
      %v6175 = vld [vmem:[%s20 + $0x220] sm:$0xff]
      %v6176 = vld [vmem:[%s20 + $0x228] sm:$0xff]
      %v6177 = vld [vmem:[%s20 + $0x230] sm:$0xff]
      %v6178 = vld [vmem:[%s20 + $0x238] sm:$0xff]
      %v6179 = vld [vmem:[%s20 + $0x240] sm:$0xff]
      %v6180 = vld [vmem:[%s20 + $0x248] sm:$0xff]
      %v6181 = vld [vmem:[%s20 + $0x250] sm:$0xff]
      %v6182 = vld [vmem:[%s20 + $0x258] sm:$0xff]
      %v6183 = vld [vmem:[%s20 + $0x260] sm:$0xff]
      %v6184 = vld [vmem:[%s20 + $0x268] sm:$0xff]
      %v6185 = vld [vmem:[%s20 + $0x270] sm:$0xff]
      %v6186 = vld [vmem:[%s20 + $0x278] sm:$0xff]
      %v6187 = vld [vmem:[%s20 + $0x280] sm:$0xff]
      %v6188 = vld [vmem:[%s20 + $0x288] sm:$0xff]
      %v6189 = vld [vmem:[%s20 + $0x290] sm:$0xff]
      %v6190 = vld [vmem:[%s20 + $0x298] sm:$0xff]
      %v6191 = vld [vmem:[%s20 + $0x2a0] sm:$0xff]
      %v6192 = vld [vmem:[%s20 + $0x2a8] sm:$0xff]
      %v6193 = vld [vmem:[%s20 + $0x2b0] sm:$0xff]
      %v6194 = vld [vmem:[%s20 + $0x2b8] sm:$0xff]
      %v6195 = vld [vmem:[%s20 + $0x2c0] sm:$0xff]
      %v6196 = vld [vmem:[%s20 + $0x2c8] sm:$0xff]
      %v6197 = vld [vmem:[%s20 + $0x2d0] sm:$0xff]
      %v6198 = vld [vmem:[%s20 + $0x2d8] sm:$0xff]
      %v6199 = vld [vmem:[%s20 + $0x2e0] sm:$0xff]
      %v6200 = vld [vmem:[%s20 + $0x2e8] sm:$0xff]
      %v6201 = vld [vmem:[%s20 + $0x2f0] sm:$0xff]
      %v6202 = vld [vmem:[%s20 + $0x2f8] sm:$0xff]
      %v6203 = vld [vmem:[%s20 + $0x300] sm:$0xff]
      %v6204 = vld [vmem:[%s20 + $0x308] sm:$0xff]
      %v6205 = vld [vmem:[%s20 + $0x310] sm:$0xff]
      %v6206 = vld [vmem:[%s20 + $0x318] sm:$0xff]
      %v6207 = vld [vmem:[%s20 + $0x320] sm:$0xff]
      %v6208 = vld [vmem:[%s20 + $0x328] sm:$0xff]
      %v6209 = vld [vmem:[%s20 + $0x330] sm:$0xff]
      %v6210 = vld [vmem:[%s20 + $0x338] sm:$0xff]
      %v6211 = vld [vmem:[%s20 + $0x340] sm:$0xff]
      %v6212 = vld [vmem:[%s20 + $0x348] sm:$0xff]
      %v6213 = vld [vmem:[%s20 + $0x350] sm:$0xff]
      %v6214 = vld [vmem:[%s20 + $0x358] sm:$0xff]
      %v6215 = vld [vmem:[%s20 + $0x360] sm:$0xff]
      %v6216 = vld [vmem:[%s20 + $0x368] sm:$0xff]
      %v6217 = vld [vmem:[%s20 + $0x370] sm:$0xff]
      %v6218 = vld [vmem:[%s20 + $0x378] sm:$0xff]
      %v6219 = vld [vmem:[%s20 + $0x380] sm:$0xff]
      %v6220 = vld [vmem:[%s20 + $0x388] sm:$0xff]
      %v6221 = vld [vmem:[%s20 + $0x390] sm:$0xff]
      %v6222 = vld [vmem:[%s20 + $0x398] sm:$0xff]
      %v6223 = vld [vmem:[%s20 + $0x3a0] sm:$0xff]
      %v6224 = vld [vmem:[%s20 + $0x3a8] sm:$0xff]
      %v6225 = vld [vmem:[%s20 + $0x3b0] sm:$0xff]
      %v6226 = vld [vmem:[%s20 + $0x3b8] sm:$0xff]
      %v6227 = vld [vmem:[%s20 + $0x3c0] sm:$0xff]
      %v6228 = vld [vmem:[%s20 + $0x3c8] sm:$0xff]
      %v6229 = vld [vmem:[%s20 + $0x3d0] sm:$0xff]
      %v6230 = vld [vmem:[%s20 + $0x3d8] sm:$0xff]
      %v6231 = vld [vmem:[%s20 + $0x3e0] sm:$0xff]
      %v6232 = vld [vmem:[%s20 + $0x3e8] sm:$0xff]
      %v6233 = vld [vmem:[%s20 + $0x3f0] sm:$0xff]
      %v6234 = vld [vmem:[%s20 + $0x3f8] sm:$0xff]
      %v6235 = vld [vmem:[%s20 + $0x400] sm:$0xff]
      %v6236 = vld [vmem:[%s20 + $0x408] sm:$0xff]
      %v6237 = vld [vmem:[%s20 + $0x410] sm:$0xff]
      %v6238 = vld [vmem:[%s20 + $0x418] sm:$0xff]
      %v6239 = vld [vmem:[%s20 + $0x420] sm:$0xff]
      %v6240 = vld [vmem:[%s20 + $0x428] sm:$0xff]
      %v6241 = vld [vmem:[%s20 + $0x430] sm:$0xff]
      %v6242 = vld [vmem:[%s20 + $0x438] sm:$0xff]
      %v6243 = vld [vmem:[%s20 + $0x440] sm:$0xff]
      %v6244 = vld [vmem:[%s20 + $0x448] sm:$0xff]
      %v6245 = vld [vmem:[%s20 + $0x450] sm:$0xff]
      %v6246 = vld [vmem:[%s20 + $0x458] sm:$0xff]
      %v6247 = vld [vmem:[%s20 + $0x460] sm:$0xff]
      %v6248 = vld [vmem:[%s20 + $0x468] sm:$0xff]
      %v6249 = vld [vmem:[%s20 + $0x470] sm:$0xff]
      %v6250 = vld [vmem:[%s20 + $0x478] sm:$0xff]
      %v6251 = vld [vmem:[%s20 + $0x480] sm:$0xff]
      %v6252 = vld [vmem:[%s20 + $0x488] sm:$0xff]
      %v6253 = vld [vmem:[%s20 + $0x490] sm:$0xff]
      %v6254 = vld [vmem:[%s20 + $0x498] sm:$0xff]
      %v6255 = vld [vmem:[%s20 + $0x4a0] sm:$0xff]
      %v6256 = vld [vmem:[%s20 + $0x4a8] sm:$0xff]
      %v6257 = vld [vmem:[%s20 + $0x4b0] sm:$0xff]
      %v6258 = vld [vmem:[%s20 + $0x4b8] sm:$0xff]
      %v6259 = vld [vmem:[%s20 + $0x4c0] sm:$0xff]
      %v6260 = vld [vmem:[%s20 + $0x4c8] sm:$0xff]
      %v6261 = vld [vmem:[%s20 + $0x4d0] sm:$0xff]
      %v6262 = vld [vmem:[%s20 + $0x4d8] sm:$0xff]
      %v6263 = vld [vmem:[%s20 + $0x4e0] sm:$0xff]
      %v6264 = vld [vmem:[%s20 + $0x4e8] sm:$0xff]
      %v6265 = vld [vmem:[%s20 + $0x4f0] sm:$0xff]
      %v6266 = vld [vmem:[%s20 + $0x4f8] sm:$0xff]
      %v6267 = vld [vmem:[%s20 + $0x500] sm:$0xff]
      %v6268 = vld [vmem:[%s20 + $0x508] sm:$0xff]
      %v6269 = vld [vmem:[%s20 + $0x510] sm:$0xff]
      %v6270 = vld [vmem:[%s20 + $0x518] sm:$0xff]
      %v6271 = vld [vmem:[%s20 + $0x520] sm:$0xff]
      %v6272 = vld [vmem:[%s20 + $0x528] sm:$0xff]
      %v6273 = vld [vmem:[%s20 + $0x530] sm:$0xff]
      %v6274 = vld [vmem:[%s20 + $0x538] sm:$0xff]
      %v6275 = vld [vmem:[%s20 + $0x540] sm:$0xff]
      %v6276 = vld [vmem:[%s20 + $0x548] sm:$0xff]
      %v6277 = vld [vmem:[%s20 + $0x550] sm:$0xff]
      %v6278 = vld [vmem:[%s20 + $0x558] sm:$0xff]
      %v6279 = vld [vmem:[%s20 + $0x560] sm:$0xff]
      %v6280 = vld [vmem:[%s20 + $0x568] sm:$0xff]
      %v6281 = vld [vmem:[%s20 + $0x570] sm:$0xff]
      %v6282 = vld [vmem:[%s20 + $0x578] sm:$0xff]
      %v6283 = vld [vmem:[%s20 + $0x580] sm:$0xff]
      %v6284 = vld [vmem:[%s20 + $0x588] sm:$0xff]
      %v6285 = vld [vmem:[%s20 + $0x590] sm:$0xff]
      %v6286 = vld [vmem:[%s20 + $0x598] sm:$0xff]
      %v6287 = vld [vmem:[%s20 + $0x5a0] sm:$0xff]
      %v6288 = vld [vmem:[%s20 + $0x5a8] sm:$0xff]
      %v6289 = vld [vmem:[%s20 + $0x5b0] sm:$0xff]
      %v6290 = vld [vmem:[%s20 + $0x5b8] sm:$0xff]
      %v6291 = vld [vmem:[%s20 + $0x5c0] sm:$0xff]
      %v6292 = vld [vmem:[%s20 + $0x5c8] sm:$0xff]
      %v6293 = vld [vmem:[%s20 + $0x5d0] sm:$0xff]
      %v6294 = vld [vmem:[%s20 + $0x5d8] sm:$0xff]
      %v6295 = vld [vmem:[%s20 + $0x5e0] sm:$0xff]
      %v6296 = vld [vmem:[%s20 + $0x5e8] sm:$0xff]
      %v6297 = vld [vmem:[%s20 + $0x5f0] sm:$0xff]
      %v6298 = vld [vmem:[%s20 + $0x5f8] sm:$0xff]
      %v6299 = vld [vmem:[%s20 + $0x600] sm:$0xff]
      %v6300 = vld [vmem:[%s20 + $0x608] sm:$0xff]
      %v6301 = vld [vmem:[%s20 + $0x610] sm:$0xff]
      %v6302 = vld [vmem:[%s20 + $0x618] sm:$0xff]
      %v6303 = vld [vmem:[%s20 + $0x620] sm:$0xff]
      %v6304 = vld [vmem:[%s20 + $0x628] sm:$0xff]
      %v6305 = vld [vmem:[%s20 + $0x630] sm:$0xff]
      %v6306 = vld [vmem:[%s20 + $0x638] sm:$0xff]
      %v6307 = vld [vmem:[%s20 + $0x640] sm:$0xff]
      %v6308 = vld [vmem:[%s20 + $0x648] sm:$0xff]
      %v6309 = vld [vmem:[%s20 + $0x650] sm:$0xff]
      %v6310 = vld [vmem:[%s20 + $0x658] sm:$0xff]
      %v6311 = vld [vmem:[%s20 + $0x660] sm:$0xff]
      %v6312 = vld [vmem:[%s20 + $0x668] sm:$0xff]
      %v6313 = vld [vmem:[%s20 + $0x670] sm:$0xff]
      %v6314 = vld [vmem:[%s20 + $0x678] sm:$0xff]
      %v6315 = vld [vmem:[%s20 + $0x680] sm:$0xff]
      %v6316 = vld [vmem:[%s20 + $0x688] sm:$0xff]
      %v6317 = vld [vmem:[%s20 + $0x690] sm:$0xff]
      %v6318 = vld [vmem:[%s20 + $0x698] sm:$0xff]
      %v6319 = vld [vmem:[%s20 + $0x6a0] sm:$0xff]
      %v6320 = vld [vmem:[%s20 + $0x6a8] sm:$0xff]
      %v6321 = vld [vmem:[%s20 + $0x6b0] sm:$0xff]
      %v6322 = vld [vmem:[%s20 + $0x6b8] sm:$0xff]
      %v6323 = vld [vmem:[%s20 + $0x6c0] sm:$0xff]
      %v6324 = vld [vmem:[%s20 + $0x6c8] sm:$0xff]
      %v6325 = vld [vmem:[%s20 + $0x6d0] sm:$0xff]
      %v6326 = vld [vmem:[%s20 + $0x6d8] sm:$0xff]
      %v6327 = vld [vmem:[%s20 + $0x6e0] sm:$0xff]
      %v6328 = vld [vmem:[%s20 + $0x6e8] sm:$0xff]
      %v6329 = vld [vmem:[%s20 + $0x6f0] sm:$0xff]
      %v6330 = vld [vmem:[%s20 + $0x6f8] sm:$0xff]
      %v6331 = vld [vmem:[%s20 + $0x700] sm:$0xff]
      %v6332 = vld [vmem:[%s20 + $0x708] sm:$0xff]
      %v6333 = vld [vmem:[%s20 + $0x710] sm:$0xff]
      %v6334 = vld [vmem:[%s20 + $0x718] sm:$0xff]
      %v6335 = vld [vmem:[%s20 + $0x720] sm:$0xff]
      %v6336 = vld [vmem:[%s20 + $0x728] sm:$0xff]
      %v6337 = vld [vmem:[%s20 + $0x730] sm:$0xff]
      %v6338 = vld [vmem:[%s20 + $0x738] sm:$0xff]
      %v6339 = vld [vmem:[%s20 + $0x740] sm:$0xff]
      %v6340 = vld [vmem:[%s20 + $0x748] sm:$0xff]
      %v6341 = vld [vmem:[%s20 + $0x750] sm:$0xff]
      %v6342 = vld [vmem:[%s20 + $0x758] sm:$0xff]
      %v6343 = vld [vmem:[%s20 + $0x760] sm:$0xff]
      %v6344 = vld [vmem:[%s20 + $0x768] sm:$0xff]
      %v6345 = vld [vmem:[%s20 + $0x770] sm:$0xff]
      %v6346 = vld [vmem:[%s20 + $0x778] sm:$0xff]
      %v6347 = vld [vmem:[%s20 + $0x780] sm:$0xff]
      %v6348 = vld [vmem:[%s20 + $0x788] sm:$0xff]
      %v6349 = vld [vmem:[%s20 + $0x790] sm:$0xff]
      %v6350 = vld [vmem:[%s20 + $0x798] sm:$0xff]
      %v6351 = vld [vmem:[%s20 + $0x7a0] sm:$0xff]
      %v6352 = vld [vmem:[%s20 + $0x7a8] sm:$0xff]
      %v6353 = vld [vmem:[%s20 + $0x7b0] sm:$0xff]
      %v6354 = vld [vmem:[%s20 + $0x7b8] sm:$0xff]
      %v6355 = vld [vmem:[%s20 + $0x7c0] sm:$0xff]
      %v6356 = vld [vmem:[%s20 + $0x7c8] sm:$0xff]
      %v6357 = vld [vmem:[%s20 + $0x7d0] sm:$0xff]
      %v6358 = vld [vmem:[%s20 + $0x7d8] sm:$0xff]
      %v6359 = vld [vmem:[%s20 + $0x7e0] sm:$0xff]
      %v6360 = vld [vmem:[%s20 + $0x7e8] sm:$0xff]
      %v6361 = vld [vmem:[%s20 + $0x7f0] sm:$0xff]
      %v6362 = vld [vmem:[%s20 + $0x7f8] sm:$0xff]
      %v6363 = vld [vmem:[%s20 + $0x800] sm:$0xff]
      %v6364 = vld [vmem:[%s20 + $0x808] sm:$0xff]
      %v6365 = vld [vmem:[%s20 + $0x810] sm:$0xff]
      %v6366 = vld [vmem:[%s20 + $0x818] sm:$0xff]
      %v6367 = vld [vmem:[%s20 + $0x820] sm:$0xff]
      %v6368 = vld [vmem:[%s20 + $0x828] sm:$0xff]
      %v6369 = vld [vmem:[%s20 + $0x830] sm:$0xff]
      %v6370 = vld [vmem:[%s20 + $0x838] sm:$0xff]
      %v6371 = vld [vmem:[%s20 + $0x840] sm:$0xff]
      %v6372 = vld [vmem:[%s20 + $0x848] sm:$0xff]
      %v6373 = vld [vmem:[%s20 + $0x850] sm:$0xff]
      %v6374 = vld [vmem:[%s20 + $0x858] sm:$0xff]
      %v6375 = vld [vmem:[%s20 + $0x860] sm:$0xff]
      %v6376 = vld [vmem:[%s20 + $0x868] sm:$0xff]
      %v6377 = vld [vmem:[%s20 + $0x870] sm:$0xff]
      %v6378 = vld [vmem:[%s20 + $0x878] sm:$0xff]
      %v6379 = vld [vmem:[%s20 + $0x880] sm:$0xff]
      %v6380 = vld [vmem:[%s20 + $0x888] sm:$0xff]
      %v6381 = vld [vmem:[%s20 + $0x890] sm:$0xff]
      %v6382 = vld [vmem:[%s20 + $0x898] sm:$0xff]
      %v6383 = vld [vmem:[%s20 + $0x8a0] sm:$0xff]
      %v6384 = vld [vmem:[%s20 + $0x8a8] sm:$0xff]
      %v6385 = vld [vmem:[%s20 + $0x8b0] sm:$0xff]
      %v6386 = vld [vmem:[%s20 + $0x8b8] sm:$0xff]
      %v6387 = vld [vmem:[%s20 + $0x8c0] sm:$0xff]
      %v6388 = vld [vmem:[%s20 + $0x8c8] sm:$0xff]
      %v6389 = vld [vmem:[%s20 + $0x8d0] sm:$0xff]
      %v6390 = vld [vmem:[%s20 + $0x8d8] sm:$0xff]
      %v6391 = vld [vmem:[%s20 + $0x8e0] sm:$0xff]
      %v6392 = vld [vmem:[%s20 + $0x8e8] sm:$0xff]
      %v6393 = vld [vmem:[%s20 + $0x8f0] sm:$0xff]
      %v6394 = vld [vmem:[%s20 + $0x8f8] sm:$0xff]
      %v6395 = vld [vmem:[%s20 + $0x900] sm:$0xff]
      %v6396 = vld [vmem:[%s20 + $0x908] sm:$0xff]
      %v6397 = vld [vmem:[%s20 + $0x910] sm:$0xff]
      %v6398 = vld [vmem:[%s20 + $0x918] sm:$0xff]
      %v6399 = vld [vmem:[%s20 + $0x920] sm:$0xff]
      %v6400 = vld [vmem:[%s20 + $0x928] sm:$0xff]
      %v6401 = vld [vmem:[%s20 + $0x930] sm:$0xff]
      %v6402 = vld [vmem:[%s20 + $0x938] sm:$0xff]
      %v6403 = vld [vmem:[%s20 + $0x940] sm:$0xff]
      %v6404 = vld [vmem:[%s20 + $0x948] sm:$0xff]
      %v6405 = vld [vmem:[%s20 + $0x950] sm:$0xff]
      %v6406 = vld [vmem:[%s20 + $0x958] sm:$0xff]
      %v6407 = vld [vmem:[%s20 + $0x960] sm:$0xff]
      %v6408 = vld [vmem:[%s20 + $0x968] sm:$0xff]
      %v6409 = vld [vmem:[%s20 + $0x970] sm:$0xff]
      %v6410 = vld [vmem:[%s20 + $0x978] sm:$0xff]
      %v6411 = vld [vmem:[%s20 + $0x980] sm:$0xff]
      %v6412 = vld [vmem:[%s20 + $0x988] sm:$0xff]
      %v6413 = vld [vmem:[%s20 + $0x990] sm:$0xff]
      %v6414 = vld [vmem:[%s20 + $0x998] sm:$0xff]
      %v6415 = vld [vmem:[%s20 + $0x9a0] sm:$0xff]
      %v6416 = vld [vmem:[%s20 + $0x9a8] sm:$0xff]
      %v6417 = vld [vmem:[%s20 + $0x9b0] sm:$0xff]
      %v6418 = vld [vmem:[%s20 + $0x9b8] sm:$0xff]
      %v6419 = vld [vmem:[%s20 + $0x9c0] sm:$0xff]
      %v6420 = vld [vmem:[%s20 + $0x9c8] sm:$0xff]
      %v6421 = vld [vmem:[%s20 + $0x9d0] sm:$0xff]
      %v6422 = vld [vmem:[%s20 + $0x9d8] sm:$0xff]
      %v6423 = vld [vmem:[%s20 + $0x9e0] sm:$0xff]
      %v6424 = vld [vmem:[%s20 + $0x9e8] sm:$0xff]
      %v6425 = vld [vmem:[%s20 + $0x9f0] sm:$0xff]
      %v6426 = vld [vmem:[%s20 + $0x9f8] sm:$0xff]
      %v6427 = vld [vmem:[%s21] sm:$0xf]
      %v6748 = vunpack.c.l.b16 %v6107
      %v6749 = vunpack.c.h.b16 %v6107
      %v6750 = vunpack.c.l.b16 %v6108
      %v6751 = vunpack.c.h.b16 %v6108
      %v6752 = vunpack.c.l.b16 %v6109
      %v6753 = vunpack.c.h.b16 %v6109
      %v6754 = vunpack.c.l.b16 %v6110
      %v6755 = vunpack.c.h.b16 %v6110
      %v6756 = vunpack.c.l.b16 %v6111
      %v6757 = vunpack.c.h.b16 %v6111
      %v6758 = vunpack.c.l.b16 %v6112
      %v6759 = vunpack.c.h.b16 %v6112
      %v6760 = vunpack.c.l.b16 %v6113
      %v6761 = vunpack.c.h.b16 %v6113
      %v6762 = vunpack.c.l.b16 %v6114
      %v6763 = vunpack.c.h.b16 %v6114
      %v6764 = vunpack.c.l.b16 %v6115
      %v6765 = vunpack.c.h.b16 %v6115
      %v6766 = vunpack.c.l.b16 %v6116
      %v6767 = vunpack.c.h.b16 %v6116
      %v6768 = vunpack.c.l.b16 %v6117
      %v6769 = vunpack.c.h.b16 %v6117
      %v6770 = vunpack.c.l.b16 %v6118
      %v6771 = vunpack.c.h.b16 %v6118
      %v6772 = vunpack.c.l.b16 %v6119
      %v6773 = vunpack.c.h.b16 %v6119
      %v6774 = vunpack.c.l.b16 %v6120
      %v6775 = vunpack.c.h.b16 %v6120
      %v6776 = vunpack.c.l.b16 %v6121
      %v6777 = vunpack.c.h.b16 %v6121
      %v6778 = vunpack.c.l.b16 %v6122
      %v6779 = vunpack.c.h.b16 %v6122
      %v6780 = vunpack.c.l.b16 %v6123
      %v6781 = vunpack.c.h.b16 %v6123
      %v6782 = vunpack.c.l.b16 %v6124
      %v6783 = vunpack.c.h.b16 %v6124
      %v6784 = vunpack.c.l.b16 %v6125
      %v6785 = vunpack.c.h.b16 %v6125
      %v6786 = vunpack.c.l.b16 %v6126
      %v6787 = vunpack.c.h.b16 %v6126
      %v6788 = vunpack.c.l.b16 %v6127
      %v6789 = vunpack.c.h.b16 %v6127
      %v6790 = vunpack.c.l.b16 %v6128
      %v6791 = vunpack.c.h.b16 %v6128
      %v6792 = vunpack.c.l.b16 %v6129
      %v6793 = vunpack.c.h.b16 %v6129
      %v6794 = vunpack.c.l.b16 %v6130
      %v6795 = vunpack.c.h.b16 %v6130
      %v6796 = vunpack.c.l.b16 %v6131
      %v6797 = vunpack.c.h.b16 %v6131
      %v6798 = vunpack.c.l.b16 %v6132
      %v6799 = vunpack.c.h.b16 %v6132
      %v6800 = vunpack.c.l.b16 %v6133
      %v6801 = vunpack.c.h.b16 %v6133
      %v6802 = vunpack.c.l.b16 %v6134
      %v6803 = vunpack.c.h.b16 %v6134
      %v6804 = vunpack.c.l.b16 %v6135
      %v6805 = vunpack.c.h.b16 %v6135
      %v6806 = vunpack.c.l.b16 %v6136
      %v6807 = vunpack.c.h.b16 %v6136
      %v6808 = vunpack.c.l.b16 %v6137
      %v6809 = vunpack.c.h.b16 %v6137
      %v6810 = vunpack.c.l.b16 %v6138
      %v6811 = vunpack.c.h.b16 %v6138
      %v6812 = vunpack.c.l.b16 %v6139
      %v6813 = vunpack.c.h.b16 %v6139
      %v6814 = vunpack.c.l.b16 %v6140
      %v6815 = vunpack.c.h.b16 %v6140
      %v6816 = vunpack.c.l.b16 %v6141
      %v6817 = vunpack.c.h.b16 %v6141
      %v6818 = vunpack.c.l.b16 %v6142
      %v6819 = vunpack.c.h.b16 %v6142
      %v6820 = vunpack.c.l.b16 %v6143
      %v6821 = vunpack.c.h.b16 %v6143
      %v6822 = vunpack.c.l.b16 %v6144
      %v6823 = vunpack.c.h.b16 %v6144
      %v6824 = vunpack.c.l.b16 %v6145
      %v6825 = vunpack.c.h.b16 %v6145
      %v6826 = vunpack.c.l.b16 %v6146
      %v6827 = vunpack.c.h.b16 %v6146
      %v6828 = vunpack.c.l.b16 %v6147
      %v6829 = vunpack.c.h.b16 %v6147
      %v6830 = vunpack.c.l.b16 %v6148
      %v6831 = vunpack.c.h.b16 %v6148
      %v6832 = vunpack.c.l.b16 %v6149
      %v6833 = vunpack.c.h.b16 %v6149
      %v6834 = vunpack.c.l.b16 %v6150
      %v6835 = vunpack.c.h.b16 %v6150
      %v6836 = vunpack.c.l.b16 %v6151
      %v6837 = vunpack.c.h.b16 %v6151
      %v6838 = vunpack.c.l.b16 %v6152
      %v6839 = vunpack.c.h.b16 %v6152
      %v6840 = vunpack.c.l.b16 %v6153
      %v6841 = vunpack.c.h.b16 %v6153
      %v6842 = vunpack.c.l.b16 %v6154
      %v6843 = vunpack.c.h.b16 %v6154
      %v6844 = vunpack.c.l.b16 %v6155
      %v6845 = vunpack.c.h.b16 %v6155
      %v6846 = vunpack.c.l.b16 %v6156
      %v6847 = vunpack.c.h.b16 %v6156
      %v6848 = vunpack.c.l.b16 %v6157
      %v6849 = vunpack.c.h.b16 %v6157
      %v6850 = vunpack.c.l.b16 %v6158
      %v6851 = vunpack.c.h.b16 %v6158
      %v6852 = vunpack.c.l.b16 %v6159
      %v6853 = vunpack.c.h.b16 %v6159
      %v6854 = vunpack.c.l.b16 %v6160
      %v6855 = vunpack.c.h.b16 %v6160
      %v6856 = vunpack.c.l.b16 %v6161
      %v6857 = vunpack.c.h.b16 %v6161
      %v6858 = vunpack.c.l.b16 %v6162
      %v6859 = vunpack.c.h.b16 %v6162
      %v6860 = vunpack.c.l.b16 %v6163
      %v6861 = vunpack.c.h.b16 %v6163
      %v6862 = vunpack.c.l.b16 %v6164
      %v6863 = vunpack.c.h.b16 %v6164
      %v6864 = vunpack.c.l.b16 %v6165
      %v6865 = vunpack.c.h.b16 %v6165
      %v6866 = vunpack.c.l.b16 %v6166
      %v6867 = vunpack.c.h.b16 %v6166
      %v6868 = vunpack.c.l.b16 %v6167
      %v6869 = vunpack.c.h.b16 %v6167
      %v6870 = vunpack.c.l.b16 %v6168
      %v6871 = vunpack.c.h.b16 %v6168
      %v6872 = vunpack.c.l.b16 %v6169
      %v6873 = vunpack.c.h.b16 %v6169
      %v6874 = vunpack.c.l.b16 %v6170
      %v6875 = vunpack.c.h.b16 %v6170
      %v6876 = vunpack.c.l.b16 %v6171
      %v6877 = vunpack.c.h.b16 %v6171
      %v6878 = vunpack.c.l.b16 %v6172
      %v6879 = vunpack.c.h.b16 %v6172
      %v6880 = vunpack.c.l.b16 %v6173
      %v6881 = vunpack.c.h.b16 %v6173
      %v6882 = vunpack.c.l.b16 %v6174
      %v6883 = vunpack.c.h.b16 %v6174
      %v6884 = vunpack.c.l.b16 %v6175
      %v6885 = vunpack.c.h.b16 %v6175
      %v6886 = vunpack.c.l.b16 %v6176
      %v6887 = vunpack.c.h.b16 %v6176
      %v6888 = vunpack.c.l.b16 %v6177
      %v6889 = vunpack.c.h.b16 %v6177
      %v6890 = vunpack.c.l.b16 %v6178
      %v6891 = vunpack.c.h.b16 %v6178
      %v6892 = vunpack.c.l.b16 %v6179
      %v6893 = vunpack.c.h.b16 %v6179
      %v6894 = vunpack.c.l.b16 %v6180
      %v6895 = vunpack.c.h.b16 %v6180
      %v6896 = vunpack.c.l.b16 %v6181
      %v6897 = vunpack.c.h.b16 %v6181
      %v6898 = vunpack.c.l.b16 %v6182
      %v6899 = vunpack.c.h.b16 %v6182
      %v6900 = vunpack.c.l.b16 %v6183
      %v6901 = vunpack.c.h.b16 %v6183
      %v6902 = vunpack.c.l.b16 %v6184
      %v6903 = vunpack.c.h.b16 %v6184
      %v6904 = vunpack.c.l.b16 %v6185
      %v6905 = vunpack.c.h.b16 %v6185
      %v6906 = vunpack.c.l.b16 %v6186
      %v6907 = vunpack.c.h.b16 %v6186
      %v6908 = vunpack.c.l.b16 %v6187
      %v6909 = vunpack.c.h.b16 %v6187
      %v6910 = vunpack.c.l.b16 %v6188
      %v6911 = vunpack.c.h.b16 %v6188
      %v6912 = vunpack.c.l.b16 %v6189
      %v6913 = vunpack.c.h.b16 %v6189
      %v6914 = vunpack.c.l.b16 %v6190
      %v6915 = vunpack.c.h.b16 %v6190
      %v6916 = vunpack.c.l.b16 %v6191
      %v6917 = vunpack.c.h.b16 %v6191
      %v6918 = vunpack.c.l.b16 %v6192
      %v6919 = vunpack.c.h.b16 %v6192
      %v6920 = vunpack.c.l.b16 %v6193
      %v6921 = vunpack.c.h.b16 %v6193
      %v6922 = vunpack.c.l.b16 %v6194
      %v6923 = vunpack.c.h.b16 %v6194
      %v6924 = vunpack.c.l.b16 %v6195
      %v6925 = vunpack.c.h.b16 %v6195
      %v6926 = vunpack.c.l.b16 %v6196
      %v6927 = vunpack.c.h.b16 %v6196
      %v6928 = vunpack.c.l.b16 %v6197
      %v6929 = vunpack.c.h.b16 %v6197
      %v6930 = vunpack.c.l.b16 %v6198
      %v6931 = vunpack.c.h.b16 %v6198
      %v6932 = vunpack.c.l.b16 %v6199
      %v6933 = vunpack.c.h.b16 %v6199
      %v6934 = vunpack.c.l.b16 %v6200
      %v6935 = vunpack.c.h.b16 %v6200
      %v6936 = vunpack.c.l.b16 %v6201
      %v6937 = vunpack.c.h.b16 %v6201
      %v6938 = vunpack.c.l.b16 %v6202
      %v6939 = vunpack.c.h.b16 %v6202
      %v6940 = vunpack.c.l.b16 %v6203
      %v6941 = vunpack.c.h.b16 %v6203
      %v6942 = vunpack.c.l.b16 %v6204
      %v6943 = vunpack.c.h.b16 %v6204
      %v6944 = vunpack.c.l.b16 %v6205
      %v6945 = vunpack.c.h.b16 %v6205
      %v6946 = vunpack.c.l.b16 %v6206
      %v6947 = vunpack.c.h.b16 %v6206
      %v6948 = vunpack.c.l.b16 %v6207
      %v6949 = vunpack.c.h.b16 %v6207
      %v6950 = vunpack.c.l.b16 %v6208
      %v6951 = vunpack.c.h.b16 %v6208
      %v6952 = vunpack.c.l.b16 %v6209
      %v6953 = vunpack.c.h.b16 %v6209
      %v6954 = vunpack.c.l.b16 %v6210
      %v6955 = vunpack.c.h.b16 %v6210
      %v6956 = vunpack.c.l.b16 %v6211
      %v6957 = vunpack.c.h.b16 %v6211
      %v6958 = vunpack.c.l.b16 %v6212
      %v6959 = vunpack.c.h.b16 %v6212
      %v6960 = vunpack.c.l.b16 %v6213
      %v6961 = vunpack.c.h.b16 %v6213
      %v6962 = vunpack.c.l.b16 %v6214
      %v6963 = vunpack.c.h.b16 %v6214
      %v6964 = vunpack.c.l.b16 %v6215
      %v6965 = vunpack.c.h.b16 %v6215
      %v6966 = vunpack.c.l.b16 %v6216
      %v6967 = vunpack.c.h.b16 %v6216
      %v6968 = vunpack.c.l.b16 %v6217
      %v6969 = vunpack.c.h.b16 %v6217
      %v6970 = vunpack.c.l.b16 %v6218
      %v6971 = vunpack.c.h.b16 %v6218
      %v6972 = vunpack.c.l.b16 %v6219
      %v6973 = vunpack.c.h.b16 %v6219
      %v6974 = vunpack.c.l.b16 %v6220
      %v6975 = vunpack.c.h.b16 %v6220
      %v6976 = vunpack.c.l.b16 %v6221
      %v6977 = vunpack.c.h.b16 %v6221
      %v6978 = vunpack.c.l.b16 %v6222
      %v6979 = vunpack.c.h.b16 %v6222
      %v6980 = vunpack.c.l.b16 %v6223
      %v6981 = vunpack.c.h.b16 %v6223
      %v6982 = vunpack.c.l.b16 %v6224
      %v6983 = vunpack.c.h.b16 %v6224
      %v6984 = vunpack.c.l.b16 %v6225
      %v6985 = vunpack.c.h.b16 %v6225
      %v6986 = vunpack.c.l.b16 %v6226
      %v6987 = vunpack.c.h.b16 %v6226
      %v6988 = vunpack.c.l.b16 %v6227
      %v6989 = vunpack.c.h.b16 %v6227
      %v6990 = vunpack.c.l.b16 %v6228
      %v6991 = vunpack.c.h.b16 %v6228
      %v6992 = vunpack.c.l.b16 %v6229
      %v6993 = vunpack.c.h.b16 %v6229
      %v6994 = vunpack.c.l.b16 %v6230
      %v6995 = vunpack.c.h.b16 %v6230
      %v6996 = vunpack.c.l.b16 %v6231
      %v6997 = vunpack.c.h.b16 %v6231
      %v6998 = vunpack.c.l.b16 %v6232
      %v6999 = vunpack.c.h.b16 %v6232
      %v7000 = vunpack.c.l.b16 %v6233
      %v7001 = vunpack.c.h.b16 %v6233
      %v7002 = vunpack.c.l.b16 %v6234
      %v7003 = vunpack.c.h.b16 %v6234
      %v7004 = vunpack.c.l.b16 %v6235
      %v7005 = vunpack.c.h.b16 %v6235
      %v7006 = vunpack.c.l.b16 %v6236
      %v7007 = vunpack.c.h.b16 %v6236
      %v7008 = vunpack.c.l.b16 %v6237
      %v7009 = vunpack.c.h.b16 %v6237
      %v7010 = vunpack.c.l.b16 %v6238
      %v7011 = vunpack.c.h.b16 %v6238
      %v7012 = vunpack.c.l.b16 %v6239
      %v7013 = vunpack.c.h.b16 %v6239
      %v7014 = vunpack.c.l.b16 %v6240
      %v7015 = vunpack.c.h.b16 %v6240
      %v7016 = vunpack.c.l.b16 %v6241
      %v7017 = vunpack.c.h.b16 %v6241
      %v7018 = vunpack.c.l.b16 %v6242
      %v7019 = vunpack.c.h.b16 %v6242
      %v7020 = vunpack.c.l.b16 %v6243
      %v7021 = vunpack.c.h.b16 %v6243
      %v7022 = vunpack.c.l.b16 %v6244
      %v7023 = vunpack.c.h.b16 %v6244
      %v7024 = vunpack.c.l.b16 %v6245
      %v7025 = vunpack.c.h.b16 %v6245
      %v7026 = vunpack.c.l.b16 %v6246
      %v7027 = vunpack.c.h.b16 %v6246
      %v7028 = vunpack.c.l.b16 %v6247
      %v7029 = vunpack.c.h.b16 %v6247
      %v7030 = vunpack.c.l.b16 %v6248
      %v7031 = vunpack.c.h.b16 %v6248
      %v7032 = vunpack.c.l.b16 %v6249
      %v7033 = vunpack.c.h.b16 %v6249
      %v7034 = vunpack.c.l.b16 %v6250
      %v7035 = vunpack.c.h.b16 %v6250
      %v7036 = vunpack.c.l.b16 %v6251
      %v7037 = vunpack.c.h.b16 %v6251
      %v7038 = vunpack.c.l.b16 %v6252
      %v7039 = vunpack.c.h.b16 %v6252
      %v7040 = vunpack.c.l.b16 %v6253
      %v7041 = vunpack.c.h.b16 %v6253
      %v7042 = vunpack.c.l.b16 %v6254
      %v7043 = vunpack.c.h.b16 %v6254
      %v7044 = vunpack.c.l.b16 %v6255
      %v7045 = vunpack.c.h.b16 %v6255
      %v7046 = vunpack.c.l.b16 %v6256
      %v7047 = vunpack.c.h.b16 %v6256
      %v7048 = vunpack.c.l.b16 %v6257
      %v7049 = vunpack.c.h.b16 %v6257
      %v7050 = vunpack.c.l.b16 %v6258
      %v7051 = vunpack.c.h.b16 %v6258
      %v7052 = vunpack.c.l.b16 %v6259
      %v7053 = vunpack.c.h.b16 %v6259
      %v7054 = vunpack.c.l.b16 %v6260
      %v7055 = vunpack.c.h.b16 %v6260
      %v7056 = vunpack.c.l.b16 %v6261
      %v7057 = vunpack.c.h.b16 %v6261
      %v7058 = vunpack.c.l.b16 %v6262
      %v7059 = vunpack.c.h.b16 %v6262
      %v7060 = vunpack.c.l.b16 %v6263
      %v7061 = vunpack.c.h.b16 %v6263
      %v7062 = vunpack.c.l.b16 %v6264
      %v7063 = vunpack.c.h.b16 %v6264
      %v7064 = vunpack.c.l.b16 %v6265
      %v7065 = vunpack.c.h.b16 %v6265
      %v7066 = vunpack.c.l.b16 %v6266
      %v7067 = vunpack.c.h.b16 %v6266
      %v7068 = vunpack.c.l.b16 %v6267
      %v7069 = vunpack.c.h.b16 %v6267
      %v7070 = vunpack.c.l.b16 %v6268
      %v7071 = vunpack.c.h.b16 %v6268
      %v7072 = vunpack.c.l.b16 %v6269
      %v7073 = vunpack.c.h.b16 %v6269
      %v7074 = vunpack.c.l.b16 %v6270
      %v7075 = vunpack.c.h.b16 %v6270
      %v7076 = vunpack.c.l.b16 %v6271
      %v7077 = vunpack.c.h.b16 %v6271
      %v7078 = vunpack.c.l.b16 %v6272
      %v7079 = vunpack.c.h.b16 %v6272
      %v7080 = vunpack.c.l.b16 %v6273
      %v7081 = vunpack.c.h.b16 %v6273
      %v7082 = vunpack.c.l.b16 %v6274
      %v7083 = vunpack.c.h.b16 %v6274
      %v7084 = vunpack.c.l.b16 %v6275
      %v7085 = vunpack.c.h.b16 %v6275
      %v7086 = vunpack.c.l.b16 %v6276
      %v7087 = vunpack.c.h.b16 %v6276
      %v7088 = vunpack.c.l.b16 %v6277
      %v7089 = vunpack.c.h.b16 %v6277
      %v7090 = vunpack.c.l.b16 %v6278
      %v7091 = vunpack.c.h.b16 %v6278
      %v7092 = vunpack.c.l.b16 %v6279
      %v7093 = vunpack.c.h.b16 %v6279
      %v7094 = vunpack.c.l.b16 %v6280
      %v7095 = vunpack.c.h.b16 %v6280
      %v7096 = vunpack.c.l.b16 %v6281
      %v7097 = vunpack.c.h.b16 %v6281
      %v7098 = vunpack.c.l.b16 %v6282
      %v7099 = vunpack.c.h.b16 %v6282
      %v7100 = vunpack.c.l.b16 %v6283
      %v7101 = vunpack.c.h.b16 %v6283
      %v7102 = vunpack.c.l.b16 %v6284
      %v7103 = vunpack.c.h.b16 %v6284
      %v7104 = vunpack.c.l.b16 %v6285
      %v7105 = vunpack.c.h.b16 %v6285
      %v7106 = vunpack.c.l.b16 %v6286
      %v7107 = vunpack.c.h.b16 %v6286
      %v7108 = vunpack.c.l.b16 %v6287
      %v7109 = vunpack.c.h.b16 %v6287
      %v7110 = vunpack.c.l.b16 %v6288
      %v7111 = vunpack.c.h.b16 %v6288
      %v7112 = vunpack.c.l.b16 %v6289
      %v7113 = vunpack.c.h.b16 %v6289
      %v7114 = vunpack.c.l.b16 %v6290
      %v7115 = vunpack.c.h.b16 %v6290
      %v7116 = vunpack.c.l.b16 %v6291
      %v7117 = vunpack.c.h.b16 %v6291
      %v7118 = vunpack.c.l.b16 %v6292
      %v7119 = vunpack.c.h.b16 %v6292
      %v7120 = vunpack.c.l.b16 %v6293
      %v7121 = vunpack.c.h.b16 %v6293
      %v7122 = vunpack.c.l.b16 %v6294
      %v7123 = vunpack.c.h.b16 %v6294
      %v7124 = vunpack.c.l.b16 %v6295
      %v7125 = vunpack.c.h.b16 %v6295
      %v7126 = vunpack.c.l.b16 %v6296
      %v7127 = vunpack.c.h.b16 %v6296
      %v7128 = vunpack.c.l.b16 %v6297
      %v7129 = vunpack.c.h.b16 %v6297
      %v7130 = vunpack.c.l.b16 %v6298
      %v7131 = vunpack.c.h.b16 %v6298
      %v7132 = vunpack.c.l.b16 %v6299
      %v7133 = vunpack.c.h.b16 %v6299
      %v7134 = vunpack.c.l.b16 %v6300
      %v7135 = vunpack.c.h.b16 %v6300
      %v7136 = vunpack.c.l.b16 %v6301
      %v7137 = vunpack.c.h.b16 %v6301
      %v7138 = vunpack.c.l.b16 %v6302
      %v7139 = vunpack.c.h.b16 %v6302
      %v7140 = vunpack.c.l.b16 %v6303
      %v7141 = vunpack.c.h.b16 %v6303
      %v7142 = vunpack.c.l.b16 %v6304
      %v7143 = vunpack.c.h.b16 %v6304
      %v7144 = vunpack.c.l.b16 %v6305
      %v7145 = vunpack.c.h.b16 %v6305
      %v7146 = vunpack.c.l.b16 %v6306
      %v7147 = vunpack.c.h.b16 %v6306
      %v7148 = vunpack.c.l.b16 %v6307
      %v7149 = vunpack.c.h.b16 %v6307
      %v7150 = vunpack.c.l.b16 %v6308
      %v7151 = vunpack.c.h.b16 %v6308
      %v7152 = vunpack.c.l.b16 %v6309
      %v7153 = vunpack.c.h.b16 %v6309
      %v7154 = vunpack.c.l.b16 %v6310
      %v7155 = vunpack.c.h.b16 %v6310
      %v7156 = vunpack.c.l.b16 %v6311
      %v7157 = vunpack.c.h.b16 %v6311
      %v7158 = vunpack.c.l.b16 %v6312
      %v7159 = vunpack.c.h.b16 %v6312
      %v7160 = vunpack.c.l.b16 %v6313
      %v7161 = vunpack.c.h.b16 %v6313
      %v7162 = vunpack.c.l.b16 %v6314
      %v7163 = vunpack.c.h.b16 %v6314
      %v7164 = vunpack.c.l.b16 %v6315
      %v7165 = vunpack.c.h.b16 %v6315
      %v7166 = vunpack.c.l.b16 %v6316
      %v7167 = vunpack.c.h.b16 %v6316
      %v7168 = vunpack.c.l.b16 %v6317
      %v7169 = vunpack.c.h.b16 %v6317
      %v7170 = vunpack.c.l.b16 %v6318
      %v7171 = vunpack.c.h.b16 %v6318
      %v7172 = vunpack.c.l.b16 %v6319
      %v7173 = vunpack.c.h.b16 %v6319
      %v7174 = vunpack.c.l.b16 %v6320
      %v7175 = vunpack.c.h.b16 %v6320
      %v7176 = vunpack.c.l.b16 %v6321
      %v7177 = vunpack.c.h.b16 %v6321
      %v7178 = vunpack.c.l.b16 %v6322
      %v7179 = vunpack.c.h.b16 %v6322
      %v7180 = vunpack.c.l.b16 %v6323
      %v7181 = vunpack.c.h.b16 %v6323
      %v7182 = vunpack.c.l.b16 %v6324
      %v7183 = vunpack.c.h.b16 %v6324
      %v7184 = vunpack.c.l.b16 %v6325
      %v7185 = vunpack.c.h.b16 %v6325
      %v7186 = vunpack.c.l.b16 %v6326
      %v7187 = vunpack.c.h.b16 %v6326
      %v7188 = vunpack.c.l.b16 %v6327
      %v7189 = vunpack.c.h.b16 %v6327
      %v7190 = vunpack.c.l.b16 %v6328
      %v7191 = vunpack.c.h.b16 %v6328
      %v7192 = vunpack.c.l.b16 %v6329
      %v7193 = vunpack.c.h.b16 %v6329
      %v7194 = vunpack.c.l.b16 %v6330
      %v7195 = vunpack.c.h.b16 %v6330
      %v7196 = vunpack.c.l.b16 %v6331
      %v7197 = vunpack.c.h.b16 %v6331
      %v7198 = vunpack.c.l.b16 %v6332
      %v7199 = vunpack.c.h.b16 %v6332
      %v7200 = vunpack.c.l.b16 %v6333
      %v7201 = vunpack.c.h.b16 %v6333
      %v7202 = vunpack.c.l.b16 %v6334
      %v7203 = vunpack.c.h.b16 %v6334
      %v7204 = vunpack.c.l.b16 %v6335
      %v7205 = vunpack.c.h.b16 %v6335
      %v7206 = vunpack.c.l.b16 %v6336
      %v7207 = vunpack.c.h.b16 %v6336
      %v7208 = vunpack.c.l.b16 %v6337
      %v7209 = vunpack.c.h.b16 %v6337
      %v7210 = vunpack.c.l.b16 %v6338
      %v7211 = vunpack.c.h.b16 %v6338
      %v7212 = vunpack.c.l.b16 %v6339
      %v7213 = vunpack.c.h.b16 %v6339
      %v7214 = vunpack.c.l.b16 %v6340
      %v7215 = vunpack.c.h.b16 %v6340
      %v7216 = vunpack.c.l.b16 %v6341
      %v7217 = vunpack.c.h.b16 %v6341
      %v7218 = vunpack.c.l.b16 %v6342
      %v7219 = vunpack.c.h.b16 %v6342
      %v7220 = vunpack.c.l.b16 %v6343
      %v7221 = vunpack.c.h.b16 %v6343
      %v7222 = vunpack.c.l.b16 %v6344
      %v7223 = vunpack.c.h.b16 %v6344
      %v7224 = vunpack.c.l.b16 %v6345
      %v7225 = vunpack.c.h.b16 %v6345
      %v7226 = vunpack.c.l.b16 %v6346
      %v7227 = vunpack.c.h.b16 %v6346
      %v7228 = vunpack.c.l.b16 %v6347
      %v7229 = vunpack.c.h.b16 %v6347
      %v7230 = vunpack.c.l.b16 %v6348
      %v7231 = vunpack.c.h.b16 %v6348
      %v7232 = vunpack.c.l.b16 %v6349
      %v7233 = vunpack.c.h.b16 %v6349
      %v7234 = vunpack.c.l.b16 %v6350
      %v7235 = vunpack.c.h.b16 %v6350
      %v7236 = vunpack.c.l.b16 %v6351
      %v7237 = vunpack.c.h.b16 %v6351
      %v7238 = vunpack.c.l.b16 %v6352
      %v7239 = vunpack.c.h.b16 %v6352
      %v7240 = vunpack.c.l.b16 %v6353
      %v7241 = vunpack.c.h.b16 %v6353
      %v7242 = vunpack.c.l.b16 %v6354
      %v7243 = vunpack.c.h.b16 %v6354
      %v7244 = vunpack.c.l.b16 %v6355
      %v7245 = vunpack.c.h.b16 %v6355
      %v7246 = vunpack.c.l.b16 %v6356
      %v7247 = vunpack.c.h.b16 %v6356
      %v7248 = vunpack.c.l.b16 %v6357
      %v7249 = vunpack.c.h.b16 %v6357
      %v7250 = vunpack.c.l.b16 %v6358
      %v7251 = vunpack.c.h.b16 %v6358
      %v7252 = vunpack.c.l.b16 %v6359
      %v7253 = vunpack.c.h.b16 %v6359
      %v7254 = vunpack.c.l.b16 %v6360
      %v7255 = vunpack.c.h.b16 %v6360
      %v7256 = vunpack.c.l.b16 %v6361
      %v7257 = vunpack.c.h.b16 %v6361
      %v7258 = vunpack.c.l.b16 %v6362
      %v7259 = vunpack.c.h.b16 %v6362
      %v7260 = vunpack.c.l.b16 %v6363
      %v7261 = vunpack.c.h.b16 %v6363
      %v7262 = vunpack.c.l.b16 %v6364
      %v7263 = vunpack.c.h.b16 %v6364
      %v7264 = vunpack.c.l.b16 %v6365
      %v7265 = vunpack.c.h.b16 %v6365
      %v7266 = vunpack.c.l.b16 %v6366
      %v7267 = vunpack.c.h.b16 %v6366
      %v7268 = vunpack.c.l.b16 %v6367
      %v7269 = vunpack.c.h.b16 %v6367
      %v7270 = vunpack.c.l.b16 %v6368
      %v7271 = vunpack.c.h.b16 %v6368
      %v7272 = vunpack.c.l.b16 %v6369
      %v7273 = vunpack.c.h.b16 %v6369
      %v7274 = vunpack.c.l.b16 %v6370
      %v7275 = vunpack.c.h.b16 %v6370
      %v7276 = vunpack.c.l.b16 %v6371
      %v7277 = vunpack.c.h.b16 %v6371
      %v7278 = vunpack.c.l.b16 %v6372
      %v7279 = vunpack.c.h.b16 %v6372
      %v7280 = vunpack.c.l.b16 %v6373
      %v7281 = vunpack.c.h.b16 %v6373
      %v7282 = vunpack.c.l.b16 %v6374
      %v7283 = vunpack.c.h.b16 %v6374
      %v7284 = vunpack.c.l.b16 %v6375
      %v7285 = vunpack.c.h.b16 %v6375
      %v7286 = vunpack.c.l.b16 %v6376
      %v7287 = vunpack.c.h.b16 %v6376
      %v7288 = vunpack.c.l.b16 %v6377
      %v7289 = vunpack.c.h.b16 %v6377
      %v7290 = vunpack.c.l.b16 %v6378
      %v7291 = vunpack.c.h.b16 %v6378
      %v7292 = vunpack.c.l.b16 %v6379
      %v7293 = vunpack.c.h.b16 %v6379
      %v7294 = vunpack.c.l.b16 %v6380
      %v7295 = vunpack.c.h.b16 %v6380
      %v7296 = vunpack.c.l.b16 %v6381
      %v7297 = vunpack.c.h.b16 %v6381
      %v7298 = vunpack.c.l.b16 %v6382
      %v7299 = vunpack.c.h.b16 %v6382
      %v7300 = vunpack.c.l.b16 %v6383
      %v7301 = vunpack.c.h.b16 %v6383
      %v7302 = vunpack.c.l.b16 %v6384
      %v7303 = vunpack.c.h.b16 %v6384
      %v7304 = vunpack.c.l.b16 %v6385
      %v7305 = vunpack.c.h.b16 %v6385
      %v7306 = vunpack.c.l.b16 %v6386
      %v7307 = vunpack.c.h.b16 %v6386
      %v7308 = vunpack.c.l.b16 %v6387
      %v7309 = vunpack.c.h.b16 %v6387
      %v7310 = vunpack.c.l.b16 %v6388
      %v7311 = vunpack.c.h.b16 %v6388
      %v7312 = vunpack.c.l.b16 %v6389
      %v7313 = vunpack.c.h.b16 %v6389
      %v7314 = vunpack.c.l.b16 %v6390
      %v7315 = vunpack.c.h.b16 %v6390
      %v7316 = vunpack.c.l.b16 %v6391
      %v7317 = vunpack.c.h.b16 %v6391
      %v7318 = vunpack.c.l.b16 %v6392
      %v7319 = vunpack.c.h.b16 %v6392
      %v7320 = vunpack.c.l.b16 %v6393
      %v7321 = vunpack.c.h.b16 %v6393
      %v7322 = vunpack.c.l.b16 %v6394
      %v7323 = vunpack.c.h.b16 %v6394
      %v7324 = vunpack.c.l.b16 %v6395
      %v7325 = vunpack.c.h.b16 %v6395
      %v7326 = vunpack.c.l.b16 %v6396
      %v7327 = vunpack.c.h.b16 %v6396
      %v7328 = vunpack.c.l.b16 %v6397
      %v7329 = vunpack.c.h.b16 %v6397
      %v7330 = vunpack.c.l.b16 %v6398
      %v7331 = vunpack.c.h.b16 %v6398
      %v7332 = vunpack.c.l.b16 %v6399
      %v7333 = vunpack.c.h.b16 %v6399
      %v7334 = vunpack.c.l.b16 %v6400
      %v7335 = vunpack.c.h.b16 %v6400
      %v7336 = vunpack.c.l.b16 %v6401
      %v7337 = vunpack.c.h.b16 %v6401
      %v7338 = vunpack.c.l.b16 %v6402
      %v7339 = vunpack.c.h.b16 %v6402
      %v7340 = vunpack.c.l.b16 %v6403
      %v7341 = vunpack.c.h.b16 %v6403
      %v7342 = vunpack.c.l.b16 %v6404
      %v7343 = vunpack.c.h.b16 %v6404
      %v7344 = vunpack.c.l.b16 %v6405
      %v7345 = vunpack.c.h.b16 %v6405
      %v7346 = vunpack.c.l.b16 %v6406
      %v7347 = vunpack.c.h.b16 %v6406
      %v7348 = vunpack.c.l.b16 %v6407
      %v7349 = vunpack.c.h.b16 %v6407
      %v7350 = vunpack.c.l.b16 %v6408
      %v7351 = vunpack.c.h.b16 %v6408
      %v7352 = vunpack.c.l.b16 %v6409
      %v7353 = vunpack.c.h.b16 %v6409
      %v7354 = vunpack.c.l.b16 %v6410
      %v7355 = vunpack.c.h.b16 %v6410
      %v7356 = vunpack.c.l.b16 %v6411
      %v7357 = vunpack.c.h.b16 %v6411
      %v7358 = vunpack.c.l.b16 %v6412
      %v7359 = vunpack.c.h.b16 %v6412
      %v7360 = vunpack.c.l.b16 %v6413
      %v7361 = vunpack.c.h.b16 %v6413
      %v7362 = vunpack.c.l.b16 %v6414
      %v7363 = vunpack.c.h.b16 %v6414
      %v7364 = vunpack.c.l.b16 %v6415
      %v7365 = vunpack.c.h.b16 %v6415
      %v7366 = vunpack.c.l.b16 %v6416
      %v7367 = vunpack.c.h.b16 %v6416
      %v7368 = vunpack.c.l.b16 %v6417
      %v7369 = vunpack.c.h.b16 %v6417
      %v7370 = vunpack.c.l.b16 %v6418
      %v7371 = vunpack.c.h.b16 %v6418
      %v7372 = vunpack.c.l.b16 %v6419
      %v7373 = vunpack.c.h.b16 %v6419
      %v7374 = vunpack.c.l.b16 %v6420
      %v7375 = vunpack.c.h.b16 %v6420
      %v7376 = vunpack.c.l.b16 %v6421
      %v7377 = vunpack.c.h.b16 %v6421
      %v7378 = vunpack.c.l.b16 %v6422
      %v7379 = vunpack.c.h.b16 %v6422
      %v7380 = vunpack.c.l.b16 %v6423
      %v7381 = vunpack.c.h.b16 %v6423
      %v7382 = vunpack.c.l.b16 %v6424
      %v7383 = vunpack.c.h.b16 %v6424
      %v7384 = vunpack.c.l.b16 %v6425
      %v7385 = vunpack.c.h.b16 %v6425
      %v7386 = vunpack.c.l.b16 %v6426
      %v7387 = vunpack.c.h.b16 %v6426
      %v7388 = vpack.c.b16 %v6752, %v6748
      %v7389 = vpack.c.b16 %v6753, %v6749
      %v7390 = vpack.c.b16 %v6754, %v6750
      %v7391 = vpack.c.b16 %v6755, %v6751
      %v7392 = vpack.c.b16 %v6760, %v6756
      %v7393 = vpack.c.b16 %v6761, %v6757
      %v7394 = vpack.c.b16 %v6762, %v6758
      %v7395 = vpack.c.b16 %v6763, %v6759
      %v7396 = vpack.c.b16 %v6768, %v6764
      %v7397 = vpack.c.b16 %v6769, %v6765
      %v7398 = vpack.c.b16 %v6770, %v6766
      %v7399 = vpack.c.b16 %v6771, %v6767
      %v7400 = vpack.c.b16 %v6776, %v6772
      %v7401 = vpack.c.b16 %v6777, %v6773
      %v7402 = vpack.c.b16 %v6778, %v6774
      %v7403 = vpack.c.b16 %v6779, %v6775
      %v7404 = vpack.c.b16 %v6784, %v6780
      %v7405 = vpack.c.b16 %v6785, %v6781
      %v7406 = vpack.c.b16 %v6786, %v6782
      %v7407 = vpack.c.b16 %v6787, %v6783
      %v7408 = vpack.c.b16 %v6792, %v6788
      %v7409 = vpack.c.b16 %v6793, %v6789
      %v7410 = vpack.c.b16 %v6794, %v6790
      %v7411 = vpack.c.b16 %v6795, %v6791
      %v7412 = vpack.c.b16 %v6800, %v6796
      %v7413 = vpack.c.b16 %v6801, %v6797
      %v7414 = vpack.c.b16 %v6802, %v6798
      %v7415 = vpack.c.b16 %v6803, %v6799
      %v7416 = vpack.c.b16 %v6808, %v6804
      %v7417 = vpack.c.b16 %v6809, %v6805
      %v7418 = vpack.c.b16 %v6810, %v6806
      %v7419 = vpack.c.b16 %v6811, %v6807
      %v7420 = vpack.c.b16 %v6816, %v6812
      %v7421 = vpack.c.b16 %v6817, %v6813
      %v7422 = vpack.c.b16 %v6818, %v6814
      %v7423 = vpack.c.b16 %v6819, %v6815
      %v7424 = vpack.c.b16 %v6824, %v6820
      %v7425 = vpack.c.b16 %v6825, %v6821
      %v7426 = vpack.c.b16 %v6826, %v6822
      %v7427 = vpack.c.b16 %v6827, %v6823
      %v7428 = vpack.c.b16 %v6832, %v6828
      %v7429 = vpack.c.b16 %v6833, %v6829
      %v7430 = vpack.c.b16 %v6834, %v6830
      %v7431 = vpack.c.b16 %v6835, %v6831
      %v7432 = vpack.c.b16 %v6840, %v6836
      %v7433 = vpack.c.b16 %v6841, %v6837
      %v7434 = vpack.c.b16 %v6842, %v6838
      %v7435 = vpack.c.b16 %v6843, %v6839
      %v7436 = vpack.c.b16 %v6848, %v6844
      %v7437 = vpack.c.b16 %v6849, %v6845
      %v7438 = vpack.c.b16 %v6850, %v6846
      %v7439 = vpack.c.b16 %v6851, %v6847
      %v7440 = vpack.c.b16 %v6856, %v6852
      %v7441 = vpack.c.b16 %v6857, %v6853
      %v7442 = vpack.c.b16 %v6858, %v6854
      %v7443 = vpack.c.b16 %v6859, %v6855
      %v7444 = vpack.c.b16 %v6864, %v6860
      %v7445 = vpack.c.b16 %v6865, %v6861
      %v7446 = vpack.c.b16 %v6866, %v6862
      %v7447 = vpack.c.b16 %v6867, %v6863
      %v7448 = vpack.c.b16 %v6872, %v6868
      %v7449 = vpack.c.b16 %v6873, %v6869
      %v7450 = vpack.c.b16 %v6874, %v6870
      %v7451 = vpack.c.b16 %v6875, %v6871
      %v7452 = vpack.c.b16 %v6880, %v6876
      %v7453 = vpack.c.b16 %v6881, %v6877
      %v7454 = vpack.c.b16 %v6882, %v6878
      %v7455 = vpack.c.b16 %v6883, %v6879
      %v7456 = vpack.c.b16 %v6888, %v6884
      %v7457 = vpack.c.b16 %v6889, %v6885
      %v7458 = vpack.c.b16 %v6890, %v6886
      %v7459 = vpack.c.b16 %v6891, %v6887
      %v7460 = vpack.c.b16 %v6896, %v6892
      %v7461 = vpack.c.b16 %v6897, %v6893
      %v7462 = vpack.c.b16 %v6898, %v6894
      %v7463 = vpack.c.b16 %v6899, %v6895
      %v7464 = vpack.c.b16 %v6904, %v6900
      %v7465 = vpack.c.b16 %v6905, %v6901
      %v7466 = vpack.c.b16 %v6906, %v6902
      %v7467 = vpack.c.b16 %v6907, %v6903
      %v7468 = vpack.c.b16 %v6912, %v6908
      %v7469 = vpack.c.b16 %v6913, %v6909
      %v7470 = vpack.c.b16 %v6914, %v6910
      %v7471 = vpack.c.b16 %v6915, %v6911
      %v7472 = vpack.c.b16 %v6920, %v6916
      %v7473 = vpack.c.b16 %v6921, %v6917
      %v7474 = vpack.c.b16 %v6922, %v6918
      %v7475 = vpack.c.b16 %v6923, %v6919
      %v7476 = vpack.c.b16 %v6928, %v6924
      %v7477 = vpack.c.b16 %v6929, %v6925
      %v7478 = vpack.c.b16 %v6930, %v6926
      %v7479 = vpack.c.b16 %v6931, %v6927
      %v7480 = vpack.c.b16 %v6936, %v6932
      %v7481 = vpack.c.b16 %v6937, %v6933
      %v7482 = vpack.c.b16 %v6938, %v6934
      %v7483 = vpack.c.b16 %v6939, %v6935
      %v7484 = vpack.c.b16 %v6944, %v6940
      %v7485 = vpack.c.b16 %v6945, %v6941
      %v7486 = vpack.c.b16 %v6946, %v6942
      %v7487 = vpack.c.b16 %v6947, %v6943
      %v7488 = vpack.c.b16 %v6952, %v6948
      %v7489 = vpack.c.b16 %v6953, %v6949
      %v7490 = vpack.c.b16 %v6954, %v6950
      %v7491 = vpack.c.b16 %v6955, %v6951
      %v7492 = vpack.c.b16 %v6960, %v6956
      %v7493 = vpack.c.b16 %v6961, %v6957
      %v7494 = vpack.c.b16 %v6962, %v6958
      %v7495 = vpack.c.b16 %v6963, %v6959
      %v7496 = vpack.c.b16 %v6968, %v6964
      %v7497 = vpack.c.b16 %v6969, %v6965
      %v7498 = vpack.c.b16 %v6970, %v6966
      %v7499 = vpack.c.b16 %v6971, %v6967
      %v7500 = vpack.c.b16 %v6976, %v6972
      %v7501 = vpack.c.b16 %v6977, %v6973
      %v7502 = vpack.c.b16 %v6978, %v6974
      %v7503 = vpack.c.b16 %v6979, %v6975
      %v7504 = vpack.c.b16 %v6984, %v6980
      %v7505 = vpack.c.b16 %v6985, %v6981
      %v7506 = vpack.c.b16 %v6986, %v6982
      %v7507 = vpack.c.b16 %v6987, %v6983
      %v7508 = vpack.c.b16 %v6992, %v6988
      %v7509 = vpack.c.b16 %v6993, %v6989
      %v7510 = vpack.c.b16 %v6994, %v6990
      %v7511 = vpack.c.b16 %v6995, %v6991
      %v7512 = vpack.c.b16 %v7000, %v6996
      %v7513 = vpack.c.b16 %v7001, %v6997
      %v7514 = vpack.c.b16 %v7002, %v6998
      %v7515 = vpack.c.b16 %v7003, %v6999
      %v7516 = vpack.c.b16 %v7008, %v7004
      %v7517 = vpack.c.b16 %v7009, %v7005
      %v7518 = vpack.c.b16 %v7010, %v7006
      %v7519 = vpack.c.b16 %v7011, %v7007
      %v7520 = vpack.c.b16 %v7016, %v7012
      %v7521 = vpack.c.b16 %v7017, %v7013
      %v7522 = vpack.c.b16 %v7018, %v7014
      %v7523 = vpack.c.b16 %v7019, %v7015
      %v7524 = vpack.c.b16 %v7024, %v7020
      %v7525 = vpack.c.b16 %v7025, %v7021
      %v7526 = vpack.c.b16 %v7026, %v7022
      %v7527 = vpack.c.b16 %v7027, %v7023
      %v7528 = vpack.c.b16 %v7032, %v7028
      %v7529 = vpack.c.b16 %v7033, %v7029
      %v7530 = vpack.c.b16 %v7034, %v7030
      %v7531 = vpack.c.b16 %v7035, %v7031
      %v7532 = vpack.c.b16 %v7040, %v7036
      %v7533 = vpack.c.b16 %v7041, %v7037
      %v7534 = vpack.c.b16 %v7042, %v7038
      %v7535 = vpack.c.b16 %v7043, %v7039
      %v7536 = vpack.c.b16 %v7048, %v7044
      %v7537 = vpack.c.b16 %v7049, %v7045
      %v7538 = vpack.c.b16 %v7050, %v7046
      %v7539 = vpack.c.b16 %v7051, %v7047
      %v7540 = vpack.c.b16 %v7056, %v7052
      %v7541 = vpack.c.b16 %v7057, %v7053
      %v7542 = vpack.c.b16 %v7058, %v7054
      %v7543 = vpack.c.b16 %v7059, %v7055
      %v7544 = vpack.c.b16 %v7064, %v7060
      %v7545 = vpack.c.b16 %v7065, %v7061
      %v7546 = vpack.c.b16 %v7066, %v7062
      %v7547 = vpack.c.b16 %v7067, %v7063
      %v7548 = vpack.c.b16 %v7072, %v7068
      %v7549 = vpack.c.b16 %v7073, %v7069
      %v7550 = vpack.c.b16 %v7074, %v7070
      %v7551 = vpack.c.b16 %v7075, %v7071
      %v7552 = vpack.c.b16 %v7080, %v7076
      %v7553 = vpack.c.b16 %v7081, %v7077
      %v7554 = vpack.c.b16 %v7082, %v7078
      %v7555 = vpack.c.b16 %v7083, %v7079
      %v7556 = vpack.c.b16 %v7088, %v7084
      %v7557 = vpack.c.b16 %v7089, %v7085
      %v7558 = vpack.c.b16 %v7090, %v7086
      %v7559 = vpack.c.b16 %v7091, %v7087
      %v7560 = vpack.c.b16 %v7096, %v7092
      %v7561 = vpack.c.b16 %v7097, %v7093
      %v7562 = vpack.c.b16 %v7098, %v7094
      %v7563 = vpack.c.b16 %v7099, %v7095
      %v7564 = vpack.c.b16 %v7104, %v7100
      %v7565 = vpack.c.b16 %v7105, %v7101
      %v7566 = vpack.c.b16 %v7106, %v7102
      %v7567 = vpack.c.b16 %v7107, %v7103
      %v7568 = vpack.c.b16 %v7112, %v7108
      %v7569 = vpack.c.b16 %v7113, %v7109
      %v7570 = vpack.c.b16 %v7114, %v7110
      %v7571 = vpack.c.b16 %v7115, %v7111
      %v7572 = vpack.c.b16 %v7120, %v7116
      %v7573 = vpack.c.b16 %v7121, %v7117
      %v7574 = vpack.c.b16 %v7122, %v7118
      %v7575 = vpack.c.b16 %v7123, %v7119
      %v7576 = vpack.c.b16 %v7128, %v7124
      %v7577 = vpack.c.b16 %v7129, %v7125
      %v7578 = vpack.c.b16 %v7130, %v7126
      %v7579 = vpack.c.b16 %v7131, %v7127
      %v7580 = vpack.c.b16 %v7136, %v7132
      %v7581 = vpack.c.b16 %v7137, %v7133
      %v7582 = vpack.c.b16 %v7138, %v7134
      %v7583 = vpack.c.b16 %v7139, %v7135
      %v7584 = vpack.c.b16 %v7144, %v7140
      %v7585 = vpack.c.b16 %v7145, %v7141
      %v7586 = vpack.c.b16 %v7146, %v7142
      %v7587 = vpack.c.b16 %v7147, %v7143
      %v7588 = vpack.c.b16 %v7152, %v7148
      %v7589 = vpack.c.b16 %v7153, %v7149
      %v7590 = vpack.c.b16 %v7154, %v7150
      %v7591 = vpack.c.b16 %v7155, %v7151
      %v7592 = vpack.c.b16 %v7160, %v7156
      %v7593 = vpack.c.b16 %v7161, %v7157
      %v7594 = vpack.c.b16 %v7162, %v7158
      %v7595 = vpack.c.b16 %v7163, %v7159
      %v7596 = vpack.c.b16 %v7168, %v7164
      %v7597 = vpack.c.b16 %v7169, %v7165
      %v7598 = vpack.c.b16 %v7170, %v7166
      %v7599 = vpack.c.b16 %v7171, %v7167
      %v7600 = vpack.c.b16 %v7176, %v7172
      %v7601 = vpack.c.b16 %v7177, %v7173
      %v7602 = vpack.c.b16 %v7178, %v7174
      %v7603 = vpack.c.b16 %v7179, %v7175
      %v7604 = vpack.c.b16 %v7184, %v7180
      %v7605 = vpack.c.b16 %v7185, %v7181
      %v7606 = vpack.c.b16 %v7186, %v7182
      %v7607 = vpack.c.b16 %v7187, %v7183
      %v7608 = vpack.c.b16 %v7192, %v7188
      %v7609 = vpack.c.b16 %v7193, %v7189
      %v7610 = vpack.c.b16 %v7194, %v7190
      %v7611 = vpack.c.b16 %v7195, %v7191
      %v7612 = vpack.c.b16 %v7200, %v7196
      %v7613 = vpack.c.b16 %v7201, %v7197
      %v7614 = vpack.c.b16 %v7202, %v7198
      %v7615 = vpack.c.b16 %v7203, %v7199
      %v7616 = vpack.c.b16 %v7208, %v7204
      %v7617 = vpack.c.b16 %v7209, %v7205
      %v7618 = vpack.c.b16 %v7210, %v7206
      %v7619 = vpack.c.b16 %v7211, %v7207
      %v7620 = vpack.c.b16 %v7216, %v7212
      %v7621 = vpack.c.b16 %v7217, %v7213
      %v7622 = vpack.c.b16 %v7218, %v7214
      %v7623 = vpack.c.b16 %v7219, %v7215
      %v7624 = vpack.c.b16 %v7224, %v7220
      %v7625 = vpack.c.b16 %v7225, %v7221
      %v7626 = vpack.c.b16 %v7226, %v7222
      %v7627 = vpack.c.b16 %v7227, %v7223
      %v7628 = vpack.c.b16 %v7232, %v7228
      %v7629 = vpack.c.b16 %v7233, %v7229
      %v7630 = vpack.c.b16 %v7234, %v7230
      %v7631 = vpack.c.b16 %v7235, %v7231
      %v7632 = vpack.c.b16 %v7240, %v7236
      %v7633 = vpack.c.b16 %v7241, %v7237
      %v7634 = vpack.c.b16 %v7242, %v7238
      %v7635 = vpack.c.b16 %v7243, %v7239
      %v7636 = vpack.c.b16 %v7248, %v7244
      %v7637 = vpack.c.b16 %v7249, %v7245
      %v7638 = vpack.c.b16 %v7250, %v7246
      %v7639 = vpack.c.b16 %v7251, %v7247
      %v7640 = vpack.c.b16 %v7256, %v7252
      %v7641 = vpack.c.b16 %v7257, %v7253
      %v7642 = vpack.c.b16 %v7258, %v7254
      %v7643 = vpack.c.b16 %v7259, %v7255
      %v7644 = vpack.c.b16 %v7264, %v7260
      %v7645 = vpack.c.b16 %v7265, %v7261
      %v7646 = vpack.c.b16 %v7266, %v7262
      %v7647 = vpack.c.b16 %v7267, %v7263
      %v7648 = vpack.c.b16 %v7272, %v7268
      %v7649 = vpack.c.b16 %v7273, %v7269
      %v7650 = vpack.c.b16 %v7274, %v7270
      %v7651 = vpack.c.b16 %v7275, %v7271
      %v7652 = vpack.c.b16 %v7280, %v7276
      %v7653 = vpack.c.b16 %v7281, %v7277
      %v7654 = vpack.c.b16 %v7282, %v7278
      %v7655 = vpack.c.b16 %v7283, %v7279
      %v7656 = vpack.c.b16 %v7288, %v7284
      %v7657 = vpack.c.b16 %v7289, %v7285
      %v7658 = vpack.c.b16 %v7290, %v7286
      %v7659 = vpack.c.b16 %v7291, %v7287
      %v7660 = vpack.c.b16 %v7296, %v7292
      %v7661 = vpack.c.b16 %v7297, %v7293
      %v7662 = vpack.c.b16 %v7298, %v7294
      %v7663 = vpack.c.b16 %v7299, %v7295
      %v7664 = vpack.c.b16 %v7304, %v7300
      %v7665 = vpack.c.b16 %v7305, %v7301
      %v7666 = vpack.c.b16 %v7306, %v7302
      %v7667 = vpack.c.b16 %v7307, %v7303
      %v7668 = vpack.c.b16 %v7312, %v7308
      %v7669 = vpack.c.b16 %v7313, %v7309
      %v7670 = vpack.c.b16 %v7314, %v7310
      %v7671 = vpack.c.b16 %v7315, %v7311
      %v7672 = vpack.c.b16 %v7320, %v7316
      %v7673 = vpack.c.b16 %v7321, %v7317
      %v7674 = vpack.c.b16 %v7322, %v7318
      %v7675 = vpack.c.b16 %v7323, %v7319
      %v7676 = vpack.c.b16 %v7328, %v7324
      %v7677 = vpack.c.b16 %v7329, %v7325
      %v7678 = vpack.c.b16 %v7330, %v7326
      %v7679 = vpack.c.b16 %v7331, %v7327
      %v7680 = vpack.c.b16 %v7336, %v7332
      %v7681 = vpack.c.b16 %v7337, %v7333
      %v7682 = vpack.c.b16 %v7338, %v7334
      %v7683 = vpack.c.b16 %v7339, %v7335
      %v7684 = vpack.c.b16 %v7344, %v7340
      %v7685 = vpack.c.b16 %v7345, %v7341
      %v7686 = vpack.c.b16 %v7346, %v7342
      %v7687 = vpack.c.b16 %v7347, %v7343
      %v7688 = vpack.c.b16 %v7352, %v7348
      %v7689 = vpack.c.b16 %v7353, %v7349
      %v7690 = vpack.c.b16 %v7354, %v7350
      %v7691 = vpack.c.b16 %v7355, %v7351
      %v7692 = vpack.c.b16 %v7360, %v7356
      %v7693 = vpack.c.b16 %v7361, %v7357
      %v7694 = vpack.c.b16 %v7362, %v7358
      %v7695 = vpack.c.b16 %v7363, %v7359
      %v7696 = vpack.c.b16 %v7368, %v7364
      %v7697 = vpack.c.b16 %v7369, %v7365
      %v7698 = vpack.c.b16 %v7370, %v7366
      %v7699 = vpack.c.b16 %v7371, %v7367
      %v7700 = vpack.c.b16 %v7376, %v7372
      %v7701 = vpack.c.b16 %v7377, %v7373
      %v7702 = vpack.c.b16 %v7378, %v7374
      %v7703 = vpack.c.b16 %v7379, %v7375
      %v7704 = vpack.c.b16 %v7384, %v7380
      %v7705 = vpack.c.b16 %v7385, %v7381
      %v7706 = vpack.c.b16 %v7386, %v7382
      %v7707 = vpack.c.b16 %v7387, %v7383
      %v8029 = vlaneseq
      %v8030 = vshrl.u32 %v8029, 7
      %v8031 = vsub.s32 0, %v8030
      %v8032 = vrot.slane %v6427, %v8031
      %v8033 = vlaneseq
      %v8034 = vshrl.u32 %v8033, 7
      %v8035 = vsub.s32 1, %v8034
      %v8036 = vrot.slane %v6427, %v8035
      %v8037 = vlaneseq
      %v8038 = vshrl.u32 %v8037, 7
      %v8039 = vsub.s32 2, %v8038
      %v8040 = vrot.slane %v6427, %v8039
      %v8041 = vlaneseq
      %v8042 = vshrl.u32 %v8041, 7
      %v8043 = vsub.s32 3, %v8042
      %v8044 = vrot.slane %v6427, %v8043
      %8049 = vmatprep.subr.bf16.mxu0 %v7389
      %8050 = vmatpush1.bf16.msra.mxu0 %v7388
      %8051 = vmatprep.subr.bf16.mxu0 %v7393
      %8052 = vmatpush1.bf16.msra.mxu0 %v7392
      %8053 = vmatprep.subr.bf16.mxu0 %v7397
      %8054 = vmatpush1.bf16.msra.mxu0 %v7396
      %8055 = vmatprep.subr.bf16.mxu0 %v7401
      %8056 = vmatpush1.bf16.msra.mxu0 %v7400
      %8057 = vmatprep.subr.bf16.mxu0 %v7405
      %8058 = vmatpush1.bf16.msra.mxu0 %v7404
      %8059 = vmatprep.subr.bf16.mxu0 %v7409
      %8060 = vmatpush1.bf16.msra.mxu0 %v7408
      %8061 = vmatprep.subr.bf16.mxu0 %v7413
      %8062 = vmatpush1.bf16.msra.mxu0 %v7412
      %8063 = vmatprep.subr.bf16.mxu0 %v7417
      %8064 = vmatpush1.bf16.msra.mxu0 %v7416
      %8065 = vmatprep.subr.bf16.mxu0 %v7421
      %8066 = vmatpush1.bf16.msra.mxu0 %v7420
      %8067 = vmatprep.subr.bf16.mxu0 %v7425
      %8068 = vmatpush1.bf16.msra.mxu0 %v7424
      %8069 = vmatprep.subr.bf16.mxu0 %v7429
      %8070 = vmatpush1.bf16.msra.mxu0 %v7428
      %8071 = vmatprep.subr.bf16.mxu0 %v7433
      %8072 = vmatpush1.bf16.msra.mxu0 %v7432
      %8073 = vmatprep.subr.bf16.mxu0 %v7437
      %8074 = vmatpush1.bf16.msra.mxu0 %v7436
      %8075 = vmatprep.subr.bf16.mxu0 %v7441
      %8076 = vmatpush1.bf16.msra.mxu0 %v7440
      %8077 = vmatprep.subr.bf16.mxu0 %v7445
      %8078 = vmatpush1.bf16.msra.mxu0 %v7444
      %8079 = vmatprep.subr.bf16.mxu0 %v7449
      %8080 = vmatpush1.bf16.msra.mxu0 %v7448
      %8081 = vmatprep.mubr.bf16.mxu0 %v6098
      %8082 = vmatmul.mubr.bf16.gmra.mrb[0].mxu0 %v6097
      %v8083 = vpop.f32.mrb[0].mxu0
      %v8084 = vadd.f32 %v8032, %v8083
      %v8085 = vpop.f32.mrb[0].mxu0
      %v8086 = vadd.f32 %v8036, %v8085
      %v8087 = vpop.f32.mrb[0].mxu0
      %v8088 = vpop.f32.mrb[0].mxu0
      %8089 = vdwg.mxu0
      %8090 = vmatprep.subr.bf16.mxu0 %v7453
      %8091 = vmatpush1.bf16.msra.mxu0 %v7452
      %8092 = vmatprep.subr.bf16.mxu0 %v7457
      %8093 = vmatpush1.bf16.msra.mxu0 %v7456
      %8094 = vmatprep.subr.bf16.mxu0 %v7461
      %8095 = vmatpush1.bf16.msra.mxu0 %v7460
      %8096 = vmatprep.subr.bf16.mxu0 %v7465
      %8097 = vmatpush1.bf16.msra.mxu0 %v7464
      %8098 = vmatprep.subr.bf16.mxu0 %v7469
      %8099 = vmatpush1.bf16.msra.mxu0 %v7468
      %8100 = vmatprep.subr.bf16.mxu0 %v7473
      %8101 = vmatpush1.bf16.msra.mxu0 %v7472
      %8102 = vmatprep.subr.bf16.mxu0 %v7477
      %8103 = vmatpush1.bf16.msra.mxu0 %v7476
      %8104 = vmatprep.subr.bf16.mxu0 %v7481
      %8105 = vmatpush1.bf16.msra.mxu0 %v7480
      %8106 = vmatprep.subr.bf16.mxu0 %v7485
      %8107 = vmatpush1.bf16.msra.mxu0 %v7484
      %8108 = vmatprep.subr.bf16.mxu0 %v7489
      %8109 = vmatpush1.bf16.msra.mxu0 %v7488
      %8110 = vmatprep.subr.bf16.mxu0 %v7493
      %8111 = vmatpush1.bf16.msra.mxu0 %v7492
      %8112 = vmatprep.subr.bf16.mxu0 %v7497
      %8113 = vmatpush1.bf16.msra.mxu0 %v7496
      %8114 = vmatprep.subr.bf16.mxu0 %v7501
      %8115 = vmatpush1.bf16.msra.mxu0 %v7500
      %8116 = vmatprep.subr.bf16.mxu0 %v7505
      %8117 = vmatpush1.bf16.msra.mxu0 %v7504
      %8118 = vmatprep.subr.bf16.mxu0 %v7509
      %8119 = vmatpush1.bf16.msra.mxu0 %v7508
      %8120 = vmatprep.subr.bf16.mxu0 %v7513
      %8121 = vmatpush1.bf16.msra.mxu0 %v7512
      %8122 = vmatprep.mubr.bf16.mxu0 %v6100
      %8123 = vmatmul.mubr.bf16.gmra.mrb[0].mxu0 %v6099
      %v8124 = vpop.f32.mrb[0].mxu0
      %v8125 = vadd.f32 %v8084, %v8124
      %v8126 = vpop.f32.mrb[0].mxu0
      %v8127 = vadd.f32 %v8086, %v8126
      %v8128 = vpop.f32.mrb[0].mxu0
      %v8129 = vpop.f32.mrb[0].mxu0
      %8130 = vdwg.mxu0
      %8131 = vmatprep.subr.bf16.mxu0 %v7517
      %8132 = vmatpush1.bf16.msra.mxu0 %v7516
      %8133 = vmatprep.subr.bf16.mxu0 %v7521
      %8134 = vmatpush1.bf16.msra.mxu0 %v7520
      %8135 = vmatprep.subr.bf16.mxu0 %v7525
      %8136 = vmatpush1.bf16.msra.mxu0 %v7524
      %8137 = vmatprep.subr.bf16.mxu0 %v7529
      %8138 = vmatpush1.bf16.msra.mxu0 %v7528
      %8139 = vmatprep.subr.bf16.mxu0 %v7533
      %8140 = vmatpush1.bf16.msra.mxu0 %v7532
      %8141 = vmatprep.subr.bf16.mxu0 %v7537
      %8142 = vmatpush1.bf16.msra.mxu0 %v7536
      %8143 = vmatprep.subr.bf16.mxu0 %v7541
      %8144 = vmatpush1.bf16.msra.mxu0 %v7540
      %8145 = vmatprep.subr.bf16.mxu0 %v7545
      %8146 = vmatpush1.bf16.msra.mxu0 %v7544
      %8147 = vmatprep.subr.bf16.mxu0 %v7549
      %8148 = vmatpush1.bf16.msra.mxu0 %v7548
      %8149 = vmatprep.subr.bf16.mxu0 %v7553
      %8150 = vmatpush1.bf16.msra.mxu0 %v7552
      %8151 = vmatprep.subr.bf16.mxu0 %v7557
      %8152 = vmatpush1.bf16.msra.mxu0 %v7556
      %8153 = vmatprep.subr.bf16.mxu0 %v7561
      %8154 = vmatpush1.bf16.msra.mxu0 %v7560
      %8155 = vmatprep.subr.bf16.mxu0 %v7565
      %8156 = vmatpush1.bf16.msra.mxu0 %v7564
      %8157 = vmatprep.subr.bf16.mxu0 %v7569
      %8158 = vmatpush1.bf16.msra.mxu0 %v7568
      %8159 = vmatprep.subr.bf16.mxu0 %v7573
      %8160 = vmatpush1.bf16.msra.mxu0 %v7572
      %8161 = vmatprep.subr.bf16.mxu0 %v7577
      %8162 = vmatpush1.bf16.msra.mxu0 %v7576
      %8163 = vmatprep.mubr.bf16.mxu0 %v6102
      %8164 = vmatmul.mubr.bf16.gmra.mrb[0].mxu0 %v6101
      %v8165 = vpop.f32.mrb[0].mxu0
      %v8166 = vadd.f32 %v8125, %v8165
      %v8167 = vpop.f32.mrb[0].mxu0
      %v8168 = vadd.f32 %v8127, %v8167
      %v8169 = vpop.f32.mrb[0].mxu0
      %v8170 = vpop.f32.mrb[0].mxu0
      %8171 = vdwg.mxu0
      %8172 = vmatprep.subr.bf16.mxu0 %v7581
      %8173 = vmatpush1.bf16.msra.mxu0 %v7580
      %8174 = vmatprep.subr.bf16.mxu0 %v7585
      %8175 = vmatpush1.bf16.msra.mxu0 %v7584
      %8176 = vmatprep.subr.bf16.mxu0 %v7589
      %8177 = vmatpush1.bf16.msra.mxu0 %v7588
      %8178 = vmatprep.subr.bf16.mxu0 %v7593
      %8179 = vmatpush1.bf16.msra.mxu0 %v7592
      %8180 = vmatprep.subr.bf16.mxu0 %v7597
      %8181 = vmatpush1.bf16.msra.mxu0 %v7596
      %8182 = vmatprep.subr.bf16.mxu0 %v7601
      %8183 = vmatpush1.bf16.msra.mxu0 %v7600
      %8184 = vmatprep.subr.bf16.mxu0 %v7605
      %8185 = vmatpush1.bf16.msra.mxu0 %v7604
      %8186 = vmatprep.subr.bf16.mxu0 %v7609
      %8187 = vmatpush1.bf16.msra.mxu0 %v7608
      %8188 = vmatprep.subr.bf16.mxu0 %v7613
      %8189 = vmatpush1.bf16.msra.mxu0 %v7612
      %8190 = vmatprep.subr.bf16.mxu0 %v7617
      %8191 = vmatpush1.bf16.msra.mxu0 %v7616
      %8192 = vmatprep.subr.bf16.mxu0 %v7621
      %8193 = vmatpush1.bf16.msra.mxu0 %v7620
      %8194 = vmatprep.subr.bf16.mxu0 %v7625
      %8195 = vmatpush1.bf16.msra.mxu0 %v7624
      %8196 = vmatprep.subr.bf16.mxu0 %v7629
      %8197 = vmatpush1.bf16.msra.mxu0 %v7628
      %8198 = vmatprep.subr.bf16.mxu0 %v7633
      %8199 = vmatpush1.bf16.msra.mxu0 %v7632
      %8200 = vmatprep.subr.bf16.mxu0 %v7637
      %8201 = vmatpush1.bf16.msra.mxu0 %v7636
      %8202 = vmatprep.subr.bf16.mxu0 %v7641
      %8203 = vmatpush1.bf16.msra.mxu0 %v7640
      %8204 = vmatprep.mubr.bf16.mxu0 %v6104
      %8205 = vmatmul.mubr.bf16.gmra.mrb[0].mxu0 %v6103
      %v8206 = vpop.f32.mrb[0].mxu0
      %v8207 = vadd.f32 %v8166, %v8206
      %v8208 = vpop.f32.mrb[0].mxu0
      %v8209 = vadd.f32 %v8168, %v8208
      %v8210 = vpop.f32.mrb[0].mxu0
      %v8211 = vpop.f32.mrb[0].mxu0
      %8212 = vdwg.mxu0
      %8213 = vmatprep.subr.bf16.mxu0 %v7645
      %8214 = vmatpush1.bf16.msra.mxu0 %v7644
      %8215 = vmatprep.subr.bf16.mxu0 %v7649
      %8216 = vmatpush1.bf16.msra.mxu0 %v7648
      %8217 = vmatprep.subr.bf16.mxu0 %v7653
      %8218 = vmatpush1.bf16.msra.mxu0 %v7652
      %8219 = vmatprep.subr.bf16.mxu0 %v7657
      %8220 = vmatpush1.bf16.msra.mxu0 %v7656
      %8221 = vmatprep.subr.bf16.mxu0 %v7661
      %8222 = vmatpush1.bf16.msra.mxu0 %v7660
      %8223 = vmatprep.subr.bf16.mxu0 %v7665
      %8224 = vmatpush1.bf16.msra.mxu0 %v7664
      %8225 = vmatprep.subr.bf16.mxu0 %v7669
      %8226 = vmatpush1.bf16.msra.mxu0 %v7668
      %8227 = vmatprep.subr.bf16.mxu0 %v7673
      %8228 = vmatpush1.bf16.msra.mxu0 %v7672
      %8229 = vmatprep.subr.bf16.mxu0 %v7677
      %8230 = vmatpush1.bf16.msra.mxu0 %v7676
      %8231 = vmatprep.subr.bf16.mxu0 %v7681
      %8232 = vmatpush1.bf16.msra.mxu0 %v7680
      %8233 = vmatprep.subr.bf16.mxu0 %v7685
      %8234 = vmatpush1.bf16.msra.mxu0 %v7684
      %8235 = vmatprep.subr.bf16.mxu0 %v7689
      %8236 = vmatpush1.bf16.msra.mxu0 %v7688
      %8237 = vmatprep.subr.bf16.mxu0 %v7693
      %8238 = vmatpush1.bf16.msra.mxu0 %v7692
      %8239 = vmatprep.subr.bf16.mxu0 %v7697
      %8240 = vmatpush1.bf16.msra.mxu0 %v7696
      %8241 = vmatprep.subr.bf16.mxu0 %v7701
      %8242 = vmatpush1.bf16.msra.mxu0 %v7700
      %8243 = vmatprep.subr.bf16.mxu0 %v7705
      %8244 = vmatpush1.bf16.msra.mxu0 %v7704
      %8245 = vmatprep.mubr.bf16.mxu0 %v6106
      %8246 = vmatmul.mubr.bf16.gmra.mrb[0].mxu0 %v6105
      %v8247 = vpop.f32.mrb[0].mxu0
      %v8248 = vadd.f32 %v8207, %v8247
      %v8249 = vpop.f32.mrb[0].mxu0
      %v8250 = vadd.f32 %v8209, %v8249
      %v8251 = vpop.f32.mrb[0].mxu0
      %v8252 = vpop.f32.mrb[0].mxu0
      %8253 = vdwg.mxu0
      %8254 = vmatprep.subr.bf16.mxu0 %v7391
      %8255 = vmatpush1.bf16.msra.mxu0 %v7390
      %8256 = vmatprep.subr.bf16.mxu0 %v7395
      %8257 = vmatpush1.bf16.msra.mxu0 %v7394
      %8258 = vmatprep.subr.bf16.mxu0 %v7399
      %8259 = vmatpush1.bf16.msra.mxu0 %v7398
      %8260 = vmatprep.subr.bf16.mxu0 %v7403
      %8261 = vmatpush1.bf16.msra.mxu0 %v7402
      %8262 = vmatprep.subr.bf16.mxu0 %v7407
      %8263 = vmatpush1.bf16.msra.mxu0 %v7406
      %8264 = vmatprep.subr.bf16.mxu0 %v7411
      %8265 = vmatpush1.bf16.msra.mxu0 %v7410
      %8266 = vmatprep.subr.bf16.mxu0 %v7415
      %8267 = vmatpush1.bf16.msra.mxu0 %v7414
      %8268 = vmatprep.subr.bf16.mxu0 %v7419
      %8269 = vmatpush1.bf16.msra.mxu0 %v7418
      %8270 = vmatprep.subr.bf16.mxu0 %v7423
      %8271 = vmatpush1.bf16.msra.mxu0 %v7422
      %8272 = vmatprep.subr.bf16.mxu0 %v7427
      %8273 = vmatpush1.bf16.msra.mxu0 %v7426
      %8274 = vmatprep.subr.bf16.mxu0 %v7431
      %8275 = vmatpush1.bf16.msra.mxu0 %v7430
      %8276 = vmatprep.subr.bf16.mxu0 %v7435
      %8277 = vmatpush1.bf16.msra.mxu0 %v7434
      %8278 = vmatprep.subr.bf16.mxu0 %v7439
      %8279 = vmatpush1.bf16.msra.mxu0 %v7438
      %8280 = vmatprep.subr.bf16.mxu0 %v7443
      %8281 = vmatpush1.bf16.msra.mxu0 %v7442
      %8282 = vmatprep.subr.bf16.mxu0 %v7447
      %8283 = vmatpush1.bf16.msra.mxu0 %v7446
      %8284 = vmatprep.subr.bf16.mxu0 %v7451
      %8285 = vmatpush1.bf16.msra.mxu0 %v7450
      %8286 = vmatprep.mubr.bf16.mxu0 %v6098
      %8287 = vmatmul.mubr.bf16.gmra.mrb[0].mxu0 %v6097
      %v8288 = vpop.f32.mrb[0].mxu0
      %v8289 = vadd.f32 %v8040, %v8288
      %v8290 = vpop.f32.mrb[0].mxu0
      %v8291 = vadd.f32 %v8044, %v8290
      %v8292 = vpop.f32.mrb[0].mxu0
      %v8293 = vpop.f32.mrb[0].mxu0
      %8294 = vdwg.mxu0
      %8295 = vmatprep.subr.bf16.mxu0 %v7455
      %8296 = vmatpush1.bf16.msra.mxu0 %v7454
      %8297 = vmatprep.subr.bf16.mxu0 %v7459
      %8298 = vmatpush1.bf16.msra.mxu0 %v7458
      %8299 = vmatprep.subr.bf16.mxu0 %v7463
      %8300 = vmatpush1.bf16.msra.mxu0 %v7462
      %8301 = vmatprep.subr.bf16.mxu0 %v7467
      %8302 = vmatpush1.bf16.msra.mxu0 %v7466
      %8303 = vmatprep.subr.bf16.mxu0 %v7471
      %8304 = vmatpush1.bf16.msra.mxu0 %v7470
      %8305 = vmatprep.subr.bf16.mxu0 %v7475
      %8306 = vmatpush1.bf16.msra.mxu0 %v7474
      %8307 = vmatprep.subr.bf16.mxu0 %v7479
      %8308 = vmatpush1.bf16.msra.mxu0 %v7478
      %8309 = vmatprep.subr.bf16.mxu0 %v7483
      %8310 = vmatpush1.bf16.msra.mxu0 %v7482
      %8311 = vmatprep.subr.bf16.mxu0 %v7487
      %8312 = vmatpush1.bf16.msra.mxu0 %v7486
      %8313 = vmatprep.subr.bf16.mxu0 %v7491
      %8314 = vmatpush1.bf16.msra.mxu0 %v7490
      %8315 = vmatprep.subr.bf16.mxu0 %v7495
      %8316 = vmatpush1.bf16.msra.mxu0 %v7494
      %8317 = vmatprep.subr.bf16.mxu0 %v7499
      %8318 = vmatpush1.bf16.msra.mxu0 %v7498
      %8319 = vmatprep.subr.bf16.mxu0 %v7503
      %8320 = vmatpush1.bf16.msra.mxu0 %v7502
      %8321 = vmatprep.subr.bf16.mxu0 %v7507
      %8322 = vmatpush1.bf16.msra.mxu0 %v7506
      %8323 = vmatprep.subr.bf16.mxu0 %v7511
      %8324 = vmatpush1.bf16.msra.mxu0 %v7510
      %8325 = vmatprep.subr.bf16.mxu0 %v7515
      %8326 = vmatpush1.bf16.msra.mxu0 %v7514
      %8327 = vmatprep.mubr.bf16.mxu0 %v6100
      %8328 = vmatmul.mubr.bf16.gmra.mrb[0].mxu0 %v6099
      %v8329 = vpop.f32.mrb[0].mxu0
      %v8330 = vadd.f32 %v8289, %v8329
      %v8331 = vpop.f32.mrb[0].mxu0
      %v8332 = vadd.f32 %v8291, %v8331
      %v8333 = vpop.f32.mrb[0].mxu0
      %v8334 = vpop.f32.mrb[0].mxu0
      %8335 = vdwg.mxu0
      %8336 = vmatprep.subr.bf16.mxu0 %v7519
      %8337 = vmatpush1.bf16.msra.mxu0 %v7518
      %8338 = vmatprep.subr.bf16.mxu0 %v7523
      %8339 = vmatpush1.bf16.msra.mxu0 %v7522
      %8340 = vmatprep.subr.bf16.mxu0 %v7527
      %8341 = vmatpush1.bf16.msra.mxu0 %v7526
      %8342 = vmatprep.subr.bf16.mxu0 %v7531
      %8343 = vmatpush1.bf16.msra.mxu0 %v7530
      %8344 = vmatprep.subr.bf16.mxu0 %v7535
      %8345 = vmatpush1.bf16.msra.mxu0 %v7534
      %8346 = vmatprep.subr.bf16.mxu0 %v7539
      %8347 = vmatpush1.bf16.msra.mxu0 %v7538
      %8348 = vmatprep.subr.bf16.mxu0 %v7543
      %8349 = vmatpush1.bf16.msra.mxu0 %v7542
      %8350 = vmatprep.subr.bf16.mxu0 %v7547
      %8351 = vmatpush1.bf16.msra.mxu0 %v7546
      %8352 = vmatprep.subr.bf16.mxu0 %v7551
      %8353 = vmatpush1.bf16.msra.mxu0 %v7550
      %8354 = vmatprep.subr.bf16.mxu0 %v7555
      %8355 = vmatpush1.bf16.msra.mxu0 %v7554
      %8356 = vmatprep.subr.bf16.mxu0 %v7559
      %8357 = vmatpush1.bf16.msra.mxu0 %v7558
      %8358 = vmatprep.subr.bf16.mxu0 %v7563
      %8359 = vmatpush1.bf16.msra.mxu0 %v7562
      %8360 = vmatprep.subr.bf16.mxu0 %v7567
      %8361 = vmatpush1.bf16.msra.mxu0 %v7566
      %8362 = vmatprep.subr.bf16.mxu0 %v7571
      %8363 = vmatpush1.bf16.msra.mxu0 %v7570
      %8364 = vmatprep.subr.bf16.mxu0 %v7575
      %8365 = vmatpush1.bf16.msra.mxu0 %v7574
      %8366 = vmatprep.subr.bf16.mxu0 %v7579
      %8367 = vmatpush1.bf16.msra.mxu0 %v7578
      %8368 = vmatprep.mubr.bf16.mxu0 %v6102
      %8369 = vmatmul.mubr.bf16.gmra.mrb[0].mxu0 %v6101
      %v8370 = vpop.f32.mrb[0].mxu0
      %v8371 = vadd.f32 %v8330, %v8370
      %v8372 = vpop.f32.mrb[0].mxu0
      %v8373 = vadd.f32 %v8332, %v8372
      %v8374 = vpop.f32.mrb[0].mxu0
      %v8375 = vpop.f32.mrb[0].mxu0
      %8376 = vdwg.mxu0
      %8377 = vmatprep.subr.bf16.mxu0 %v7583
      %8378 = vmatpush1.bf16.msra.mxu0 %v7582
      %8379 = vmatprep.subr.bf16.mxu0 %v7587
      %8380 = vmatpush1.bf16.msra.mxu0 %v7586
      %8381 = vmatprep.subr.bf16.mxu0 %v7591
      %8382 = vmatpush1.bf16.msra.mxu0 %v7590
      %8383 = vmatprep.subr.bf16.mxu0 %v7595
      %8384 = vmatpush1.bf16.msra.mxu0 %v7594
      %8385 = vmatprep.subr.bf16.mxu0 %v7599
      %8386 = vmatpush1.bf16.msra.mxu0 %v7598
      %8387 = vmatprep.subr.bf16.mxu0 %v7603
      %8388 = vmatpush1.bf16.msra.mxu0 %v7602
      %8389 = vmatprep.subr.bf16.mxu0 %v7607
      %8390 = vmatpush1.bf16.msra.mxu0 %v7606
      %8391 = vmatprep.subr.bf16.mxu0 %v7611
      %8392 = vmatpush1.bf16.msra.mxu0 %v7610
      %8393 = vmatprep.subr.bf16.mxu0 %v7615
      %8394 = vmatpush1.bf16.msra.mxu0 %v7614
      %8395 = vmatprep.subr.bf16.mxu0 %v7619
      %8396 = vmatpush1.bf16.msra.mxu0 %v7618
      %8397 = vmatprep.subr.bf16.mxu0 %v7623
      %8398 = vmatpush1.bf16.msra.mxu0 %v7622
      %8399 = vmatprep.subr.bf16.mxu0 %v7627
      %8400 = vmatpush1.bf16.msra.mxu0 %v7626
      %8401 = vmatprep.subr.bf16.mxu0 %v7631
      %8402 = vmatpush1.bf16.msra.mxu0 %v7630
      %8403 = vmatprep.subr.bf16.mxu0 %v7635
      %8404 = vmatpush1.bf16.msra.mxu0 %v7634
      %8405 = vmatprep.subr.bf16.mxu0 %v7639
      %8406 = vmatpush1.bf16.msra.mxu0 %v7638
      %8407 = vmatprep.subr.bf16.mxu0 %v7643
      %8408 = vmatpush1.bf16.msra.mxu0 %v7642
      %8409 = vmatprep.mubr.bf16.mxu0 %v6104
      %8410 = vmatmul.mubr.bf16.gmra.mrb[0].mxu0 %v6103
      %v8411 = vpop.f32.mrb[0].mxu0
      %v8412 = vadd.f32 %v8371, %v8411
      %v8413 = vpop.f32.mrb[0].mxu0
      %v8414 = vadd.f32 %v8373, %v8413
      %v8415 = vpop.f32.mrb[0].mxu0
      %v8416 = vpop.f32.mrb[0].mxu0
      %8417 = vdwg.mxu0
      %8418 = vmatprep.subr.bf16.mxu0 %v7647
      %8419 = vmatpush1.bf16.msra.mxu0 %v7646
      %8420 = vmatprep.subr.bf16.mxu0 %v7651
      %8421 = vmatpush1.bf16.msra.mxu0 %v7650
      %8422 = vmatprep.subr.bf16.mxu0 %v7655
      %8423 = vmatpush1.bf16.msra.mxu0 %v7654
      %8424 = vmatprep.subr.bf16.mxu0 %v7659
      %8425 = vmatpush1.bf16.msra.mxu0 %v7658
      %8426 = vmatprep.subr.bf16.mxu0 %v7663
      %8427 = vmatpush1.bf16.msra.mxu0 %v7662
      %8428 = vmatprep.subr.bf16.mxu0 %v7667
      %8429 = vmatpush1.bf16.msra.mxu0 %v7666
      %8430 = vmatprep.subr.bf16.mxu0 %v7671
      %8431 = vmatpush1.bf16.msra.mxu0 %v7670
      %8432 = vmatprep.subr.bf16.mxu0 %v7675
      %8433 = vmatpush1.bf16.msra.mxu0 %v7674
      %8434 = vmatprep.subr.bf16.mxu0 %v7679
      %8435 = vmatpush1.bf16.msra.mxu0 %v7678
      %8436 = vmatprep.subr.bf16.mxu0 %v7683
      %8437 = vmatpush1.bf16.msra.mxu0 %v7682
      %8438 = vmatprep.subr.bf16.mxu0 %v7687
      %8439 = vmatpush1.bf16.msra.mxu0 %v7686
      %8440 = vmatprep.subr.bf16.mxu0 %v7691
      %8441 = vmatpush1.bf16.msra.mxu0 %v7690
      %8442 = vmatprep.subr.bf16.mxu0 %v7695
      %8443 = vmatpush1.bf16.msra.mxu0 %v7694
      %8444 = vmatprep.subr.bf16.mxu0 %v7699
      %8445 = vmatpush1.bf16.msra.mxu0 %v7698
      %8446 = vmatprep.subr.bf16.mxu0 %v7703
      %8447 = vmatpush1.bf16.msra.mxu0 %v7702
      %8448 = vmatprep.subr.bf16.mxu0 %v7707
      %8449 = vmatpush1.bf16.msra.mxu0 %v7706
      %8450 = vmatprep.mubr.bf16.mxu0 %v6106
      %8451 = vmatmul.mubr.bf16.gmra.mrb[0].mxu0 %v6105
      %v8452 = vpop.f32.mrb[0].mxu0
      %v8453 = vadd.f32 %v8412, %v8452
      %v8454 = vpop.f32.mrb[0].mxu0
      %v8455 = vadd.f32 %v8414, %v8454
      %v8456 = vpop.f32.mrb[0].mxu0
      %v8457 = vpop.f32.mrb[0].mxu0
      %8458 = vdwg.mxu0
      %v8463 = vcombine.low %v8248, %v8250
      %v8464 = vcombine.low %v8453, %v8455
      %v8466 = vunpack.c.l.s4 1966171168
      %v8467 = vunpack.c.0.s8 %v8466
      %v8468 = vlaneseq
      %v8469 = vshrl.u32 %v8468, 7
      %v8470 = vsub.s32 %v8467, %v8469
      %v8471 = vrot.slane %v8463, %v8470
      %v8473 = vunpack.c.l.s4 1966171168
      %v8474 = vunpack.c.0.s8 %v8473
      %v8475 = vlaneseq
      %v8476 = vshrl.u32 %v8475, 7
      %v8477 = vsub.s32 %v8474, %v8476
      %v8478 = vrot.slane %v8464, %v8477
      %v8479 = vcombine.low %v8471, %v8478
      %v8481 = vunpack.c.l.s4 1966171168
      %v8482 = vunpack.c.0.s8 %v8481
      %v8483 = vlaneseq
      %v8484 = vshrl.u32 %v8483, 7
      %v8485 = vsub.s32 %v8482, %v8484
      %v8486 = vrot.slane %v8479, %v8485
      %v8488 = vlaneseq
      %vm8489 = vcmp.ge.s32.totalorder %v8488, 0
      %vm8490 = vcmp.lt.s32.totalorder %v8488, 512
      %vm8491 = vmand %vm8489, %vm8490
      %8492 = vst.msk [vmem:[%s681] sm:$0xf] %vm8491, %v8486
      %p8493 = scmp.lt.s32.totalorder %s33, 1
      %s8494 = scalar_select %p8493, %s33, 1
      %s8495 = smul.addr %s8494, 4
      %s8496 = scalar_lea.vmem %s22, %s8495
      // Predicated region
      $region109: #{effnetbx_v2_forward.1} parent=107 // pred_check
        %p8497 = pneg %p518
      $region110: #{effnetbx_v2_forward.1} parent=107 // pred_check_branch
        %8499 = sbr.rel (%p8497) target = $region112
      $region111: #{effnetbx_v2_forward.1} parent=107 // pred_region
        _
      $region112: #{effnetbx_v2_forward.1} parent=107 // pred_fallthru
        _
    $region108: #{effnetbx_v2_forward.1} parent=5 // pred_fallthru
      _
    %p8500 = scmp.le.s32.totalorder 2, %s28
    // Predicated region
    $region113: #{effnetbx_v2_forward.1} parent=5 // pred_check
      %p8501 = pneg %p8500
    $region114: #{effnetbx_v2_forward.1} parent=5 // pred_check_branch
      %8503 = sbr.rel (%p8501) target = $region116
    $region115: #{effnetbx_v2_forward.1} parent=5 // pred_region
      %s8504 = ssub.s32 %s28, 2
      // Predicated region
      $region117: #{effnetbx_v2_forward.1} parent=115 // pred_check
        %p8505 = pneg %p524
      $region118: #{effnetbx_v2_forward.1} parent=115 // pred_check_branch
        %8507 = sbr.rel (%p8505) target = $region120
      $region119: #{effnetbx_v2_forward.1} parent=115 // pred_region
        %p8508 = scmp.lt.s32.totalorder %s34, 1
        %s8509 = scalar_select %p8508, %s34, 1
        %s8510 = smul.addr %s8509, 4
        %s8511 = scalar_lea.vmem %s22, %s8510
      $region120: #{effnetbx_v2_forward.1} parent=115 // pred_fallthru
        _
    $region116: #{effnetbx_v2_forward.1} parent=5 // pred_fallthru
      _
  $region6: #{effnetbx_v2_forward.1} parent=0 // loop_footer
    %s32 = sadd.s32 1, %s28
  $region7: #{effnetbx_v2_forward.1} parent=0 // loop_footer_branch
    %27 = sbr.rel target = $region3
  $region8: #{effnetbx_v2_forward.1} parent=0 // loop_exit
    _

</llo_original>
